<compile_context>
chip_gen: v7x
topology: tpu7x:2x2x1
jax: 0.10.0
libtpu: 0.0.40
codegen_flags: <defaults>
</compile_context>

<pallas_src>
import jax
import jax.numpy as jnp
from jax.experimental import pallas as pl
from jax.experimental.pallas import tpu as pltpu


# ---------------------------------------------------------------------------
# fc1 + ReLU: grid over 384-wide output-column tiles.  The embedding stays
# resident in VMEM; the [512, 1920] weight (the dominant HBM traffic of this
# layer) is streamed tile by tile and overlapped with the matmuls.
# ---------------------------------------------------------------------------
def _fc_relu_kernel(x_ref, w_ref, b_ref, out_ref):
    y = jnp.dot(x_ref[...], w_ref[...], preferred_element_type=jnp.float32)
    out_ref[...] = jnp.maximum(y + b_ref[...], 0.0)


def fc1_relu(emb, w, b, *, tn=384):
    B, K = emb.shape
    N = w.shape[1]
    if N % tn != 0:
        tn = N
    return pl.pallas_call(
        _fc_relu_kernel,
        out_shape=jax.ShapeDtypeStruct((B, N), jnp.float32),
        grid_spec=pltpu.PrefetchScalarGridSpec(
            num_scalar_prefetch=0,
            grid=(N // tn,),
            in_specs=[
                pl.BlockSpec((B, K), lambda i: (0, 0)),      # emb, resident
                pl.BlockSpec((K, tn), lambda i: (0, i)),     # weight column tile
                pl.BlockSpec((1, tn), lambda i: (0, i)),     # bias tile
            ],
            out_specs=pl.BlockSpec((B, tn), lambda i: (0, i)),
        ),
        compiler_params=pltpu.CompilerParams(
            dimension_semantics=("parallel",),
            vmem_limit_bytes=32 * 1024 * 1024,
        ),
    )(emb, w, b)


# ---------------------------------------------------------------------------
# 3x3 conv (+ InstanceNorm + ReLU, or + sigmoid for the last layer).
# One grid step = one batch sample (instance norm statistics are per sample).
# Input arrives already zero-padded for a "valid" 3x3 window.
# ---------------------------------------------------------------------------
def _make_conv_kernel(Ho, Wo, Cout, *, instance_norm_relu, eps=1e-5):
    def kernel(x_ref, w_ref, b_ref, out_ref, *scratch):
        # x_ref:   [Ho+2, Wo+2, Cin]   (pre-padded NHWC slab, C on lanes)
        # w_ref:   [9, Cin, Cout]      tap k = dy*3 + dx
        # b_ref:   [1, Cout]
        # out_ref: [Ho, Wo, Cout]
        bias = b_ref[...]
        acc_ref = scratch[0] if scratch else None

        def row_body(h, carry):
            acc = jnp.zeros((Wo, Cout), jnp.float32)
            for dy in range(3):
                row = x_ref[h + dy]                    # [Wo+2, Cin]
                for dx in range(3):
                    patch = row[dx:dx + Wo, :]         # [Wo, Cin]
                    acc = acc + jnp.dot(patch, w_ref[dy * 3 + dx],
                                        preferred_element_type=jnp.float32)
            acc = acc + bias
            if instance_norm_relu:
                acc_ref[h] = acc                       # raw conv row; normalized below
            else:
                out_ref[h] = 1.0 / (1.0 + jnp.exp(-acc))   # sigmoid
            return carry

        jax.lax.fori_loop(0, Ho, row_body, 0)

        if instance_norm_relu:
            y = acc_ref[...]                                           # [Ho, Wo, Cout]
            n = float(Ho * Wo)
            s = jnp.sum(jnp.sum(y, axis=1, keepdims=True), axis=0, keepdims=True)
            ss = jnp.sum(jnp.sum(y * y, axis=1, keepdims=True), axis=0, keepdims=True)
            mean = s / n
            var = ss / n - mean * mean                                 # biased, like InstanceNorm2d
            inv = jax.lax.rsqrt(var + eps)
            out_ref[...] = jnp.maximum((y - mean) * inv, 0.0)

    return kernel


def conv3x3(x_padded, w_taps, b, *, instance_norm_relu):
    B, Hp, Wp, Cin = x_padded.shape
    Cout = w_taps.shape[-1]
    Ho, Wo = Hp - 2, Wp - 2
    kernel = _make_conv_kernel(Ho, Wo, Cout, instance_norm_relu=instance_norm_relu)
    scratch = [pltpu.VMEM((Ho, Wo, Cout), jnp.float32)] if instance_norm_relu else []
    return pl.pallas_call(
        kernel,
        out_shape=jax.ShapeDtypeStruct((B, Ho, Wo, Cout), jnp.float32),
        grid_spec=pltpu.PrefetchScalarGridSpec(
            num_scalar_prefetch=0,
            grid=(B,),
            in_specs=[
                pl.BlockSpec((pl.Squeezed(), Hp, Wp, Cin),
                             lambda bb: (bb, 0, 0, 0)),
                pl.BlockSpec((9, Cin, Cout), lambda bb: (0, 0, 0)),    # resident
                pl.BlockSpec((1, Cout), lambda bb: (0, 0)),            # resident
            ],
            out_specs=pl.BlockSpec((pl.Squeezed(), Ho, Wo, Cout),
                                   lambda bb: (bb, 0, 0, 0)),
            scratch_shapes=scratch,
        ),
        compiler_params=pltpu.CompilerParams(
            dimension_semantics=("parallel",),
            vmem_limit_bytes=32 * 1024 * 1024,
        ),
    )(x_padded, w_taps, b)


# ---------------------------------------------------------------------------
# Full forward pass
# ---------------------------------------------------------------------------
def _upsample2x(x):
    # nn.UpsamplingNearest2d(scale_factor=2) in NHWC
    return jnp.repeat(jnp.repeat(x, 2, axis=1), 2, axis=2)


def _prepare_params(p):
    """Exact re-layout of the PyTorch-style parameters for the kernels."""
    c = jnp.arange(128)
    h = jnp.arange(3)
    w = jnp.arange(5)
    # column g=(h*5+w)*128+c of the permuted weight == column f=c*15+h*5+w of w1
    perm = (c[None, None, :] * 15 + h[:, None, None] * 5 + w[None, :, None]).reshape(-1)
    kp = {"w1": p["w1"][:, perm], "b1": p["b1"][perm][None, :]}
    for name in ("c1", "c2", "c3", "c4"):
        wc = p["w" + name]
        kp["w" + name] = wc.reshape(9, wc.shape[2], wc.shape[3])   # [9, Cin, Cout]
        kp["b" + name] = p["b" + name][None, :]
    return kp


@jax.jit
def ae_decoder_forward(embedding, params):
    """embedding [B, 512] -> image [B, 3, 45, 80] (NCHW, like the PyTorch module)."""
    B = embedding.shape[0]
    kp = _prepare_params(params)

    # fc1 (+identity bn) + ReLU, reshaped straight to NHWC (3, 5, 128)
    x = fc1_relu(embedding, kp["w1"], kp["b1"]).reshape(B, 3, 5, 128)

    # block 1: up -> conv(pad=1) -> InstanceNorm -> ReLU
    x = _upsample2x(x)                                              # [B, 6, 10, 128]
    x = jnp.pad(x, ((0, 0), (1, 1), (1, 1), (0, 0)))
    x = conv3x3(x, kp["wc1"], kp["bc1"], instance_norm_relu=True)   # [B, 6, 10, 128]

    # block 2: up -> conv(pad=(0,1)) -> InstanceNorm -> ReLU -> F.pad (0,0,1,0)
    x = _upsample2x(x)                                              # [B, 12, 20, 128]
    x = jnp.pad(x, ((0, 0), (0, 0), (1, 1), (0, 0)))                # width pad only
    x = conv3x3(x, kp["wc2"], kp["bc2"], instance_norm_relu=True)   # [B, 10, 20, 128]
    x = jnp.pad(x, ((0, 0), (1, 0), (0, 0), (0, 0)))                # [B, 11, 20, 128]

    # block 3: up -> conv(pad=1) -> InstanceNorm -> ReLU
    x = _upsample2x(x)                                              # [B, 22, 40, 128]
    x = jnp.pad(x, ((0, 0), (1, 1), (1, 1), (0, 0)))
    x = conv3x3(x, kp["wc3"], kp["bc3"], instance_norm_relu=True)   # [B, 22, 40, 128]

    # block 4: up -> F.pad (0,0,1,0) -> conv(pad=1) -> sigmoid
    x = _upsample2x(x)                                              # [B, 44, 80, 128]
    x = jnp.pad(x, ((0, 0), (2, 1), (1, 1), (0, 0)))                # F.pad top + conv pad
    x = conv3x3(x, kp["wc4"], kp["bc4"], instance_norm_relu=False)  # [B, 45, 80, 3]

    return jnp.transpose(x, (0, 3, 1, 2))                           # NCHW


# ---------------------------------------------------------------------------
# Pure-JAX reference (independent of the kernel-side weight re-layout)
# ---------------------------------------------------------------------------
def ae_decoder_reference(embedding, p):
    B = embedding.shape[0]
    x = jax.nn.relu(embedding @ p["w1"] + p["b1"])
    x = x.reshape(B, 128, 3, 5).transpose(0, 2, 3, 1)               # NHWC

    def up(x):
        return jnp.repeat(jnp.repeat(x, 2, axis=1), 2, axis=2)

    def conv(x, w, b, padding):
        y = jax.lax.conv_general_dilated(
            x, w, window_strides=(1, 1), padding=padding,
            dimension_numbers=("NHWC", "HWIO", "NHWC"))
        return y + b

    def inorm(x, eps=1e-5):
        m = x.mean(axis=(1, 2), keepdims=True)
        v = ((x - m) ** 2).mean(axis=(1, 2), keepdims=True)
        return (x - m) / jnp.sqrt(v + eps)

    x = up(x)
    x = jax.nn.relu(inorm(conv(x, p["wc1"], p["bc1"], ((1, 1), (1, 1)))))
    x = up(x)
    x = jax.nn.relu(inorm(conv(x, p["wc2"], p["bc2"], ((0, 0), (1, 1)))))
    x = jnp.pad(x, ((0, 0), (1, 0), (0, 0), (0, 0)))
    x = up(x)
    x = jax.nn.relu(inorm(conv(x, p["wc3"], p["bc3"], ((1, 1), (1, 1)))))
    x = up(x)
    x = jnp.pad(x, ((0, 0), (1, 0), (0, 0), (0, 0)))
    x = jax.nn.sigmoid(conv(x, p["wc4"], p["bc4"], ((1, 1), (1, 1))))
    return jnp.transpose(x, (0, 3, 1, 2))


def init_params(key):
    """Mirrors init_weights: Conv ~ N(0, sqrt(2/(k*k*cout))), Linear ~ N(0, 0.02);
    biases small (init_weights leaves them at PyTorch defaults)."""
    ks = jax.random.split(key, 10)

    def conv_w(k, cin, cout):
        std = (2.0 / (3 * 3 * cout)) ** 0.5
        return std * jax.random.normal(k, (3, 3, cin, cout), jnp.float32)  # HWIO

    return {
        "w1": 0.02 * jax.random.normal(ks[0], (512, 1920), jnp.float32),
        "b1": 0.01 * jax.random.normal(ks[1], (1920,), jnp.float32),
        "wc1": conv_w(ks[2], 128, 128),
        "bc1": 0.01 * jax.random.normal(ks[3], (128,), jnp.float32),
        "wc2": conv_w(ks[4], 128, 128),
        "bc2": 0.01 * jax.random.normal(ks[5], (128,), jnp.float32),
        "wc3": conv_w(ks[6], 128, 128),
        "bc3": 0.01 * jax.random.normal(ks[7], (128,), jnp.float32),
        "wc4": conv_w(ks[8], 128, 3),
        "bc4": 0.01 * jax.random.normal(ks[9], (3,), jnp.float32),
    }


if __name__ == "__main__":
    key = jax.random.PRNGKey(0)
    k_emb, k_par = jax.random.split(key)

    B = 2
    emb = jax.random.normal(k_emb, (B, 512), jnp.float32)
    params = init_params(k_par)

    out = jax.block_until_ready(ae_decoder_forward(emb, params))
    assert out.shape == (B, 3, 45, 80), out.shape

    ref = ae_decoder_reference(emb, params)
    max_err = float(jnp.max(jnp.abs(out - ref)))
    assert max_err < 1e-3, f"mismatch vs reference: max abs err {max_err}"

    print("KERNEL_OK")
</pallas_src>

<mosaic_0001>
module attributes {stable_mosaic.version = 11 : i64} {
  func.func private @main(%arg0: i32) attributes {dimension_semantics = [#tpu.dimension_semantics<core_parallel>], iteration_bounds = array<i64: 2>, tpu.core_type = #tpu.core_type<sc_scalar_subcore>, window_params = []} {
    return
  }
}

module attributes {stable_mosaic.version = 11 : i64} {
  func.func private @main(%arg0: i32) attributes {dimension_semantics = [#tpu.dimension_semantics<core_parallel>], iteration_bounds = array<i64: 2>, tpu.core_type = #tpu.core_type<sc_scalar_subcore>, window_params = []} {
    return
  }
}

module attributes {stable_mosaic.version = 11 : i64} {
  func.func @_fc_relu_kernel(%arg0: i32, %arg1: memref<2x512xf32, #tpu.memory_space<vmem>>, %arg2: memref<512x384xf32, #tpu.memory_space<vmem>>, %arg3: memref<1x384xf32, #tpu.memory_space<vmem>>, %arg4: memref<2x384xf32, #tpu.memory_space<vmem>>) attributes {dimension_semantics = [#tpu.dimension_semantics<parallel>], iteration_bounds = array<i64: 5>, scalar_prefetch = 0 : i64, scratch_operands = 0 : i64, tpu.core_type = #tpu.core_type<tc>, window_params = [{pipeline_mode = #tpu.pipeline_mode<synchronous>, transform_indices = @transform_0, window_bounds = array<i64: 2, 512>}, {transform_indices = @transform_1, window_bounds = array<i64: 512, 384>}, {transform_indices = @transform_2, window_bounds = array<i64: 1, 384>}, {transform_indices = @transform_3, window_bounds = array<i64: 2, 384>}]} {
    %c0 = arith.constant 0 : index
    %c0_0 = arith.constant 0 : index
    %0 = vector.load %arg1[%c0, %c0_0] : memref<2x512xf32, #tpu.memory_space<vmem>>, vector<2x512xf32>
    %c0_1 = arith.constant 0 : index
    %c0_2 = arith.constant 0 : index
    %1 = vector.load %arg2[%c0_1, %c0_2] : memref<512x384xf32, #tpu.memory_space<vmem>>, vector<512x384xf32>
    %cst = arith.constant dense<0.000000e+00> : vector<2x384xf32>
    %2 = tpu.matmul %0, %1, %cst {dimension_numbers = #tpu.dot_dimension_numbers<[1], [0], [0], [1], [0, 0, 1, 1], [], []>} : vector<2x512xf32>, vector<512x384xf32>, vector<2x384xf32> -> vector<2x384xf32>
    %c0_3 = arith.constant 0 : index
    %c0_4 = arith.constant 0 : index
    %3 = vector.load %arg3[%c0_3, %c0_4] : memref<1x384xf32, #tpu.memory_space<vmem>>, vector<1x384xf32>
    %4 = vector.broadcast %3 : vector<1x384xf32> to vector<2x384xf32>
    %5 = arith.addf %2, %4 : vector<2x384xf32>
    %cst_5 = arith.constant 0.000000e+00 : f32
    %6 = vector.broadcast %cst_5 : f32 to vector<2x384xf32>
    %7 = arith.maximumf %5, %6 : vector<2x384xf32>
    %c0_6 = arith.constant 0 : index
    %c0_7 = arith.constant 0 : index
    %8 = vector.load %arg4[%c0_6, %c0_7] : memref<2x384xf32, #tpu.memory_space<vmem>>, vector<2x384xf32>
    tpu.vector_store %arg4[%c0_6, %c0_7], %7 {strides = array<i32>} : memref<2x384xf32, #tpu.memory_space<vmem>>, vector<2x384xf32>,
    return
  }
  func.func @transform_0(%arg0: i32) -> (i32, i32) {
    %c0_i32 = arith.constant 0 : i32
    %c0_i32_0 = arith.constant 0 : i32
    %c0_i32_1 = arith.constant 0 : i32
    return %c0_i32, %c0_i32_0 : i32, i32
  }
  func.func @transform_1(%arg0: i32) -> (i32, i32) {
    %c0_i32 = arith.constant 0 : i32
    %c0_i32_0 = arith.constant 0 : i32
    return %c0_i32, %arg0 : i32, i32
  }
  func.func @transform_2(%arg0: i32) -> (i32, i32) {
    %c0_i32 = arith.constant 0 : i32
    %c0_i32_0 = arith.constant 0 : i32
    return %c0_i32, %arg0 : i32, i32
  }
  func.func @transform_3(%arg0: i32) -> (i32, i32) {
    %c0_i32 = arith.constant 0 : i32
    %c0_i32_0 = arith.constant 0 : i32
    return %c0_i32, %arg0 : i32, i32
  }
}

module attributes {stable_mosaic.version = 11 : i64} {
  func.func @kernel(%arg0: i32, %arg1: memref<1x8x12x128xf32, #tpu.memory_space<vmem>>, %arg2: memref<9x128x128xf32, #tpu.memory_space<vmem>>, %arg3: memref<1x128xf32, #tpu.memory_space<vmem>>, %arg4: memref<1x6x10x128xf32, #tpu.memory_space<vmem>>, %arg5: memref<6x10x128xf32, #tpu.memory_space<vmem>>) attributes {dimension_semantics = [#tpu.dimension_semantics<parallel>], iteration_bounds = array<i64: 2>, scalar_prefetch = 0 : i64, scratch_operands = 1 : i64, tpu.core_type = #tpu.core_type<tc>, window_params = [{transform_indices = @transform_0, window_bounds = array<i64: 1, 8, 12, 128>}, {pipeline_mode = #tpu.pipeline_mode<synchronous>, transform_indices = @transform_1, window_bounds = array<i64: 9, 128, 128>}, {pipeline_mode = #tpu.pipeline_mode<synchronous>, transform_indices = @transform_2, window_bounds = array<i64: 1, 128>}, {transform_indices = @transform_3, window_bounds = array<i64: 1, 6, 10, 128>}]} {
    %c0 = arith.constant 0 : index
    %c0_0 = arith.constant 0 : index
    %0 = vector.load %arg3[%c0, %c0_0] : memref<1x128xf32, #tpu.memory_space<vmem>>, vector<1x128xf32>
    %c0_i32 = arith.constant 0 : i32
    %c6_i32 = arith.constant 6 : i32
    %1 = arith.addi %c0_i32, %c6_i32 : i32
    %c1_i32 = arith.constant 1 : i32
    scf.for %arg6 = %c0_i32 to %1 step %c1_i32  : i32 {
      %cst_16 = arith.constant 0.000000e+00 : f32
      %30 = vector.broadcast %cst_16 : f32 to vector<10x128xf32>
      %c0_i32_17 = arith.constant 0 : i32
      %31 = arith.addi %arg6, %c0_i32_17 : i32
      %c0_18 = arith.constant 0 : index
      %32 = arith.index_cast %31 : i32 to index
      %c0_19 = arith.constant 0 : index
      %c0_20 = arith.constant 0 : index
      %33 = vector.load %arg1[%c0_18, %32, %c0_19, %c0_20] : memref<1x8x12x128xf32, #tpu.memory_space<vmem>>, vector<1x1x12x128xf32>
      %34 = vector.shape_cast %33 : vector<1x1x12x128xf32> to vector<12x128xf32>
      %35 = vector.extract_strided_slice %34 {offsets = [0, 0], sizes = [10, 128], strides = [1, 1]} : vector<12x128xf32> to vector<10x128xf32>
      %c0_21 = arith.constant 0 : index
      %c0_22 = arith.constant 0 : index
      %c0_23 = arith.constant 0 : index
      %36 = vector.load %arg2[%c0_21, %c0_22, %c0_23] : memref<9x128x128xf32, #tpu.memory_space<vmem>>, vector<1x128x128xf32>
      %37 = vector.shape_cast %36 : vector<1x128x128xf32> to vector<128x128xf32>
      %cst_24 = arith.constant dense<0.000000e+00> : vector<10x128xf32>
      %38 = tpu.matmul %35, %37, %cst_24 {dimension_numbers = #tpu.dot_dimension_numbers<[1], [0], [0], [1], [0, 0, 1, 1], [], []>} : vector<10x128xf32>, vector<128x128xf32>, vector<10x128xf32> -> vector<10x128xf32>
      %39 = arith.addf %30, %38 : vector<10x128xf32>
      %40 = vector.extract_strided_slice %34 {offsets = [1, 0], sizes = [10, 128], strides = [1, 1]} : vector<12x128xf32> to vector<10x128xf32>
      %c1 = arith.constant 1 : index
      %c0_25 = arith.constant 0 : index
      %c0_26 = arith.constant 0 : index
      %41 = vector.load %arg2[%c1, %c0_25, %c0_26] : memref<9x128x128xf32, #tpu.memory_space<vmem>>, vector<1x128x128xf32>
      %42 = vector.shape_cast %41 : vector<1x128x128xf32> to vector<128x128xf32>
      %cst_27 = arith.constant dense<0.000000e+00> : vector<10x128xf32>
      %43 = tpu.matmul %40, %42, %cst_27 {dimension_numbers = #tpu.dot_dimension_numbers<[1], [0], [0], [1], [0, 0, 1, 1], [], []>} : vector<10x128xf32>, vector<128x128xf32>, vector<10x128xf32> -> vector<10x128xf32>
      %44 = arith.addf %39, %43 : vector<10x128xf32>
      %45 = vector.extract_strided_slice %34 {offsets = [2, 0], sizes = [10, 128], strides = [1, 1]} : vector<12x128xf32> to vector<10x128xf32>
      %c2 = arith.constant 2 : index
      %c0_28 = arith.constant 0 : index
      %c0_29 = arith.constant 0 : index
      %46 = vector.load %arg2[%c2, %c0_28, %c0_29] : memref<9x128x128xf32, #tpu.memory_space<vmem>>, vector<1x128x128xf32>
      %47 = vector.shape_cast %46 : vector<1x128x128xf32> to vector<128x128xf32>
      %cst_30 = arith.constant dense<0.000000e+00> : vector<10x128xf32>
      %48 = tpu.matmul %45, %47, %cst_30 {dimension_numbers = #tpu.dot_dimension_numbers<[1], [0], [0], [1], [0, 0, 1, 1], [], []>} : vector<10x128xf32>, vector<128x128xf32>, vector<10x128xf32> -> vector<10x128xf32>
      %49 = arith.addf %44, %48 : vector<10x128xf32>
      %c1_i32_31 = arith.constant 1 : i32
      %50 = arith.addi %arg6, %c1_i32_31 : i32
      %c0_32 = arith.constant 0 : index
      %51 = arith.index_cast %50 : i32 to index
      %c0_33 = arith.constant 0 : index
      %c0_34 = arith.constant 0 : index
      %52 = vector.load %arg1[%c0_32, %51, %c0_33, %c0_34] : memref<1x8x12x128xf32, #tpu.memory_space<vmem>>, vector<1x1x12x128xf32>
      %53 = vector.shape_cast %52 : vector<1x1x12x128xf32> to vector<12x128xf32>
      %54 = vector.extract_strided_slice %53 {offsets = [0, 0], sizes = [10, 128], strides = [1, 1]} : vector<12x128xf32> to vector<10x128xf32>
      %c3 = arith.constant 3 : index
      %c0_35 = arith.constant 0 : index
      %c0_36 = arith.constant 0 : index
      %55 = vector.load %arg2[%c3, %c0_35, %c0_36] : memref<9x128x128xf32, #tpu.memory_space<vmem>>, vector<1x128x128xf32>
      %56 = vector.shape_cast %55 : vector<1x128x128xf32> to vector<128x128xf32>
      %cst_37 = arith.constant dense<0.000000e+00> : vector<10x128xf32>
      %57 = tpu.matmul %54, %56, %cst_37 {dimension_numbers = #tpu.dot_dimension_numbers<[1], [0], [0], [1], [0, 0, 1, 1], [], []>} : vector<10x128xf32>, vector<128x128xf32>, vector<10x128xf32> -> vector<10x128xf32>
      %58 = arith.addf %49, %57 : vector<10x128xf32>
      %59 = vector.extract_strided_slice %53 {offsets = [1, 0], sizes = [10, 128], strides = [1, 1]} : vector<12x128xf32> to vector<10x128xf32>
      %c4 = arith.constant 4 : index
      %c0_38 = arith.constant 0 : index
      %c0_39 = arith.constant 0 : index
      %60 = vector.load %arg2[%c4, %c0_38, %c0_39] : memref<9x128x128xf32, #tpu.memory_space<vmem>>, vector<1x128x128xf32>
      %61 = vector.shape_cast %60 : vector<1x128x128xf32> to vector<128x128xf32>
      %cst_40 = arith.constant dense<0.000000e+00> : vector<10x128xf32>
      %62 = tpu.matmul %59, %61, %cst_40 {dimension_numbers = #tpu.dot_dimension_numbers<[1], [0], [0], [1], [0, 0, 1, 1], [], []>} : vector<10x128xf32>, vector<128x128xf32>, vector<10x128xf32> -> vector<10x128xf32>
      %63 = arith.addf %58, %62 : vector<10x128xf32>
      %64 = vector.extract_strided_slice %53 {offsets = [2, 0], sizes = [10, 128], strides = [1, 1]} : vector<12x128xf32> to vector<10x128xf32>
      %c5 = arith.constant 5 : index
      %c0_41 = arith.constant 0 : index
      %c0_42 = arith.constant 0 : index
      %65 = vector.load %arg2[%c5, %c0_41, %c0_42] : memref<9x128x128xf32, #tpu.memory_space<vmem>>, vector<1x128x128xf32>
      %66 = vector.shape_cast %65 : vector<1x128x128xf32> to vector<128x128xf32>
      %cst_43 = arith.constant dense<0.000000e+00> : vector<10x128xf32>
      %67 = tpu.matmul %64, %66, %cst_43 {dimension_numbers = #tpu.dot_dimension_numbers<[1], [0], [0], [1], [0, 0, 1, 1], [], []>} : vector<10x128xf32>, vector<128x128xf32>, vector<10x128xf32> -> vector<10x128xf32>
      %68 = arith.addf %63, %67 : vector<10x128xf32>
      %c2_i32 = arith.constant 2 : i32
      %69 = arith.addi %arg6, %c2_i32 : i32
      %c0_44 = arith.constant 0 : index
      %70 = arith.index_cast %69 : i32 to index
      %c0_45 = arith.constant 0 : index
      %c0_46 = arith.constant 0 : index
      %71 = vector.load %arg1[%c0_44, %70, %c0_45, %c0_46] : memref<1x8x12x128xf32, #tpu.memory_space<vmem>>, vector<1x1x12x128xf32>
      %72 = vector.shape_cast %71 : vector<1x1x12x128xf32> to vector<12x128xf32>
      %73 = vector.extract_strided_slice %72 {offsets = [0, 0], sizes = [10, 128], strides = [1, 1]} : vector<12x128xf32> to vector<10x128xf32>
      %c6 = arith.constant 6 : index
      %c0_47 = arith.constant 0 : index
      %c0_48 = arith.constant 0 : index
      %74 = vector.load %arg2[%c6, %c0_47, %c0_48] : memref<9x128x128xf32, #tpu.memory_space<vmem>>, vector<1x128x128xf32>
      %75 = vector.shape_cast %74 : vector<1x128x128xf32> to vector<128x128xf32>
      %cst_49 = arith.constant dense<0.000000e+00> : vector<10x128xf32>
      %76 = tpu.matmul %73, %75, %cst_49 {dimension_numbers = #tpu.dot_dimension_numbers<[1], [0], [0], [1], [0, 0, 1, 1], [], []>} : vector<10x128xf32>, vector<128x128xf32>, vector<10x128xf32> -> vector<10x128xf32>
      %77 = arith.addf %68, %76 : vector<10x128xf32>
      %78 = vector.extract_strided_slice %72 {offsets = [1, 0], sizes = [10, 128], strides = [1, 1]} : vector<12x128xf32> to vector<10x128xf32>
      %c7 = arith.constant 7 : index
      %c0_50 = arith.constant 0 : index
      %c0_51 = arith.constant 0 : index
      %79 = vector.load %arg2[%c7, %c0_50, %c0_51] : memref<9x128x128xf32, #tpu.memory_space<vmem>>, vector<1x128x128xf32>
      %80 = vector.shape_cast %79 : vector<1x128x128xf32> to vector<128x128xf32>
      %cst_52 = arith.constant dense<0.000000e+00> : vector<10x128xf32>
      %81 = tpu.matmul %78, %80, %cst_52 {dimension_numbers = #tpu.dot_dimension_numbers<[1], [0], [0], [1], [0, 0, 1, 1], [], []>} : vector<10x128xf32>, vector<128x128xf32>, vector<10x128xf32> -> vector<10x128xf32>
      %82 = arith.addf %77, %81 : vector<10x128xf32>
      %83 = vector.extract_strided_slice %72 {offsets = [2, 0], sizes = [10, 128], strides = [1, 1]} : vector<12x128xf32> to vector<10x128xf32>
      %c8 = arith.constant 8 : index
      %c0_53 = arith.constant 0 : index
      %c0_54 = arith.constant 0 : index
      %84 = vector.load %arg2[%c8, %c0_53, %c0_54] : memref<9x128x128xf32, #tpu.memory_space<vmem>>, vector<1x128x128xf32>
      %85 = vector.shape_cast %84 : vector<1x128x128xf32> to vector<128x128xf32>
      %cst_55 = arith.constant dense<0.000000e+00> : vector<10x128xf32>
      %86 = tpu.matmul %83, %85, %cst_55 {dimension_numbers = #tpu.dot_dimension_numbers<[1], [0], [0], [1], [0, 0, 1, 1], [], []>} : vector<10x128xf32>, vector<128x128xf32>, vector<10x128xf32> -> vector<10x128xf32>
      %87 = arith.addf %82, %86 : vector<10x128xf32>
      %88 = vector.broadcast %0 : vector<1x128xf32> to vector<10x128xf32>
      %89 = arith.addf %87, %88 : vector<10x128xf32>
      %90 = arith.index_cast %arg6 : i32 to index
      %c0_56 = arith.constant 0 : index
      %c0_57 = arith.constant 0 : index
      %91 = vector.load %arg5[%90, %c0_56, %c0_57] : memref<6x10x128xf32, #tpu.memory_space<vmem>>, vector<1x10x128xf32>
      %92 = vector.shape_cast %91 : vector<1x10x128xf32> to vector<10x128xf32>
      %93 = vector.shape_cast %89 : vector<10x128xf32> to vector<1x10x128xf32>
      tpu.vector_store %arg5[%90, %c0_56, %c0_57], %93 {strides = array<i32>} : memref<6x10x128xf32, #tpu.memory_space<vmem>>, vector<1x10x128xf32>,
    }
    %c6_i32_1 = arith.constant 6 : i32
    %c0_2 = arith.constant 0 : index
    %c0_3 = arith.constant 0 : index
    %c0_4 = arith.constant 0 : index
    %2 = vector.load %arg5[%c0_2, %c0_3, %c0_4] : memref<6x10x128xf32, #tpu.memory_space<vmem>>, vector<6x10x128xf32>
    %cst = arith.constant dense<0.000000e+00> : vector<6x128xf32>
    %3 = vector.multi_reduction <add>, %2, %cst [1] : vector<6x10x128xf32> to vector<6x128xf32>
    %4 = vector.shape_cast %3 : vector<6x128xf32> to vector<6x1x128xf32>
    %cst_5 = arith.constant dense<0.000000e+00> : vector<1x128xf32>
    %5 = vector.multi_reduction <add>, %4, %cst_5 [0] : vector<6x1x128xf32> to vector<1x128xf32>
    %6 = vector.shape_cast %5 : vector<1x128xf32> to vector<1x1x128xf32>
    %7 = arith.mulf %2, %2 : vector<6x10x128xf32>
    %cst_6 = arith.constant dense<0.000000e+00> : vector<6x128xf32>
    %8 = vector.multi_reduction <add>, %7, %cst_6 [1] : vector<6x10x128xf32> to vector<6x128xf32>
    %9 = vector.shape_cast %8 : vector<6x128xf32> to vector<6x1x128xf32>
    %cst_7 = arith.constant dense<0.000000e+00> : vector<1x128xf32>
    %10 = vector.multi_reduction <add>, %9, %cst_7 [0] : vector<6x1x128xf32> to vector<1x128xf32>
    %11 = vector.shape_cast %10 : vector<1x128xf32> to vector<1x1x128xf32>
    %cst_8 = arith.constant 6.000000e+01 : f32
    %12 = vector.broadcast %cst_8 : f32 to vector<1x1x128xf32>
    %13 = arith.divf %6, %12 : vector<1x1x128xf32>
    %cst_9 = arith.constant 6.000000e+01 : f32
    %14 = vector.broadcast %cst_9 : f32 to vector<1x1x128xf32>
    %15 = arith.divf %11, %14 : vector<1x1x128xf32>
    %16 = arith.mulf %13, %13 : vector<1x1x128xf32>
    %17 = arith.subf %15, %16 : vector<1x1x128xf32>
    %cst_10 = arith.constant 9.99999974E-6 : f32
    %18 = vector.broadcast %cst_10 : f32 to vector<1x1x128xf32>
    %19 = arith.addf %17, %18 : vector<1x1x128xf32>
    %20 = math.rsqrt %19 : vector<1x1x128xf32>
    %21 = vector.broadcast %13 : vector<1x1x128xf32> to vector<6x10x128xf32>
    %22 = arith.subf %2, %21 : vector<6x10x128xf32>
    %23 = vector.broadcast %20 : vector<1x1x128xf32> to vector<6x10x128xf32>
    %24 = arith.mulf %22, %23 : vector<6x10x128xf32>
    %cst_11 = arith.constant 0.000000e+00 : f32
    %25 = vector.broadcast %cst_11 : f32 to vector<6x10x128xf32>
    %26 = arith.maximumf %24, %25 : vector<6x10x128xf32>
    %c0_12 = arith.constant 0 : index
    %c0_13 = arith.constant 0 : index
    %c0_14 = arith.constant 0 : index
    %c0_15 = arith.constant 0 : index
    %27 = vector.load %arg4[%c0_12, %c0_13, %c0_14, %c0_15] : memref<1x6x10x128xf32, #tpu.memory_space<vmem>>, vector<1x6x10x128xf32>
    %28 = vector.shape_cast %27 : vector<1x6x10x128xf32> to vector<6x10x128xf32>
    %29 = vector.shape_cast %26 : vector<6x10x128xf32> to vector<1x6x10x128xf32>
    tpu.vector_store %arg4[%c0_12, %c0_13, %c0_14, %c0_15], %29 {strides = array<i32>} : memref<1x6x10x128xf32, #tpu.memory_space<vmem>>, vector<1x6x10x128xf32>,
    return
  }
  func.func @transform_0(%arg0: i32) -> (i32, i32, i32, i32) {
    %c0_i32 = arith.constant 0 : i32
    %c0_i32_0 = arith.constant 0 : i32
    %c0_i32_1 = arith.constant 0 : i32
    %c0_i32_2 = arith.constant 0 : i32
    return %arg0, %c0_i32, %c0_i32_0, %c0_i32_1 : i32, i32, i32, i32
  }
  func.func @transform_1(%arg0: i32) -> (i32, i32, i32) {
    %c0_i32 = arith.constant 0 : i32
    %c0_i32_0 = arith.constant 0 : i32
    %c0_i32_1 = arith.constant 0 : i32
    %c0_i32_2 = arith.constant 0 : i32
    return %c0_i32, %c0_i32_0, %c0_i32_1 : i32, i32, i32
  }
  func.func @transform_2(%arg0: i32) -> (i32, i32) {
    %c0_i32 = arith.constant 0 : i32
    %c0_i32_0 = arith.constant 0 : i32
    %c0_i32_1 = arith.constant 0 : i32
    return %c0_i32, %c0_i32_0 : i32, i32
  }
  func.func @transform_3(%arg0: i32) -> (i32, i32, i32, i32) {
    %c0_i32 = arith.constant 0 : i32
    %c0_i32_0 = arith.constant 0 : i32
    %c0_i32_1 = arith.constant 0 : i32
    %c0_i32_2 = arith.constant 0 : i32
    return %arg0, %c0_i32, %c0_i32_0, %c0_i32_1 : i32, i32, i32, i32
  }
}

module attributes {stable_mosaic.version = 11 : i64} {
  func.func @kernel(%arg0: i32, %arg1: memref<1x12x22x128xf32, #tpu.memory_space<vmem>>, %arg2: memref<9x128x128xf32, #tpu.memory_space<vmem>>, %arg3: memref<1x128xf32, #tpu.memory_space<vmem>>, %arg4: memref<1x10x20x128xf32, #tpu.memory_space<vmem>>, %arg5: memref<10x20x128xf32, #tpu.memory_space<vmem>>) attributes {dimension_semantics = [#tpu.dimension_semantics<parallel>], iteration_bounds = array<i64: 2>, scalar_prefetch = 0 : i64, scratch_operands = 1 : i64, tpu.core_type = #tpu.core_type<tc>, window_params = [{transform_indices = @transform_0, window_bounds = array<i64: 1, 12, 22, 128>}, {pipeline_mode = #tpu.pipeline_mode<synchronous>, transform_indices = @transform_1, window_bounds = array<i64: 9, 128, 128>}, {pipeline_mode = #tpu.pipeline_mode<synchronous>, transform_indices = @transform_2, window_bounds = array<i64: 1, 128>}, {transform_indices = @transform_3, window_bounds = array<i64: 1, 10, 20, 128>}]} {
    %c0 = arith.constant 0 : index
    %c0_0 = arith.constant 0 : index
    %0 = vector.load %arg3[%c0, %c0_0] : memref<1x128xf32, #tpu.memory_space<vmem>>, vector<1x128xf32>
    %c0_i32 = arith.constant 0 : i32
    %c10_i32 = arith.constant 10 : i32
    %1 = arith.addi %c0_i32, %c10_i32 : i32
    %c1_i32 = arith.constant 1 : i32
    scf.for %arg6 = %c0_i32 to %1 step %c1_i32  : i32 {
      %cst_16 = arith.constant 0.000000e+00 : f32
      %30 = vector.broadcast %cst_16 : f32 to vector<20x128xf32>
      %c0_i32_17 = arith.constant 0 : i32
      %31 = arith.addi %arg6, %c0_i32_17 : i32
      %c0_18 = arith.constant 0 : index
      %32 = arith.index_cast %31 : i32 to index
      %c0_19 = arith.constant 0 : index
      %c0_20 = arith.constant 0 : index
      %33 = vector.load %arg1[%c0_18, %32, %c0_19, %c0_20] : memref<1x12x22x128xf32, #tpu.memory_space<vmem>>, vector<1x1x22x128xf32>
      %34 = vector.shape_cast %33 : vector<1x1x22x128xf32> to vector<22x128xf32>
      %35 = vector.extract_strided_slice %34 {offsets = [0, 0], sizes = [20, 128], strides = [1, 1]} : vector<22x128xf32> to vector<20x128xf32>
      %c0_21 = arith.constant 0 : index
      %c0_22 = arith.constant 0 : index
      %c0_23 = arith.constant 0 : index
      %36 = vector.load %arg2[%c0_21, %c0_22, %c0_23] : memref<9x128x128xf32, #tpu.memory_space<vmem>>, vector<1x128x128xf32>
      %37 = vector.shape_cast %36 : vector<1x128x128xf32> to vector<128x128xf32>
      %cst_24 = arith.constant dense<0.000000e+00> : vector<20x128xf32>
      %38 = tpu.matmul %35, %37, %cst_24 {dimension_numbers = #tpu.dot_dimension_numbers<[1], [0], [0], [1], [0, 0, 1, 1], [], []>} : vector<20x128xf32>, vector<128x128xf32>, vector<20x128xf32> -> vector<20x128xf32>
      %39 = arith.addf %30, %38 : vector<20x128xf32>
      %40 = vector.extract_strided_slice %34 {offsets = [1, 0], sizes = [20, 128], strides = [1, 1]} : vector<22x128xf32> to vector<20x128xf32>
      %c1 = arith.constant 1 : index
      %c0_25 = arith.constant 0 : index
      %c0_26 = arith.constant 0 : index
      %41 = vector.load %arg2[%c1, %c0_25, %c0_26] : memref<9x128x128xf32, #tpu.memory_space<vmem>>, vector<1x128x128xf32>
      %42 = vector.shape_cast %41 : vector<1x128x128xf32> to vector<128x128xf32>
      %cst_27 = arith.constant dense<0.000000e+00> : vector<20x128xf32>
      %43 = tpu.matmul %40, %42, %cst_27 {dimension_numbers = #tpu.dot_dimension_numbers<[1], [0], [0], [1], [0, 0, 1, 1], [], []>} : vector<20x128xf32>, vector<128x128xf32>, vector<20x128xf32> -> vector<20x128xf32>
      %44 = arith.addf %39, %43 : vector<20x128xf32>
      %45 = vector.extract_strided_slice %34 {offsets = [2, 0], sizes = [20, 128], strides = [1, 1]} : vector<22x128xf32> to vector<20x128xf32>
      %c2 = arith.constant 2 : index
      %c0_28 = arith.constant 0 : index
      %c0_29 = arith.constant 0 : index
      %46 = vector.load %arg2[%c2, %c0_28, %c0_29] : memref<9x128x128xf32, #tpu.memory_space<vmem>>, vector<1x128x128xf32>
      %47 = vector.shape_cast %46 : vector<1x128x128xf32> to vector<128x128xf32>
      %cst_30 = arith.constant dense<0.000000e+00> : vector<20x128xf32>
      %48 = tpu.matmul %45, %47, %cst_30 {dimension_numbers = #tpu.dot_dimension_numbers<[1], [0], [0], [1], [0, 0, 1, 1], [], []>} : vector<20x128xf32>, vector<128x128xf32>, vector<20x128xf32> -> vector<20x128xf32>
      %49 = arith.addf %44, %48 : vector<20x128xf32>
      %c1_i32_31 = arith.constant 1 : i32
      %50 = arith.addi %arg6, %c1_i32_31 : i32
      %c0_32 = arith.constant 0 : index
      %51 = arith.index_cast %50 : i32 to index
      %c0_33 = arith.constant 0 : index
      %c0_34 = arith.constant 0 : index
      %52 = vector.load %arg1[%c0_32, %51, %c0_33, %c0_34] : memref<1x12x22x128xf32, #tpu.memory_space<vmem>>, vector<1x1x22x128xf32>
      %53 = vector.shape_cast %52 : vector<1x1x22x128xf32> to vector<22x128xf32>
      %54 = vector.extract_strided_slice %53 {offsets = [0, 0], sizes = [20, 128], strides = [1, 1]} : vector<22x128xf32> to vector<20x128xf32>
      %c3 = arith.constant 3 : index
      %c0_35 = arith.constant 0 : index
      %c0_36 = arith.constant 0 : index
      %55 = vector.load %arg2[%c3, %c0_35, %c0_36] : memref<9x128x128xf32, #tpu.memory_space<vmem>>, vector<1x128x128xf32>
      %56 = vector.shape_cast %55 : vector<1x128x128xf32> to vector<128x128xf32>
      %cst_37 = arith.constant dense<0.000000e+00> : vector<20x128xf32>
      %57 = tpu.matmul %54, %56, %cst_37 {dimension_numbers = #tpu.dot_dimension_numbers<[1], [0], [0], [1], [0, 0, 1, 1], [], []>} : vector<20x128xf32>, vector<128x128xf32>, vector<20x128xf32> -> vector<20x128xf32>
      %58 = arith.addf %49, %57 : vector<20x128xf32>
      %59 = vector.extract_strided_slice %53 {offsets = [1, 0], sizes = [20, 128], strides = [1, 1]} : vector<22x128xf32> to vector<20x128xf32>
      %c4 = arith.constant 4 : index
      %c0_38 = arith.constant 0 : index
      %c0_39 = arith.constant 0 : index
      %60 = vector.load %arg2[%c4, %c0_38, %c0_39] : memref<9x128x128xf32, #tpu.memory_space<vmem>>, vector<1x128x128xf32>
      %61 = vector.shape_cast %60 : vector<1x128x128xf32> to vector<128x128xf32>
      %cst_40 = arith.constant dense<0.000000e+00> : vector<20x128xf32>
      %62 = tpu.matmul %59, %61, %cst_40 {dimension_numbers = #tpu.dot_dimension_numbers<[1], [0], [0], [1], [0, 0, 1, 1], [], []>} : vector<20x128xf32>, vector<128x128xf32>, vector<20x128xf32> -> vector<20x128xf32>
      %63 = arith.addf %58, %62 : vector<20x128xf32>
      %64 = vector.extract_strided_slice %53 {offsets = [2, 0], sizes = [20, 128], strides = [1, 1]} : vector<22x128xf32> to vector<20x128xf32>
      %c5 = arith.constant 5 : index
      %c0_41 = arith.constant 0 : index
      %c0_42 = arith.constant 0 : index
      %65 = vector.load %arg2[%c5, %c0_41, %c0_42] : memref<9x128x128xf32, #tpu.memory_space<vmem>>, vector<1x128x128xf32>
      %66 = vector.shape_cast %65 : vector<1x128x128xf32> to vector<128x128xf32>
      %cst_43 = arith.constant dense<0.000000e+00> : vector<20x128xf32>
      %67 = tpu.matmul %64, %66, %cst_43 {dimension_numbers = #tpu.dot_dimension_numbers<[1], [0], [0], [1], [0, 0, 1, 1], [], []>} : vector<20x128xf32>, vector<128x128xf32>, vector<20x128xf32> -> vector<20x128xf32>
      %68 = arith.addf %63, %67 : vector<20x128xf32>
      %c2_i32 = arith.constant 2 : i32
      %69 = arith.addi %arg6, %c2_i32 : i32
      %c0_44 = arith.constant 0 : index
      %70 = arith.index_cast %69 : i32 to index
      %c0_45 = arith.constant 0 : index
      %c0_46 = arith.constant 0 : index
      %71 = vector.load %arg1[%c0_44, %70, %c0_45, %c0_46] : memref<1x12x22x128xf32, #tpu.memory_space<vmem>>, vector<1x1x22x128xf32>
      %72 = vector.shape_cast %71 : vector<1x1x22x128xf32> to vector<22x128xf32>
      %73 = vector.extract_strided_slice %72 {offsets = [0, 0], sizes = [20, 128], strides = [1, 1]} : vector<22x128xf32> to vector<20x128xf32>
      %c6 = arith.constant 6 : index
      %c0_47 = arith.constant 0 : index
      %c0_48 = arith.constant 0 : index
      %74 = vector.load %arg2[%c6, %c0_47, %c0_48] : memref<9x128x128xf32, #tpu.memory_space<vmem>>, vector<1x128x128xf32>
      %75 = vector.shape_cast %74 : vector<1x128x128xf32> to vector<128x128xf32>
      %cst_49 = arith.constant dense<0.000000e+00> : vector<20x128xf32>
      %76 = tpu.matmul %73, %75, %cst_49 {dimension_numbers = #tpu.dot_dimension_numbers<[1], [0], [0], [1], [0, 0, 1, 1], [], []>} : vector<20x128xf32>, vector<128x128xf32>, vector<20x128xf32> -> vector<20x128xf32>
      %77 = arith.addf %68, %76 : vector<20x128xf32>
      %78 = vector.extract_strided_slice %72 {offsets = [1, 0], sizes = [20, 128], strides = [1, 1]} : vector<22x128xf32> to vector<20x128xf32>
      %c7 = arith.constant 7 : index
      %c0_50 = arith.constant 0 : index
      %c0_51 = arith.constant 0 : index
      %79 = vector.load %arg2[%c7, %c0_50, %c0_51] : memref<9x128x128xf32, #tpu.memory_space<vmem>>, vector<1x128x128xf32>
      %80 = vector.shape_cast %79 : vector<1x128x128xf32> to vector<128x128xf32>
      %cst_52 = arith.constant dense<0.000000e+00> : vector<20x128xf32>
      %81 = tpu.matmul %78, %80, %cst_52 {dimension_numbers = #tpu.dot_dimension_numbers<[1], [0], [0], [1], [0, 0, 1, 1], [], []>} : vector<20x128xf32>, vector<128x128xf32>, vector<20x128xf32> -> vector<20x128xf32>
      %82 = arith.addf %77, %81 : vector<20x128xf32>
      %83 = vector.extract_strided_slice %72 {offsets = [2, 0], sizes = [20, 128], strides = [1, 1]} : vector<22x128xf32> to vector<20x128xf32>
      %c8 = arith.constant 8 : index
      %c0_53 = arith.constant 0 : index
      %c0_54 = arith.constant 0 : index
      %84 = vector.load %arg2[%c8, %c0_53, %c0_54] : memref<9x128x128xf32, #tpu.memory_space<vmem>>, vector<1x128x128xf32>
      %85 = vector.shape_cast %84 : vector<1x128x128xf32> to vector<128x128xf32>
      %cst_55 = arith.constant dense<0.000000e+00> : vector<20x128xf32>
      %86 = tpu.matmul %83, %85, %cst_55 {dimension_numbers = #tpu.dot_dimension_numbers<[1], [0], [0], [1], [0, 0, 1, 1], [], []>} : vector<20x128xf32>, vector<128x128xf32>, vector<20x128xf32> -> vector<20x128xf32>
      %87 = arith.addf %82, %86 : vector<20x128xf32>
      %88 = vector.broadcast %0 : vector<1x128xf32> to vector<20x128xf32>
      %89 = arith.addf %87, %88 : vector<20x128xf32>
      %90 = arith.index_cast %arg6 : i32 to index
      %c0_56 = arith.constant 0 : index
      %c0_57 = arith.constant 0 : index
      %91 = vector.load %arg5[%90, %c0_56, %c0_57] : memref<10x20x128xf32, #tpu.memory_space<vmem>>, vector<1x20x128xf32>
      %92 = vector.shape_cast %91 : vector<1x20x128xf32> to vector<20x128xf32>
      %93 = vector.shape_cast %89 : vector<20x128xf32> to vector<1x20x128xf32>
      tpu.vector_store %arg5[%90, %c0_56, %c0_57], %93 {strides = array<i32>} : memref<10x20x128xf32, #tpu.memory_space<vmem>>, vector<1x20x128xf32>,
    }
    %c10_i32_1 = arith.constant 10 : i32
    %c0_2 = arith.constant 0 : index
    %c0_3 = arith.constant 0 : index
    %c0_4 = arith.constant 0 : index
    %2 = vector.load %arg5[%c0_2, %c0_3, %c0_4] : memref<10x20x128xf32, #tpu.memory_space<vmem>>, vector<10x20x128xf32>
    %cst = arith.constant dense<0.000000e+00> : vector<10x128xf32>
    %3 = vector.multi_reduction <add>, %2, %cst [1] : vector<10x20x128xf32> to vector<10x128xf32>
    %4 = vector.shape_cast %3 : vector<10x128xf32> to vector<10x1x128xf32>
    %cst_5 = arith.constant dense<0.000000e+00> : vector<1x128xf32>
    %5 = vector.multi_reduction <add>, %4, %cst_5 [0] : vector<10x1x128xf32> to vector<1x128xf32>
    %6 = vector.shape_cast %5 : vector<1x128xf32> to vector<1x1x128xf32>
    %7 = arith.mulf %2, %2 : vector<10x20x128xf32>
    %cst_6 = arith.constant dense<0.000000e+00> : vector<10x128xf32>
    %8 = vector.multi_reduction <add>, %7, %cst_6 [1] : vector<10x20x128xf32> to vector<10x128xf32>
    %9 = vector.shape_cast %8 : vector<10x128xf32> to vector<10x1x128xf32>
    %cst_7 = arith.constant dense<0.000000e+00> : vector<1x128xf32>
    %10 = vector.multi_reduction <add>, %9, %cst_7 [0] : vector<10x1x128xf32> to vector<1x128xf32>
    %11 = vector.shape_cast %10 : vector<1x128xf32> to vector<1x1x128xf32>
    %cst_8 = arith.constant 2.000000e+02 : f32
    %12 = vector.broadcast %cst_8 : f32 to vector<1x1x128xf32>
    %13 = arith.divf %6, %12 : vector<1x1x128xf32>
    %cst_9 = arith.constant 2.000000e+02 : f32
    %14 = vector.broadcast %cst_9 : f32 to vector<1x1x128xf32>
    %15 = arith.divf %11, %14 : vector<1x1x128xf32>
    %16 = arith.mulf %13, %13 : vector<1x1x128xf32>
    %17 = arith.subf %15, %16 : vector<1x1x128xf32>
    %cst_10 = arith.constant 9.99999974E-6 : f32
    %18 = vector.broadcast %cst_10 : f32 to vector<1x1x128xf32>
    %19 = arith.addf %17, %18 : vector<1x1x128xf32>
    %20 = math.rsqrt %19 : vector<1x1x128xf32>
    %21 = vector.broadcast %13 : vector<1x1x128xf32> to vector<10x20x128xf32>
    %22 = arith.subf %2, %21 : vector<10x20x128xf32>
    %23 = vector.broadcast %20 : vector<1x1x128xf32> to vector<10x20x128xf32>
    %24 = arith.mulf %22, %23 : vector<10x20x128xf32>
    %cst_11 = arith.constant 0.000000e+00 : f32
    %25 = vector.broadcast %cst_11 : f32 to vector<10x20x128xf32>
    %26 = arith.maximumf %24, %25 : vector<10x20x128xf32>
    %c0_12 = arith.constant 0 : index
    %c0_13 = arith.constant 0 : index
    %c0_14 = arith.constant 0 : index
    %c0_15 = arith.constant 0 : index
    %27 = vector.load %arg4[%c0_12, %c0_13, %c0_14, %c0_15] : memref<1x10x20x128xf32, #tpu.memory_space<vmem>>, vector<1x10x20x128xf32>
    %28 = vector.shape_cast %27 : vector<1x10x20x128xf32> to vector<10x20x128xf32>
    %29 = vector.shape_cast %26 : vector<10x20x128xf32> to vector<1x10x20x128xf32>
    tpu.vector_store %arg4[%c0_12, %c0_13, %c0_14, %c0_15], %29 {strides = array<i32>} : memref<1x10x20x128xf32, #tpu.memory_space<vmem>>, vector<1x10x20x128xf32>,
    return
  }
  func.func @transform_0(%arg0: i32) -> (i32, i32, i32, i32) {
    %c0_i32 = arith.constant 0 : i32
    %c0_i32_0 = arith.constant 0 : i32
    %c0_i32_1 = arith.constant 0 : i32
    %c0_i32_2 = arith.constant 0 : i32
    return %arg0, %c0_i32, %c0_i32_0, %c0_i32_1 : i32, i32, i32, i32
  }
  func.func @transform_1(%arg0: i32) -> (i32, i32, i32) {
    %c0_i32 = arith.constant 0 : i32
    %c0_i32_0 = arith.constant 0 : i32
    %c0_i32_1 = arith.constant 0 : i32
    %c0_i32_2 = arith.constant 0 : i32
    return %c0_i32, %c0_i32_0, %c0_i32_1 : i32, i32, i32
  }
  func.func @transform_2(%arg0: i32) -> (i32, i32) {
    %c0_i32 = arith.constant 0 : i32
    %c0_i32_0 = arith.constant 0 : i32
    %c0_i32_1 = arith.constant 0 : i32
    return %c0_i32, %c0_i32_0 : i32, i32
  }
  func.func @transform_3(%arg0: i32) -> (i32, i32, i32, i32) {
    %c0_i32 = arith.constant 0 : i32
    %c0_i32_0 = arith.constant 0 : i32
    %c0_i32_1 = arith.constant 0 : i32
    %c0_i32_2 = arith.constant 0 : i32
    return %arg0, %c0_i32, %c0_i32_0, %c0_i32_1 : i32, i32, i32, i32
  }
}

module attributes {stable_mosaic.version = 11 : i64} {
  func.func @kernel(%arg0: i32, %arg1: memref<1x24x42x128xf32, #tpu.memory_space<vmem>>, %arg2: memref<9x128x128xf32, #tpu.memory_space<vmem>>, %arg3: memref<1x128xf32, #tpu.memory_space<vmem>>, %arg4: memref<1x22x40x128xf32, #tpu.memory_space<vmem>>, %arg5: memref<22x40x128xf32, #tpu.memory_space<vmem>>) attributes {dimension_semantics = [#tpu.dimension_semantics<parallel>], iteration_bounds = array<i64: 2>, scalar_prefetch = 0 : i64, scratch_operands = 1 : i64, tpu.core_type = #tpu.core_type<tc>, window_params = [{transform_indices = @transform_0, window_bounds = array<i64: 1, 24, 42, 128>}, {pipeline_mode = #tpu.pipeline_mode<synchronous>, transform_indices = @transform_1, window_bounds = array<i64: 9, 128, 128>}, {pipeline_mode = #tpu.pipeline_mode<synchronous>, transform_indices = @transform_2, window_bounds = array<i64: 1, 128>}, {transform_indices = @transform_3, window_bounds = array<i64: 1, 22, 40, 128>}]} {
    %c0 = arith.constant 0 : index
    %c0_0 = arith.constant 0 : index
    %0 = vector.load %arg3[%c0, %c0_0] : memref<1x128xf32, #tpu.memory_space<vmem>>, vector<1x128xf32>
    %c0_i32 = arith.constant 0 : i32
    %c22_i32 = arith.constant 22 : i32
    %1 = arith.addi %c0_i32, %c22_i32 : i32
    %c1_i32 = arith.constant 1 : i32
    scf.for %arg6 = %c0_i32 to %1 step %c1_i32  : i32 {
      %cst_16 = arith.constant 0.000000e+00 : f32
      %30 = vector.broadcast %cst_16 : f32 to vector<40x128xf32>
      %c0_i32_17 = arith.constant 0 : i32
      %31 = arith.addi %arg6, %c0_i32_17 : i32
      %c0_18 = arith.constant 0 : index
      %32 = arith.index_cast %31 : i32 to index
      %c0_19 = arith.constant 0 : index
      %c0_20 = arith.constant 0 : index
      %33 = vector.load %arg1[%c0_18, %32, %c0_19, %c0_20] : memref<1x24x42x128xf32, #tpu.memory_space<vmem>>, vector<1x1x42x128xf32>
      %34 = vector.shape_cast %33 : vector<1x1x42x128xf32> to vector<42x128xf32>
      %35 = vector.extract_strided_slice %34 {offsets = [0, 0], sizes = [40, 128], strides = [1, 1]} : vector<42x128xf32> to vector<40x128xf32>
      %c0_21 = arith.constant 0 : index
      %c0_22 = arith.constant 0 : index
      %c0_23 = arith.constant 0 : index
      %36 = vector.load %arg2[%c0_21, %c0_22, %c0_23] : memref<9x128x128xf32, #tpu.memory_space<vmem>>, vector<1x128x128xf32>
      %37 = vector.shape_cast %36 : vector<1x128x128xf32> to vector<128x128xf32>
      %cst_24 = arith.constant dense<0.000000e+00> : vector<40x128xf32>
      %38 = tpu.matmul %35, %37, %cst_24 {dimension_numbers = #tpu.dot_dimension_numbers<[1], [0], [0], [1], [0, 0, 1, 1], [], []>} : vector<40x128xf32>, vector<128x128xf32>, vector<40x128xf32> -> vector<40x128xf32>
      %39 = arith.addf %30, %38 : vector<40x128xf32>
      %40 = vector.extract_strided_slice %34 {offsets = [1, 0], sizes = [40, 128], strides = [1, 1]} : vector<42x128xf32> to vector<40x128xf32>
      %c1 = arith.constant 1 : index
      %c0_25 = arith.constant 0 : index
      %c0_26 = arith.constant 0 : index
      %41 = vector.load %arg2[%c1, %c0_25, %c0_26] : memref<9x128x128xf32, #tpu.memory_space<vmem>>, vector<1x128x128xf32>
      %42 = vector.shape_cast %41 : vector<1x128x128xf32> to vector<128x128xf32>
      %cst_27 = arith.constant dense<0.000000e+00> : vector<40x128xf32>
      %43 = tpu.matmul %40, %42, %cst_27 {dimension_numbers = #tpu.dot_dimension_numbers<[1], [0], [0], [1], [0, 0, 1, 1], [], []>} : vector<40x128xf32>, vector<128x128xf32>, vector<40x128xf32> -> vector<40x128xf32>
      %44 = arith.addf %39, %43 : vector<40x128xf32>
      %45 = vector.extract_strided_slice %34 {offsets = [2, 0], sizes = [40, 128], strides = [1, 1]} : vector<42x128xf32> to vector<40x128xf32>
      %c2 = arith.constant 2 : index
      %c0_28 = arith.constant 0 : index
      %c0_29 = arith.constant 0 : index
      %46 = vector.load %arg2[%c2, %c0_28, %c0_29] : memref<9x128x128xf32, #tpu.memory_space<vmem>>, vector<1x128x128xf32>
      %47 = vector.shape_cast %46 : vector<1x128x128xf32> to vector<128x128xf32>
      %cst_30 = arith.constant dense<0.000000e+00> : vector<40x128xf32>
      %48 = tpu.matmul %45, %47, %cst_30 {dimension_numbers = #tpu.dot_dimension_numbers<[1], [0], [0], [1], [0, 0, 1, 1], [], []>} : vector<40x128xf32>, vector<128x128xf32>, vector<40x128xf32> -> vector<40x128xf32>
      %49 = arith.addf %44, %48 : vector<40x128xf32>
      %c1_i32_31 = arith.constant 1 : i32
      %50 = arith.addi %arg6, %c1_i32_31 : i32
      %c0_32 = arith.constant 0 : index
      %51 = arith.index_cast %50 : i32 to index
      %c0_33 = arith.constant 0 : index
      %c0_34 = arith.constant 0 : index
      %52 = vector.load %arg1[%c0_32, %51, %c0_33, %c0_34] : memref<1x24x42x128xf32, #tpu.memory_space<vmem>>, vector<1x1x42x128xf32>
      %53 = vector.shape_cast %52 : vector<1x1x42x128xf32> to vector<42x128xf32>
      %54 = vector.extract_strided_slice %53 {offsets = [0, 0], sizes = [40, 128], strides = [1, 1]} : vector<42x128xf32> to vector<40x128xf32>
      %c3 = arith.constant 3 : index
      %c0_35 = arith.constant 0 : index
      %c0_36 = arith.constant 0 : index
      %55 = vector.load %arg2[%c3, %c0_35, %c0_36] : memref<9x128x128xf32, #tpu.memory_space<vmem>>, vector<1x128x128xf32>
      %56 = vector.shape_cast %55 : vector<1x128x128xf32> to vector<128x128xf32>
      %cst_37 = arith.constant dense<0.000000e+00> : vector<40x128xf32>
      %57 = tpu.matmul %54, %56, %cst_37 {dimension_numbers = #tpu.dot_dimension_numbers<[1], [0], [0], [1], [0, 0, 1, 1], [], []>} : vector<40x128xf32>, vector<128x128xf32>, vector<40x128xf32> -> vector<40x128xf32>
      %58 = arith.addf %49, %57 : vector<40x128xf32>
      %59 = vector.extract_strided_slice %53 {offsets = [1, 0], sizes = [40, 128], strides = [1, 1]} : vector<42x128xf32> to vector<40x128xf32>
      %c4 = arith.constant 4 : index
      %c0_38 = arith.constant 0 : index
      %c0_39 = arith.constant 0 : index
      %60 = vector.load %arg2[%c4, %c0_38, %c0_39] : memref<9x128x128xf32, #tpu.memory_space<vmem>>, vector<1x128x128xf32>
      %61 = vector.shape_cast %60 : vector<1x128x128xf32> to vector<128x128xf32>
      %cst_40 = arith.constant dense<0.000000e+00> : vector<40x128xf32>
      %62 = tpu.matmul %59, %61, %cst_40 {dimension_numbers = #tpu.dot_dimension_numbers<[1], [0], [0], [1], [0, 0, 1, 1], [], []>} : vector<40x128xf32>, vector<128x128xf32>, vector<40x128xf32> -> vector<40x128xf32>
      %63 = arith.addf %58, %62 : vector<40x128xf32>
      %64 = vector.extract_strided_slice %53 {offsets = [2, 0], sizes = [40, 128], strides = [1, 1]} : vector<42x128xf32> to vector<40x128xf32>
      %c5 = arith.constant 5 : index
      %c0_41 = arith.constant 0 : index
      %c0_42 = arith.constant 0 : index
      %65 = vector.load %arg2[%c5, %c0_41, %c0_42] : memref<9x128x128xf32, #tpu.memory_space<vmem>>, vector<1x128x128xf32>
      %66 = vector.shape_cast %65 : vector<1x128x128xf32> to vector<128x128xf32>
      %cst_43 = arith.constant dense<0.000000e+00> : vector<40x128xf32>
      %67 = tpu.matmul %64, %66, %cst_43 {dimension_numbers = #tpu.dot_dimension_numbers<[1], [0], [0], [1], [0, 0, 1, 1], [], []>} : vector<40x128xf32>, vector<128x128xf32>, vector<40x128xf32> -> vector<40x128xf32>
      %68 = arith.addf %63, %67 : vector<40x128xf32>
      %c2_i32 = arith.constant 2 : i32
      %69 = arith.addi %arg6, %c2_i32 : i32
      %c0_44 = arith.constant 0 : index
      %70 = arith.index_cast %69 : i32 to index
      %c0_45 = arith.constant 0 : index
      %c0_46 = arith.constant 0 : index
      %71 = vector.load %arg1[%c0_44, %70, %c0_45, %c0_46] : memref<1x24x42x128xf32, #tpu.memory_space<vmem>>, vector<1x1x42x128xf32>
      %72 = vector.shape_cast %71 : vector<1x1x42x128xf32> to vector<42x128xf32>
      %73 = vector.extract_strided_slice %72 {offsets = [0, 0], sizes = [40, 128], strides = [1, 1]} : vector<42x128xf32> to vector<40x128xf32>
      %c6 = arith.constant 6 : index
      %c0_47 = arith.constant 0 : index
      %c0_48 = arith.constant 0 : index
      %74 = vector.load %arg2[%c6, %c0_47, %c0_48] : memref<9x128x128xf32, #tpu.memory_space<vmem>>, vector<1x128x128xf32>
      %75 = vector.shape_cast %74 : vector<1x128x128xf32> to vector<128x128xf32>
      %cst_49 = arith.constant dense<0.000000e+00> : vector<40x128xf32>
      %76 = tpu.matmul %73, %75, %cst_49 {dimension_numbers = #tpu.dot_dimension_numbers<[1], [0], [0], [1], [0, 0, 1, 1], [], []>} : vector<40x128xf32>, vector<128x128xf32>, vector<40x128xf32> -> vector<40x128xf32>
      %77 = arith.addf %68, %76 : vector<40x128xf32>
      %78 = vector.extract_strided_slice %72 {offsets = [1, 0], sizes = [40, 128], strides = [1, 1]} : vector<42x128xf32> to vector<40x128xf32>
      %c7 = arith.constant 7 : index
      %c0_50 = arith.constant 0 : index
      %c0_51 = arith.constant 0 : index
      %79 = vector.load %arg2[%c7, %c0_50, %c0_51] : memref<9x128x128xf32, #tpu.memory_space<vmem>>, vector<1x128x128xf32>
      %80 = vector.shape_cast %79 : vector<1x128x128xf32> to vector<128x128xf32>
      %cst_52 = arith.constant dense<0.000000e+00> : vector<40x128xf32>
      %81 = tpu.matmul %78, %80, %cst_52 {dimension_numbers = #tpu.dot_dimension_numbers<[1], [0], [0], [1], [0, 0, 1, 1], [], []>} : vector<40x128xf32>, vector<128x128xf32>, vector<40x128xf32> -> vector<40x128xf32>
      %82 = arith.addf %77, %81 : vector<40x128xf32>
      %83 = vector.extract_strided_slice %72 {offsets = [2, 0], sizes = [40, 128], strides = [1, 1]} : vector<42x128xf32> to vector<40x128xf32>
      %c8 = arith.constant 8 : index
      %c0_53 = arith.constant 0 : index
      %c0_54 = arith.constant 0 : index
      %84 = vector.load %arg2[%c8, %c0_53, %c0_54] : memref<9x128x128xf32, #tpu.memory_space<vmem>>, vector<1x128x128xf32>
      %85 = vector.shape_cast %84 : vector<1x128x128xf32> to vector<128x128xf32>
      %cst_55 = arith.constant dense<0.000000e+00> : vector<40x128xf32>
      %86 = tpu.matmul %83, %85, %cst_55 {dimension_numbers = #tpu.dot_dimension_numbers<[1], [0], [0], [1], [0, 0, 1, 1], [], []>} : vector<40x128xf32>, vector<128x128xf32>, vector<40x128xf32> -> vector<40x128xf32>
      %87 = arith.addf %82, %86 : vector<40x128xf32>
      %88 = vector.broadcast %0 : vector<1x128xf32> to vector<40x128xf32>
      %89 = arith.addf %87, %88 : vector<40x128xf32>
      %90 = arith.index_cast %arg6 : i32 to index
      %c0_56 = arith.constant 0 : index
      %c0_57 = arith.constant 0 : index
      %91 = vector.load %arg5[%90, %c0_56, %c0_57] : memref<22x40x128xf32, #tpu.memory_space<vmem>>, vector<1x40x128xf32>
      %92 = vector.shape_cast %91 : vector<1x40x128xf32> to vector<40x128xf32>
      %93 = vector.shape_cast %89 : vector<40x128xf32> to vector<1x40x128xf32>
      tpu.vector_store %arg5[%90, %c0_56, %c0_57], %93 {strides = array<i32>} : memref<22x40x128xf32, #tpu.memory_space<vmem>>, vector<1x40x128xf32>,
    }
    %c22_i32_1 = arith.constant 22 : i32
    %c0_2 = arith.constant 0 : index
    %c0_3 = arith.constant 0 : index
    %c0_4 = arith.constant 0 : index
    %2 = vector.load %arg5[%c0_2, %c0_3, %c0_4] : memref<22x40x128xf32, #tpu.memory_space<vmem>>, vector<22x40x128xf32>
    %cst = arith.constant dense<0.000000e+00> : vector<22x128xf32>
    %3 = vector.multi_reduction <add>, %2, %cst [1] : vector<22x40x128xf32> to vector<22x128xf32>
    %4 = vector.shape_cast %3 : vector<22x128xf32> to vector<22x1x128xf32>
    %cst_5 = arith.constant dense<0.000000e+00> : vector<1x128xf32>
    %5 = vector.multi_reduction <add>, %4, %cst_5 [0] : vector<22x1x128xf32> to vector<1x128xf32>
    %6 = vector.shape_cast %5 : vector<1x128xf32> to vector<1x1x128xf32>
    %7 = arith.mulf %2, %2 : vector<22x40x128xf32>
    %cst_6 = arith.constant dense<0.000000e+00> : vector<22x128xf32>
    %8 = vector.multi_reduction <add>, %7, %cst_6 [1] : vector<22x40x128xf32> to vector<22x128xf32>
    %9 = vector.shape_cast %8 : vector<22x128xf32> to vector<22x1x128xf32>
    %cst_7 = arith.constant dense<0.000000e+00> : vector<1x128xf32>
    %10 = vector.multi_reduction <add>, %9, %cst_7 [0] : vector<22x1x128xf32> to vector<1x128xf32>
    %11 = vector.shape_cast %10 : vector<1x128xf32> to vector<1x1x128xf32>
    %cst_8 = arith.constant 8.800000e+02 : f32
    %12 = vector.broadcast %cst_8 : f32 to vector<1x1x128xf32>
    %13 = arith.divf %6, %12 : vector<1x1x128xf32>
    %cst_9 = arith.constant 8.800000e+02 : f32
    %14 = vector.broadcast %cst_9 : f32 to vector<1x1x128xf32>
    %15 = arith.divf %11, %14 : vector<1x1x128xf32>
    %16 = arith.mulf %13, %13 : vector<1x1x128xf32>
    %17 = arith.subf %15, %16 : vector<1x1x128xf32>
    %cst_10 = arith.constant 9.99999974E-6 : f32
    %18 = vector.broadcast %cst_10 : f32 to vector<1x1x128xf32>
    %19 = arith.addf %17, %18 : vector<1x1x128xf32>
    %20 = math.rsqrt %19 : vector<1x1x128xf32>
    %21 = vector.broadcast %13 : vector<1x1x128xf32> to vector<22x40x128xf32>
    %22 = arith.subf %2, %21 : vector<22x40x128xf32>
    %23 = vector.broadcast %20 : vector<1x1x128xf32> to vector<22x40x128xf32>
    %24 = arith.mulf %22, %23 : vector<22x40x128xf32>
    %cst_11 = arith.constant 0.000000e+00 : f32
    %25 = vector.broadcast %cst_11 : f32 to vector<22x40x128xf32>
    %26 = arith.maximumf %24, %25 : vector<22x40x128xf32>
    %c0_12 = arith.constant 0 : index
    %c0_13 = arith.constant 0 : index
    %c0_14 = arith.constant 0 : index
    %c0_15 = arith.constant 0 : index
    %27 = vector.load %arg4[%c0_12, %c0_13, %c0_14, %c0_15] : memref<1x22x40x128xf32, #tpu.memory_space<vmem>>, vector<1x22x40x128xf32>
    %28 = vector.shape_cast %27 : vector<1x22x40x128xf32> to vector<22x40x128xf32>
    %29 = vector.shape_cast %26 : vector<22x40x128xf32> to vector<1x22x40x128xf32>
    tpu.vector_store %arg4[%c0_12, %c0_13, %c0_14, %c0_15], %29 {strides = array<i32>} : memref<1x22x40x128xf32, #tpu.memory_space<vmem>>, vector<1x22x40x128xf32>,
    return
  }
  func.func @transform_0(%arg0: i32) -> (i32, i32, i32, i32) {
    %c0_i32 = arith.constant 0 : i32
    %c0_i32_0 = arith.constant 0 : i32
    %c0_i32_1 = arith.constant 0 : i32
    %c0_i32_2 = arith.constant 0 : i32
    return %arg0, %c0_i32, %c0_i32_0, %c0_i32_1 : i32, i32, i32, i32
  }
  func.func @transform_1(%arg0: i32) -> (i32, i32, i32) {
    %c0_i32 = arith.constant 0 : i32
    %c0_i32_0 = arith.constant 0 : i32
    %c0_i32_1 = arith.constant 0 : i32
    %c0_i32_2 = arith.constant 0 : i32
    return %c0_i32, %c0_i32_0, %c0_i32_1 : i32, i32, i32
  }
  func.func @transform_2(%arg0: i32) -> (i32, i32) {
    %c0_i32 = arith.constant 0 : i32
    %c0_i32_0 = arith.constant 0 : i32
    %c0_i32_1 = arith.constant 0 : i32
    return %c0_i32, %c0_i32_0 : i32, i32
  }
  func.func @transform_3(%arg0: i32) -> (i32, i32, i32, i32) {
    %c0_i32 = arith.constant 0 : i32
    %c0_i32_0 = arith.constant 0 : i32
    %c0_i32_1 = arith.constant 0 : i32
    %c0_i32_2 = arith.constant 0 : i32
    return %arg0, %c0_i32, %c0_i32_0, %c0_i32_1 : i32, i32, i32, i32
  }
}

module attributes {stable_mosaic.version = 11 : i64} {
  func.func @kernel(%arg0: i32, %arg1: memref<1x47x82x128xf32, #tpu.memory_space<vmem>>, %arg2: memref<9x128x3xf32, #tpu.memory_space<vmem>>, %arg3: memref<1x3xf32, #tpu.memory_space<vmem>>, %arg4: memref<1x45x80x3xf32, #tpu.memory_space<vmem>>) attributes {dimension_semantics = [#tpu.dimension_semantics<parallel>], iteration_bounds = array<i64: 2>, scalar_prefetch = 0 : i64, scratch_operands = 0 : i64, tpu.core_type = #tpu.core_type<tc>, window_params = [{transform_indices = @transform_0, window_bounds = array<i64: 1, 47, 82, 128>}, {pipeline_mode = #tpu.pipeline_mode<synchronous>, transform_indices = @transform_1, window_bounds = array<i64: 9, 128, 3>}, {pipeline_mode = #tpu.pipeline_mode<synchronous>, transform_indices = @transform_2, window_bounds = array<i64: 1, 3>}, {transform_indices = @transform_3, window_bounds = array<i64: 1, 45, 80, 3>}]} {
    %c0 = arith.constant 0 : index
    %c0_0 = arith.constant 0 : index
    %0 = vector.load %arg3[%c0, %c0_0] : memref<1x3xf32, #tpu.memory_space<vmem>>, vector<1x3xf32>
    %c0_i32 = arith.constant 0 : i32
    %c45_i32 = arith.constant 45 : i32
    %1 = arith.addi %c0_i32, %c45_i32 : i32
    %c1_i32 = arith.constant 1 : i32
    scf.for %arg5 = %c0_i32 to %1 step %c1_i32  : i32 {
      %cst = arith.constant 0.000000e+00 : f32
      %2 = vector.broadcast %cst : f32 to vector<80x3xf32>
      %c0_i32_2 = arith.constant 0 : i32
      %3 = arith.addi %arg5, %c0_i32_2 : i32
      %c0_3 = arith.constant 0 : index
      %4 = arith.index_cast %3 : i32 to index
      %c0_4 = arith.constant 0 : index
      %c0_5 = arith.constant 0 : index
      %5 = vector.load %arg1[%c0_3, %4, %c0_4, %c0_5] : memref<1x47x82x128xf32, #tpu.memory_space<vmem>>, vector<1x1x82x128xf32>
      %6 = vector.shape_cast %5 : vector<1x1x82x128xf32> to vector<82x128xf32>
      %7 = vector.extract_strided_slice %6 {offsets = [0, 0], sizes = [80, 128], strides = [1, 1]} : vector<82x128xf32> to vector<80x128xf32>
      %c0_6 = arith.constant 0 : index
      %c0_7 = arith.constant 0 : index
      %c0_8 = arith.constant 0 : index
      %8 = vector.load %arg2[%c0_6, %c0_7, %c0_8] : memref<9x128x3xf32, #tpu.memory_space<vmem>>, vector<1x128x3xf32>
      %9 = vector.shape_cast %8 : vector<1x128x3xf32> to vector<128x3xf32>
      %cst_9 = arith.constant dense<0.000000e+00> : vector<80x3xf32>
      %10 = tpu.matmul %7, %9, %cst_9 {dimension_numbers = #tpu.dot_dimension_numbers<[1], [0], [0], [1], [0, 0, 1, 1], [], []>} : vector<80x128xf32>, vector<128x3xf32>, vector<80x3xf32> -> vector<80x3xf32>
      %11 = arith.addf %2, %10 : vector<80x3xf32>
      %12 = vector.extract_strided_slice %6 {offsets = [1, 0], sizes = [80, 128], strides = [1, 1]} : vector<82x128xf32> to vector<80x128xf32>
      %c1 = arith.constant 1 : index
      %c0_10 = arith.constant 0 : index
      %c0_11 = arith.constant 0 : index
      %13 = vector.load %arg2[%c1, %c0_10, %c0_11] : memref<9x128x3xf32, #tpu.memory_space<vmem>>, vector<1x128x3xf32>
      %14 = vector.shape_cast %13 : vector<1x128x3xf32> to vector<128x3xf32>
      %cst_12 = arith.constant dense<0.000000e+00> : vector<80x3xf32>
      %15 = tpu.matmul %12, %14, %cst_12 {dimension_numbers = #tpu.dot_dimension_numbers<[1], [0], [0], [1], [0, 0, 1, 1], [], []>} : vector<80x128xf32>, vector<128x3xf32>, vector<80x3xf32> -> vector<80x3xf32>
      %16 = arith.addf %11, %15 : vector<80x3xf32>
      %17 = vector.extract_strided_slice %6 {offsets = [2, 0], sizes = [80, 128], strides = [1, 1]} : vector<82x128xf32> to vector<80x128xf32>
      %c2 = arith.constant 2 : index
      %c0_13 = arith.constant 0 : index
      %c0_14 = arith.constant 0 : index
      %18 = vector.load %arg2[%c2, %c0_13, %c0_14] : memref<9x128x3xf32, #tpu.memory_space<vmem>>, vector<1x128x3xf32>
      %19 = vector.shape_cast %18 : vector<1x128x3xf32> to vector<128x3xf32>
      %cst_15 = arith.constant dense<0.000000e+00> : vector<80x3xf32>
      %20 = tpu.matmul %17, %19, %cst_15 {dimension_numbers = #tpu.dot_dimension_numbers<[1], [0], [0], [1], [0, 0, 1, 1], [], []>} : vector<80x128xf32>, vector<128x3xf32>, vector<80x3xf32> -> vector<80x3xf32>
      %21 = arith.addf %16, %20 : vector<80x3xf32>
      %c1_i32_16 = arith.constant 1 : i32
      %22 = arith.addi %arg5, %c1_i32_16 : i32
      %c0_17 = arith.constant 0 : index
      %23 = arith.index_cast %22 : i32 to index
      %c0_18 = arith.constant 0 : index
      %c0_19 = arith.constant 0 : index
      %24 = vector.load %arg1[%c0_17, %23, %c0_18, %c0_19] : memref<1x47x82x128xf32, #tpu.memory_space<vmem>>, vector<1x1x82x128xf32>
      %25 = vector.shape_cast %24 : vector<1x1x82x128xf32> to vector<82x128xf32>
      %26 = vector.extract_strided_slice %25 {offsets = [0, 0], sizes = [80, 128], strides = [1, 1]} : vector<82x128xf32> to vector<80x128xf32>
      %c3 = arith.constant 3 : index
      %c0_20 = arith.constant 0 : index
      %c0_21 = arith.constant 0 : index
      %27 = vector.load %arg2[%c3, %c0_20, %c0_21] : memref<9x128x3xf32, #tpu.memory_space<vmem>>, vector<1x128x3xf32>
      %28 = vector.shape_cast %27 : vector<1x128x3xf32> to vector<128x3xf32>
      %cst_22 = arith.constant dense<0.000000e+00> : vector<80x3xf32>
      %29 = tpu.matmul %26, %28, %cst_22 {dimension_numbers = #tpu.dot_dimension_numbers<[1], [0], [0], [1], [0, 0, 1, 1], [], []>} : vector<80x128xf32>, vector<128x3xf32>, vector<80x3xf32> -> vector<80x3xf32>
      %30 = arith.addf %21, %29 : vector<80x3xf32>
      %31 = vector.extract_strided_slice %25 {offsets = [1, 0], sizes = [80, 128], strides = [1, 1]} : vector<82x128xf32> to vector<80x128xf32>
      %c4 = arith.constant 4 : index
      %c0_23 = arith.constant 0 : index
      %c0_24 = arith.constant 0 : index
      %32 = vector.load %arg2[%c4, %c0_23, %c0_24] : memref<9x128x3xf32, #tpu.memory_space<vmem>>, vector<1x128x3xf32>
      %33 = vector.shape_cast %32 : vector<1x128x3xf32> to vector<128x3xf32>
      %cst_25 = arith.constant dense<0.000000e+00> : vector<80x3xf32>
      %34 = tpu.matmul %31, %33, %cst_25 {dimension_numbers = #tpu.dot_dimension_numbers<[1], [0], [0], [1], [0, 0, 1, 1], [], []>} : vector<80x128xf32>, vector<128x3xf32>, vector<80x3xf32> -> vector<80x3xf32>
      %35 = arith.addf %30, %34 : vector<80x3xf32>
      %36 = vector.extract_strided_slice %25 {offsets = [2, 0], sizes = [80, 128], strides = [1, 1]} : vector<82x128xf32> to vector<80x128xf32>
      %c5 = arith.constant 5 : index
      %c0_26 = arith.constant 0 : index
      %c0_27 = arith.constant 0 : index
      %37 = vector.load %arg2[%c5, %c0_26, %c0_27] : memref<9x128x3xf32, #tpu.memory_space<vmem>>, vector<1x128x3xf32>
      %38 = vector.shape_cast %37 : vector<1x128x3xf32> to vector<128x3xf32>
      %cst_28 = arith.constant dense<0.000000e+00> : vector<80x3xf32>
      %39 = tpu.matmul %36, %38, %cst_28 {dimension_numbers = #tpu.dot_dimension_numbers<[1], [0], [0], [1], [0, 0, 1, 1], [], []>} : vector<80x128xf32>, vector<128x3xf32>, vector<80x3xf32> -> vector<80x3xf32>
      %40 = arith.addf %35, %39 : vector<80x3xf32>
      %c2_i32 = arith.constant 2 : i32
      %41 = arith.addi %arg5, %c2_i32 : i32
      %c0_29 = arith.constant 0 : index
      %42 = arith.index_cast %41 : i32 to index
      %c0_30 = arith.constant 0 : index
      %c0_31 = arith.constant 0 : index
      %43 = vector.load %arg1[%c0_29, %42, %c0_30, %c0_31] : memref<1x47x82x128xf32, #tpu.memory_space<vmem>>, vector<1x1x82x128xf32>
      %44 = vector.shape_cast %43 : vector<1x1x82x128xf32> to vector<82x128xf32>
      %45 = vector.extract_strided_slice %44 {offsets = [0, 0], sizes = [80, 128], strides = [1, 1]} : vector<82x128xf32> to vector<80x128xf32>
      %c6 = arith.constant 6 : index
      %c0_32 = arith.constant 0 : index
      %c0_33 = arith.constant 0 : index
      %46 = vector.load %arg2[%c6, %c0_32, %c0_33] : memref<9x128x3xf32, #tpu.memory_space<vmem>>, vector<1x128x3xf32>
      %47 = vector.shape_cast %46 : vector<1x128x3xf32> to vector<128x3xf32>
      %cst_34 = arith.constant dense<0.000000e+00> : vector<80x3xf32>
      %48 = tpu.matmul %45, %47, %cst_34 {dimension_numbers = #tpu.dot_dimension_numbers<[1], [0], [0], [1], [0, 0, 1, 1], [], []>} : vector<80x128xf32>, vector<128x3xf32>, vector<80x3xf32> -> vector<80x3xf32>
      %49 = arith.addf %40, %48 : vector<80x3xf32>
      %50 = vector.extract_strided_slice %44 {offsets = [1, 0], sizes = [80, 128], strides = [1, 1]} : vector<82x128xf32> to vector<80x128xf32>
      %c7 = arith.constant 7 : index
      %c0_35 = arith.constant 0 : index
      %c0_36 = arith.constant 0 : index
      %51 = vector.load %arg2[%c7, %c0_35, %c0_36] : memref<9x128x3xf32, #tpu.memory_space<vmem>>, vector<1x128x3xf32>
      %52 = vector.shape_cast %51 : vector<1x128x3xf32> to vector<128x3xf32>
      %cst_37 = arith.constant dense<0.000000e+00> : vector<80x3xf32>
      %53 = tpu.matmul %50, %52, %cst_37 {dimension_numbers = #tpu.dot_dimension_numbers<[1], [0], [0], [1], [0, 0, 1, 1], [], []>} : vector<80x128xf32>, vector<128x3xf32>, vector<80x3xf32> -> vector<80x3xf32>
      %54 = arith.addf %49, %53 : vector<80x3xf32>
      %55 = vector.extract_strided_slice %44 {offsets = [2, 0], sizes = [80, 128], strides = [1, 1]} : vector<82x128xf32> to vector<80x128xf32>
      %c8 = arith.constant 8 : index
      %c0_38 = arith.constant 0 : index
      %c0_39 = arith.constant 0 : index
      %56 = vector.load %arg2[%c8, %c0_38, %c0_39] : memref<9x128x3xf32, #tpu.memory_space<vmem>>, vector<1x128x3xf32>
      %57 = vector.shape_cast %56 : vector<1x128x3xf32> to vector<128x3xf32>
      %cst_40 = arith.constant dense<0.000000e+00> : vector<80x3xf32>
      %58 = tpu.matmul %55, %57, %cst_40 {dimension_numbers = #tpu.dot_dimension_numbers<[1], [0], [0], [1], [0, 0, 1, 1], [], []>} : vector<80x128xf32>, vector<128x3xf32>, vector<80x3xf32> -> vector<80x3xf32>
      %59 = arith.addf %54, %58 : vector<80x3xf32>
      %60 = vector.broadcast %0 : vector<1x3xf32> to vector<80x3xf32>
      %61 = arith.addf %59, %60 : vector<80x3xf32>
      %cst_41 = arith.constant 0.000000e+00 : f32
      %62 = vector.broadcast %cst_41 : f32 to vector<80x3xf32>
      %63 = arith.subf %62, %61 : vector<80x3xf32>
      %64 = math.exp %63 : vector<80x3xf32>
      %cst_42 = arith.constant 1.000000e+00 : f32
      %65 = vector.broadcast %cst_42 : f32 to vector<80x3xf32>
      %66 = arith.addf %65, %64 : vector<80x3xf32>
      %cst_43 = arith.constant 1.000000e+00 : f32
      %67 = vector.broadcast %cst_43 : f32 to vector<80x3xf32>
      %68 = arith.divf %67, %66 : vector<80x3xf32>
      %c0_44 = arith.constant 0 : index
      %69 = arith.index_cast %arg5 : i32 to index
      %c0_45 = arith.constant 0 : index
      %c0_46 = arith.constant 0 : index
      %70 = vector.load %arg4[%c0_44, %69, %c0_45, %c0_46] : memref<1x45x80x3xf32, #tpu.memory_space<vmem>>, vector<1x1x80x3xf32>
      %71 = vector.shape_cast %70 : vector<1x1x80x3xf32> to vector<80x3xf32>
      %72 = vector.shape_cast %68 : vector<80x3xf32> to vector<1x1x80x3xf32>
      tpu.vector_store %arg4[%c0_44, %69, %c0_45, %c0_46], %72 {strides = array<i32>} : memref<1x45x80x3xf32, #tpu.memory_space<vmem>>, vector<1x1x80x3xf32>,
    }
    %c45_i32_1 = arith.constant 45 : i32
    return
  }
  func.func @transform_0(%arg0: i32) -> (i32, i32, i32, i32) {
    %c0_i32 = arith.constant 0 : i32
    %c0_i32_0 = arith.constant 0 : i32
    %c0_i32_1 = arith.constant 0 : i32
    %c0_i32_2 = arith.constant 0 : i32
    return %arg0, %c0_i32, %c0_i32_0, %c0_i32_1 : i32, i32, i32, i32
  }
  func.func @transform_1(%arg0: i32) -> (i32, i32, i32) {
    %c0_i32 = arith.constant 0 : i32
    %c0_i32_0 = arith.constant 0 : i32
    %c0_i32_1 = arith.constant 0 : i32
    %c0_i32_2 = arith.constant 0 : i32
    return %c0_i32, %c0_i32_0, %c0_i32_1 : i32, i32, i32
  }
  func.func @transform_2(%arg0: i32) -> (i32, i32) {
    %c0_i32 = arith.constant 0 : i32
    %c0_i32_0 = arith.constant 0 : i32
    %c0_i32_1 = arith.constant 0 : i32
    return %c0_i32, %c0_i32_0 : i32, i32
  }
  func.func @transform_3(%arg0: i32) -> (i32, i32, i32, i32) {
    %c0_i32 = arith.constant 0 : i32
    %c0_i32_0 = arith.constant 0 : i32
    %c0_i32_1 = arith.constant 0 : i32
    %c0_i32_2 = arith.constant 0 : i32
    return %arg0, %c0_i32, %c0_i32_0, %c0_i32_1 : i32, i32, i32, i32
  }
}

</mosaic_0001>

<llo_original>
// kernel: ae_decoder_forward.5
$region0: #{ae_decoder_forward.5}
  #allocation0 [shape = 'u32[]', space=smem, size = 0x4, offset = 0x4, fixed_abs, tag = 'smem constant byte address 0x4 - core index']
  #allocation1 [shape = 'u32[144,128]{1,0:T(1,128)}', space=vmem, size = 0x12000, scoped, tag = 'internal scratch']
  %s0 = inlined_call_operand.vmem [shape: f32[2,512], index: 0, kind: input, shape index: {}]
  %s1 = inlined_call_operand.vmem [shape: f32[512,1920], index: 1, kind: input, shape index: {}]
  %s2 = inlined_call_operand.vmem [shape: f32[1,1920], index: 2, kind: input, shape index: {}]
  %s3 = inlined_call_operand.vmem [shape: f32[2,1920], index: 3, kind: output, shape index: {}]
  %s4 = sld [smem:[#allocation0]]
  $region68: #{ae_decoder_forward.5} parent=0
    _
  %s6 = ssub.s32 1, %s4
  %s7 = scalar_select 0, %s6, %s4
  $region1: #{ae_decoder_forward.5} parent=0
    #allocation2 [shape = 'u8[1572864]{0}', space=vmem, size = 0x180000, scoped, tag = 'input window, operand 1']
    loop: start=0, step=1, limit=7
    $region2: #{ae_decoder_forward.5} parent=1 // loop_pre_header
      _
    $region3: #{ae_decoder_forward.5} parent=1 // loop_header
      %s9 = sphi 0, %s13
      %p10 = scmp.ge.s32.totalorder %s9, 7
      %s17 = sphi 0, %s17
      %s19 = sphi 0, %s17
      %s20 = sphi 0, %s19
      %s34 = sphi 0, %s20
      %s40 = sphi 0, %s42
      %s43 = sphi 0, %s40
      %s44 = sphi 0, %s43
      %s60 = sphi 0, %s44
      %s66 = sphi 0, %s68
      %s69 = sphi 0, %s66
      %s70 = sphi 0, %s69
      %s86 = sphi 0, %s70
      %s92 = sphi 0, %s94
      %s95 = sphi 0, %s92
      %s96 = sphi 0, %s95
      %s112 = sphi 0, %s96
    $region4: #{ae_decoder_forward.5} parent=1 // loop_header_branch
      %12 = sbr.rel (%p10) target = $region8
    $region5: #{ae_decoder_forward.5} parent=1 // loop_body
      %s14 = ssub.s32 %s9, 1
      %s15 = ssub.s32 %s9, 2
      %s16 = sadd.s32 %s9, 1
      %s18 = sadd.s32 %s17, 1
      %p21 = scmp.eq.s32.totalorder %s9, 4
      %p22 = scmp.ne.s32.totalorder %s17, %s19
      %p23 = scmp.eq.s32.totalorder %s9, 0
      %p24 = por %p22, %p23
      %p25 = scmp.ne.s32.totalorder %s17, %s19
      %p26 = scmp.eq.s32.totalorder %s14, 4
      %p27 = por %p25, %p26
      %p28 = scmp.ne.s32.totalorder %s19, %s20
      %p29 = scmp.eq.s32.totalorder %s14, 0
      %p30 = por %p28, %p29
      %p31 = scmp.ne.s32.totalorder %s19, %s20
      %p32 = scmp.eq.s32.totalorder %s15, 4
      %p33 = por %p31, %p32
      %p35 = scmp.ne.s32.totalorder %s20, %s34
      %p36 = scmp.eq.s32.totalorder %s15, 0
      %p37 = por %p35, %p36
      %s38 = ssub.s32 %s9, %s16
      %p39 = scmp.eq.s32.totalorder %s38, 0
      %s41 = sadd.s32 %s40, 1
      %s42 = scalar_select %p39, %s40, %s41
      %p45 = pneg %p39
      %p46 = scmp.eq.s32.totalorder %s9, 4
      %p47 = por %p45, %p46
      %p48 = scmp.ne.s32.totalorder %s40, %s43
      %p49 = scmp.eq.s32.totalorder %s9, 0
      %p50 = por %p48, %p49
      %p51 = scmp.ne.s32.totalorder %s40, %s43
      %p52 = scmp.eq.s32.totalorder %s14, 4
      %p53 = por %p51, %p52
      %p54 = scmp.ne.s32.totalorder %s43, %s44
      %p55 = scmp.eq.s32.totalorder %s14, 0
      %p56 = por %p54, %p55
      %p57 = scmp.ne.s32.totalorder %s43, %s44
      %p58 = scmp.eq.s32.totalorder %s15, 4
      %p59 = por %p57, %p58
      %p61 = scmp.ne.s32.totalorder %s44, %s60
      %p62 = scmp.eq.s32.totalorder %s15, 0
      %p63 = por %p61, %p62
      %s64 = ssub.s32 %s9, %s16
      %p65 = scmp.eq.s32.totalorder %s64, 0
      %s67 = sadd.s32 %s66, 1
      %s68 = scalar_select %p65, %s66, %s67
      %p71 = pneg %p65
      %p72 = scmp.eq.s32.totalorder %s9, 4
      %p73 = por %p71, %p72
      %p74 = scmp.ne.s32.totalorder %s66, %s69
      %p75 = scmp.eq.s32.totalorder %s9, 0
      %p76 = por %p74, %p75
      %p77 = scmp.ne.s32.totalorder %s66, %s69
      %p78 = scmp.eq.s32.totalorder %s14, 4
      %p79 = por %p77, %p78
      %p80 = scmp.ne.s32.totalorder %s69, %s70
      %p81 = scmp.eq.s32.totalorder %s14, 0
      %p82 = por %p80, %p81
      %p83 = scmp.ne.s32.totalorder %s69, %s70
      %p84 = scmp.eq.s32.totalorder %s15, 4
      %p85 = por %p83, %p84
      %p87 = scmp.ne.s32.totalorder %s70, %s86
      %p88 = scmp.eq.s32.totalorder %s15, 0
      %p89 = por %p87, %p88
      %s90 = ssub.s32 %s9, %s16
      %p91 = scmp.eq.s32.totalorder %s90, 0
      %s93 = sadd.s32 %s92, 1
      %s94 = scalar_select %p91, %s92, %s93
      %p97 = pneg %p91
      %p98 = scmp.eq.s32.totalorder %s9, 4
      %p99 = por %p97, %p98
      %p100 = scmp.ne.s32.totalorder %s92, %s95
      %p101 = scmp.eq.s32.totalorder %s9, 0
      %p102 = por %p100, %p101
      %p103 = scmp.ne.s32.totalorder %s92, %s95
      %p104 = scmp.eq.s32.totalorder %s14, 4
      %p105 = por %p103, %p104
      %p106 = scmp.ne.s32.totalorder %s95, %s96
      %p107 = scmp.eq.s32.totalorder %s14, 0
      %p108 = por %p106, %p107
      %p109 = scmp.ne.s32.totalorder %s95, %s96
      %p110 = scmp.eq.s32.totalorder %s15, 4
      %p111 = por %p109, %p110
      %p113 = scmp.ne.s32.totalorder %s96, %s112
      %p114 = scmp.eq.s32.totalorder %s15, 0
      %p115 = por %p113, %p114
      %p116 = scmp.le.s32.totalorder 1, %s9
      %p117 = scmp.lt.s32.totalorder %s9, 6
      %p118 = pnand %p116, %p117
      %p119 = pneg %p118
      // Predicated region
      $region9: #{ae_decoder_forward.5} parent=5 // pred_check
        _
      $region10: #{ae_decoder_forward.5} parent=5 // pred_check_branch
        %121 = sbr.rel (%p118) target = $region12
      $region11: #{ae_decoder_forward.5} parent=5 // pred_region
        %s122 = ssub.s32 %s9, 1
        // Predicated region
        $region13: #{ae_decoder_forward.5} parent=11 // pred_check
          %p123 = pneg %p30
        $region14: #{ae_decoder_forward.5} parent=11 // pred_check_branch
          %125 = sbr.rel (%p123) target = $region16
        $region15: #{ae_decoder_forward.5} parent=11 // pred_region
          _
        $region16: #{ae_decoder_forward.5} parent=11 // pred_fallthru
          _
      $region12: #{ae_decoder_forward.5} parent=5 // pred_fallthru
        _
      %p126 = scmp.lt.s32.totalorder %s9, 5
      // Predicated region
      $region17: #{ae_decoder_forward.5} parent=5 // pred_check
        %p127 = pneg %p126
      $region18: #{ae_decoder_forward.5} parent=5 // pred_check_branch
        %129 = sbr.rel (%p127) target = $region20
      $region19: #{ae_decoder_forward.5} parent=5 // pred_region
        // Predicated region
        $region21: #{ae_decoder_forward.5} parent=19 // pred_check
          %p130 = pneg %p50
        $region22: #{ae_decoder_forward.5} parent=19 // pred_check_branch
          %132 = sbr.rel (%p130) target = $region24
        $region23: #{ae_decoder_forward.5} parent=19 // pred_region
          %s133 = sand.u32 %s40, 1
          %s134 = sand.u32 %s40, 1
          %s135 = smul.addr %s134, 1536
          %s136 = scalar_lea.vmem [#allocation2], %s135
          %s137 = smul.u32 3, %s9
          %s138 = smul.addr %s137, 8
          %s139 = scalar_lea.vmem %s1, %s138
          // Predicated region
          $region25: #{ae_decoder_forward.5} parent=23 // pred_check
            _
          $region26: #{ae_decoder_forward.5} parent=23 // pred_check_branch
            %141 = sbr.rel (0) target = $region28
          $region27: #{ae_decoder_forward.5} parent=23 // pred_region
            // Predicated region
            $region29: #{ae_decoder_forward.5} parent=27 // pred_check
              _
            $region30: #{ae_decoder_forward.5} parent=27 // pred_check_branch
              %143 = sbr.rel (0) target = $region32
            $region31: #{ae_decoder_forward.5} parent=27 // pred_region
              loop: start=0, step=1, limit=1
              $region33: #{ae_decoder_forward.5} parent=31 // loop_pre_header
                _
              $region34: #{ae_decoder_forward.5} parent=31 // loop_header
                %s145 = sphi 0, %s149
                %p146 = scmp.ge.s32.totalorder %s145, 1
                %s150 = sphi %s139, %s139
                %s151 = sphi %s136, %s136
              $region35: #{ae_decoder_forward.5} parent=31 // loop_header_branch
                %148 = sbr.rel (%p146) target = $region39
              $region36: #{ae_decoder_forward.5} parent=31 // loop_body
                %v152 = vld [vmem:[%s150] sm:$0xff]
                %153 = vst [vmem:[%s151] sm:$0xff] %v152
                %v154 = vld [vmem:[%s150 + $0x8] sm:$0xff]
                %155 = vst [vmem:[%s151 + $0x8] sm:$0xff] %v154
                %v156 = vld [vmem:[%s150 + $0x10] sm:$0xff]
                %157 = vst [vmem:[%s151 + $0x10] sm:$0xff] %v156
                %v158 = vld [vmem:[%s150 + $0x78] sm:$0xff]
                %159 = vst [vmem:[%s151 + $0x18] sm:$0xff] %v158
                %v160 = vld [vmem:[%s150 + $0x80] sm:$0xff]
                %161 = vst [vmem:[%s151 + $0x20] sm:$0xff] %v160
                %v162 = vld [vmem:[%s150 + $0x88] sm:$0xff]
                %163 = vst [vmem:[%s151 + $0x28] sm:$0xff] %v162
                %v164 = vld [vmem:[%s150 + $0xf0] sm:$0xff]
                %165 = vst [vmem:[%s151 + $0x30] sm:$0xff] %v164
                %v166 = vld [vmem:[%s150 + $0xf8] sm:$0xff]
                %167 = vst [vmem:[%s151 + $0x38] sm:$0xff] %v166
                %v168 = vld [vmem:[%s150 + $0x100] sm:$0xff]
                %169 = vst [vmem:[%s151 + $0x40] sm:$0xff] %v168
                %v170 = vld [vmem:[%s150 + $0x168] sm:$0xff]
                %171 = vst [vmem:[%s151 + $0x48] sm:$0xff] %v170
                %v172 = vld [vmem:[%s150 + $0x170] sm:$0xff]
                %173 = vst [vmem:[%s151 + $0x50] sm:$0xff] %v172
                %v174 = vld [vmem:[%s150 + $0x178] sm:$0xff]
                %175 = vst [vmem:[%s151 + $0x58] sm:$0xff] %v174
                %v176 = vld [vmem:[%s150 + $0x1e0] sm:$0xff]
                %177 = vst [vmem:[%s151 + $0x60] sm:$0xff] %v176
                %v178 = vld [vmem:[%s150 + $0x1e8] sm:$0xff]
                %179 = vst [vmem:[%s151 + $0x68] sm:$0xff] %v178
                %v180 = vld [vmem:[%s150 + $0x1f0] sm:$0xff]
                %181 = vst [vmem:[%s151 + $0x70] sm:$0xff] %v180
                %v182 = vld [vmem:[%s150 + $0x258] sm:$0xff]
                %183 = vst [vmem:[%s151 + $0x78] sm:$0xff] %v182
                %v184 = vld [vmem:[%s150 + $0x260] sm:$0xff]
                %185 = vst [vmem:[%s151 + $0x80] sm:$0xff] %v184
                %v186 = vld [vmem:[%s150 + $0x268] sm:$0xff]
                %187 = vst [vmem:[%s151 + $0x88] sm:$0xff] %v186
                %v188 = vld [vmem:[%s150 + $0x2d0] sm:$0xff]
                %189 = vst [vmem:[%s151 + $0x90] sm:$0xff] %v188
                %v190 = vld [vmem:[%s150 + $0x2d8] sm:$0xff]
                %191 = vst [vmem:[%s151 + $0x98] sm:$0xff] %v190
                %v192 = vld [vmem:[%s150 + $0x2e0] sm:$0xff]
                %193 = vst [vmem:[%s151 + $0xa0] sm:$0xff] %v192
                %v194 = vld [vmem:[%s150 + $0x348] sm:$0xff]
                %195 = vst [vmem:[%s151 + $0xa8] sm:$0xff] %v194
                %v196 = vld [vmem:[%s150 + $0x350] sm:$0xff]
                %197 = vst [vmem:[%s151 + $0xb0] sm:$0xff] %v196
                %v198 = vld [vmem:[%s150 + $0x358] sm:$0xff]
                %199 = vst [vmem:[%s151 + $0xb8] sm:$0xff] %v198
                %v200 = vld [vmem:[%s150 + $0x3c0] sm:$0xff]
                %201 = vst [vmem:[%s151 + $0xc0] sm:$0xff] %v200
                %v202 = vld [vmem:[%s150 + $0x3c8] sm:$0xff]
                %203 = vst [vmem:[%s151 + $0xc8] sm:$0xff] %v202
                %v204 = vld [vmem:[%s150 + $0x3d0] sm:$0xff]
                %205 = vst [vmem:[%s151 + $0xd0] sm:$0xff] %v204
                %v206 = vld [vmem:[%s150 + $0x438] sm:$0xff]
                %207 = vst [vmem:[%s151 + $0xd8] sm:$0xff] %v206
                %v208 = vld [vmem:[%s150 + $0x440] sm:$0xff]
                %209 = vst [vmem:[%s151 + $0xe0] sm:$0xff] %v208
                %v210 = vld [vmem:[%s150 + $0x448] sm:$0xff]
                %211 = vst [vmem:[%s151 + $0xe8] sm:$0xff] %v210
                %v212 = vld [vmem:[%s150 + $0x4b0] sm:$0xff]
                %213 = vst [vmem:[%s151 + $0xf0] sm:$0xff] %v212
                %v214 = vld [vmem:[%s150 + $0x4b8] sm:$0xff]
                %215 = vst [vmem:[%s151 + $0xf8] sm:$0xff] %v214
                %v216 = vld [vmem:[%s150 + $0x4c0] sm:$0xff]
                %217 = vst [vmem:[%s151 + $0x100] sm:$0xff] %v216
                %v218 = vld [vmem:[%s150 + $0x528] sm:$0xff]
                %219 = vst [vmem:[%s151 + $0x108] sm:$0xff] %v218
                %v220 = vld [vmem:[%s150 + $0x530] sm:$0xff]
                %221 = vst [vmem:[%s151 + $0x110] sm:$0xff] %v220
                %v222 = vld [vmem:[%s150 + $0x538] sm:$0xff]
                %223 = vst [vmem:[%s151 + $0x118] sm:$0xff] %v222
                %v224 = vld [vmem:[%s150 + $0x5a0] sm:$0xff]
                %225 = vst [vmem:[%s151 + $0x120] sm:$0xff] %v224
                %v226 = vld [vmem:[%s150 + $0x5a8] sm:$0xff]
                %227 = vst [vmem:[%s151 + $0x128] sm:$0xff] %v226
                %v228 = vld [vmem:[%s150 + $0x5b0] sm:$0xff]
                %229 = vst [vmem:[%s151 + $0x130] sm:$0xff] %v228
                %v230 = vld [vmem:[%s150 + $0x618] sm:$0xff]
                %231 = vst [vmem:[%s151 + $0x138] sm:$0xff] %v230
                %v232 = vld [vmem:[%s150 + $0x620] sm:$0xff]
                %233 = vst [vmem:[%s151 + $0x140] sm:$0xff] %v232
                %v234 = vld [vmem:[%s150 + $0x628] sm:$0xff]
                %235 = vst [vmem:[%s151 + $0x148] sm:$0xff] %v234
                %v236 = vld [vmem:[%s150 + $0x690] sm:$0xff]
                %237 = vst [vmem:[%s151 + $0x150] sm:$0xff] %v236
                %v238 = vld [vmem:[%s150 + $0x698] sm:$0xff]
                %239 = vst [vmem:[%s151 + $0x158] sm:$0xff] %v238
                %v240 = vld [vmem:[%s150 + $0x6a0] sm:$0xff]
                %241 = vst [vmem:[%s151 + $0x160] sm:$0xff] %v240
                %v242 = vld [vmem:[%s150 + $0x708] sm:$0xff]
                %243 = vst [vmem:[%s151 + $0x168] sm:$0xff] %v242
                %v244 = vld [vmem:[%s150 + $0x710] sm:$0xff]
                %245 = vst [vmem:[%s151 + $0x170] sm:$0xff] %v244
                %v246 = vld [vmem:[%s150 + $0x718] sm:$0xff]
                %247 = vst [vmem:[%s151 + $0x178] sm:$0xff] %v246
                %v248 = vld [vmem:[%s150 + $0x780] sm:$0xff]
                %249 = vst [vmem:[%s151 + $0x180] sm:$0xff] %v248
                %v250 = vld [vmem:[%s150 + $0x788] sm:$0xff]
                %251 = vst [vmem:[%s151 + $0x188] sm:$0xff] %v250
                %v252 = vld [vmem:[%s150 + $0x790] sm:$0xff]
                %253 = vst [vmem:[%s151 + $0x190] sm:$0xff] %v252
                %v254 = vld [vmem:[%s150 + $0x7f8] sm:$0xff]
                %255 = vst [vmem:[%s151 + $0x198] sm:$0xff] %v254
                %v256 = vld [vmem:[%s150 + $0x800] sm:$0xff]
                %257 = vst [vmem:[%s151 + $0x1a0] sm:$0xff] %v256
                %v258 = vld [vmem:[%s150 + $0x808] sm:$0xff]
                %259 = vst [vmem:[%s151 + $0x1a8] sm:$0xff] %v258
                %v260 = vld [vmem:[%s150 + $0x870] sm:$0xff]
                %261 = vst [vmem:[%s151 + $0x1b0] sm:$0xff] %v260
                %v262 = vld [vmem:[%s150 + $0x878] sm:$0xff]
                %263 = vst [vmem:[%s151 + $0x1b8] sm:$0xff] %v262
                %v264 = vld [vmem:[%s150 + $0x880] sm:$0xff]
                %265 = vst [vmem:[%s151 + $0x1c0] sm:$0xff] %v264
                %v266 = vld [vmem:[%s150 + $0x8e8] sm:$0xff]
                %267 = vst [vmem:[%s151 + $0x1c8] sm:$0xff] %v266
                %v268 = vld [vmem:[%s150 + $0x8f0] sm:$0xff]
                %269 = vst [vmem:[%s151 + $0x1d0] sm:$0xff] %v268
                %v270 = vld [vmem:[%s150 + $0x8f8] sm:$0xff]
                %271 = vst [vmem:[%s151 + $0x1d8] sm:$0xff] %v270
                %v272 = vld [vmem:[%s150 + $0x960] sm:$0xff]
                %273 = vst [vmem:[%s151 + $0x1e0] sm:$0xff] %v272
                %v274 = vld [vmem:[%s150 + $0x968] sm:$0xff]
                %275 = vst [vmem:[%s151 + $0x1e8] sm:$0xff] %v274
                %v276 = vld [vmem:[%s150 + $0x970] sm:$0xff]
                %277 = vst [vmem:[%s151 + $0x1f0] sm:$0xff] %v276
                %v278 = vld [vmem:[%s150 + $0x9d8] sm:$0xff]
                %279 = vst [vmem:[%s151 + $0x1f8] sm:$0xff] %v278
                %v280 = vld [vmem:[%s150 + $0x9e0] sm:$0xff]
                %281 = vst [vmem:[%s151 + $0x200] sm:$0xff] %v280
                %v282 = vld [vmem:[%s150 + $0x9e8] sm:$0xff]
                %283 = vst [vmem:[%s151 + $0x208] sm:$0xff] %v282
                %v284 = vld [vmem:[%s150 + $0xa50] sm:$0xff]
                %285 = vst [vmem:[%s151 + $0x210] sm:$0xff] %v284
                %v286 = vld [vmem:[%s150 + $0xa58] sm:$0xff]
                %287 = vst [vmem:[%s151 + $0x218] sm:$0xff] %v286
                %v288 = vld [vmem:[%s150 + $0xa60] sm:$0xff]
                %289 = vst [vmem:[%s151 + $0x220] sm:$0xff] %v288
                %v290 = vld [vmem:[%s150 + $0xac8] sm:$0xff]
                %291 = vst [vmem:[%s151 + $0x228] sm:$0xff] %v290
                %v292 = vld [vmem:[%s150 + $0xad0] sm:$0xff]
                %293 = vst [vmem:[%s151 + $0x230] sm:$0xff] %v292
                %v294 = vld [vmem:[%s150 + $0xad8] sm:$0xff]
                %295 = vst [vmem:[%s151 + $0x238] sm:$0xff] %v294
                %v296 = vld [vmem:[%s150 + $0xb40] sm:$0xff]
                %297 = vst [vmem:[%s151 + $0x240] sm:$0xff] %v296
                %v298 = vld [vmem:[%s150 + $0xb48] sm:$0xff]
                %299 = vst [vmem:[%s151 + $0x248] sm:$0xff] %v298
                %v300 = vld [vmem:[%s150 + $0xb50] sm:$0xff]
                %301 = vst [vmem:[%s151 + $0x250] sm:$0xff] %v300
                %v302 = vld [vmem:[%s150 + $0xbb8] sm:$0xff]
                %303 = vst [vmem:[%s151 + $0x258] sm:$0xff] %v302
                %v304 = vld [vmem:[%s150 + $0xbc0] sm:$0xff]
                %305 = vst [vmem:[%s151 + $0x260] sm:$0xff] %v304
                %v306 = vld [vmem:[%s150 + $0xbc8] sm:$0xff]
                %307 = vst [vmem:[%s151 + $0x268] sm:$0xff] %v306
                %v308 = vld [vmem:[%s150 + $0xc30] sm:$0xff]
                %309 = vst [vmem:[%s151 + $0x270] sm:$0xff] %v308
                %v310 = vld [vmem:[%s150 + $0xc38] sm:$0xff]
                %311 = vst [vmem:[%s151 + $0x278] sm:$0xff] %v310
                %v312 = vld [vmem:[%s150 + $0xc40] sm:$0xff]
                %313 = vst [vmem:[%s151 + $0x280] sm:$0xff] %v312
                %v314 = vld [vmem:[%s150 + $0xca8] sm:$0xff]
                %315 = vst [vmem:[%s151 + $0x288] sm:$0xff] %v314
                %v316 = vld [vmem:[%s150 + $0xcb0] sm:$0xff]
                %317 = vst [vmem:[%s151 + $0x290] sm:$0xff] %v316
                %v318 = vld [vmem:[%s150 + $0xcb8] sm:$0xff]
                %319 = vst [vmem:[%s151 + $0x298] sm:$0xff] %v318
                %v320 = vld [vmem:[%s150 + $0xd20] sm:$0xff]
                %321 = vst [vmem:[%s151 + $0x2a0] sm:$0xff] %v320
                %v322 = vld [vmem:[%s150 + $0xd28] sm:$0xff]
                %323 = vst [vmem:[%s151 + $0x2a8] sm:$0xff] %v322
                %v324 = vld [vmem:[%s150 + $0xd30] sm:$0xff]
                %325 = vst [vmem:[%s151 + $0x2b0] sm:$0xff] %v324
                %v326 = vld [vmem:[%s150 + $0xd98] sm:$0xff]
                %327 = vst [vmem:[%s151 + $0x2b8] sm:$0xff] %v326
                %v328 = vld [vmem:[%s150 + $0xda0] sm:$0xff]
                %329 = vst [vmem:[%s151 + $0x2c0] sm:$0xff] %v328
                %v330 = vld [vmem:[%s150 + $0xda8] sm:$0xff]
                %331 = vst [vmem:[%s151 + $0x2c8] sm:$0xff] %v330
                %v332 = vld [vmem:[%s150 + $0xe10] sm:$0xff]
                %333 = vst [vmem:[%s151 + $0x2d0] sm:$0xff] %v332
                %v334 = vld [vmem:[%s150 + $0xe18] sm:$0xff]
                %335 = vst [vmem:[%s151 + $0x2d8] sm:$0xff] %v334
                %v336 = vld [vmem:[%s150 + $0xe20] sm:$0xff]
                %337 = vst [vmem:[%s151 + $0x2e0] sm:$0xff] %v336
                %v338 = vld [vmem:[%s150 + $0xe88] sm:$0xff]
                %339 = vst [vmem:[%s151 + $0x2e8] sm:$0xff] %v338
                %v340 = vld [vmem:[%s150 + $0xe90] sm:$0xff]
                %341 = vst [vmem:[%s151 + $0x2f0] sm:$0xff] %v340
                %v342 = vld [vmem:[%s150 + $0xe98] sm:$0xff]
                %343 = vst [vmem:[%s151 + $0x2f8] sm:$0xff] %v342
                %v344 = vld [vmem:[%s150 + $0xf00] sm:$0xff]
                %345 = vst [vmem:[%s151 + $0x300] sm:$0xff] %v344
                %v346 = vld [vmem:[%s150 + $0xf08] sm:$0xff]
                %347 = vst [vmem:[%s151 + $0x308] sm:$0xff] %v346
                %v348 = vld [vmem:[%s150 + $0xf10] sm:$0xff]
                %349 = vst [vmem:[%s151 + $0x310] sm:$0xff] %v348
                %v350 = vld [vmem:[%s150 + $0xf78] sm:$0xff]
                %351 = vst [vmem:[%s151 + $0x318] sm:$0xff] %v350
                %v352 = vld [vmem:[%s150 + $0xf80] sm:$0xff]
                %353 = vst [vmem:[%s151 + $0x320] sm:$0xff] %v352
                %v354 = vld [vmem:[%s150 + $0xf88] sm:$0xff]
                %355 = vst [vmem:[%s151 + $0x328] sm:$0xff] %v354
                %v356 = vld [vmem:[%s150 + $0xff0] sm:$0xff]
                %357 = vst [vmem:[%s151 + $0x330] sm:$0xff] %v356
                %v358 = vld [vmem:[%s150 + $0xff8] sm:$0xff]
                %359 = vst [vmem:[%s151 + $0x338] sm:$0xff] %v358
                %v360 = vld [vmem:[%s150 + $0x1000] sm:$0xff]
                %361 = vst [vmem:[%s151 + $0x340] sm:$0xff] %v360
                %v362 = vld [vmem:[%s150 + $0x1068] sm:$0xff]
                %363 = vst [vmem:[%s151 + $0x348] sm:$0xff] %v362
                %v364 = vld [vmem:[%s150 + $0x1070] sm:$0xff]
                %365 = vst [vmem:[%s151 + $0x350] sm:$0xff] %v364
                %v366 = vld [vmem:[%s150 + $0x1078] sm:$0xff]
                %367 = vst [vmem:[%s151 + $0x358] sm:$0xff] %v366
                %v368 = vld [vmem:[%s150 + $0x10e0] sm:$0xff]
                %369 = vst [vmem:[%s151 + $0x360] sm:$0xff] %v368
                %v370 = vld [vmem:[%s150 + $0x10e8] sm:$0xff]
                %371 = vst [vmem:[%s151 + $0x368] sm:$0xff] %v370
                %v372 = vld [vmem:[%s150 + $0x10f0] sm:$0xff]
                %373 = vst [vmem:[%s151 + $0x370] sm:$0xff] %v372
                %v374 = vld [vmem:[%s150 + $0x1158] sm:$0xff]
                %375 = vst [vmem:[%s151 + $0x378] sm:$0xff] %v374
                %v376 = vld [vmem:[%s150 + $0x1160] sm:$0xff]
                %377 = vst [vmem:[%s151 + $0x380] sm:$0xff] %v376
                %v378 = vld [vmem:[%s150 + $0x1168] sm:$0xff]
                %379 = vst [vmem:[%s151 + $0x388] sm:$0xff] %v378
                %v380 = vld [vmem:[%s150 + $0x11d0] sm:$0xff]
                %381 = vst [vmem:[%s151 + $0x390] sm:$0xff] %v380
                %v382 = vld [vmem:[%s150 + $0x11d8] sm:$0xff]
                %383 = vst [vmem:[%s151 + $0x398] sm:$0xff] %v382
                %v384 = vld [vmem:[%s150 + $0x11e0] sm:$0xff]
                %385 = vst [vmem:[%s151 + $0x3a0] sm:$0xff] %v384
                %v386 = vld [vmem:[%s150 + $0x1248] sm:$0xff]
                %387 = vst [vmem:[%s151 + $0x3a8] sm:$0xff] %v386
                %v388 = vld [vmem:[%s150 + $0x1250] sm:$0xff]
                %389 = vst [vmem:[%s151 + $0x3b0] sm:$0xff] %v388
                %v390 = vld [vmem:[%s150 + $0x1258] sm:$0xff]
                %391 = vst [vmem:[%s151 + $0x3b8] sm:$0xff] %v390
                %v392 = vld [vmem:[%s150 + $0x12c0] sm:$0xff]
                %393 = vst [vmem:[%s151 + $0x3c0] sm:$0xff] %v392
                %v394 = vld [vmem:[%s150 + $0x12c8] sm:$0xff]
                %395 = vst [vmem:[%s151 + $0x3c8] sm:$0xff] %v394
                %v396 = vld [vmem:[%s150 + $0x12d0] sm:$0xff]
                %397 = vst [vmem:[%s151 + $0x3d0] sm:$0xff] %v396
                %v398 = vld [vmem:[%s150 + $0x1338] sm:$0xff]
                %399 = vst [vmem:[%s151 + $0x3d8] sm:$0xff] %v398
                %v400 = vld [vmem:[%s150 + $0x1340] sm:$0xff]
                %401 = vst [vmem:[%s151 + $0x3e0] sm:$0xff] %v400
                %v402 = vld [vmem:[%s150 + $0x1348] sm:$0xff]
                %403 = vst [vmem:[%s151 + $0x3e8] sm:$0xff] %v402
                %v404 = vld [vmem:[%s150 + $0x13b0] sm:$0xff]
                %405 = vst [vmem:[%s151 + $0x3f0] sm:$0xff] %v404
                %v406 = vld [vmem:[%s150 + $0x13b8] sm:$0xff]
                %407 = vst [vmem:[%s151 + $0x3f8] sm:$0xff] %v406
                %v408 = vld [vmem:[%s150 + $0x13c0] sm:$0xff]
                %409 = vst [vmem:[%s151 + $0x400] sm:$0xff] %v408
                %v410 = vld [vmem:[%s150 + $0x1428] sm:$0xff]
                %411 = vst [vmem:[%s151 + $0x408] sm:$0xff] %v410
                %v412 = vld [vmem:[%s150 + $0x1430] sm:$0xff]
                %413 = vst [vmem:[%s151 + $0x410] sm:$0xff] %v412
                %v414 = vld [vmem:[%s150 + $0x1438] sm:$0xff]
                %415 = vst [vmem:[%s151 + $0x418] sm:$0xff] %v414
                %v416 = vld [vmem:[%s150 + $0x14a0] sm:$0xff]
                %417 = vst [vmem:[%s151 + $0x420] sm:$0xff] %v416
                %v418 = vld [vmem:[%s150 + $0x14a8] sm:$0xff]
                %419 = vst [vmem:[%s151 + $0x428] sm:$0xff] %v418
                %v420 = vld [vmem:[%s150 + $0x14b0] sm:$0xff]
                %421 = vst [vmem:[%s151 + $0x430] sm:$0xff] %v420
                %v422 = vld [vmem:[%s150 + $0x1518] sm:$0xff]
                %423 = vst [vmem:[%s151 + $0x438] sm:$0xff] %v422
                %v424 = vld [vmem:[%s150 + $0x1520] sm:$0xff]
                %425 = vst [vmem:[%s151 + $0x440] sm:$0xff] %v424
                %v426 = vld [vmem:[%s150 + $0x1528] sm:$0xff]
                %427 = vst [vmem:[%s151 + $0x448] sm:$0xff] %v426
                %v428 = vld [vmem:[%s150 + $0x1590] sm:$0xff]
                %429 = vst [vmem:[%s151 + $0x450] sm:$0xff] %v428
                %v430 = vld [vmem:[%s150 + $0x1598] sm:$0xff]
                %431 = vst [vmem:[%s151 + $0x458] sm:$0xff] %v430
                %v432 = vld [vmem:[%s150 + $0x15a0] sm:$0xff]
                %433 = vst [vmem:[%s151 + $0x460] sm:$0xff] %v432
                %v434 = vld [vmem:[%s150 + $0x1608] sm:$0xff]
                %435 = vst [vmem:[%s151 + $0x468] sm:$0xff] %v434
                %v436 = vld [vmem:[%s150 + $0x1610] sm:$0xff]
                %437 = vst [vmem:[%s151 + $0x470] sm:$0xff] %v436
                %v438 = vld [vmem:[%s150 + $0x1618] sm:$0xff]
                %439 = vst [vmem:[%s151 + $0x478] sm:$0xff] %v438
                %v440 = vld [vmem:[%s150 + $0x1680] sm:$0xff]
                %441 = vst [vmem:[%s151 + $0x480] sm:$0xff] %v440
                %v442 = vld [vmem:[%s150 + $0x1688] sm:$0xff]
                %443 = vst [vmem:[%s151 + $0x488] sm:$0xff] %v442
                %v444 = vld [vmem:[%s150 + $0x1690] sm:$0xff]
                %445 = vst [vmem:[%s151 + $0x490] sm:$0xff] %v444
                %v446 = vld [vmem:[%s150 + $0x16f8] sm:$0xff]
                %447 = vst [vmem:[%s151 + $0x498] sm:$0xff] %v446
                %v448 = vld [vmem:[%s150 + $0x1700] sm:$0xff]
                %449 = vst [vmem:[%s151 + $0x4a0] sm:$0xff] %v448
                %v450 = vld [vmem:[%s150 + $0x1708] sm:$0xff]
                %451 = vst [vmem:[%s151 + $0x4a8] sm:$0xff] %v450
                %v452 = vld [vmem:[%s150 + $0x1770] sm:$0xff]
                %453 = vst [vmem:[%s151 + $0x4b0] sm:$0xff] %v452
                %v454 = vld [vmem:[%s150 + $0x1778] sm:$0xff]
                %455 = vst [vmem:[%s151 + $0x4b8] sm:$0xff] %v454
                %v456 = vld [vmem:[%s150 + $0x1780] sm:$0xff]
                %457 = vst [vmem:[%s151 + $0x4c0] sm:$0xff] %v456
                %v458 = vld [vmem:[%s150 + $0x17e8] sm:$0xff]
                %459 = vst [vmem:[%s151 + $0x4c8] sm:$0xff] %v458
                %v460 = vld [vmem:[%s150 + $0x17f0] sm:$0xff]
                %461 = vst [vmem:[%s151 + $0x4d0] sm:$0xff] %v460
                %v462 = vld [vmem:[%s150 + $0x17f8] sm:$0xff]
                %463 = vst [vmem:[%s151 + $0x4d8] sm:$0xff] %v462
                %v464 = vld [vmem:[%s150 + $0x1860] sm:$0xff]
                %465 = vst [vmem:[%s151 + $0x4e0] sm:$0xff] %v464
                %v466 = vld [vmem:[%s150 + $0x1868] sm:$0xff]
                %467 = vst [vmem:[%s151 + $0x4e8] sm:$0xff] %v466
                %v468 = vld [vmem:[%s150 + $0x1870] sm:$0xff]
                %469 = vst [vmem:[%s151 + $0x4f0] sm:$0xff] %v468
                %v470 = vld [vmem:[%s150 + $0x18d8] sm:$0xff]
                %471 = vst [vmem:[%s151 + $0x4f8] sm:$0xff] %v470
                %v472 = vld [vmem:[%s150 + $0x18e0] sm:$0xff]
                %473 = vst [vmem:[%s151 + $0x500] sm:$0xff] %v472
                %v474 = vld [vmem:[%s150 + $0x18e8] sm:$0xff]
                %475 = vst [vmem:[%s151 + $0x508] sm:$0xff] %v474
                %v476 = vld [vmem:[%s150 + $0x1950] sm:$0xff]
                %477 = vst [vmem:[%s151 + $0x510] sm:$0xff] %v476
                %v478 = vld [vmem:[%s150 + $0x1958] sm:$0xff]
                %479 = vst [vmem:[%s151 + $0x518] sm:$0xff] %v478
                %v480 = vld [vmem:[%s150 + $0x1960] sm:$0xff]
                %481 = vst [vmem:[%s151 + $0x520] sm:$0xff] %v480
                %v482 = vld [vmem:[%s150 + $0x19c8] sm:$0xff]
                %483 = vst [vmem:[%s151 + $0x528] sm:$0xff] %v482
                %v484 = vld [vmem:[%s150 + $0x19d0] sm:$0xff]
                %485 = vst [vmem:[%s151 + $0x530] sm:$0xff] %v484
                %v486 = vld [vmem:[%s150 + $0x19d8] sm:$0xff]
                %487 = vst [vmem:[%s151 + $0x538] sm:$0xff] %v486
                %v488 = vld [vmem:[%s150 + $0x1a40] sm:$0xff]
                %489 = vst [vmem:[%s151 + $0x540] sm:$0xff] %v488
                %v490 = vld [vmem:[%s150 + $0x1a48] sm:$0xff]
                %491 = vst [vmem:[%s151 + $0x548] sm:$0xff] %v490
                %v492 = vld [vmem:[%s150 + $0x1a50] sm:$0xff]
                %493 = vst [vmem:[%s151 + $0x550] sm:$0xff] %v492
                %v494 = vld [vmem:[%s150 + $0x1ab8] sm:$0xff]
                %495 = vst [vmem:[%s151 + $0x558] sm:$0xff] %v494
                %v496 = vld [vmem:[%s150 + $0x1ac0] sm:$0xff]
                %497 = vst [vmem:[%s151 + $0x560] sm:$0xff] %v496
                %v498 = vld [vmem:[%s150 + $0x1ac8] sm:$0xff]
                %499 = vst [vmem:[%s151 + $0x568] sm:$0xff] %v498
                %v500 = vld [vmem:[%s150 + $0x1b30] sm:$0xff]
                %501 = vst [vmem:[%s151 + $0x570] sm:$0xff] %v500
                %v502 = vld [vmem:[%s150 + $0x1b38] sm:$0xff]
                %503 = vst [vmem:[%s151 + $0x578] sm:$0xff] %v502
                %v504 = vld [vmem:[%s150 + $0x1b40] sm:$0xff]
                %505 = vst [vmem:[%s151 + $0x580] sm:$0xff] %v504
                %v506 = vld [vmem:[%s150 + $0x1ba8] sm:$0xff]
                %507 = vst [vmem:[%s151 + $0x588] sm:$0xff] %v506
                %v508 = vld [vmem:[%s150 + $0x1bb0] sm:$0xff]
                %509 = vst [vmem:[%s151 + $0x590] sm:$0xff] %v508
                %v510 = vld [vmem:[%s150 + $0x1bb8] sm:$0xff]
                %511 = vst [vmem:[%s151 + $0x598] sm:$0xff] %v510
                %v512 = vld [vmem:[%s150 + $0x1c20] sm:$0xff]
                %513 = vst [vmem:[%s151 + $0x5a0] sm:$0xff] %v512
                %v514 = vld [vmem:[%s150 + $0x1c28] sm:$0xff]
                %515 = vst [vmem:[%s151 + $0x5a8] sm:$0xff] %v514
                %v516 = vld [vmem:[%s150 + $0x1c30] sm:$0xff]
                %517 = vst [vmem:[%s151 + $0x5b0] sm:$0xff] %v516
                %v518 = vld [vmem:[%s150 + $0x1c98] sm:$0xff]
                %519 = vst [vmem:[%s151 + $0x5b8] sm:$0xff] %v518
                %v520 = vld [vmem:[%s150 + $0x1ca0] sm:$0xff]
                %521 = vst [vmem:[%s151 + $0x5c0] sm:$0xff] %v520
                %v522 = vld [vmem:[%s150 + $0x1ca8] sm:$0xff]
                %523 = vst [vmem:[%s151 + $0x5c8] sm:$0xff] %v522
                %v524 = vld [vmem:[%s150 + $0x1d10] sm:$0xff]
                %525 = vst [vmem:[%s151 + $0x5d0] sm:$0xff] %v524
                %v526 = vld [vmem:[%s150 + $0x1d18] sm:$0xff]
                %527 = vst [vmem:[%s151 + $0x5d8] sm:$0xff] %v526
                %v528 = vld [vmem:[%s150 + $0x1d20] sm:$0xff]
                %529 = vst [vmem:[%s151 + $0x5e0] sm:$0xff] %v528
                %v530 = vld [vmem:[%s150 + $0x1d88] sm:$0xff]
                %531 = vst [vmem:[%s151 + $0x5e8] sm:$0xff] %v530
                %v532 = vld [vmem:[%s150 + $0x1d90] sm:$0xff]
                %533 = vst [vmem:[%s151 + $0x5f0] sm:$0xff] %v532
                %v534 = vld [vmem:[%s150 + $0x1d98] sm:$0xff]
                %535 = vst [vmem:[%s151 + $0x5f8] sm:$0xff] %v534
              $region37: #{ae_decoder_forward.5} parent=31 // loop_footer
                %s149 = sadd.s32 1, %s145
              $region38: #{ae_decoder_forward.5} parent=31 // loop_footer_branch
                %144 = sbr.rel target = $region34
              $region39: #{ae_decoder_forward.5} parent=31 // loop_exit
                _
            $region32: #{ae_decoder_forward.5} parent=27 // pred_fallthru
              _
            // Predicated region
            $region40: #{ae_decoder_forward.5} parent=27 // pred_check
              _
            $region41: #{ae_decoder_forward.5} parent=27 // pred_check_branch
              %537 = sbr.rel target = $region43
            $region42: #{ae_decoder_forward.5} parent=27 // pred_region
              _
            $region43: #{ae_decoder_forward.5} parent=27 // pred_fallthru
              _
          $region28: #{ae_decoder_forward.5} parent=23 // pred_fallthru
            _
          %538 = vnop
        $region24: #{ae_decoder_forward.5} parent=19 // pred_fallthru
          _
        // Predicated region
        $region44: #{ae_decoder_forward.5} parent=19 // pred_check
          %p539 = pneg %p76
        $region45: #{ae_decoder_forward.5} parent=19 // pred_check_branch
          %541 = sbr.rel (%p539) target = $region47
        $region46: #{ae_decoder_forward.5} parent=19 // pred_region
          %s542 = smul.u32 3, %s9
          %p543 = scmp.lt.s32.totalorder %s542, 14
          %s544 = scalar_select %p543, %s542, 14
          %s545 = scalar_lea.vmem %s2, %s544
          %s546 = smul.u32 3, %s9
        $region47: #{ae_decoder_forward.5} parent=19 // pred_fallthru
          _
      $region20: #{ae_decoder_forward.5} parent=5 // pred_fallthru
        _
      %p547 = scmp.le.s32.totalorder 1, %s9
      %p548 = scmp.lt.s32.totalorder %s9, 6
      %p549 = pnand %p547, %p548
      %p550 = pneg %p549
      // Predicated region
      $region48: #{ae_decoder_forward.5} parent=5 // pred_check
        _
      $region49: #{ae_decoder_forward.5} parent=5 // pred_check_branch
        %552 = sbr.rel (%p549) target = $region51
      $region50: #{ae_decoder_forward.5} parent=5 // pred_region
        %s553 = ssub.s32 %s9, 1
        %s554 = sand.u32 %s43, 1
        %s555 = sand.u32 %s43, 1
        %s556 = smul.addr %s555, 1536
        %s557 = scalar_lea.vmem [#allocation2], %s556
        // Predicated region
        $region52: #{ae_decoder_forward.5} parent=50 // pred_check
          %p558 = pneg %p56
        $region53: #{ae_decoder_forward.5} parent=50 // pred_check_branch
          %560 = sbr.rel (%p558) target = $region55
        $region54: #{ae_decoder_forward.5} parent=50 // pred_region
          _
        $region55: #{ae_decoder_forward.5} parent=50 // pred_fallthru
          _
        %p561 = pneg %p30
        %p562 = pneg %p27
        %s563 = sand.u32 %s43, 1
        %s564 = sand.u32 %s43, 1
        %s565 = smul.addr %s564, 1536
        %s566 = scalar_lea.vmem [#allocation2], %s565
        %p567 = pneg %p56
        %p568 = pneg %p53
        %s569 = smul.u32 3, %s14
        %p570 = scmp.lt.s32.totalorder %s569, 14
        %s571 = scalar_select %p570, %s569, 14
        %s572 = scalar_lea.vmem %s2, %s571
        %p573 = pneg %p82
        %p574 = pneg %p79
        %p575 = pneg %p108
        %p576 = pneg %p105
        %s577 = smul.u32 3, %s14
        %p578 = scmp.lt.s32.totalorder %s577, 14
        %s579 = scalar_select %p578, %s577, 14
        %s580 = smul.addr %s579, 2
        %s581 = scalar_lea.vmem %s3, %s580
        %s582 = smul.u32 3, %s14
        %s583 = smul.u32 3, %s14
        %p584 = scmp.lt.s32.totalorder %s583, 14
        %s585 = scalar_select %p584, %s583, 14
        %s586 = scalar_lea.vmem %s2, %s585
        %s587 = smul.u32 3, %s14
        %s588 = smul.u32 3, %s14
        %p589 = scmp.lt.s32.totalorder %s588, 14
        %s590 = scalar_select %p589, %s588, 14
        %s591 = smul.addr %s590, 2
        %s592 = scalar_lea.vmem %s3, %s591
        %s593 = smul.u32 3, %s14
        %v594 = vld [vmem:[%s0] sm:$0xff]
        %v595 = vld [vmem:[%s557] sm:$0xff]
        %v596 = vld [vmem:[%s557 + $0x8] sm:$0xff]
        %v597 = vld [vmem:[%s557 + $0x10] sm:$0xff]
        %v598 = vld [vmem:[%s557 + $0x18] sm:$0xff]
        %v599 = vld [vmem:[%s557 + $0x20] sm:$0xff]
        %v600 = vld [vmem:[%s557 + $0x28] sm:$0xff]
        %v601 = vld [vmem:[%s557 + $0x30] sm:$0xff]
        %v602 = vld [vmem:[%s557 + $0x38] sm:$0xff]
        %v603 = vld [vmem:[%s557 + $0x40] sm:$0xff]
        %v604 = vld [vmem:[%s557 + $0x48] sm:$0xff]
        %v605 = vld [vmem:[%s557 + $0x50] sm:$0xff]
        %v606 = vld [vmem:[%s557 + $0x58] sm:$0xff]
        %v607 = vld [vmem:[%s557 + $0x60] sm:$0xff]
        %v608 = vld [vmem:[%s557 + $0x68] sm:$0xff]
        %v609 = vld [vmem:[%s557 + $0x70] sm:$0xff]
        %v610 = vld [vmem:[%s557 + $0x78] sm:$0xff]
        %v611 = vld [vmem:[%s557 + $0x80] sm:$0xff]
        %v612 = vld [vmem:[%s557 + $0x88] sm:$0xff]
        %v613 = vld [vmem:[%s557 + $0x90] sm:$0xff]
        %v614 = vld [vmem:[%s557 + $0x98] sm:$0xff]
        %v615 = vld [vmem:[%s557 + $0xa0] sm:$0xff]
        %v616 = vld [vmem:[%s557 + $0xa8] sm:$0xff]
        %v617 = vld [vmem:[%s557 + $0xb0] sm:$0xff]
        %v618 = vld [vmem:[%s557 + $0xb8] sm:$0xff]
        %v619 = vld [vmem:[%s557 + $0xc0] sm:$0xff]
        %v620 = vld [vmem:[%s557 + $0xc8] sm:$0xff]
        %v621 = vld [vmem:[%s557 + $0xd0] sm:$0xff]
        %v622 = vld [vmem:[%s557 + $0xd8] sm:$0xff]
        %v623 = vld [vmem:[%s557 + $0xe0] sm:$0xff]
        %v624 = vld [vmem:[%s557 + $0xe8] sm:$0xff]
        %v625 = vld [vmem:[%s557 + $0xf0] sm:$0xff]
        %v626 = vld [vmem:[%s557 + $0xf8] sm:$0xff]
        %v627 = vld [vmem:[%s557 + $0x100] sm:$0xff]
        %v628 = vld [vmem:[%s557 + $0x108] sm:$0xff]
        %v629 = vld [vmem:[%s557 + $0x110] sm:$0xff]
        %v630 = vld [vmem:[%s557 + $0x118] sm:$0xff]
        %v631 = vld [vmem:[%s557 + $0x120] sm:$0xff]
        %v632 = vld [vmem:[%s557 + $0x128] sm:$0xff]
        %v633 = vld [vmem:[%s557 + $0x130] sm:$0xff]
        %v634 = vld [vmem:[%s557 + $0x138] sm:$0xff]
        %v635 = vld [vmem:[%s557 + $0x140] sm:$0xff]
        %v636 = vld [vmem:[%s557 + $0x148] sm:$0xff]
        %v637 = vld [vmem:[%s557 + $0x150] sm:$0xff]
        %v638 = vld [vmem:[%s557 + $0x158] sm:$0xff]
        %v639 = vld [vmem:[%s557 + $0x160] sm:$0xff]
        %v640 = vld [vmem:[%s557 + $0x168] sm:$0xff]
        %v641 = vld [vmem:[%s557 + $0x170] sm:$0xff]
        %v642 = vld [vmem:[%s557 + $0x178] sm:$0xff]
        %v643 = vld [vmem:[%s557 + $0x180] sm:$0xff]
        %v644 = vld [vmem:[%s557 + $0x188] sm:$0xff]
        %v645 = vld [vmem:[%s557 + $0x190] sm:$0xff]
        %v646 = vld [vmem:[%s557 + $0x198] sm:$0xff]
        %v647 = vld [vmem:[%s557 + $0x1a0] sm:$0xff]
        %v648 = vld [vmem:[%s557 + $0x1a8] sm:$0xff]
        %v649 = vld [vmem:[%s557 + $0x1b0] sm:$0xff]
        %v650 = vld [vmem:[%s557 + $0x1b8] sm:$0xff]
        %v651 = vld [vmem:[%s557 + $0x1c0] sm:$0xff]
        %v652 = vld [vmem:[%s557 + $0x1c8] sm:$0xff]
        %v653 = vld [vmem:[%s557 + $0x1d0] sm:$0xff]
        %v654 = vld [vmem:[%s557 + $0x1d8] sm:$0xff]
        %v655 = vld [vmem:[%s557 + $0x1e0] sm:$0xff]
        %v656 = vld [vmem:[%s557 + $0x1e8] sm:$0xff]
        %v657 = vld [vmem:[%s557 + $0x1f0] sm:$0xff]
        %v658 = vld [vmem:[%s557 + $0x1f8] sm:$0xff]
        %v659 = vld [vmem:[%s557 + $0x200] sm:$0xff]
        %v660 = vld [vmem:[%s557 + $0x208] sm:$0xff]
        %v661 = vld [vmem:[%s557 + $0x210] sm:$0xff]
        %v662 = vld [vmem:[%s557 + $0x218] sm:$0xff]
        %v663 = vld [vmem:[%s557 + $0x220] sm:$0xff]
        %v664 = vld [vmem:[%s557 + $0x228] sm:$0xff]
        %v665 = vld [vmem:[%s557 + $0x230] sm:$0xff]
        %v666 = vld [vmem:[%s557 + $0x238] sm:$0xff]
        %v667 = vld [vmem:[%s557 + $0x240] sm:$0xff]
        %v668 = vld [vmem:[%s557 + $0x248] sm:$0xff]
        %v669 = vld [vmem:[%s557 + $0x250] sm:$0xff]
        %v670 = vld [vmem:[%s557 + $0x258] sm:$0xff]
        %v671 = vld [vmem:[%s557 + $0x260] sm:$0xff]
        %v672 = vld [vmem:[%s557 + $0x268] sm:$0xff]
        %v673 = vld [vmem:[%s557 + $0x270] sm:$0xff]
        %v674 = vld [vmem:[%s557 + $0x278] sm:$0xff]
        %v675 = vld [vmem:[%s557 + $0x280] sm:$0xff]
        %v676 = vld [vmem:[%s557 + $0x288] sm:$0xff]
        %v677 = vld [vmem:[%s557 + $0x290] sm:$0xff]
        %v678 = vld [vmem:[%s557 + $0x298] sm:$0xff]
        %v679 = vld [vmem:[%s557 + $0x2a0] sm:$0xff]
        %v680 = vld [vmem:[%s557 + $0x2a8] sm:$0xff]
        %v681 = vld [vmem:[%s557 + $0x2b0] sm:$0xff]
        %v682 = vld [vmem:[%s557 + $0x2b8] sm:$0xff]
        %v683 = vld [vmem:[%s557 + $0x2c0] sm:$0xff]
        %v684 = vld [vmem:[%s557 + $0x2c8] sm:$0xff]
        %v685 = vld [vmem:[%s557 + $0x2d0] sm:$0xff]
        %v686 = vld [vmem:[%s557 + $0x2d8] sm:$0xff]
        %v687 = vld [vmem:[%s557 + $0x2e0] sm:$0xff]
        %v688 = vld [vmem:[%s557 + $0x2e8] sm:$0xff]
        %v689 = vld [vmem:[%s557 + $0x2f0] sm:$0xff]
        %v690 = vld [vmem:[%s557 + $0x2f8] sm:$0xff]
        %v691 = vld [vmem:[%s557 + $0x300] sm:$0xff]
        %v692 = vld [vmem:[%s557 + $0x308] sm:$0xff]
        %v693 = vld [vmem:[%s557 + $0x310] sm:$0xff]
        %v694 = vld [vmem:[%s557 + $0x318] sm:$0xff]
        %v695 = vld [vmem:[%s557 + $0x320] sm:$0xff]
        %v696 = vld [vmem:[%s557 + $0x328] sm:$0xff]
        %v697 = vld [vmem:[%s557 + $0x330] sm:$0xff]
        %v698 = vld [vmem:[%s557 + $0x338] sm:$0xff]
        %v699 = vld [vmem:[%s557 + $0x340] sm:$0xff]
        %v700 = vld [vmem:[%s557 + $0x348] sm:$0xff]
        %v701 = vld [vmem:[%s557 + $0x350] sm:$0xff]
        %v702 = vld [vmem:[%s557 + $0x358] sm:$0xff]
        %v703 = vld [vmem:[%s557 + $0x360] sm:$0xff]
        %v704 = vld [vmem:[%s557 + $0x368] sm:$0xff]
        %v705 = vld [vmem:[%s557 + $0x370] sm:$0xff]
        %v706 = vld [vmem:[%s557 + $0x378] sm:$0xff]
        %v707 = vld [vmem:[%s557 + $0x380] sm:$0xff]
        %v708 = vld [vmem:[%s557 + $0x388] sm:$0xff]
        %v709 = vld [vmem:[%s557 + $0x390] sm:$0xff]
        %v710 = vld [vmem:[%s557 + $0x398] sm:$0xff]
        %v711 = vld [vmem:[%s557 + $0x3a0] sm:$0xff]
        %v712 = vld [vmem:[%s557 + $0x3a8] sm:$0xff]
        %v713 = vld [vmem:[%s557 + $0x3b0] sm:$0xff]
        %v714 = vld [vmem:[%s557 + $0x3b8] sm:$0xff]
        %v715 = vld [vmem:[%s557 + $0x3c0] sm:$0xff]
        %v716 = vld [vmem:[%s557 + $0x3c8] sm:$0xff]
        %v717 = vld [vmem:[%s557 + $0x3d0] sm:$0xff]
        %v718 = vld [vmem:[%s557 + $0x3d8] sm:$0xff]
        %v719 = vld [vmem:[%s557 + $0x3e0] sm:$0xff]
        %v720 = vld [vmem:[%s557 + $0x3e8] sm:$0xff]
        %v721 = vld [vmem:[%s557 + $0x3f0] sm:$0xff]
        %v722 = vld [vmem:[%s557 + $0x3f8] sm:$0xff]
        %v723 = vld [vmem:[%s557 + $0x400] sm:$0xff]
        %v724 = vld [vmem:[%s557 + $0x408] sm:$0xff]
        %v725 = vld [vmem:[%s557 + $0x410] sm:$0xff]
        %v726 = vld [vmem:[%s557 + $0x418] sm:$0xff]
        %v727 = vld [vmem:[%s557 + $0x420] sm:$0xff]
        %v728 = vld [vmem:[%s557 + $0x428] sm:$0xff]
        %v729 = vld [vmem:[%s557 + $0x430] sm:$0xff]
        %v730 = vld [vmem:[%s557 + $0x438] sm:$0xff]
        %v731 = vld [vmem:[%s557 + $0x440] sm:$0xff]
        %v732 = vld [vmem:[%s557 + $0x448] sm:$0xff]
        %v733 = vld [vmem:[%s557 + $0x450] sm:$0xff]
        %v734 = vld [vmem:[%s557 + $0x458] sm:$0xff]
        %v735 = vld [vmem:[%s557 + $0x460] sm:$0xff]
        %v736 = vld [vmem:[%s557 + $0x468] sm:$0xff]
        %v737 = vld [vmem:[%s557 + $0x470] sm:$0xff]
        %v738 = vld [vmem:[%s557 + $0x478] sm:$0xff]
        %v739 = vld [vmem:[%s557 + $0x480] sm:$0xff]
        %v740 = vld [vmem:[%s557 + $0x488] sm:$0xff]
        %v741 = vld [vmem:[%s557 + $0x490] sm:$0xff]
        %v742 = vld [vmem:[%s557 + $0x498] sm:$0xff]
        %v743 = vld [vmem:[%s557 + $0x4a0] sm:$0xff]
        %v744 = vld [vmem:[%s557 + $0x4a8] sm:$0xff]
        %v745 = vld [vmem:[%s557 + $0x4b0] sm:$0xff]
        %v746 = vld [vmem:[%s557 + $0x4b8] sm:$0xff]
        %v747 = vld [vmem:[%s557 + $0x4c0] sm:$0xff]
        %v748 = vld [vmem:[%s557 + $0x4c8] sm:$0xff]
        %v749 = vld [vmem:[%s557 + $0x4d0] sm:$0xff]
        %v750 = vld [vmem:[%s557 + $0x4d8] sm:$0xff]
        %v751 = vld [vmem:[%s557 + $0x4e0] sm:$0xff]
        %v752 = vld [vmem:[%s557 + $0x4e8] sm:$0xff]
        %v753 = vld [vmem:[%s557 + $0x4f0] sm:$0xff]
        %v754 = vld [vmem:[%s557 + $0x4f8] sm:$0xff]
        %v755 = vld [vmem:[%s557 + $0x500] sm:$0xff]
        %v756 = vld [vmem:[%s557 + $0x508] sm:$0xff]
        %v757 = vld [vmem:[%s557 + $0x510] sm:$0xff]
        %v758 = vld [vmem:[%s557 + $0x518] sm:$0xff]
        %v759 = vld [vmem:[%s557 + $0x520] sm:$0xff]
        %v760 = vld [vmem:[%s557 + $0x528] sm:$0xff]
        %v761 = vld [vmem:[%s557 + $0x530] sm:$0xff]
        %v762 = vld [vmem:[%s557 + $0x538] sm:$0xff]
        %v763 = vld [vmem:[%s557 + $0x540] sm:$0xff]
        %v764 = vld [vmem:[%s557 + $0x548] sm:$0xff]
        %v765 = vld [vmem:[%s557 + $0x550] sm:$0xff]
        %v766 = vld [vmem:[%s557 + $0x558] sm:$0xff]
        %v767 = vld [vmem:[%s557 + $0x560] sm:$0xff]
        %v768 = vld [vmem:[%s557 + $0x568] sm:$0xff]
        %v769 = vld [vmem:[%s557 + $0x570] sm:$0xff]
        %v770 = vld [vmem:[%s557 + $0x578] sm:$0xff]
        %v771 = vld [vmem:[%s557 + $0x580] sm:$0xff]
        %v772 = vld [vmem:[%s557 + $0x588] sm:$0xff]
        %v773 = vld [vmem:[%s557 + $0x590] sm:$0xff]
        %v774 = vld [vmem:[%s557 + $0x598] sm:$0xff]
        %v775 = vld [vmem:[%s557 + $0x5a0] sm:$0xff]
        %v776 = vld [vmem:[%s557 + $0x5a8] sm:$0xff]
        %v777 = vld [vmem:[%s557 + $0x5b0] sm:$0xff]
        %v778 = vld [vmem:[%s557 + $0x5b8] sm:$0xff]
        %v779 = vld [vmem:[%s557 + $0x5c0] sm:$0xff]
        %v780 = vld [vmem:[%s557 + $0x5c8] sm:$0xff]
        %v781 = vld [vmem:[%s557 + $0x5d0] sm:$0xff]
        %v782 = vld [vmem:[%s557 + $0x5d8] sm:$0xff]
        %v783 = vld [vmem:[%s557 + $0x5e0] sm:$0xff]
        %v784 = vld [vmem:[%s557 + $0x5e8] sm:$0xff]
        %v785 = vld [vmem:[%s557 + $0x5f0] sm:$0xff]
        %v786 = vld [vmem:[%s557 + $0x5f8] sm:$0xff]
        %v787 = vld [vmem:[%s586] sm:$0x7]
        %v789 = vlaneseq
        %v790 = vshrl.u32 %v789, 7
        %v791 = vsub.s32 0, %v790
        %v792 = vrot.slane %v787, %v791
        %v793 = vlaneseq
        %v794 = vshrl.u32 %v793, 7
        %v795 = vsub.s32 1, %v794
        %v796 = vrot.slane %v787, %v795
        %v797 = vlaneseq
        %v798 = vshrl.u32 %v797, 7
        %v799 = vsub.s32 2, %v798
        %v800 = vrot.slane %v787, %v799
        %v805 = vcombine.high %v594, %v594
        %v807 = vunpack.c.l.s4 1983009808
        %v808 = vunpack.c.0.s8 %v807
        %v809 = vlaneseq
        %v810 = vshrl.u32 %v809, 7
        %v811 = vsub.s32 %v808, %v810
        %v812 = vrot.slane %v594, %v811
        %v814 = vunpack.c.l.s4 1983009808
        %v815 = vunpack.c.0.s8 %v814
        %v816 = vlaneseq
        %v817 = vshrl.u32 %v816, 7
        %v818 = vsub.s32 %v815, %v817
        %v819 = vrot.slane %v805, %v818
        %v820 = vcombine.high %v812, %v812
        %v821 = vcombine.high %v819, %v819
        %826 = vmatprep.subr.mxu0 %v596
        %827 = vmatpush1.msra.mxu0 %v595
        %828 = vmatprep.subr.mxu0 %v599
        %829 = vmatpush1.msra.mxu0 %v598
        %830 = vmatprep.subr.mxu0 %v602
        %831 = vmatpush1.msra.mxu0 %v601
        %832 = vmatprep.subr.mxu0 %v605
        %833 = vmatpush1.msra.mxu0 %v604
        %834 = vmatprep.subr.mxu0 %v608
        %835 = vmatpush1.msra.mxu0 %v607
        %836 = vmatprep.subr.mxu0 %v611
        %837 = vmatpush1.msra.mxu0 %v610
        %838 = vmatprep.subr.mxu0 %v614
        %839 = vmatpush1.msra.mxu0 %v613
        %840 = vmatprep.subr.mxu0 %v617
        %841 = vmatpush1.msra.mxu0 %v616
        %842 = vmatprep.subr.mxu0 %v620
        %843 = vmatpush1.msra.mxu0 %v619
        %844 = vmatprep.subr.mxu0 %v623
        %845 = vmatpush1.msra.mxu0 %v622
        %846 = vmatprep.subr.mxu0 %v626
        %847 = vmatpush1.msra.mxu0 %v625
        %848 = vmatprep.subr.mxu0 %v629
        %849 = vmatpush1.msra.mxu0 %v628
        %850 = vmatprep.subr.mxu0 %v632
        %851 = vmatpush1.msra.mxu0 %v631
        %852 = vmatprep.subr.mxu0 %v635
        %853 = vmatpush1.msra.mxu0 %v634
        %854 = vmatprep.subr.mxu0 %v638
        %855 = vmatpush1.msra.mxu0 %v637
        %856 = vmatprep.subr.mxu0 %v641
        %857 = vmatpush1.msra.mxu0 %v640
        %858 = vmatprep.subr.mxu0 %v644
        %859 = vmatpush1.msra.mxu0 %v643
        %860 = vmatprep.subr.mxu0 %v647
        %861 = vmatpush1.msra.mxu0 %v646
        %862 = vmatprep.subr.mxu0 %v650
        %863 = vmatpush1.msra.mxu0 %v649
        %864 = vmatprep.subr.mxu0 %v653
        %865 = vmatpush1.msra.mxu0 %v652
        %866 = vmatprep.subr.mxu0 %v656
        %867 = vmatpush1.msra.mxu0 %v655
        %868 = vmatprep.subr.mxu0 %v659
        %869 = vmatpush1.msra.mxu0 %v658
        %870 = vmatprep.subr.mxu0 %v662
        %871 = vmatpush1.msra.mxu0 %v661
        %872 = vmatprep.subr.mxu0 %v665
        %873 = vmatpush1.msra.mxu0 %v664
        %874 = vmatprep.subr.mxu0 %v668
        %875 = vmatpush1.msra.mxu0 %v667
        %876 = vmatprep.subr.mxu0 %v671
        %877 = vmatpush1.msra.mxu0 %v670
        %878 = vmatprep.subr.mxu0 %v674
        %879 = vmatpush1.msra.mxu0 %v673
        %880 = vmatprep.subr.mxu0 %v677
        %881 = vmatpush1.msra.mxu0 %v676
        %882 = vmatprep.subr.mxu0 %v680
        %883 = vmatpush1.msra.mxu0 %v679
        %884 = vmatprep.subr.mxu0 %v683
        %885 = vmatpush1.msra.mxu0 %v682
        %886 = vmatprep.subr.mxu0 %v686
        %887 = vmatpush1.msra.mxu0 %v685
        %888 = vmatprep.subr.mxu0 %v689
        %889 = vmatpush1.msra.mxu0 %v688
        %890 = vmatprep.mubr.f32.mxu0 %v820
        %891 = vmatmul.mubr.f32.gmra.mrb[0].mxu0 %v812
        %v892 = vpop.f32.mrb[0].mxu0
        %v893 = vadd.f32 %v792, %v892
        %v894 = vpop.f32.mrb[0].mxu0
        %v895 = vadd.f32 %v796, %v894
        %896 = vdwg.mxu0
        %897 = vmatprep.subr.mxu0 %v692
        %898 = vmatpush1.msra.mxu0 %v691
        %899 = vmatprep.subr.mxu0 %v695
        %900 = vmatpush1.msra.mxu0 %v694
        %901 = vmatprep.subr.mxu0 %v698
        %902 = vmatpush1.msra.mxu0 %v697
        %903 = vmatprep.subr.mxu0 %v701
        %904 = vmatpush1.msra.mxu0 %v700
        %905 = vmatprep.subr.mxu0 %v704
        %906 = vmatpush1.msra.mxu0 %v703
        %907 = vmatprep.subr.mxu0 %v707
        %908 = vmatpush1.msra.mxu0 %v706
        %909 = vmatprep.subr.mxu0 %v710
        %910 = vmatpush1.msra.mxu0 %v709
        %911 = vmatprep.subr.mxu0 %v713
        %912 = vmatpush1.msra.mxu0 %v712
        %913 = vmatprep.subr.mxu0 %v716
        %914 = vmatpush1.msra.mxu0 %v715
        %915 = vmatprep.subr.mxu0 %v719
        %916 = vmatpush1.msra.mxu0 %v718
        %917 = vmatprep.subr.mxu0 %v722
        %918 = vmatpush1.msra.mxu0 %v721
        %919 = vmatprep.subr.mxu0 %v725
        %920 = vmatpush1.msra.mxu0 %v724
        %921 = vmatprep.subr.mxu0 %v728
        %922 = vmatpush1.msra.mxu0 %v727
        %923 = vmatprep.subr.mxu0 %v731
        %924 = vmatpush1.msra.mxu0 %v730
        %925 = vmatprep.subr.mxu0 %v734
        %926 = vmatpush1.msra.mxu0 %v733
        %927 = vmatprep.subr.mxu0 %v737
        %928 = vmatpush1.msra.mxu0 %v736
        %929 = vmatprep.subr.mxu0 %v740
        %930 = vmatpush1.msra.mxu0 %v739
        %931 = vmatprep.subr.mxu0 %v743
        %932 = vmatpush1.msra.mxu0 %v742
        %933 = vmatprep.subr.mxu0 %v746
        %934 = vmatpush1.msra.mxu0 %v745
        %935 = vmatprep.subr.mxu0 %v749
        %936 = vmatpush1.msra.mxu0 %v748
        %937 = vmatprep.subr.mxu0 %v752
        %938 = vmatpush1.msra.mxu0 %v751
        %939 = vmatprep.subr.mxu0 %v755
        %940 = vmatpush1.msra.mxu0 %v754
        %941 = vmatprep.subr.mxu0 %v758
        %942 = vmatpush1.msra.mxu0 %v757
        %943 = vmatprep.subr.mxu0 %v761
        %944 = vmatpush1.msra.mxu0 %v760
        %945 = vmatprep.subr.mxu0 %v764
        %946 = vmatpush1.msra.mxu0 %v763
        %947 = vmatprep.subr.mxu0 %v767
        %948 = vmatpush1.msra.mxu0 %v766
        %949 = vmatprep.subr.mxu0 %v770
        %950 = vmatpush1.msra.mxu0 %v769
        %951 = vmatprep.subr.mxu0 %v773
        %952 = vmatpush1.msra.mxu0 %v772
        %953 = vmatprep.subr.mxu0 %v776
        %954 = vmatpush1.msra.mxu0 %v775
        %955 = vmatprep.subr.mxu0 %v779
        %956 = vmatpush1.msra.mxu0 %v778
        %957 = vmatprep.subr.mxu0 %v782
        %958 = vmatpush1.msra.mxu0 %v781
        %959 = vmatprep.subr.mxu0 %v785
        %960 = vmatpush1.msra.mxu0 %v784
        %961 = vmatprep.mubr.f32.mxu0 %v821
        %962 = vmatmul.mubr.f32.gmra.mrb[0].mxu0 %v819
        %v963 = vpop.f32.mrb[0].mxu0
        %v964 = vadd.f32 %v893, %v963
        %v965 = vpop.f32.mrb[0].mxu0
        %v966 = vadd.f32 %v895, %v965
        %967 = vdwg.mxu0
        %968 = vmatprep.subr.mxu0 0.0
        %969 = vmatpush1.msra.mxu0 %v597
        %970 = vmatprep.subr.mxu0 0.0
        %971 = vmatpush1.msra.mxu0 %v600
        %972 = vmatprep.subr.mxu0 0.0
        %973 = vmatpush1.msra.mxu0 %v603
        %974 = vmatprep.subr.mxu0 0.0
        %975 = vmatpush1.msra.mxu0 %v606
        %976 = vmatprep.subr.mxu0 0.0
        %977 = vmatpush1.msra.mxu0 %v609
        %978 = vmatprep.subr.mxu0 0.0
        %979 = vmatpush1.msra.mxu0 %v612
        %980 = vmatprep.subr.mxu0 0.0
        %981 = vmatpush1.msra.mxu0 %v615
        %982 = vmatprep.subr.mxu0 0.0
        %983 = vmatpush1.msra.mxu0 %v618
        %984 = vmatprep.subr.mxu0 0.0
        %985 = vmatpush1.msra.mxu0 %v621
        %986 = vmatprep.subr.mxu0 0.0
        %987 = vmatpush1.msra.mxu0 %v624
        %988 = vmatprep.subr.mxu0 0.0
        %989 = vmatpush1.msra.mxu0 %v627
        %990 = vmatprep.subr.mxu0 0.0
        %991 = vmatpush1.msra.mxu0 %v630
        %992 = vmatprep.subr.mxu0 0.0
        %993 = vmatpush1.msra.mxu0 %v633
        %994 = vmatprep.subr.mxu0 0.0
        %995 = vmatpush1.msra.mxu0 %v636
        %996 = vmatprep.subr.mxu0 0.0
        %997 = vmatpush1.msra.mxu0 %v639
        %998 = vmatprep.subr.mxu0 0.0
        %999 = vmatpush1.msra.mxu0 %v642
        %1000 = vmatprep.subr.mxu0 0.0
        %1001 = vmatpush1.msra.mxu0 %v645
        %1002 = vmatprep.subr.mxu0 0.0
        %1003 = vmatpush1.msra.mxu0 %v648
        %1004 = vmatprep.subr.mxu0 0.0
        %1005 = vmatpush1.msra.mxu0 %v651
        %1006 = vmatprep.subr.mxu0 0.0
        %1007 = vmatpush1.msra.mxu0 %v654
        %1008 = vmatprep.subr.mxu0 0.0
        %1009 = vmatpush1.msra.mxu0 %v657
        %1010 = vmatprep.subr.mxu0 0.0
        %1011 = vmatpush1.msra.mxu0 %v660
        %1012 = vmatprep.subr.mxu0 0.0
        %1013 = vmatpush1.msra.mxu0 %v663
        %1014 = vmatprep.subr.mxu0 0.0
        %1015 = vmatpush1.msra.mxu0 %v666
        %1016 = vmatprep.subr.mxu0 0.0
        %1017 = vmatpush1.msra.mxu0 %v669
        %1018 = vmatprep.subr.mxu0 0.0
        %1019 = vmatpush1.msra.mxu0 %v672
        %1020 = vmatprep.subr.mxu0 0.0
        %1021 = vmatpush1.msra.mxu0 %v675
        %1022 = vmatprep.subr.mxu0 0.0
        %1023 = vmatpush1.msra.mxu0 %v678
        %1024 = vmatprep.subr.mxu0 0.0
        %1025 = vmatpush1.msra.mxu0 %v681
        %1026 = vmatprep.subr.mxu0 0.0
        %1027 = vmatpush1.msra.mxu0 %v684
        %1028 = vmatprep.subr.mxu0 0.0
        %1029 = vmatpush1.msra.mxu0 %v687
        %1030 = vmatprep.subr.mxu0 0.0
        %1031 = vmatpush1.msra.mxu0 %v690
        %1032 = vmatprep.mubr.f32.mxu0 %v820
        %1033 = vmatmul.mubr.f32.gmra.mrb[0].mxu0 %v812
        %v1034 = vpop.f32.mrb[0].mxu0
        %v1035 = vadd.f32 %v800, %v1034
        %v1036 = vpop.f32.mrb[0].mxu0
        %1037 = vdwg.mxu0
        %1038 = vmatprep.subr.mxu0 0.0
        %1039 = vmatpush1.msra.mxu0 %v693
        %1040 = vmatprep.subr.mxu0 0.0
        %1041 = vmatpush1.msra.mxu0 %v696
        %1042 = vmatprep.subr.mxu0 0.0
        %1043 = vmatpush1.msra.mxu0 %v699
        %1044 = vmatprep.subr.mxu0 0.0
        %1045 = vmatpush1.msra.mxu0 %v702
        %1046 = vmatprep.subr.mxu0 0.0
        %1047 = vmatpush1.msra.mxu0 %v705
        %1048 = vmatprep.subr.mxu0 0.0
        %1049 = vmatpush1.msra.mxu0 %v708
        %1050 = vmatprep.subr.mxu0 0.0
        %1051 = vmatpush1.msra.mxu0 %v711
        %1052 = vmatprep.subr.mxu0 0.0
        %1053 = vmatpush1.msra.mxu0 %v714
        %1054 = vmatprep.subr.mxu0 0.0
        %1055 = vmatpush1.msra.mxu0 %v717
        %1056 = vmatprep.subr.mxu0 0.0
        %1057 = vmatpush1.msra.mxu0 %v720
        %1058 = vmatprep.subr.mxu0 0.0
        %1059 = vmatpush1.msra.mxu0 %v723
        %1060 = vmatprep.subr.mxu0 0.0
        %1061 = vmatpush1.msra.mxu0 %v726
        %1062 = vmatprep.subr.mxu0 0.0
        %1063 = vmatpush1.msra.mxu0 %v729
        %1064 = vmatprep.subr.mxu0 0.0
        %1065 = vmatpush1.msra.mxu0 %v732
        %1066 = vmatprep.subr.mxu0 0.0
        %1067 = vmatpush1.msra.mxu0 %v735
        %1068 = vmatprep.subr.mxu0 0.0
        %1069 = vmatpush1.msra.mxu0 %v738
        %1070 = vmatprep.subr.mxu0 0.0
        %1071 = vmatpush1.msra.mxu0 %v741
        %1072 = vmatprep.subr.mxu0 0.0
        %1073 = vmatpush1.msra.mxu0 %v744
        %1074 = vmatprep.subr.mxu0 0.0
        %1075 = vmatpush1.msra.mxu0 %v747
        %1076 = vmatprep.subr.mxu0 0.0
        %1077 = vmatpush1.msra.mxu0 %v750
        %1078 = vmatprep.subr.mxu0 0.0
        %1079 = vmatpush1.msra.mxu0 %v753
        %1080 = vmatprep.subr.mxu0 0.0
        %1081 = vmatpush1.msra.mxu0 %v756
        %1082 = vmatprep.subr.mxu0 0.0
        %1083 = vmatpush1.msra.mxu0 %v759
        %1084 = vmatprep.subr.mxu0 0.0
        %1085 = vmatpush1.msra.mxu0 %v762
        %1086 = vmatprep.subr.mxu0 0.0
        %1087 = vmatpush1.msra.mxu0 %v765
        %1088 = vmatprep.subr.mxu0 0.0
        %1089 = vmatpush1.msra.mxu0 %v768
        %1090 = vmatprep.subr.mxu0 0.0
        %1091 = vmatpush1.msra.mxu0 %v771
        %1092 = vmatprep.subr.mxu0 0.0
        %1093 = vmatpush1.msra.mxu0 %v774
        %1094 = vmatprep.subr.mxu0 0.0
        %1095 = vmatpush1.msra.mxu0 %v777
        %1096 = vmatprep.subr.mxu0 0.0
        %1097 = vmatpush1.msra.mxu0 %v780
        %1098 = vmatprep.subr.mxu0 0.0
        %1099 = vmatpush1.msra.mxu0 %v783
        %1100 = vmatprep.subr.mxu0 0.0
        %1101 = vmatpush1.msra.mxu0 %v786
        %1102 = vmatprep.mubr.f32.mxu0 %v821
        %1103 = vmatmul.mubr.f32.gmra.mrb[0].mxu0 %v819
        %v1104 = vpop.f32.mrb[0].mxu0
        %v1105 = vadd.f32 %v1035, %v1104
        %v1106 = vpop.f32.mrb[0].mxu0
        %1107 = vdwg.mxu0
        %v1108 = vmax.f32 %v964, 0.0
        %v1109 = vmax.f32 %v966, 0.0
        %v1110 = vmax.f32 %v1105, 0.0
        %v1114 = vcombine.low %v1108, %v1109
        %v1116 = vunpack.c.l.s4 1983009808
        %v1117 = vunpack.c.0.s8 %v1116
        %v1118 = vlaneseq
        %v1119 = vshrl.u32 %v1118, 7
        %v1120 = vsub.s32 %v1117, %v1119
        %v1121 = vrot.slane %v1114, %v1120
        %v1123 = vunpack.c.l.s4 1983009808
        %v1124 = vunpack.c.0.s8 %v1123
        %v1125 = vlaneseq
        %v1126 = vshrl.u32 %v1125, 7
        %v1127 = vsub.s32 %v1124, %v1126
        %v1128 = vrot.slane %v1110, %v1127
        %v1129 = vcombine.low %v1121, %v1128
        %1131 = vst [vmem:[%s592] sm:$0x3f] %v1129
        %s1132 = smul.u32 3, %s14
        %p1133 = scmp.lt.s32.totalorder %s1132, 14
        %s1134 = scalar_select %p1133, %s1132, 14
        %s1135 = smul.addr %s1134, 2
        %s1136 = scalar_lea.vmem %s3, %s1135
        // Predicated region
        $region56: #{ae_decoder_forward.5} parent=50 // pred_check
          %p1137 = pneg %p105
        $region57: #{ae_decoder_forward.5} parent=50 // pred_check_branch
          %1139 = sbr.rel (%p1137) target = $region59
        $region58: #{ae_decoder_forward.5} parent=50 // pred_region
          %s1140 = smul.u32 3, %s14
        $region59: #{ae_decoder_forward.5} parent=50 // pred_fallthru
          _
      $region51: #{ae_decoder_forward.5} parent=5 // pred_fallthru
        _
      %p1141 = scmp.le.s32.totalorder 2, %s9
      // Predicated region
      $region60: #{ae_decoder_forward.5} parent=5 // pred_check
        %p1142 = pneg %p1141
      $region61: #{ae_decoder_forward.5} parent=5 // pred_check_branch
        %1144 = sbr.rel (%p1142) target = $region63
      $region62: #{ae_decoder_forward.5} parent=5 // pred_region
        %s1145 = ssub.s32 %s9, 2
        // Predicated region
        $region64: #{ae_decoder_forward.5} parent=62 // pred_check
          %p1146 = pneg %p111
        $region65: #{ae_decoder_forward.5} parent=62 // pred_check_branch
          %1148 = sbr.rel (%p1146) target = $region67
        $region66: #{ae_decoder_forward.5} parent=62 // pred_region
          %s1149 = smul.u32 3, %s15
          %p1150 = scmp.lt.s32.totalorder %s1149, 14
          %s1151 = scalar_select %p1150, %s1149, 14
          %s1152 = smul.addr %s1151, 2
          %s1153 = scalar_lea.vmem %s3, %s1152
        $region67: #{ae_decoder_forward.5} parent=62 // pred_fallthru
          _
      $region63: #{ae_decoder_forward.5} parent=5 // pred_fallthru
        _
    $region6: #{ae_decoder_forward.5} parent=1 // loop_footer
      %s13 = sadd.s32 1, %s9
    $region7: #{ae_decoder_forward.5} parent=1 // loop_footer_branch
      %8 = sbr.rel target = $region3
    $region8: #{ae_decoder_forward.5} parent=1 // loop_exit
      _

// kernel: ae_decoder_forward.6
$region0: #{ae_decoder_forward.6}
  #allocation0 [shape = 'u32[]', space=smem, size = 0x4, offset = 0x4, fixed_abs, tag = 'smem constant byte address 0x4 - core index']
  #allocation1 [shape = 'u32[144,128]{1,0:T(1,128)}', space=vmem, size = 0x12000, scoped, tag = 'internal scratch']
  #allocation2 [shape = 'f32[6,10,128]{2,1,0:T(8,128)}', space=vmem, size = 0xc000, scoped, tag = 'scratch operand']
  %s0 = inlined_call_operand.vmem [shape: f32[2,8,12,128], index: 0, kind: input, shape index: {}]
  %s1 = inlined_call_operand.vmem [shape: f32[9,128,128], index: 1, kind: input, shape index: {}]
  %s2 = inlined_call_operand.vmem [shape: f32[1,128], index: 2, kind: input, shape index: {}]
  %s3 = inlined_call_operand.vmem [shape: f32[2,6,10,128], index: 3, kind: output, shape index: {}]
  %s4 = sld [smem:[#allocation0]]
  $region52: #{ae_decoder_forward.6} parent=0
    _
  %s6 = ssub.s32 1, %s4
  %s7 = scalar_select 0, %s6, %s4
  loop: start=0, step=1, limit=4
  $region2: #{ae_decoder_forward.6} parent=0 // loop_pre_header
    _
  $region3: #{ae_decoder_forward.6} parent=0 // loop_header
    %s9 = sphi 0, %s13
    %p10 = scmp.ge.s32.totalorder %s9, 4
    %s19 = sphi 0, %s21
    %s22 = sphi 0, %s19
    %s23 = sphi 0, %s22
    %s39 = sphi 0, %s23
    %s43 = sphi 0, %s43
    %s45 = sphi 0, %s43
    %s46 = sphi 0, %s45
    %s60 = sphi 0, %s46
    %s64 = sphi 0, %s64
    %s66 = sphi 0, %s64
    %s67 = sphi 0, %s66
    %s81 = sphi 0, %s67
    %s87 = sphi 0, %s89
    %s90 = sphi 0, %s87
    %s91 = sphi 0, %s90
    %s107 = sphi 0, %s91
  $region4: #{ae_decoder_forward.6} parent=0 // loop_header_branch
    %12 = sbr.rel (%p10) target = $region8
  $region5: #{ae_decoder_forward.6} parent=0 // loop_body
    %s14 = ssub.s32 %s9, 1
    %s15 = ssub.s32 %s9, 2
    %s16 = sadd.s32 %s9, 1
    %s17 = ssub.s32 %s9, %s16
    %p18 = scmp.eq.s32.totalorder %s17, 0
    %s20 = sadd.s32 %s19, 1
    %s21 = scalar_select %p18, %s19, %s20
    %p24 = pneg %p18
    %p25 = scmp.eq.s32.totalorder %s9, 1
    %p26 = por %p24, %p25
    %p27 = scmp.ne.s32.totalorder %s19, %s22
    %p28 = scmp.eq.s32.totalorder %s9, 0
    %p29 = por %p27, %p28
    %p30 = scmp.ne.s32.totalorder %s19, %s22
    %p31 = scmp.eq.s32.totalorder %s14, 1
    %p32 = por %p30, %p31
    %p33 = scmp.ne.s32.totalorder %s22, %s23
    %p34 = scmp.eq.s32.totalorder %s14, 0
    %p35 = por %p33, %p34
    %p36 = scmp.ne.s32.totalorder %s22, %s23
    %p37 = scmp.eq.s32.totalorder %s15, 1
    %p38 = por %p36, %p37
    %p40 = scmp.ne.s32.totalorder %s23, %s39
    %p41 = scmp.eq.s32.totalorder %s15, 0
    %p42 = por %p40, %p41
    %s44 = sadd.s32 %s43, 1
    %p47 = scmp.eq.s32.totalorder %s9, 1
    %p48 = scmp.ne.s32.totalorder %s43, %s45
    %p49 = scmp.eq.s32.totalorder %s9, 0
    %p50 = por %p48, %p49
    %p51 = scmp.ne.s32.totalorder %s43, %s45
    %p52 = scmp.eq.s32.totalorder %s14, 1
    %p53 = por %p51, %p52
    %p54 = scmp.ne.s32.totalorder %s45, %s46
    %p55 = scmp.eq.s32.totalorder %s14, 0
    %p56 = por %p54, %p55
    %p57 = scmp.ne.s32.totalorder %s45, %s46
    %p58 = scmp.eq.s32.totalorder %s15, 1
    %p59 = por %p57, %p58
    %p61 = scmp.ne.s32.totalorder %s46, %s60
    %p62 = scmp.eq.s32.totalorder %s15, 0
    %p63 = por %p61, %p62
    %s65 = sadd.s32 %s64, 1
    %p68 = scmp.eq.s32.totalorder %s9, 1
    %p69 = scmp.ne.s32.totalorder %s64, %s66
    %p70 = scmp.eq.s32.totalorder %s9, 0
    %p71 = por %p69, %p70
    %p72 = scmp.ne.s32.totalorder %s64, %s66
    %p73 = scmp.eq.s32.totalorder %s14, 1
    %p74 = por %p72, %p73
    %p75 = scmp.ne.s32.totalorder %s66, %s67
    %p76 = scmp.eq.s32.totalorder %s14, 0
    %p77 = por %p75, %p76
    %p78 = scmp.ne.s32.totalorder %s66, %s67
    %p79 = scmp.eq.s32.totalorder %s15, 1
    %p80 = por %p78, %p79
    %p82 = scmp.ne.s32.totalorder %s67, %s81
    %p83 = scmp.eq.s32.totalorder %s15, 0
    %p84 = por %p82, %p83
    %s85 = ssub.s32 %s9, %s16
    %p86 = scmp.eq.s32.totalorder %s85, 0
    %s88 = sadd.s32 %s87, 1
    %s89 = scalar_select %p86, %s87, %s88
    %p92 = pneg %p86
    %p93 = scmp.eq.s32.totalorder %s9, 1
    %p94 = por %p92, %p93
    %p95 = scmp.ne.s32.totalorder %s87, %s90
    %p96 = scmp.eq.s32.totalorder %s9, 0
    %p97 = por %p95, %p96
    %p98 = scmp.ne.s32.totalorder %s87, %s90
    %p99 = scmp.eq.s32.totalorder %s14, 1
    %p100 = por %p98, %p99
    %p101 = scmp.ne.s32.totalorder %s90, %s91
    %p102 = scmp.eq.s32.totalorder %s14, 0
    %p103 = por %p101, %p102
    %p104 = scmp.ne.s32.totalorder %s90, %s91
    %p105 = scmp.eq.s32.totalorder %s15, 1
    %p106 = por %p104, %p105
    %p108 = scmp.ne.s32.totalorder %s91, %s107
    %p109 = scmp.eq.s32.totalorder %s15, 0
    %p110 = por %p108, %p109
    %p111 = scmp.le.s32.totalorder 1, %s9
    %p112 = scmp.lt.s32.totalorder %s9, 3
    %p113 = pnand %p111, %p112
    %p114 = pneg %p113
    // Predicated region
    $region9: #{ae_decoder_forward.6} parent=5 // pred_check
      _
    $region10: #{ae_decoder_forward.6} parent=5 // pred_check_branch
      %116 = sbr.rel (%p113) target = $region12
    $region11: #{ae_decoder_forward.6} parent=5 // pred_region
      %s117 = ssub.s32 %s9, 1
      // Predicated region
      $region13: #{ae_decoder_forward.6} parent=11 // pred_check
        %p118 = pneg %p56
      $region14: #{ae_decoder_forward.6} parent=11 // pred_check_branch
        %120 = sbr.rel (%p118) target = $region16
      $region15: #{ae_decoder_forward.6} parent=11 // pred_region
        _
      $region16: #{ae_decoder_forward.6} parent=11 // pred_fallthru
        _
      // Predicated region
      $region17: #{ae_decoder_forward.6} parent=11 // pred_check
        %p121 = pneg %p77
      $region18: #{ae_decoder_forward.6} parent=11 // pred_check_branch
        %123 = sbr.rel (%p121) target = $region20
      $region19: #{ae_decoder_forward.6} parent=11 // pred_region
        _
      $region20: #{ae_decoder_forward.6} parent=11 // pred_fallthru
        _
    $region12: #{ae_decoder_forward.6} parent=5 // pred_fallthru
      _
    %p124 = scmp.lt.s32.totalorder %s9, 2
    // Predicated region
    $region21: #{ae_decoder_forward.6} parent=5 // pred_check
      %p125 = pneg %p124
    $region22: #{ae_decoder_forward.6} parent=5 // pred_check_branch
      %127 = sbr.rel (%p125) target = $region24
    $region23: #{ae_decoder_forward.6} parent=5 // pred_region
      // Predicated region
      $region25: #{ae_decoder_forward.6} parent=23 // pred_check
        %p128 = pneg %p29
      $region26: #{ae_decoder_forward.6} parent=23 // pred_check_branch
        %130 = sbr.rel (%p128) target = $region28
      $region27: #{ae_decoder_forward.6} parent=23 // pred_region
        %p131 = scmp.lt.s32.totalorder %s9, 1
        %s132 = scalar_select %p131, %s9, 1
        %s133 = smul.addr %s132, 16
        %s134 = smul.addr %s133, 8
        %s135 = scalar_lea.vmem %s0, %s134
      $region28: #{ae_decoder_forward.6} parent=23 // pred_fallthru
        _
    $region24: #{ae_decoder_forward.6} parent=5 // pred_fallthru
      _
    %p136 = scmp.le.s32.totalorder 1, %s9
    %p137 = scmp.lt.s32.totalorder %s9, 3
    %p138 = pnand %p136, %p137
    %p139 = pneg %p138
    // Predicated region
    $region29: #{ae_decoder_forward.6} parent=5 // pred_check
      _
    $region30: #{ae_decoder_forward.6} parent=5 // pred_check_branch
      %141 = sbr.rel (%p138) target = $region32
    $region31: #{ae_decoder_forward.6} parent=5 // pred_region
      %s142 = ssub.s32 %s9, 1
      %p143 = scmp.lt.s32.totalorder %s14, 1
      %s144 = scalar_select %p143, %s14, 1
      %s145 = smul.addr %s144, 16
      %s146 = smul.addr %s145, 8
      %s147 = scalar_lea.vmem %s0, %s146
      %p148 = pneg %p35
      %p149 = pneg %p32
      %p150 = pneg %p56
      %p151 = pneg %p53
      %p152 = pneg %p77
      %p153 = pneg %p74
      %p154 = pneg %p103
      %p155 = pneg %p100
      %p156 = scmp.lt.s32.totalorder %s14, 1
      %s157 = scalar_select %p156, %s14, 1
      %s158 = smul.addr %s157, 12
      %s159 = smul.addr %s158, 8
      %s160 = scalar_lea.vmem %s3, %s159
      %p161 = scmp.lt.s32.totalorder %s14, 1
      %s162 = scalar_select %p161, %s14, 1
      %s163 = smul.addr %s162, 16
      %s164 = smul.addr %s163, 8
      %s165 = scalar_lea.vmem %s0, %s164
      %p166 = scmp.lt.s32.totalorder %s14, 1
      %s167 = scalar_select %p166, %s14, 1
      %s168 = smul.addr %s167, 12
      %s169 = smul.addr %s168, 8
      %s170 = scalar_lea.vmem %s3, %s169
      %v171 = vld [vmem:[%s2] sm:$0x1]
      loop: start=0, step=1, limit=6
      $region33: #{ae_decoder_forward.6} parent=31 // loop_pre_header
        _
      $region34: #{ae_decoder_forward.6} parent=31 // loop_header
        %s173 = sphi 0, %s177
        %p174 = scmp.ge.s32.totalorder %s173, 6
      $region35: #{ae_decoder_forward.6} parent=31 // loop_header_branch
        %176 = sbr.rel (%p174) target = $region39
      $region36: #{ae_decoder_forward.6} parent=31 // loop_body
        %s178 = smul.u32 %s173, 16
        %s179 = scalar_lea.vmem %s165, %s178
        %v180 = vld [vmem:[%s179] sm:$0xff]
        %v181 = vld [vmem:[%s179 + $0x8] sm:$0xf]
        %v182 = vld [vmem:[%s1] sm:$0xff]
        %v183 = vld [vmem:[%s1 + $0x8] sm:$0xff]
        %v184 = vld [vmem:[%s1 + $0x10] sm:$0xff]
        %v185 = vld [vmem:[%s1 + $0x18] sm:$0xff]
        %v186 = vld [vmem:[%s1 + $0x20] sm:$0xff]
        %v187 = vld [vmem:[%s1 + $0x28] sm:$0xff]
        %v188 = vld [vmem:[%s1 + $0x30] sm:$0xff]
        %v189 = vld [vmem:[%s1 + $0x38] sm:$0xff]
        %v190 = vld [vmem:[%s1 + $0x40] sm:$0xff]
        %v191 = vld [vmem:[%s1 + $0x48] sm:$0xff]
        %v192 = vld [vmem:[%s1 + $0x50] sm:$0xff]
        %v193 = vld [vmem:[%s1 + $0x58] sm:$0xff]
        %v194 = vld [vmem:[%s1 + $0x60] sm:$0xff]
        %v195 = vld [vmem:[%s1 + $0x68] sm:$0xff]
        %v196 = vld [vmem:[%s1 + $0x70] sm:$0xff]
        %v197 = vld [vmem:[%s1 + $0x78] sm:$0xff]
        %s198 = scalar_lea.vmem %s1, 128
        %v199 = vld [vmem:[%s198] sm:$0xff]
        %v200 = vld [vmem:[%s198 + $0x8] sm:$0xff]
        %v201 = vld [vmem:[%s198 + $0x10] sm:$0xff]
        %v202 = vld [vmem:[%s198 + $0x18] sm:$0xff]
        %v203 = vld [vmem:[%s198 + $0x20] sm:$0xff]
        %v204 = vld [vmem:[%s198 + $0x28] sm:$0xff]
        %v205 = vld [vmem:[%s198 + $0x30] sm:$0xff]
        %v206 = vld [vmem:[%s198 + $0x38] sm:$0xff]
        %v207 = vld [vmem:[%s198 + $0x40] sm:$0xff]
        %v208 = vld [vmem:[%s198 + $0x48] sm:$0xff]
        %v209 = vld [vmem:[%s198 + $0x50] sm:$0xff]
        %v210 = vld [vmem:[%s198 + $0x58] sm:$0xff]
        %v211 = vld [vmem:[%s198 + $0x60] sm:$0xff]
        %v212 = vld [vmem:[%s198 + $0x68] sm:$0xff]
        %v213 = vld [vmem:[%s198 + $0x70] sm:$0xff]
        %v214 = vld [vmem:[%s198 + $0x78] sm:$0xff]
        %vm217 = vcmask 1046528
        %v218 = vrot.slane %v180, 1
        %v219 = vrot.slane %v181, 1
        %v220 = vsel %vm217, %v218, %v219
        %223 = vmatprep.subr.mxu0 0.0
        %224 = vmatpush1.msra.mxu0 %v199
        %225 = vmatprep.subr.mxu0 0.0
        %226 = vmatpush1.msra.mxu0 %v200
        %227 = vmatprep.subr.mxu0 0.0
        %228 = vmatpush1.msra.mxu0 %v201
        %229 = vmatprep.subr.mxu0 0.0
        %230 = vmatpush1.msra.mxu0 %v202
        %231 = vmatprep.subr.mxu0 0.0
        %232 = vmatpush1.msra.mxu0 %v203
        %233 = vmatprep.subr.mxu0 0.0
        %234 = vmatpush1.msra.mxu0 %v204
        %235 = vmatprep.subr.mxu0 0.0
        %236 = vmatpush1.msra.mxu0 %v205
        %237 = vmatprep.subr.mxu0 0.0
        %238 = vmatpush1.msra.mxu0 %v206
        %239 = vmatprep.subr.mxu0 0.0
        %240 = vmatpush1.msra.mxu0 %v207
        %241 = vmatprep.subr.mxu0 0.0
        %242 = vmatpush1.msra.mxu0 %v208
        %243 = vmatprep.subr.mxu0 0.0
        %244 = vmatpush1.msra.mxu0 %v209
        %245 = vmatprep.subr.mxu0 0.0
        %246 = vmatpush1.msra.mxu0 %v210
        %247 = vmatprep.subr.mxu0 0.0
        %248 = vmatpush1.msra.mxu0 %v211
        %249 = vmatprep.subr.mxu0 0.0
        %250 = vmatpush1.msra.mxu0 %v212
        %251 = vmatprep.subr.mxu0 0.0
        %252 = vmatpush1.msra.mxu0 %v213
        %253 = vmatprep.subr.mxu0 0.0
        %254 = vmatpush1.msra.mxu0 %v214
        %255 = vmatprep.subr.mxu0 0.0
        %256 = vmatpush1.msra.mxu0 0.0
        %257 = vmatprep.subr.mxu0 0.0
        %258 = vmatpush1.msra.mxu0 0.0
        %259 = vmatprep.subr.mxu0 0.0
        %260 = vmatpush1.msra.mxu0 0.0
        %261 = vmatprep.subr.mxu0 0.0
        %262 = vmatpush1.msra.mxu0 0.0
        %263 = vmatprep.subr.mxu0 0.0
        %264 = vmatpush1.msra.mxu0 0.0
        %265 = vmatprep.subr.mxu0 0.0
        %266 = vmatpush1.msra.mxu0 0.0
        %267 = vmatprep.subr.mxu0 0.0
        %268 = vmatpush1.msra.mxu0 0.0
        %269 = vmatprep.subr.mxu0 0.0
        %270 = vmatpush1.msra.mxu0 0.0
        %271 = vmatprep.subr.mxu0 0.0
        %272 = vmatpush1.msra.mxu0 0.0
        %273 = vmatprep.subr.mxu0 0.0
        %274 = vmatpush1.msra.mxu0 0.0
        %275 = vmatprep.subr.mxu0 0.0
        %276 = vmatpush1.msra.mxu0 0.0
        %277 = vmatprep.subr.mxu0 0.0
        %278 = vmatpush1.msra.mxu0 0.0
        %279 = vmatprep.subr.mxu0 0.0
        %280 = vmatpush1.msra.mxu0 0.0
        %281 = vmatprep.subr.mxu0 0.0
        %282 = vmatpush1.msra.mxu0 0.0
        %283 = vmatprep.subr.mxu0 0.0
        %284 = vmatpush1.msra.mxu0 0.0
        %285 = vmatprep.subr.mxu0 0.0
        %286 = vmatpush1.msra.mxu0 0.0
        %287 = vmatprep.mubr.f32.mxu0 0.0
        %288 = vmatmul.mubr.f32.gmra.mrb[0].mxu0 %v220
        %v289 = vpop.f32.mrb[0].mxu0
        %v290 = vadd.f32 0.0, %v289
        %v291 = vpop.f32.mrb[0].mxu0
        %292 = vmatprep.mubr.f32.mxu0 0.0
        %293 = vmatmul.mubr.f32.gmra.mrb[0].mxu0 %v219
        %v294 = vpop.f32.mrb[0].mxu0
        %v295 = vadd.f32 0.0, %v294
        %v296 = vpop.f32.mrb[0].mxu0
        %297 = vdwg.mxu0
        %298 = vmatprep.subr.mxu0 0.0
        %299 = vmatpush1.msra.mxu0 %v182
        %300 = vmatprep.subr.mxu0 0.0
        %301 = vmatpush1.msra.mxu0 %v183
        %302 = vmatprep.subr.mxu0 0.0
        %303 = vmatpush1.msra.mxu0 %v184
        %304 = vmatprep.subr.mxu0 0.0
        %305 = vmatpush1.msra.mxu0 %v185
        %306 = vmatprep.subr.mxu0 0.0
        %307 = vmatpush1.msra.mxu0 %v186
        %308 = vmatprep.subr.mxu0 0.0
        %309 = vmatpush1.msra.mxu0 %v187
        %310 = vmatprep.subr.mxu0 0.0
        %311 = vmatpush1.msra.mxu0 %v188
        %312 = vmatprep.subr.mxu0 0.0
        %313 = vmatpush1.msra.mxu0 %v189
        %314 = vmatprep.subr.mxu0 0.0
        %315 = vmatpush1.msra.mxu0 %v190
        %316 = vmatprep.subr.mxu0 0.0
        %317 = vmatpush1.msra.mxu0 %v191
        %318 = vmatprep.subr.mxu0 0.0
        %319 = vmatpush1.msra.mxu0 %v192
        %320 = vmatprep.subr.mxu0 0.0
        %321 = vmatpush1.msra.mxu0 %v193
        %322 = vmatprep.subr.mxu0 0.0
        %323 = vmatpush1.msra.mxu0 %v194
        %324 = vmatprep.subr.mxu0 0.0
        %325 = vmatpush1.msra.mxu0 %v195
        %326 = vmatprep.subr.mxu0 0.0
        %327 = vmatpush1.msra.mxu0 %v196
        %328 = vmatprep.subr.mxu0 0.0
        %329 = vmatpush1.msra.mxu0 %v197
        %330 = vmatprep.subr.mxu0 0.0
        %331 = vmatpush1.msra.mxu0 0.0
        %332 = vmatprep.subr.mxu0 0.0
        %333 = vmatpush1.msra.mxu0 0.0
        %334 = vmatprep.subr.mxu0 0.0
        %335 = vmatpush1.msra.mxu0 0.0
        %336 = vmatprep.subr.mxu0 0.0
        %337 = vmatpush1.msra.mxu0 0.0
        %338 = vmatprep.subr.mxu0 0.0
        %339 = vmatpush1.msra.mxu0 0.0
        %340 = vmatprep.subr.mxu0 0.0
        %341 = vmatpush1.msra.mxu0 0.0
        %342 = vmatprep.subr.mxu0 0.0
        %343 = vmatpush1.msra.mxu0 0.0
        %344 = vmatprep.subr.mxu0 0.0
        %345 = vmatpush1.msra.mxu0 0.0
        %346 = vmatprep.subr.mxu0 0.0
        %347 = vmatpush1.msra.mxu0 0.0
        %348 = vmatprep.subr.mxu0 0.0
        %349 = vmatpush1.msra.mxu0 0.0
        %350 = vmatprep.subr.mxu0 0.0
        %351 = vmatpush1.msra.mxu0 0.0
        %352 = vmatprep.subr.mxu0 0.0
        %353 = vmatpush1.msra.mxu0 0.0
        %354 = vmatprep.subr.mxu0 0.0
        %355 = vmatpush1.msra.mxu0 0.0
        %356 = vmatprep.subr.mxu0 0.0
        %357 = vmatpush1.msra.mxu0 0.0
        %358 = vmatprep.subr.mxu0 0.0
        %359 = vmatpush1.msra.mxu0 0.0
        %360 = vmatprep.subr.mxu0 0.0
        %361 = vmatpush1.msra.mxu0 0.0
        %362 = vmatprep.mubr.f32.mxu0 0.0
        %363 = vmatmul.mubr.f32.gmra.mrb[0].mxu0 %v180
        %v364 = vpop.f32.mrb[0].mxu0
        %v365 = vadd.f32 %v290, %v364
        %v366 = vpop.f32.mrb[0].mxu0
        %367 = vmatprep.mubr.f32.mxu0 0.0
        %368 = vmatmul.mubr.f32.gmra.mrb[0].mxu0 %v181
        %v369 = vpop.f32.mrb[0].mxu0
        %v370 = vadd.f32 %v295, %v369
        %v371 = vpop.f32.mrb[0].mxu0
        %372 = vdwg.mxu0
        %s373 = scalar_lea.vmem %s1, 256
        %v374 = vld [vmem:[%s373] sm:$0xff]
        %v375 = vld [vmem:[%s373 + $0x8] sm:$0xff]
        %v376 = vld [vmem:[%s373 + $0x10] sm:$0xff]
        %v377 = vld [vmem:[%s373 + $0x18] sm:$0xff]
        %v378 = vld [vmem:[%s373 + $0x20] sm:$0xff]
        %v379 = vld [vmem:[%s373 + $0x28] sm:$0xff]
        %v380 = vld [vmem:[%s373 + $0x30] sm:$0xff]
        %v381 = vld [vmem:[%s373 + $0x38] sm:$0xff]
        %v382 = vld [vmem:[%s373 + $0x40] sm:$0xff]
        %v383 = vld [vmem:[%s373 + $0x48] sm:$0xff]
        %v384 = vld [vmem:[%s373 + $0x50] sm:$0xff]
        %v385 = vld [vmem:[%s373 + $0x58] sm:$0xff]
        %v386 = vld [vmem:[%s373 + $0x60] sm:$0xff]
        %v387 = vld [vmem:[%s373 + $0x68] sm:$0xff]
        %v388 = vld [vmem:[%s373 + $0x70] sm:$0xff]
        %v389 = vld [vmem:[%s373 + $0x78] sm:$0xff]
        %vm390 = vcmask 1045504
        %v391 = vrot.slane %v180, 2
        %v392 = vrot.slane %v181, 2
        %v393 = vsel %vm390, %v391, %v392
        %396 = vmatprep.subr.mxu0 0.0
        %397 = vmatpush1.msra.mxu0 %v374
        %398 = vmatprep.subr.mxu0 0.0
        %399 = vmatpush1.msra.mxu0 %v375
        %400 = vmatprep.subr.mxu0 0.0
        %401 = vmatpush1.msra.mxu0 %v376
        %402 = vmatprep.subr.mxu0 0.0
        %403 = vmatpush1.msra.mxu0 %v377
        %404 = vmatprep.subr.mxu0 0.0
        %405 = vmatpush1.msra.mxu0 %v378
        %406 = vmatprep.subr.mxu0 0.0
        %407 = vmatpush1.msra.mxu0 %v379
        %408 = vmatprep.subr.mxu0 0.0
        %409 = vmatpush1.msra.mxu0 %v380
        %410 = vmatprep.subr.mxu0 0.0
        %411 = vmatpush1.msra.mxu0 %v381
        %412 = vmatprep.subr.mxu0 0.0
        %413 = vmatpush1.msra.mxu0 %v382
        %414 = vmatprep.subr.mxu0 0.0
        %415 = vmatpush1.msra.mxu0 %v383
        %416 = vmatprep.subr.mxu0 0.0
        %417 = vmatpush1.msra.mxu0 %v384
        %418 = vmatprep.subr.mxu0 0.0
        %419 = vmatpush1.msra.mxu0 %v385
        %420 = vmatprep.subr.mxu0 0.0
        %421 = vmatpush1.msra.mxu0 %v386
        %422 = vmatprep.subr.mxu0 0.0
        %423 = vmatpush1.msra.mxu0 %v387
        %424 = vmatprep.subr.mxu0 0.0
        %425 = vmatpush1.msra.mxu0 %v388
        %426 = vmatprep.subr.mxu0 0.0
        %427 = vmatpush1.msra.mxu0 %v389
        %428 = vmatprep.subr.mxu0 0.0
        %429 = vmatpush1.msra.mxu0 0.0
        %430 = vmatprep.subr.mxu0 0.0
        %431 = vmatpush1.msra.mxu0 0.0
        %432 = vmatprep.subr.mxu0 0.0
        %433 = vmatpush1.msra.mxu0 0.0
        %434 = vmatprep.subr.mxu0 0.0
        %435 = vmatpush1.msra.mxu0 0.0
        %436 = vmatprep.subr.mxu0 0.0
        %437 = vmatpush1.msra.mxu0 0.0
        %438 = vmatprep.subr.mxu0 0.0
        %439 = vmatpush1.msra.mxu0 0.0
        %440 = vmatprep.subr.mxu0 0.0
        %441 = vmatpush1.msra.mxu0 0.0
        %442 = vmatprep.subr.mxu0 0.0
        %443 = vmatpush1.msra.mxu0 0.0
        %444 = vmatprep.subr.mxu0 0.0
        %445 = vmatpush1.msra.mxu0 0.0
        %446 = vmatprep.subr.mxu0 0.0
        %447 = vmatpush1.msra.mxu0 0.0
        %448 = vmatprep.subr.mxu0 0.0
        %449 = vmatpush1.msra.mxu0 0.0
        %450 = vmatprep.subr.mxu0 0.0
        %451 = vmatpush1.msra.mxu0 0.0
        %452 = vmatprep.subr.mxu0 0.0
        %453 = vmatpush1.msra.mxu0 0.0
        %454 = vmatprep.subr.mxu0 0.0
        %455 = vmatpush1.msra.mxu0 0.0
        %456 = vmatprep.subr.mxu0 0.0
        %457 = vmatpush1.msra.mxu0 0.0
        %458 = vmatprep.subr.mxu0 0.0
        %459 = vmatpush1.msra.mxu0 0.0
        %460 = vmatprep.mubr.f32.mxu0 0.0
        %461 = vmatmul.mubr.f32.gmra.mrb[0].mxu0 %v393
        %v462 = vpop.f32.mrb[0].mxu0
        %v463 = vadd.f32 0.0, %v462
        %v464 = vpop.f32.mrb[0].mxu0
        %465 = vmatprep.mubr.f32.mxu0 0.0
        %466 = vmatmul.mubr.f32.gmra.mrb[0].mxu0 %v392
        %v467 = vpop.f32.mrb[0].mxu0
        %v468 = vadd.f32 0.0, %v467
        %v469 = vpop.f32.mrb[0].mxu0
        %470 = vdwg.mxu0
        %v471 = vadd.f32 %v365, %v463
        %v472 = vadd.f32 %v370, %v468
        %s473 = sadd.s32 %s173, 1
        %s474 = smul.u32 %s473, 16
        %s475 = scalar_lea.vmem %s165, %s474
        %v476 = vld [vmem:[%s475] sm:$0xff]
        %v477 = vld [vmem:[%s475 + $0x8] sm:$0xf]
        %s478 = scalar_lea.vmem %s1, 384
        %v479 = vld [vmem:[%s478] sm:$0xff]
        %v480 = vld [vmem:[%s478 + $0x8] sm:$0xff]
        %v481 = vld [vmem:[%s478 + $0x10] sm:$0xff]
        %v482 = vld [vmem:[%s478 + $0x18] sm:$0xff]
        %v483 = vld [vmem:[%s478 + $0x20] sm:$0xff]
        %v484 = vld [vmem:[%s478 + $0x28] sm:$0xff]
        %v485 = vld [vmem:[%s478 + $0x30] sm:$0xff]
        %v486 = vld [vmem:[%s478 + $0x38] sm:$0xff]
        %v487 = vld [vmem:[%s478 + $0x40] sm:$0xff]
        %v488 = vld [vmem:[%s478 + $0x48] sm:$0xff]
        %v489 = vld [vmem:[%s478 + $0x50] sm:$0xff]
        %v490 = vld [vmem:[%s478 + $0x58] sm:$0xff]
        %v491 = vld [vmem:[%s478 + $0x60] sm:$0xff]
        %v492 = vld [vmem:[%s478 + $0x68] sm:$0xff]
        %v493 = vld [vmem:[%s478 + $0x70] sm:$0xff]
        %v494 = vld [vmem:[%s478 + $0x78] sm:$0xff]
        %495 = vmatprep.subr.mxu0 0.0
        %496 = vmatpush1.msra.mxu0 %v479
        %497 = vmatprep.subr.mxu0 0.0
        %498 = vmatpush1.msra.mxu0 %v480
        %499 = vmatprep.subr.mxu0 0.0
        %500 = vmatpush1.msra.mxu0 %v481
        %501 = vmatprep.subr.mxu0 0.0
        %502 = vmatpush1.msra.mxu0 %v482
        %503 = vmatprep.subr.mxu0 0.0
        %504 = vmatpush1.msra.mxu0 %v483
        %505 = vmatprep.subr.mxu0 0.0
        %506 = vmatpush1.msra.mxu0 %v484
        %507 = vmatprep.subr.mxu0 0.0
        %508 = vmatpush1.msra.mxu0 %v485
        %509 = vmatprep.subr.mxu0 0.0
        %510 = vmatpush1.msra.mxu0 %v486
        %511 = vmatprep.subr.mxu0 0.0
        %512 = vmatpush1.msra.mxu0 %v487
        %513 = vmatprep.subr.mxu0 0.0
        %514 = vmatpush1.msra.mxu0 %v488
        %515 = vmatprep.subr.mxu0 0.0
        %516 = vmatpush1.msra.mxu0 %v489
        %517 = vmatprep.subr.mxu0 0.0
        %518 = vmatpush1.msra.mxu0 %v490
        %519 = vmatprep.subr.mxu0 0.0
        %520 = vmatpush1.msra.mxu0 %v491
        %521 = vmatprep.subr.mxu0 0.0
        %522 = vmatpush1.msra.mxu0 %v492
        %523 = vmatprep.subr.mxu0 0.0
        %524 = vmatpush1.msra.mxu0 %v493
        %525 = vmatprep.subr.mxu0 0.0
        %526 = vmatpush1.msra.mxu0 %v494
        %527 = vmatprep.subr.mxu0 0.0
        %528 = vmatpush1.msra.mxu0 0.0
        %529 = vmatprep.subr.mxu0 0.0
        %530 = vmatpush1.msra.mxu0 0.0
        %531 = vmatprep.subr.mxu0 0.0
        %532 = vmatpush1.msra.mxu0 0.0
        %533 = vmatprep.subr.mxu0 0.0
        %534 = vmatpush1.msra.mxu0 0.0
        %535 = vmatprep.subr.mxu0 0.0
        %536 = vmatpush1.msra.mxu0 0.0
        %537 = vmatprep.subr.mxu0 0.0
        %538 = vmatpush1.msra.mxu0 0.0
        %539 = vmatprep.subr.mxu0 0.0
        %540 = vmatpush1.msra.mxu0 0.0
        %541 = vmatprep.subr.mxu0 0.0
        %542 = vmatpush1.msra.mxu0 0.0
        %543 = vmatprep.subr.mxu0 0.0
        %544 = vmatpush1.msra.mxu0 0.0
        %545 = vmatprep.subr.mxu0 0.0
        %546 = vmatpush1.msra.mxu0 0.0
        %547 = vmatprep.subr.mxu0 0.0
        %548 = vmatpush1.msra.mxu0 0.0
        %549 = vmatprep.subr.mxu0 0.0
        %550 = vmatpush1.msra.mxu0 0.0
        %551 = vmatprep.subr.mxu0 0.0
        %552 = vmatpush1.msra.mxu0 0.0
        %553 = vmatprep.subr.mxu0 0.0
        %554 = vmatpush1.msra.mxu0 0.0
        %555 = vmatprep.subr.mxu0 0.0
        %556 = vmatpush1.msra.mxu0 0.0
        %557 = vmatprep.subr.mxu0 0.0
        %558 = vmatpush1.msra.mxu0 0.0
        %559 = vmatprep.mubr.f32.mxu0 0.0
        %560 = vmatmul.mubr.f32.gmra.mrb[0].mxu0 %v476
        %v561 = vpop.f32.mrb[0].mxu0
        %v562 = vadd.f32 0.0, %v561
        %v563 = vpop.f32.mrb[0].mxu0
        %564 = vmatprep.mubr.f32.mxu0 0.0
        %565 = vmatmul.mubr.f32.gmra.mrb[0].mxu0 %v477
        %v566 = vpop.f32.mrb[0].mxu0
        %v567 = vadd.f32 0.0, %v566
        %v568 = vpop.f32.mrb[0].mxu0
        %569 = vdwg.mxu0
        %v570 = vadd.f32 %v471, %v562
        %v571 = vadd.f32 %v472, %v567
        %s572 = scalar_lea.vmem %s1, 512
        %v573 = vld [vmem:[%s572] sm:$0xff]
        %v574 = vld [vmem:[%s572 + $0x8] sm:$0xff]
        %v575 = vld [vmem:[%s572 + $0x10] sm:$0xff]
        %v576 = vld [vmem:[%s572 + $0x18] sm:$0xff]
        %v577 = vld [vmem:[%s572 + $0x20] sm:$0xff]
        %v578 = vld [vmem:[%s572 + $0x28] sm:$0xff]
        %v579 = vld [vmem:[%s572 + $0x30] sm:$0xff]
        %v580 = vld [vmem:[%s572 + $0x38] sm:$0xff]
        %v581 = vld [vmem:[%s572 + $0x40] sm:$0xff]
        %v582 = vld [vmem:[%s572 + $0x48] sm:$0xff]
        %v583 = vld [vmem:[%s572 + $0x50] sm:$0xff]
        %v584 = vld [vmem:[%s572 + $0x58] sm:$0xff]
        %v585 = vld [vmem:[%s572 + $0x60] sm:$0xff]
        %v586 = vld [vmem:[%s572 + $0x68] sm:$0xff]
        %v587 = vld [vmem:[%s572 + $0x70] sm:$0xff]
        %v588 = vld [vmem:[%s572 + $0x78] sm:$0xff]
        %v591 = vrot.slane %v476, 1
        %v592 = vrot.slane %v477, 1
        %v593 = vsel %vm217, %v591, %v592
        %596 = vmatprep.subr.mxu0 0.0
        %597 = vmatpush1.msra.mxu0 %v573
        %598 = vmatprep.subr.mxu0 0.0
        %599 = vmatpush1.msra.mxu0 %v574
        %600 = vmatprep.subr.mxu0 0.0
        %601 = vmatpush1.msra.mxu0 %v575
        %602 = vmatprep.subr.mxu0 0.0
        %603 = vmatpush1.msra.mxu0 %v576
        %604 = vmatprep.subr.mxu0 0.0
        %605 = vmatpush1.msra.mxu0 %v577
        %606 = vmatprep.subr.mxu0 0.0
        %607 = vmatpush1.msra.mxu0 %v578
        %608 = vmatprep.subr.mxu0 0.0
        %609 = vmatpush1.msra.mxu0 %v579
        %610 = vmatprep.subr.mxu0 0.0
        %611 = vmatpush1.msra.mxu0 %v580
        %612 = vmatprep.subr.mxu0 0.0
        %613 = vmatpush1.msra.mxu0 %v581
        %614 = vmatprep.subr.mxu0 0.0
        %615 = vmatpush1.msra.mxu0 %v582
        %616 = vmatprep.subr.mxu0 0.0
        %617 = vmatpush1.msra.mxu0 %v583
        %618 = vmatprep.subr.mxu0 0.0
        %619 = vmatpush1.msra.mxu0 %v584
        %620 = vmatprep.subr.mxu0 0.0
        %621 = vmatpush1.msra.mxu0 %v585
        %622 = vmatprep.subr.mxu0 0.0
        %623 = vmatpush1.msra.mxu0 %v586
        %624 = vmatprep.subr.mxu0 0.0
        %625 = vmatpush1.msra.mxu0 %v587
        %626 = vmatprep.subr.mxu0 0.0
        %627 = vmatpush1.msra.mxu0 %v588
        %628 = vmatprep.subr.mxu0 0.0
        %629 = vmatpush1.msra.mxu0 0.0
        %630 = vmatprep.subr.mxu0 0.0
        %631 = vmatpush1.msra.mxu0 0.0
        %632 = vmatprep.subr.mxu0 0.0
        %633 = vmatpush1.msra.mxu0 0.0
        %634 = vmatprep.subr.mxu0 0.0
        %635 = vmatpush1.msra.mxu0 0.0
        %636 = vmatprep.subr.mxu0 0.0
        %637 = vmatpush1.msra.mxu0 0.0
        %638 = vmatprep.subr.mxu0 0.0
        %639 = vmatpush1.msra.mxu0 0.0
        %640 = vmatprep.subr.mxu0 0.0
        %641 = vmatpush1.msra.mxu0 0.0
        %642 = vmatprep.subr.mxu0 0.0
        %643 = vmatpush1.msra.mxu0 0.0
        %644 = vmatprep.subr.mxu0 0.0
        %645 = vmatpush1.msra.mxu0 0.0
        %646 = vmatprep.subr.mxu0 0.0
        %647 = vmatpush1.msra.mxu0 0.0
        %648 = vmatprep.subr.mxu0 0.0
        %649 = vmatpush1.msra.mxu0 0.0
        %650 = vmatprep.subr.mxu0 0.0
        %651 = vmatpush1.msra.mxu0 0.0
        %652 = vmatprep.subr.mxu0 0.0
        %653 = vmatpush1.msra.mxu0 0.0
        %654 = vmatprep.subr.mxu0 0.0
        %655 = vmatpush1.msra.mxu0 0.0
        %656 = vmatprep.subr.mxu0 0.0
        %657 = vmatpush1.msra.mxu0 0.0
        %658 = vmatprep.subr.mxu0 0.0
        %659 = vmatpush1.msra.mxu0 0.0
        %660 = vmatprep.mubr.f32.mxu0 0.0
        %661 = vmatmul.mubr.f32.gmra.mrb[0].mxu0 %v593
        %v662 = vpop.f32.mrb[0].mxu0
        %v663 = vadd.f32 0.0, %v662
        %v664 = vpop.f32.mrb[0].mxu0
        %665 = vmatprep.mubr.f32.mxu0 0.0
        %666 = vmatmul.mubr.f32.gmra.mrb[0].mxu0 %v592
        %v667 = vpop.f32.mrb[0].mxu0
        %v668 = vadd.f32 0.0, %v667
        %v669 = vpop.f32.mrb[0].mxu0
        %670 = vdwg.mxu0
        %v671 = vadd.f32 %v570, %v663
        %v672 = vadd.f32 %v571, %v668
        %s673 = scalar_lea.vmem %s1, 640
        %v674 = vld [vmem:[%s673] sm:$0xff]
        %v675 = vld [vmem:[%s673 + $0x8] sm:$0xff]
        %v676 = vld [vmem:[%s673 + $0x10] sm:$0xff]
        %v677 = vld [vmem:[%s673 + $0x18] sm:$0xff]
        %v678 = vld [vmem:[%s673 + $0x20] sm:$0xff]
        %v679 = vld [vmem:[%s673 + $0x28] sm:$0xff]
        %v680 = vld [vmem:[%s673 + $0x30] sm:$0xff]
        %v681 = vld [vmem:[%s673 + $0x38] sm:$0xff]
        %v682 = vld [vmem:[%s673 + $0x40] sm:$0xff]
        %v683 = vld [vmem:[%s673 + $0x48] sm:$0xff]
        %v684 = vld [vmem:[%s673 + $0x50] sm:$0xff]
        %v685 = vld [vmem:[%s673 + $0x58] sm:$0xff]
        %v686 = vld [vmem:[%s673 + $0x60] sm:$0xff]
        %v687 = vld [vmem:[%s673 + $0x68] sm:$0xff]
        %v688 = vld [vmem:[%s673 + $0x70] sm:$0xff]
        %v689 = vld [vmem:[%s673 + $0x78] sm:$0xff]
        %v690 = vrot.slane %v476, 2
        %v691 = vrot.slane %v477, 2
        %v692 = vsel %vm390, %v690, %v691
        %695 = vmatprep.subr.mxu0 0.0
        %696 = vmatpush1.msra.mxu0 %v674
        %697 = vmatprep.subr.mxu0 0.0
        %698 = vmatpush1.msra.mxu0 %v675
        %699 = vmatprep.subr.mxu0 0.0
        %700 = vmatpush1.msra.mxu0 %v676
        %701 = vmatprep.subr.mxu0 0.0
        %702 = vmatpush1.msra.mxu0 %v677
        %703 = vmatprep.subr.mxu0 0.0
        %704 = vmatpush1.msra.mxu0 %v678
        %705 = vmatprep.subr.mxu0 0.0
        %706 = vmatpush1.msra.mxu0 %v679
        %707 = vmatprep.subr.mxu0 0.0
        %708 = vmatpush1.msra.mxu0 %v680
        %709 = vmatprep.subr.mxu0 0.0
        %710 = vmatpush1.msra.mxu0 %v681
        %711 = vmatprep.subr.mxu0 0.0
        %712 = vmatpush1.msra.mxu0 %v682
        %713 = vmatprep.subr.mxu0 0.0
        %714 = vmatpush1.msra.mxu0 %v683
        %715 = vmatprep.subr.mxu0 0.0
        %716 = vmatpush1.msra.mxu0 %v684
        %717 = vmatprep.subr.mxu0 0.0
        %718 = vmatpush1.msra.mxu0 %v685
        %719 = vmatprep.subr.mxu0 0.0
        %720 = vmatpush1.msra.mxu0 %v686
        %721 = vmatprep.subr.mxu0 0.0
        %722 = vmatpush1.msra.mxu0 %v687
        %723 = vmatprep.subr.mxu0 0.0
        %724 = vmatpush1.msra.mxu0 %v688
        %725 = vmatprep.subr.mxu0 0.0
        %726 = vmatpush1.msra.mxu0 %v689
        %727 = vmatprep.subr.mxu0 0.0
        %728 = vmatpush1.msra.mxu0 0.0
        %729 = vmatprep.subr.mxu0 0.0
        %730 = vmatpush1.msra.mxu0 0.0
        %731 = vmatprep.subr.mxu0 0.0
        %732 = vmatpush1.msra.mxu0 0.0
        %733 = vmatprep.subr.mxu0 0.0
        %734 = vmatpush1.msra.mxu0 0.0
        %735 = vmatprep.subr.mxu0 0.0
        %736 = vmatpush1.msra.mxu0 0.0
        %737 = vmatprep.subr.mxu0 0.0
        %738 = vmatpush1.msra.mxu0 0.0
        %739 = vmatprep.subr.mxu0 0.0
        %740 = vmatpush1.msra.mxu0 0.0
        %741 = vmatprep.subr.mxu0 0.0
        %742 = vmatpush1.msra.mxu0 0.0
        %743 = vmatprep.subr.mxu0 0.0
        %744 = vmatpush1.msra.mxu0 0.0
        %745 = vmatprep.subr.mxu0 0.0
        %746 = vmatpush1.msra.mxu0 0.0
        %747 = vmatprep.subr.mxu0 0.0
        %748 = vmatpush1.msra.mxu0 0.0
        %749 = vmatprep.subr.mxu0 0.0
        %750 = vmatpush1.msra.mxu0 0.0
        %751 = vmatprep.subr.mxu0 0.0
        %752 = vmatpush1.msra.mxu0 0.0
        %753 = vmatprep.subr.mxu0 0.0
        %754 = vmatpush1.msra.mxu0 0.0
        %755 = vmatprep.subr.mxu0 0.0
        %756 = vmatpush1.msra.mxu0 0.0
        %757 = vmatprep.subr.mxu0 0.0
        %758 = vmatpush1.msra.mxu0 0.0
        %759 = vmatprep.mubr.f32.mxu0 0.0
        %760 = vmatmul.mubr.f32.gmra.mrb[0].mxu0 %v692
        %v761 = vpop.f32.mrb[0].mxu0
        %v762 = vadd.f32 0.0, %v761
        %v763 = vpop.f32.mrb[0].mxu0
        %764 = vmatprep.mubr.f32.mxu0 0.0
        %765 = vmatmul.mubr.f32.gmra.mrb[0].mxu0 %v691
        %v766 = vpop.f32.mrb[0].mxu0
        %v767 = vadd.f32 0.0, %v766
        %v768 = vpop.f32.mrb[0].mxu0
        %769 = vdwg.mxu0
        %v770 = vadd.f32 %v671, %v762
        %v771 = vadd.f32 %v672, %v767
        %s772 = sadd.s32 %s173, 2
        %s773 = smul.u32 %s772, 16
        %s774 = scalar_lea.vmem %s165, %s773
        %v775 = vld [vmem:[%s774] sm:$0xff]
        %v776 = vld [vmem:[%s774 + $0x8] sm:$0xf]
        %s777 = scalar_lea.vmem %s1, 768
        %v778 = vld [vmem:[%s777] sm:$0xff]
        %v779 = vld [vmem:[%s777 + $0x8] sm:$0xff]
        %v780 = vld [vmem:[%s777 + $0x10] sm:$0xff]
        %v781 = vld [vmem:[%s777 + $0x18] sm:$0xff]
        %v782 = vld [vmem:[%s777 + $0x20] sm:$0xff]
        %v783 = vld [vmem:[%s777 + $0x28] sm:$0xff]
        %v784 = vld [vmem:[%s777 + $0x30] sm:$0xff]
        %v785 = vld [vmem:[%s777 + $0x38] sm:$0xff]
        %v786 = vld [vmem:[%s777 + $0x40] sm:$0xff]
        %v787 = vld [vmem:[%s777 + $0x48] sm:$0xff]
        %v788 = vld [vmem:[%s777 + $0x50] sm:$0xff]
        %v789 = vld [vmem:[%s777 + $0x58] sm:$0xff]
        %v790 = vld [vmem:[%s777 + $0x60] sm:$0xff]
        %v791 = vld [vmem:[%s777 + $0x68] sm:$0xff]
        %v792 = vld [vmem:[%s777 + $0x70] sm:$0xff]
        %v793 = vld [vmem:[%s777 + $0x78] sm:$0xff]
        %794 = vmatprep.subr.mxu0 0.0
        %795 = vmatpush1.msra.mxu0 %v778
        %796 = vmatprep.subr.mxu0 0.0
        %797 = vmatpush1.msra.mxu0 %v779
        %798 = vmatprep.subr.mxu0 0.0
        %799 = vmatpush1.msra.mxu0 %v780
        %800 = vmatprep.subr.mxu0 0.0
        %801 = vmatpush1.msra.mxu0 %v781
        %802 = vmatprep.subr.mxu0 0.0
        %803 = vmatpush1.msra.mxu0 %v782
        %804 = vmatprep.subr.mxu0 0.0
        %805 = vmatpush1.msra.mxu0 %v783
        %806 = vmatprep.subr.mxu0 0.0
        %807 = vmatpush1.msra.mxu0 %v784
        %808 = vmatprep.subr.mxu0 0.0
        %809 = vmatpush1.msra.mxu0 %v785
        %810 = vmatprep.subr.mxu0 0.0
        %811 = vmatpush1.msra.mxu0 %v786
        %812 = vmatprep.subr.mxu0 0.0
        %813 = vmatpush1.msra.mxu0 %v787
        %814 = vmatprep.subr.mxu0 0.0
        %815 = vmatpush1.msra.mxu0 %v788
        %816 = vmatprep.subr.mxu0 0.0
        %817 = vmatpush1.msra.mxu0 %v789
        %818 = vmatprep.subr.mxu0 0.0
        %819 = vmatpush1.msra.mxu0 %v790
        %820 = vmatprep.subr.mxu0 0.0
        %821 = vmatpush1.msra.mxu0 %v791
        %822 = vmatprep.subr.mxu0 0.0
        %823 = vmatpush1.msra.mxu0 %v792
        %824 = vmatprep.subr.mxu0 0.0
        %825 = vmatpush1.msra.mxu0 %v793
        %826 = vmatprep.subr.mxu0 0.0
        %827 = vmatpush1.msra.mxu0 0.0
        %828 = vmatprep.subr.mxu0 0.0
        %829 = vmatpush1.msra.mxu0 0.0
        %830 = vmatprep.subr.mxu0 0.0
        %831 = vmatpush1.msra.mxu0 0.0
        %832 = vmatprep.subr.mxu0 0.0
        %833 = vmatpush1.msra.mxu0 0.0
        %834 = vmatprep.subr.mxu0 0.0
        %835 = vmatpush1.msra.mxu0 0.0
        %836 = vmatprep.subr.mxu0 0.0
        %837 = vmatpush1.msra.mxu0 0.0
        %838 = vmatprep.subr.mxu0 0.0
        %839 = vmatpush1.msra.mxu0 0.0
        %840 = vmatprep.subr.mxu0 0.0
        %841 = vmatpush1.msra.mxu0 0.0
        %842 = vmatprep.subr.mxu0 0.0
        %843 = vmatpush1.msra.mxu0 0.0
        %844 = vmatprep.subr.mxu0 0.0
        %845 = vmatpush1.msra.mxu0 0.0
        %846 = vmatprep.subr.mxu0 0.0
        %847 = vmatpush1.msra.mxu0 0.0
        %848 = vmatprep.subr.mxu0 0.0
        %849 = vmatpush1.msra.mxu0 0.0
        %850 = vmatprep.subr.mxu0 0.0
        %851 = vmatpush1.msra.mxu0 0.0
        %852 = vmatprep.subr.mxu0 0.0
        %853 = vmatpush1.msra.mxu0 0.0
        %854 = vmatprep.subr.mxu0 0.0
        %855 = vmatpush1.msra.mxu0 0.0
        %856 = vmatprep.subr.mxu0 0.0
        %857 = vmatpush1.msra.mxu0 0.0
        %858 = vmatprep.mubr.f32.mxu0 0.0
        %859 = vmatmul.mubr.f32.gmra.mrb[0].mxu0 %v775
        %v860 = vpop.f32.mrb[0].mxu0
        %v861 = vadd.f32 0.0, %v860
        %v862 = vpop.f32.mrb[0].mxu0
        %863 = vmatprep.mubr.f32.mxu0 0.0
        %864 = vmatmul.mubr.f32.gmra.mrb[0].mxu0 %v776
        %v865 = vpop.f32.mrb[0].mxu0
        %v866 = vadd.f32 0.0, %v865
        %v867 = vpop.f32.mrb[0].mxu0
        %868 = vdwg.mxu0
        %v869 = vadd.f32 %v770, %v861
        %v870 = vadd.f32 %v771, %v866
        %s871 = scalar_lea.vmem %s1, 896
        %v872 = vld [vmem:[%s871] sm:$0xff]
        %v873 = vld [vmem:[%s871 + $0x8] sm:$0xff]
        %v874 = vld [vmem:[%s871 + $0x10] sm:$0xff]
        %v875 = vld [vmem:[%s871 + $0x18] sm:$0xff]
        %v876 = vld [vmem:[%s871 + $0x20] sm:$0xff]
        %v877 = vld [vmem:[%s871 + $0x28] sm:$0xff]
        %v878 = vld [vmem:[%s871 + $0x30] sm:$0xff]
        %v879 = vld [vmem:[%s871 + $0x38] sm:$0xff]
        %v880 = vld [vmem:[%s871 + $0x40] sm:$0xff]
        %v881 = vld [vmem:[%s871 + $0x48] sm:$0xff]
        %v882 = vld [vmem:[%s871 + $0x50] sm:$0xff]
        %v883 = vld [vmem:[%s871 + $0x58] sm:$0xff]
        %v884 = vld [vmem:[%s871 + $0x60] sm:$0xff]
        %v885 = vld [vmem:[%s871 + $0x68] sm:$0xff]
        %v886 = vld [vmem:[%s871 + $0x70] sm:$0xff]
        %v887 = vld [vmem:[%s871 + $0x78] sm:$0xff]
        %v890 = vrot.slane %v775, 1
        %v891 = vrot.slane %v776, 1
        %v892 = vsel %vm217, %v890, %v891
        %895 = vmatprep.subr.mxu0 0.0
        %896 = vmatpush1.msra.mxu0 %v872
        %897 = vmatprep.subr.mxu0 0.0
        %898 = vmatpush1.msra.mxu0 %v873
        %899 = vmatprep.subr.mxu0 0.0
        %900 = vmatpush1.msra.mxu0 %v874
        %901 = vmatprep.subr.mxu0 0.0
        %902 = vmatpush1.msra.mxu0 %v875
        %903 = vmatprep.subr.mxu0 0.0
        %904 = vmatpush1.msra.mxu0 %v876
        %905 = vmatprep.subr.mxu0 0.0
        %906 = vmatpush1.msra.mxu0 %v877
        %907 = vmatprep.subr.mxu0 0.0
        %908 = vmatpush1.msra.mxu0 %v878
        %909 = vmatprep.subr.mxu0 0.0
        %910 = vmatpush1.msra.mxu0 %v879
        %911 = vmatprep.subr.mxu0 0.0
        %912 = vmatpush1.msra.mxu0 %v880
        %913 = vmatprep.subr.mxu0 0.0
        %914 = vmatpush1.msra.mxu0 %v881
        %915 = vmatprep.subr.mxu0 0.0
        %916 = vmatpush1.msra.mxu0 %v882
        %917 = vmatprep.subr.mxu0 0.0
        %918 = vmatpush1.msra.mxu0 %v883
        %919 = vmatprep.subr.mxu0 0.0
        %920 = vmatpush1.msra.mxu0 %v884
        %921 = vmatprep.subr.mxu0 0.0
        %922 = vmatpush1.msra.mxu0 %v885
        %923 = vmatprep.subr.mxu0 0.0
        %924 = vmatpush1.msra.mxu0 %v886
        %925 = vmatprep.subr.mxu0 0.0
        %926 = vmatpush1.msra.mxu0 %v887
        %927 = vmatprep.subr.mxu0 0.0
        %928 = vmatpush1.msra.mxu0 0.0
        %929 = vmatprep.subr.mxu0 0.0
        %930 = vmatpush1.msra.mxu0 0.0
        %931 = vmatprep.subr.mxu0 0.0
        %932 = vmatpush1.msra.mxu0 0.0
        %933 = vmatprep.subr.mxu0 0.0
        %934 = vmatpush1.msra.mxu0 0.0
        %935 = vmatprep.subr.mxu0 0.0
        %936 = vmatpush1.msra.mxu0 0.0
        %937 = vmatprep.subr.mxu0 0.0
        %938 = vmatpush1.msra.mxu0 0.0
        %939 = vmatprep.subr.mxu0 0.0
        %940 = vmatpush1.msra.mxu0 0.0
        %941 = vmatprep.subr.mxu0 0.0
        %942 = vmatpush1.msra.mxu0 0.0
        %943 = vmatprep.subr.mxu0 0.0
        %944 = vmatpush1.msra.mxu0 0.0
        %945 = vmatprep.subr.mxu0 0.0
        %946 = vmatpush1.msra.mxu0 0.0
        %947 = vmatprep.subr.mxu0 0.0
        %948 = vmatpush1.msra.mxu0 0.0
        %949 = vmatprep.subr.mxu0 0.0
        %950 = vmatpush1.msra.mxu0 0.0
        %951 = vmatprep.subr.mxu0 0.0
        %952 = vmatpush1.msra.mxu0 0.0
        %953 = vmatprep.subr.mxu0 0.0
        %954 = vmatpush1.msra.mxu0 0.0
        %955 = vmatprep.subr.mxu0 0.0
        %956 = vmatpush1.msra.mxu0 0.0
        %957 = vmatprep.subr.mxu0 0.0
        %958 = vmatpush1.msra.mxu0 0.0
        %959 = vmatprep.mubr.f32.mxu0 0.0
        %960 = vmatmul.mubr.f32.gmra.mrb[0].mxu0 %v892
        %v961 = vpop.f32.mrb[0].mxu0
        %v962 = vadd.f32 0.0, %v961
        %v963 = vpop.f32.mrb[0].mxu0
        %964 = vmatprep.mubr.f32.mxu0 0.0
        %965 = vmatmul.mubr.f32.gmra.mrb[0].mxu0 %v891
        %v966 = vpop.f32.mrb[0].mxu0
        %v967 = vadd.f32 0.0, %v966
        %v968 = vpop.f32.mrb[0].mxu0
        %969 = vdwg.mxu0
        %v970 = vadd.f32 %v869, %v962
        %v971 = vadd.f32 %v870, %v967
        %s972 = scalar_lea.vmem %s1, 1024
        %v973 = vld [vmem:[%s972] sm:$0xff]
        %v974 = vld [vmem:[%s972 + $0x8] sm:$0xff]
        %v975 = vld [vmem:[%s972 + $0x10] sm:$0xff]
        %v976 = vld [vmem:[%s972 + $0x18] sm:$0xff]
        %v977 = vld [vmem:[%s972 + $0x20] sm:$0xff]
        %v978 = vld [vmem:[%s972 + $0x28] sm:$0xff]
        %v979 = vld [vmem:[%s972 + $0x30] sm:$0xff]
        %v980 = vld [vmem:[%s972 + $0x38] sm:$0xff]
        %v981 = vld [vmem:[%s972 + $0x40] sm:$0xff]
        %v982 = vld [vmem:[%s972 + $0x48] sm:$0xff]
        %v983 = vld [vmem:[%s972 + $0x50] sm:$0xff]
        %v984 = vld [vmem:[%s972 + $0x58] sm:$0xff]
        %v985 = vld [vmem:[%s972 + $0x60] sm:$0xff]
        %v986 = vld [vmem:[%s972 + $0x68] sm:$0xff]
        %v987 = vld [vmem:[%s972 + $0x70] sm:$0xff]
        %v988 = vld [vmem:[%s972 + $0x78] sm:$0xff]
        %v989 = vrot.slane %v775, 2
        %v990 = vrot.slane %v776, 2
        %v991 = vsel %vm390, %v989, %v990
        %994 = vmatprep.subr.mxu0 0.0
        %995 = vmatpush1.msra.mxu0 %v973
        %996 = vmatprep.subr.mxu0 0.0
        %997 = vmatpush1.msra.mxu0 %v974
        %998 = vmatprep.subr.mxu0 0.0
        %999 = vmatpush1.msra.mxu0 %v975
        %1000 = vmatprep.subr.mxu0 0.0
        %1001 = vmatpush1.msra.mxu0 %v976
        %1002 = vmatprep.subr.mxu0 0.0
        %1003 = vmatpush1.msra.mxu0 %v977
        %1004 = vmatprep.subr.mxu0 0.0
        %1005 = vmatpush1.msra.mxu0 %v978
        %1006 = vmatprep.subr.mxu0 0.0
        %1007 = vmatpush1.msra.mxu0 %v979
        %1008 = vmatprep.subr.mxu0 0.0
        %1009 = vmatpush1.msra.mxu0 %v980
        %1010 = vmatprep.subr.mxu0 0.0
        %1011 = vmatpush1.msra.mxu0 %v981
        %1012 = vmatprep.subr.mxu0 0.0
        %1013 = vmatpush1.msra.mxu0 %v982
        %1014 = vmatprep.subr.mxu0 0.0
        %1015 = vmatpush1.msra.mxu0 %v983
        %1016 = vmatprep.subr.mxu0 0.0
        %1017 = vmatpush1.msra.mxu0 %v984
        %1018 = vmatprep.subr.mxu0 0.0
        %1019 = vmatpush1.msra.mxu0 %v985
        %1020 = vmatprep.subr.mxu0 0.0
        %1021 = vmatpush1.msra.mxu0 %v986
        %1022 = vmatprep.subr.mxu0 0.0
        %1023 = vmatpush1.msra.mxu0 %v987
        %1024 = vmatprep.subr.mxu0 0.0
        %1025 = vmatpush1.msra.mxu0 %v988
        %1026 = vmatprep.subr.mxu0 0.0
        %1027 = vmatpush1.msra.mxu0 0.0
        %1028 = vmatprep.subr.mxu0 0.0
        %1029 = vmatpush1.msra.mxu0 0.0
        %1030 = vmatprep.subr.mxu0 0.0
        %1031 = vmatpush1.msra.mxu0 0.0
        %1032 = vmatprep.subr.mxu0 0.0
        %1033 = vmatpush1.msra.mxu0 0.0
        %1034 = vmatprep.subr.mxu0 0.0
        %1035 = vmatpush1.msra.mxu0 0.0
        %1036 = vmatprep.subr.mxu0 0.0
        %1037 = vmatpush1.msra.mxu0 0.0
        %1038 = vmatprep.subr.mxu0 0.0
        %1039 = vmatpush1.msra.mxu0 0.0
        %1040 = vmatprep.subr.mxu0 0.0
        %1041 = vmatpush1.msra.mxu0 0.0
        %1042 = vmatprep.subr.mxu0 0.0
        %1043 = vmatpush1.msra.mxu0 0.0
        %1044 = vmatprep.subr.mxu0 0.0
        %1045 = vmatpush1.msra.mxu0 0.0
        %1046 = vmatprep.subr.mxu0 0.0
        %1047 = vmatpush1.msra.mxu0 0.0
        %1048 = vmatprep.subr.mxu0 0.0
        %1049 = vmatpush1.msra.mxu0 0.0
        %1050 = vmatprep.subr.mxu0 0.0
        %1051 = vmatpush1.msra.mxu0 0.0
        %1052 = vmatprep.subr.mxu0 0.0
        %1053 = vmatpush1.msra.mxu0 0.0
        %1054 = vmatprep.subr.mxu0 0.0
        %1055 = vmatpush1.msra.mxu0 0.0
        %1056 = vmatprep.subr.mxu0 0.0
        %1057 = vmatpush1.msra.mxu0 0.0
        %1058 = vmatprep.mubr.f32.mxu0 0.0
        %1059 = vmatmul.mubr.f32.gmra.mrb[0].mxu0 %v991
        %v1060 = vpop.f32.mrb[0].mxu0
        %v1061 = vadd.f32 0.0, %v1060
        %v1062 = vpop.f32.mrb[0].mxu0
        %1063 = vmatprep.mubr.f32.mxu0 0.0
        %1064 = vmatmul.mubr.f32.gmra.mrb[0].mxu0 %v990
        %v1065 = vpop.f32.mrb[0].mxu0
        %v1066 = vadd.f32 0.0, %v1065
        %v1067 = vpop.f32.mrb[0].mxu0
        %1068 = vdwg.mxu0
        %v1069 = vadd.f32 %v970, %v1061
        %v1070 = vadd.f32 %v971, %v1066
        %v1072 = vlaneseq
        %v1073 = vshrl.u32 %v1072, 7
        %v1074 = vsub.s32 0, %v1073
        %v1075 = vrot.slane %v171, %v1074
        %v1077 = vadd.f32 %v1069, %v1075
        %v1078 = vadd.f32 %v1070, %v1075
        %s1079 = scalar_lea.vmem [#allocation2], %s178
        %1080 = vst [vmem:[%s1079] sm:$0xff] %v1077
        %1081 = vst [vmem:[%s1079 + $0x8] sm:$0x3] %v1078
      $region37: #{ae_decoder_forward.6} parent=31 // loop_footer
        %s177 = sadd.s32 1, %s173
      $region38: #{ae_decoder_forward.6} parent=31 // loop_footer_branch
        %172 = sbr.rel target = $region34
      $region39: #{ae_decoder_forward.6} parent=31 // loop_exit
        _
      %v1082 = vld [vmem:[#allocation2] sm:$0xff]
      %v1083 = vld [vmem:[#allocation2 + $0x8] sm:$0x3]
      %v1084 = vld [vmem:[#allocation2 + $0x10] sm:$0xff]
      %v1085 = vld [vmem:[#allocation2 + $0x18] sm:$0x3]
      %v1086 = vld [vmem:[#allocation2 + $0x20] sm:$0xff]
      %v1087 = vld [vmem:[#allocation2 + $0x28] sm:$0x3]
      %v1088 = vld [vmem:[#allocation2 + $0x30] sm:$0xff]
      %v1089 = vld [vmem:[#allocation2 + $0x38] sm:$0x3]
      %v1090 = vld [vmem:[#allocation2 + $0x40] sm:$0xff]
      %v1091 = vld [vmem:[#allocation2 + $0x48] sm:$0x3]
      %v1092 = vld [vmem:[#allocation2 + $0x50] sm:$0xff]
      %v1093 = vld [vmem:[#allocation2 + $0x58] sm:$0x3]
      %vm1094 = vcmask 1041408
      %v1095 = vsel %vm1094, %v1083, 0.0
      %v1096 = vadd.f32 %v1082, %v1095
      %v1097 = vrot.slane %v1096, 4
      %v1098 = vadd.f32 %v1096, %v1097
      %v1099 = vrot.slane %v1098, 2
      %v1100 = vadd.f32 %v1098, %v1099
      %v1101 = vrot.slane %v1100, 1
      %v1102 = vadd.f32 %v1100, %v1101
      %v1103 = vsel %vm1094, %v1085, 0.0
      %v1104 = vadd.f32 %v1084, %v1103
      %v1105 = vrot.slane %v1104, 4
      %v1106 = vadd.f32 %v1104, %v1105
      %v1107 = vrot.slane %v1106, 2
      %v1108 = vadd.f32 %v1106, %v1107
      %v1109 = vrot.slane %v1108, 1
      %v1110 = vadd.f32 %v1108, %v1109
      %v1111 = vsel %vm1094, %v1087, 0.0
      %v1112 = vadd.f32 %v1086, %v1111
      %v1113 = vrot.slane %v1112, 4
      %v1114 = vadd.f32 %v1112, %v1113
      %v1115 = vrot.slane %v1114, 2
      %v1116 = vadd.f32 %v1114, %v1115
      %v1117 = vrot.slane %v1116, 1
      %v1118 = vadd.f32 %v1116, %v1117
      %v1119 = vsel %vm1094, %v1089, 0.0
      %v1120 = vadd.f32 %v1088, %v1119
      %v1121 = vrot.slane %v1120, 4
      %v1122 = vadd.f32 %v1120, %v1121
      %v1123 = vrot.slane %v1122, 2
      %v1124 = vadd.f32 %v1122, %v1123
      %v1125 = vrot.slane %v1124, 1
      %v1126 = vadd.f32 %v1124, %v1125
      %v1127 = vsel %vm1094, %v1091, 0.0
      %v1128 = vadd.f32 %v1090, %v1127
      %v1129 = vrot.slane %v1128, 4
      %v1130 = vadd.f32 %v1128, %v1129
      %v1131 = vrot.slane %v1130, 2
      %v1132 = vadd.f32 %v1130, %v1131
      %v1133 = vrot.slane %v1132, 1
      %v1134 = vadd.f32 %v1132, %v1133
      %v1135 = vsel %vm1094, %v1093, 0.0
      %v1136 = vadd.f32 %v1092, %v1135
      %v1137 = vrot.slane %v1136, 4
      %v1138 = vadd.f32 %v1136, %v1137
      %v1139 = vrot.slane %v1138, 2
      %v1140 = vadd.f32 %v1138, %v1139
      %v1141 = vrot.slane %v1140, 1
      %v1142 = vadd.f32 %v1140, %v1141
      %v1143 = vadd.f32 %v1102, %v1110
      %v1144 = vadd.f32 %v1143, %v1118
      %v1145 = vadd.f32 %v1144, %v1126
      %v1146 = vadd.f32 %v1145, %v1134
      %v1147 = vadd.f32 %v1146, %v1142
      %v1148 = vmul.f32 %v1082, %v1082
      %v1149 = vmul.f32 %v1083, %v1083
      %v1150 = vmul.f32 %v1084, %v1084
      %v1151 = vmul.f32 %v1085, %v1085
      %v1152 = vmul.f32 %v1086, %v1086
      %v1153 = vmul.f32 %v1087, %v1087
      %v1154 = vmul.f32 %v1088, %v1088
      %v1155 = vmul.f32 %v1089, %v1089
      %v1156 = vmul.f32 %v1090, %v1090
      %v1157 = vmul.f32 %v1091, %v1091
      %v1158 = vmul.f32 %v1092, %v1092
      %v1159 = vmul.f32 %v1093, %v1093
      %v1160 = vsel %vm1094, %v1149, 0.0
      %v1161 = vadd.f32 %v1148, %v1160
      %v1162 = vrot.slane %v1161, 4
      %v1163 = vadd.f32 %v1161, %v1162
      %v1164 = vrot.slane %v1163, 2
      %v1165 = vadd.f32 %v1163, %v1164
      %v1166 = vrot.slane %v1165, 1
      %v1167 = vadd.f32 %v1165, %v1166
      %v1168 = vsel %vm1094, %v1151, 0.0
      %v1169 = vadd.f32 %v1150, %v1168
      %v1170 = vrot.slane %v1169, 4
      %v1171 = vadd.f32 %v1169, %v1170
      %v1172 = vrot.slane %v1171, 2
      %v1173 = vadd.f32 %v1171, %v1172
      %v1174 = vrot.slane %v1173, 1
      %v1175 = vadd.f32 %v1173, %v1174
      %v1176 = vsel %vm1094, %v1153, 0.0
      %v1177 = vadd.f32 %v1152, %v1176
      %v1178 = vrot.slane %v1177, 4
      %v1179 = vadd.f32 %v1177, %v1178
      %v1180 = vrot.slane %v1179, 2
      %v1181 = vadd.f32 %v1179, %v1180
      %v1182 = vrot.slane %v1181, 1
      %v1183 = vadd.f32 %v1181, %v1182
      %v1184 = vsel %vm1094, %v1155, 0.0
      %v1185 = vadd.f32 %v1154, %v1184
      %v1186 = vrot.slane %v1185, 4
      %v1187 = vadd.f32 %v1185, %v1186
      %v1188 = vrot.slane %v1187, 2
      %v1189 = vadd.f32 %v1187, %v1188
      %v1190 = vrot.slane %v1189, 1
      %v1191 = vadd.f32 %v1189, %v1190
      %v1192 = vsel %vm1094, %v1157, 0.0
      %v1193 = vadd.f32 %v1156, %v1192
      %v1194 = vrot.slane %v1193, 4
      %v1195 = vadd.f32 %v1193, %v1194
      %v1196 = vrot.slane %v1195, 2
      %v1197 = vadd.f32 %v1195, %v1196
      %v1198 = vrot.slane %v1197, 1
      %v1199 = vadd.f32 %v1197, %v1198
      %v1200 = vsel %vm1094, %v1159, 0.0
      %v1201 = vadd.f32 %v1158, %v1200
      %v1202 = vrot.slane %v1201, 4
      %v1203 = vadd.f32 %v1201, %v1202
      %v1204 = vrot.slane %v1203, 2
      %v1205 = vadd.f32 %v1203, %v1204
      %v1206 = vrot.slane %v1205, 1
      %v1207 = vadd.f32 %v1205, %v1206
      %v1208 = vadd.f32 %v1167, %v1175
      %v1209 = vadd.f32 %v1208, %v1183
      %v1210 = vadd.f32 %v1209, %v1191
      %v1211 = vadd.f32 %v1210, %v1199
      %v1212 = vadd.f32 %v1211, %v1207
      %v1213 = vrcp.pop 60.0
      %v1214 = vmul.f32 %v1147, %v1213
      %v1215 = vmul.f32 %v1212, %v1213
      %v1216 = vmul.f32 %v1214, %v1214
      %v1217 = vsub.f32 %v1215, %v1216
      %v1218 = vadd.f32 %v1217, 1e-05
      %v1219 = vrsqrt.pop %v1218
      %v1220 = vsub.f32 %v1082, %v1214
      %v1221 = vsub.f32 %v1083, %v1214
      %v1222 = vsub.f32 %v1084, %v1214
      %v1223 = vsub.f32 %v1085, %v1214
      %v1224 = vsub.f32 %v1086, %v1214
      %v1225 = vsub.f32 %v1087, %v1214
      %v1226 = vsub.f32 %v1088, %v1214
      %v1227 = vsub.f32 %v1089, %v1214
      %v1228 = vsub.f32 %v1090, %v1214
      %v1229 = vsub.f32 %v1091, %v1214
      %v1230 = vsub.f32 %v1092, %v1214
      %v1231 = vsub.f32 %v1093, %v1214
      %v1232 = vmul.f32 %v1220, %v1219
      %v1233 = vmul.f32 %v1221, %v1219
      %v1234 = vmul.f32 %v1222, %v1219
      %v1235 = vmul.f32 %v1223, %v1219
      %v1236 = vmul.f32 %v1224, %v1219
      %v1237 = vmul.f32 %v1225, %v1219
      %v1238 = vmul.f32 %v1226, %v1219
      %v1239 = vmul.f32 %v1227, %v1219
      %v1240 = vmul.f32 %v1228, %v1219
      %v1241 = vmul.f32 %v1229, %v1219
      %v1242 = vmul.f32 %v1230, %v1219
      %v1243 = vmul.f32 %v1231, %v1219
      %v1244 = vmax.f32 %v1232, 0.0
      %v1245 = vmax.f32 %v1233, 0.0
      %v1246 = vmax.f32 %v1234, 0.0
      %v1247 = vmax.f32 %v1235, 0.0
      %v1248 = vmax.f32 %v1236, 0.0
      %v1249 = vmax.f32 %v1237, 0.0
      %v1250 = vmax.f32 %v1238, 0.0
      %v1251 = vmax.f32 %v1239, 0.0
      %v1252 = vmax.f32 %v1240, 0.0
      %v1253 = vmax.f32 %v1241, 0.0
      %v1254 = vmax.f32 %v1242, 0.0
      %v1255 = vmax.f32 %v1243, 0.0
      %1256 = vst [vmem:[%s170] sm:$0xff] %v1244
      %1257 = vst [vmem:[%s170 + $0x8] sm:$0x3] %v1245
      %1258 = vst [vmem:[%s170 + $0x10] sm:$0xff] %v1246
      %1259 = vst [vmem:[%s170 + $0x18] sm:$0x3] %v1247
      %1260 = vst [vmem:[%s170 + $0x20] sm:$0xff] %v1248
      %1261 = vst [vmem:[%s170 + $0x28] sm:$0x3] %v1249
      %1262 = vst [vmem:[%s170 + $0x30] sm:$0xff] %v1250
      %1263 = vst [vmem:[%s170 + $0x38] sm:$0x3] %v1251
      %1264 = vst [vmem:[%s170 + $0x40] sm:$0xff] %v1252
      %1265 = vst [vmem:[%s170 + $0x48] sm:$0x3] %v1253
      %1266 = vst [vmem:[%s170 + $0x50] sm:$0xff] %v1254
      %1267 = vst [vmem:[%s170 + $0x58] sm:$0x3] %v1255
      %p1268 = scmp.lt.s32.totalorder %s14, 1
      %s1269 = scalar_select %p1268, %s14, 1
      %s1270 = smul.addr %s1269, 12
      %s1271 = smul.addr %s1270, 8
      %s1272 = scalar_lea.vmem %s3, %s1271
      // Predicated region
      $region40: #{ae_decoder_forward.6} parent=31 // pred_check
        %p1273 = pneg %p100
      $region41: #{ae_decoder_forward.6} parent=31 // pred_check_branch
        %1275 = sbr.rel (%p1273) target = $region43
      $region42: #{ae_decoder_forward.6} parent=31 // pred_region
        _
      $region43: #{ae_decoder_forward.6} parent=31 // pred_fallthru
        _
    $region32: #{ae_decoder_forward.6} parent=5 // pred_fallthru
      _
    %p1276 = scmp.le.s32.totalorder 2, %s9
    // Predicated region
    $region44: #{ae_decoder_forward.6} parent=5 // pred_check
      %p1277 = pneg %p1276
    $region45: #{ae_decoder_forward.6} parent=5 // pred_check_branch
      %1279 = sbr.rel (%p1277) target = $region47
    $region46: #{ae_decoder_forward.6} parent=5 // pred_region
      %s1280 = ssub.s32 %s9, 2
      // Predicated region
      $region48: #{ae_decoder_forward.6} parent=46 // pred_check
        %p1281 = pneg %p106
      $region49: #{ae_decoder_forward.6} parent=46 // pred_check_branch
        %1283 = sbr.rel (%p1281) target = $region51
      $region50: #{ae_decoder_forward.6} parent=46 // pred_region
        %p1284 = scmp.lt.s32.totalorder %s15, 1
        %s1285 = scalar_select %p1284, %s15, 1
        %s1286 = smul.addr %s1285, 12
        %s1287 = smul.addr %s1286, 8
        %s1288 = scalar_lea.vmem %s3, %s1287
      $region51: #{ae_decoder_forward.6} parent=46 // pred_fallthru
        _
    $region47: #{ae_decoder_forward.6} parent=5 // pred_fallthru
      _
  $region6: #{ae_decoder_forward.6} parent=0 // loop_footer
    %s13 = sadd.s32 1, %s9
  $region7: #{ae_decoder_forward.6} parent=0 // loop_footer_branch
    %8 = sbr.rel target = $region3
  $region8: #{ae_decoder_forward.6} parent=0 // loop_exit
    _

// kernel: ae_decoder_forward.7
$region0: #{ae_decoder_forward.7}
  #allocation0 [shape = 'u32[]', space=smem, size = 0x4, offset = 0x4, fixed_abs, tag = 'smem constant byte address 0x4 - core index']
  #allocation1 [shape = 'u32[144,128]{1,0:T(1,128)}', space=vmem, size = 0x12000, scoped, tag = 'internal scratch']
  #allocation2 [shape = 'f32[10,20,128]{2,1,0:T(8,128)}', space=vmem, size = 0x1e000, scoped, tag = 'scratch operand']
  %s0 = inlined_call_operand.vmem [shape: f32[2,12,22,128], index: 0, kind: input, shape index: {}]
  %s1 = inlined_call_operand.vmem [shape: f32[9,128,128], index: 1, kind: input, shape index: {}]
  %s2 = inlined_call_operand.vmem [shape: f32[1,128], index: 2, kind: input, shape index: {}]
  %s3 = inlined_call_operand.vmem [shape: f32[2,10,20,128], index: 3, kind: output, shape index: {}]
  %s4 = sld [smem:[#allocation0]]
  $region52: #{ae_decoder_forward.7} parent=0
    _
  %s6 = ssub.s32 1, %s4
  %s7 = scalar_select 0, %s6, %s4
  loop: start=0, step=1, limit=4
  $region2: #{ae_decoder_forward.7} parent=0 // loop_pre_header
    _
  $region3: #{ae_decoder_forward.7} parent=0 // loop_header
    %s9 = sphi 0, %s13
    %p10 = scmp.ge.s32.totalorder %s9, 4
    %s19 = sphi 0, %s21
    %s22 = sphi 0, %s19
    %s23 = sphi 0, %s22
    %s39 = sphi 0, %s23
    %s43 = sphi 0, %s43
    %s45 = sphi 0, %s43
    %s46 = sphi 0, %s45
    %s60 = sphi 0, %s46
    %s64 = sphi 0, %s64
    %s66 = sphi 0, %s64
    %s67 = sphi 0, %s66
    %s81 = sphi 0, %s67
    %s87 = sphi 0, %s89
    %s90 = sphi 0, %s87
    %s91 = sphi 0, %s90
    %s107 = sphi 0, %s91
  $region4: #{ae_decoder_forward.7} parent=0 // loop_header_branch
    %12 = sbr.rel (%p10) target = $region8
  $region5: #{ae_decoder_forward.7} parent=0 // loop_body
    %s14 = ssub.s32 %s9, 1
    %s15 = ssub.s32 %s9, 2
    %s16 = sadd.s32 %s9, 1
    %s17 = ssub.s32 %s9, %s16
    %p18 = scmp.eq.s32.totalorder %s17, 0
    %s20 = sadd.s32 %s19, 1
    %s21 = scalar_select %p18, %s19, %s20
    %p24 = pneg %p18
    %p25 = scmp.eq.s32.totalorder %s9, 1
    %p26 = por %p24, %p25
    %p27 = scmp.ne.s32.totalorder %s19, %s22
    %p28 = scmp.eq.s32.totalorder %s9, 0
    %p29 = por %p27, %p28
    %p30 = scmp.ne.s32.totalorder %s19, %s22
    %p31 = scmp.eq.s32.totalorder %s14, 1
    %p32 = por %p30, %p31
    %p33 = scmp.ne.s32.totalorder %s22, %s23
    %p34 = scmp.eq.s32.totalorder %s14, 0
    %p35 = por %p33, %p34
    %p36 = scmp.ne.s32.totalorder %s22, %s23
    %p37 = scmp.eq.s32.totalorder %s15, 1
    %p38 = por %p36, %p37
    %p40 = scmp.ne.s32.totalorder %s23, %s39
    %p41 = scmp.eq.s32.totalorder %s15, 0
    %p42 = por %p40, %p41
    %s44 = sadd.s32 %s43, 1
    %p47 = scmp.eq.s32.totalorder %s9, 1
    %p48 = scmp.ne.s32.totalorder %s43, %s45
    %p49 = scmp.eq.s32.totalorder %s9, 0
    %p50 = por %p48, %p49
    %p51 = scmp.ne.s32.totalorder %s43, %s45
    %p52 = scmp.eq.s32.totalorder %s14, 1
    %p53 = por %p51, %p52
    %p54 = scmp.ne.s32.totalorder %s45, %s46
    %p55 = scmp.eq.s32.totalorder %s14, 0
    %p56 = por %p54, %p55
    %p57 = scmp.ne.s32.totalorder %s45, %s46
    %p58 = scmp.eq.s32.totalorder %s15, 1
    %p59 = por %p57, %p58
    %p61 = scmp.ne.s32.totalorder %s46, %s60
    %p62 = scmp.eq.s32.totalorder %s15, 0
    %p63 = por %p61, %p62
    %s65 = sadd.s32 %s64, 1
    %p68 = scmp.eq.s32.totalorder %s9, 1
    %p69 = scmp.ne.s32.totalorder %s64, %s66
    %p70 = scmp.eq.s32.totalorder %s9, 0
    %p71 = por %p69, %p70
    %p72 = scmp.ne.s32.totalorder %s64, %s66
    %p73 = scmp.eq.s32.totalorder %s14, 1
    %p74 = por %p72, %p73
    %p75 = scmp.ne.s32.totalorder %s66, %s67
    %p76 = scmp.eq.s32.totalorder %s14, 0
    %p77 = por %p75, %p76
    %p78 = scmp.ne.s32.totalorder %s66, %s67
    %p79 = scmp.eq.s32.totalorder %s15, 1
    %p80 = por %p78, %p79
    %p82 = scmp.ne.s32.totalorder %s67, %s81
    %p83 = scmp.eq.s32.totalorder %s15, 0
    %p84 = por %p82, %p83
    %s85 = ssub.s32 %s9, %s16
    %p86 = scmp.eq.s32.totalorder %s85, 0
    %s88 = sadd.s32 %s87, 1
    %s89 = scalar_select %p86, %s87, %s88
    %p92 = pneg %p86
    %p93 = scmp.eq.s32.totalorder %s9, 1
    %p94 = por %p92, %p93
    %p95 = scmp.ne.s32.totalorder %s87, %s90
    %p96 = scmp.eq.s32.totalorder %s9, 0
    %p97 = por %p95, %p96
    %p98 = scmp.ne.s32.totalorder %s87, %s90
    %p99 = scmp.eq.s32.totalorder %s14, 1
    %p100 = por %p98, %p99
    %p101 = scmp.ne.s32.totalorder %s90, %s91
    %p102 = scmp.eq.s32.totalorder %s14, 0
    %p103 = por %p101, %p102
    %p104 = scmp.ne.s32.totalorder %s90, %s91
    %p105 = scmp.eq.s32.totalorder %s15, 1
    %p106 = por %p104, %p105
    %p108 = scmp.ne.s32.totalorder %s91, %s107
    %p109 = scmp.eq.s32.totalorder %s15, 0
    %p110 = por %p108, %p109
    %p111 = scmp.le.s32.totalorder 1, %s9
    %p112 = scmp.lt.s32.totalorder %s9, 3
    %p113 = pnand %p111, %p112
    %p114 = pneg %p113
    // Predicated region
    $region9: #{ae_decoder_forward.7} parent=5 // pred_check
      _
    $region10: #{ae_decoder_forward.7} parent=5 // pred_check_branch
      %116 = sbr.rel (%p113) target = $region12
    $region11: #{ae_decoder_forward.7} parent=5 // pred_region
      %s117 = ssub.s32 %s9, 1
      // Predicated region
      $region13: #{ae_decoder_forward.7} parent=11 // pred_check
        %p118 = pneg %p56
      $region14: #{ae_decoder_forward.7} parent=11 // pred_check_branch
        %120 = sbr.rel (%p118) target = $region16
      $region15: #{ae_decoder_forward.7} parent=11 // pred_region
        _
      $region16: #{ae_decoder_forward.7} parent=11 // pred_fallthru
        _
      // Predicated region
      $region17: #{ae_decoder_forward.7} parent=11 // pred_check
        %p121 = pneg %p77
      $region18: #{ae_decoder_forward.7} parent=11 // pred_check_branch
        %123 = sbr.rel (%p121) target = $region20
      $region19: #{ae_decoder_forward.7} parent=11 // pred_region
        _
      $region20: #{ae_decoder_forward.7} parent=11 // pred_fallthru
        _
    $region12: #{ae_decoder_forward.7} parent=5 // pred_fallthru
      _
    %p124 = scmp.lt.s32.totalorder %s9, 2
    // Predicated region
    $region21: #{ae_decoder_forward.7} parent=5 // pred_check
      %p125 = pneg %p124
    $region22: #{ae_decoder_forward.7} parent=5 // pred_check_branch
      %127 = sbr.rel (%p125) target = $region24
    $region23: #{ae_decoder_forward.7} parent=5 // pred_region
      // Predicated region
      $region25: #{ae_decoder_forward.7} parent=23 // pred_check
        %p128 = pneg %p29
      $region26: #{ae_decoder_forward.7} parent=23 // pred_check_branch
        %130 = sbr.rel (%p128) target = $region28
      $region27: #{ae_decoder_forward.7} parent=23 // pred_region
        %p131 = scmp.lt.s32.totalorder %s9, 1
        %s132 = scalar_select %p131, %s9, 1
        %s133 = smul.addr %s132, 36
        %s134 = smul.addr %s133, 8
        %s135 = scalar_lea.vmem %s0, %s134
      $region28: #{ae_decoder_forward.7} parent=23 // pred_fallthru
        _
    $region24: #{ae_decoder_forward.7} parent=5 // pred_fallthru
      _
    %p136 = scmp.le.s32.totalorder 1, %s9
    %p137 = scmp.lt.s32.totalorder %s9, 3
    %p138 = pnand %p136, %p137
    %p139 = pneg %p138
    // Predicated region
    $region29: #{ae_decoder_forward.7} parent=5 // pred_check
      _
    $region30: #{ae_decoder_forward.7} parent=5 // pred_check_branch
      %141 = sbr.rel (%p138) target = $region32
    $region31: #{ae_decoder_forward.7} parent=5 // pred_region
      %s142 = ssub.s32 %s9, 1
      %p143 = scmp.lt.s32.totalorder %s14, 1
      %s144 = scalar_select %p143, %s14, 1
      %s145 = smul.addr %s144, 36
      %s146 = smul.addr %s145, 8
      %s147 = scalar_lea.vmem %s0, %s146
      %p148 = pneg %p35
      %p149 = pneg %p32
      %p150 = pneg %p56
      %p151 = pneg %p53
      %p152 = pneg %p77
      %p153 = pneg %p74
      %p154 = pneg %p103
      %p155 = pneg %p100
      %p156 = scmp.lt.s32.totalorder %s14, 1
      %s157 = scalar_select %p156, %s14, 1
      %s158 = smul.addr %s157, 30
      %s159 = smul.addr %s158, 8
      %s160 = scalar_lea.vmem %s3, %s159
      %p161 = scmp.lt.s32.totalorder %s14, 1
      %s162 = scalar_select %p161, %s14, 1
      %s163 = smul.addr %s162, 36
      %s164 = smul.addr %s163, 8
      %s165 = scalar_lea.vmem %s0, %s164
      %p166 = scmp.lt.s32.totalorder %s14, 1
      %s167 = scalar_select %p166, %s14, 1
      %s168 = smul.addr %s167, 30
      %s169 = smul.addr %s168, 8
      %s170 = scalar_lea.vmem %s3, %s169
      %v171 = vld [vmem:[%s2] sm:$0x1]
      loop: start=0, step=1, limit=10
      $region33: #{ae_decoder_forward.7} parent=31 // loop_pre_header
        _
      $region34: #{ae_decoder_forward.7} parent=31 // loop_header
        %s173 = sphi 0, %s177
        %p174 = scmp.ge.s32.totalorder %s173, 10
      $region35: #{ae_decoder_forward.7} parent=31 // loop_header_branch
        %176 = sbr.rel (%p174) target = $region39
      $region36: #{ae_decoder_forward.7} parent=31 // loop_body
        %s178 = smul.u32 %s173, 24
        %s179 = scalar_lea.vmem %s165, %s178
        %v180 = vld [vmem:[%s179] sm:$0xff]
        %v181 = vld [vmem:[%s179 + $0x8] sm:$0xff]
        %v182 = vld [vmem:[%s179 + $0x10] sm:$0x3f]
        %v183 = vld [vmem:[%s1] sm:$0xff]
        %v184 = vld [vmem:[%s1 + $0x8] sm:$0xff]
        %v185 = vld [vmem:[%s1 + $0x10] sm:$0xff]
        %v186 = vld [vmem:[%s1 + $0x18] sm:$0xff]
        %v187 = vld [vmem:[%s1 + $0x20] sm:$0xff]
        %v188 = vld [vmem:[%s1 + $0x28] sm:$0xff]
        %v189 = vld [vmem:[%s1 + $0x30] sm:$0xff]
        %v190 = vld [vmem:[%s1 + $0x38] sm:$0xff]
        %v191 = vld [vmem:[%s1 + $0x40] sm:$0xff]
        %v192 = vld [vmem:[%s1 + $0x48] sm:$0xff]
        %v193 = vld [vmem:[%s1 + $0x50] sm:$0xff]
        %v194 = vld [vmem:[%s1 + $0x58] sm:$0xff]
        %v195 = vld [vmem:[%s1 + $0x60] sm:$0xff]
        %v196 = vld [vmem:[%s1 + $0x68] sm:$0xff]
        %v197 = vld [vmem:[%s1 + $0x70] sm:$0xff]
        %v198 = vld [vmem:[%s1 + $0x78] sm:$0xff]
        %s199 = scalar_lea.vmem %s1, 128
        %v200 = vld [vmem:[%s199] sm:$0xff]
        %v201 = vld [vmem:[%s199 + $0x8] sm:$0xff]
        %v202 = vld [vmem:[%s199 + $0x10] sm:$0xff]
        %v203 = vld [vmem:[%s199 + $0x18] sm:$0xff]
        %v204 = vld [vmem:[%s199 + $0x20] sm:$0xff]
        %v205 = vld [vmem:[%s199 + $0x28] sm:$0xff]
        %v206 = vld [vmem:[%s199 + $0x30] sm:$0xff]
        %v207 = vld [vmem:[%s199 + $0x38] sm:$0xff]
        %v208 = vld [vmem:[%s199 + $0x40] sm:$0xff]
        %v209 = vld [vmem:[%s199 + $0x48] sm:$0xff]
        %v210 = vld [vmem:[%s199 + $0x50] sm:$0xff]
        %v211 = vld [vmem:[%s199 + $0x58] sm:$0xff]
        %v212 = vld [vmem:[%s199 + $0x60] sm:$0xff]
        %v213 = vld [vmem:[%s199 + $0x68] sm:$0xff]
        %v214 = vld [vmem:[%s199 + $0x70] sm:$0xff]
        %v215 = vld [vmem:[%s199 + $0x78] sm:$0xff]
        %vm219 = vcmask 1046528
        %v220 = vrot.slane %v180, 1
        %v221 = vrot.slane %v181, 1
        %v222 = vsel %vm219, %v220, %v221
        %v223 = vrot.slane %v182, 1
        %v224 = vsel %vm219, %v221, %v223
        %228 = vmatprep.subr.mxu0 0.0
        %229 = vmatpush1.msra.mxu0 %v200
        %230 = vmatprep.subr.mxu0 0.0
        %231 = vmatpush1.msra.mxu0 %v201
        %232 = vmatprep.subr.mxu0 0.0
        %233 = vmatpush1.msra.mxu0 %v202
        %234 = vmatprep.subr.mxu0 0.0
        %235 = vmatpush1.msra.mxu0 %v203
        %236 = vmatprep.subr.mxu0 0.0
        %237 = vmatpush1.msra.mxu0 %v204
        %238 = vmatprep.subr.mxu0 0.0
        %239 = vmatpush1.msra.mxu0 %v205
        %240 = vmatprep.subr.mxu0 0.0
        %241 = vmatpush1.msra.mxu0 %v206
        %242 = vmatprep.subr.mxu0 0.0
        %243 = vmatpush1.msra.mxu0 %v207
        %244 = vmatprep.subr.mxu0 0.0
        %245 = vmatpush1.msra.mxu0 %v208
        %246 = vmatprep.subr.mxu0 0.0
        %247 = vmatpush1.msra.mxu0 %v209
        %248 = vmatprep.subr.mxu0 0.0
        %249 = vmatpush1.msra.mxu0 %v210
        %250 = vmatprep.subr.mxu0 0.0
        %251 = vmatpush1.msra.mxu0 %v211
        %252 = vmatprep.subr.mxu0 0.0
        %253 = vmatpush1.msra.mxu0 %v212
        %254 = vmatprep.subr.mxu0 0.0
        %255 = vmatpush1.msra.mxu0 %v213
        %256 = vmatprep.subr.mxu0 0.0
        %257 = vmatpush1.msra.mxu0 %v214
        %258 = vmatprep.subr.mxu0 0.0
        %259 = vmatpush1.msra.mxu0 %v215
        %260 = vmatprep.subr.mxu0 0.0
        %261 = vmatpush1.msra.mxu0 0.0
        %262 = vmatprep.subr.mxu0 0.0
        %263 = vmatpush1.msra.mxu0 0.0
        %264 = vmatprep.subr.mxu0 0.0
        %265 = vmatpush1.msra.mxu0 0.0
        %266 = vmatprep.subr.mxu0 0.0
        %267 = vmatpush1.msra.mxu0 0.0
        %268 = vmatprep.subr.mxu0 0.0
        %269 = vmatpush1.msra.mxu0 0.0
        %270 = vmatprep.subr.mxu0 0.0
        %271 = vmatpush1.msra.mxu0 0.0
        %272 = vmatprep.subr.mxu0 0.0
        %273 = vmatpush1.msra.mxu0 0.0
        %274 = vmatprep.subr.mxu0 0.0
        %275 = vmatpush1.msra.mxu0 0.0
        %276 = vmatprep.subr.mxu0 0.0
        %277 = vmatpush1.msra.mxu0 0.0
        %278 = vmatprep.subr.mxu0 0.0
        %279 = vmatpush1.msra.mxu0 0.0
        %280 = vmatprep.subr.mxu0 0.0
        %281 = vmatpush1.msra.mxu0 0.0
        %282 = vmatprep.subr.mxu0 0.0
        %283 = vmatpush1.msra.mxu0 0.0
        %284 = vmatprep.subr.mxu0 0.0
        %285 = vmatpush1.msra.mxu0 0.0
        %286 = vmatprep.subr.mxu0 0.0
        %287 = vmatpush1.msra.mxu0 0.0
        %288 = vmatprep.subr.mxu0 0.0
        %289 = vmatpush1.msra.mxu0 0.0
        %290 = vmatprep.subr.mxu0 0.0
        %291 = vmatpush1.msra.mxu0 0.0
        %292 = vmatprep.mubr.f32.mxu0 0.0
        %293 = vmatmul.mubr.f32.gmra.mrb[0].mxu0 %v222
        %v294 = vpop.f32.mrb[0].mxu0
        %v295 = vadd.f32 0.0, %v294
        %v296 = vpop.f32.mrb[0].mxu0
        %297 = vmatprep.mubr.f32.mxu0 0.0
        %298 = vmatmul.mubr.f32.gmra.mrb[0].mxu0 %v224
        %v299 = vpop.f32.mrb[0].mxu0
        %v300 = vadd.f32 0.0, %v299
        %v301 = vpop.f32.mrb[0].mxu0
        %302 = vmatprep.mubr.f32.mxu0 0.0
        %303 = vmatmul.mubr.f32.gmra.mrb[0].mxu0 %v223
        %v304 = vpop.f32.mrb[0].mxu0
        %v305 = vadd.f32 0.0, %v304
        %v306 = vpop.f32.mrb[0].mxu0
        %307 = vdwg.mxu0
        %308 = vmatprep.subr.mxu0 0.0
        %309 = vmatpush1.msra.mxu0 %v183
        %310 = vmatprep.subr.mxu0 0.0
        %311 = vmatpush1.msra.mxu0 %v184
        %312 = vmatprep.subr.mxu0 0.0
        %313 = vmatpush1.msra.mxu0 %v185
        %314 = vmatprep.subr.mxu0 0.0
        %315 = vmatpush1.msra.mxu0 %v186
        %316 = vmatprep.subr.mxu0 0.0
        %317 = vmatpush1.msra.mxu0 %v187
        %318 = vmatprep.subr.mxu0 0.0
        %319 = vmatpush1.msra.mxu0 %v188
        %320 = vmatprep.subr.mxu0 0.0
        %321 = vmatpush1.msra.mxu0 %v189
        %322 = vmatprep.subr.mxu0 0.0
        %323 = vmatpush1.msra.mxu0 %v190
        %324 = vmatprep.subr.mxu0 0.0
        %325 = vmatpush1.msra.mxu0 %v191
        %326 = vmatprep.subr.mxu0 0.0
        %327 = vmatpush1.msra.mxu0 %v192
        %328 = vmatprep.subr.mxu0 0.0
        %329 = vmatpush1.msra.mxu0 %v193
        %330 = vmatprep.subr.mxu0 0.0
        %331 = vmatpush1.msra.mxu0 %v194
        %332 = vmatprep.subr.mxu0 0.0
        %333 = vmatpush1.msra.mxu0 %v195
        %334 = vmatprep.subr.mxu0 0.0
        %335 = vmatpush1.msra.mxu0 %v196
        %336 = vmatprep.subr.mxu0 0.0
        %337 = vmatpush1.msra.mxu0 %v197
        %338 = vmatprep.subr.mxu0 0.0
        %339 = vmatpush1.msra.mxu0 %v198
        %340 = vmatprep.subr.mxu0 0.0
        %341 = vmatpush1.msra.mxu0 0.0
        %342 = vmatprep.subr.mxu0 0.0
        %343 = vmatpush1.msra.mxu0 0.0
        %344 = vmatprep.subr.mxu0 0.0
        %345 = vmatpush1.msra.mxu0 0.0
        %346 = vmatprep.subr.mxu0 0.0
        %347 = vmatpush1.msra.mxu0 0.0
        %348 = vmatprep.subr.mxu0 0.0
        %349 = vmatpush1.msra.mxu0 0.0
        %350 = vmatprep.subr.mxu0 0.0
        %351 = vmatpush1.msra.mxu0 0.0
        %352 = vmatprep.subr.mxu0 0.0
        %353 = vmatpush1.msra.mxu0 0.0
        %354 = vmatprep.subr.mxu0 0.0
        %355 = vmatpush1.msra.mxu0 0.0
        %356 = vmatprep.subr.mxu0 0.0
        %357 = vmatpush1.msra.mxu0 0.0
        %358 = vmatprep.subr.mxu0 0.0
        %359 = vmatpush1.msra.mxu0 0.0
        %360 = vmatprep.subr.mxu0 0.0
        %361 = vmatpush1.msra.mxu0 0.0
        %362 = vmatprep.subr.mxu0 0.0
        %363 = vmatpush1.msra.mxu0 0.0
        %364 = vmatprep.subr.mxu0 0.0
        %365 = vmatpush1.msra.mxu0 0.0
        %366 = vmatprep.subr.mxu0 0.0
        %367 = vmatpush1.msra.mxu0 0.0
        %368 = vmatprep.subr.mxu0 0.0
        %369 = vmatpush1.msra.mxu0 0.0
        %370 = vmatprep.subr.mxu0 0.0
        %371 = vmatpush1.msra.mxu0 0.0
        %372 = vmatprep.mubr.f32.mxu0 0.0
        %373 = vmatmul.mubr.f32.gmra.mrb[0].mxu0 %v180
        %v374 = vpop.f32.mrb[0].mxu0
        %v375 = vadd.f32 %v295, %v374
        %v376 = vpop.f32.mrb[0].mxu0
        %377 = vmatprep.mubr.f32.mxu0 0.0
        %378 = vmatmul.mubr.f32.gmra.mrb[0].mxu0 %v181
        %v379 = vpop.f32.mrb[0].mxu0
        %v380 = vadd.f32 %v300, %v379
        %v381 = vpop.f32.mrb[0].mxu0
        %382 = vmatprep.mubr.f32.mxu0 0.0
        %383 = vmatmul.mubr.f32.gmra.mrb[0].mxu0 %v182
        %v384 = vpop.f32.mrb[0].mxu0
        %v385 = vadd.f32 %v305, %v384
        %v386 = vpop.f32.mrb[0].mxu0
        %387 = vdwg.mxu0
        %s388 = scalar_lea.vmem %s1, 256
        %v389 = vld [vmem:[%s388] sm:$0xff]
        %v390 = vld [vmem:[%s388 + $0x8] sm:$0xff]
        %v391 = vld [vmem:[%s388 + $0x10] sm:$0xff]
        %v392 = vld [vmem:[%s388 + $0x18] sm:$0xff]
        %v393 = vld [vmem:[%s388 + $0x20] sm:$0xff]
        %v394 = vld [vmem:[%s388 + $0x28] sm:$0xff]
        %v395 = vld [vmem:[%s388 + $0x30] sm:$0xff]
        %v396 = vld [vmem:[%s388 + $0x38] sm:$0xff]
        %v397 = vld [vmem:[%s388 + $0x40] sm:$0xff]
        %v398 = vld [vmem:[%s388 + $0x48] sm:$0xff]
        %v399 = vld [vmem:[%s388 + $0x50] sm:$0xff]
        %v400 = vld [vmem:[%s388 + $0x58] sm:$0xff]
        %v401 = vld [vmem:[%s388 + $0x60] sm:$0xff]
        %v402 = vld [vmem:[%s388 + $0x68] sm:$0xff]
        %v403 = vld [vmem:[%s388 + $0x70] sm:$0xff]
        %v404 = vld [vmem:[%s388 + $0x78] sm:$0xff]
        %vm405 = vcmask 1045504
        %v406 = vrot.slane %v180, 2
        %v407 = vrot.slane %v181, 2
        %v408 = vsel %vm405, %v406, %v407
        %v409 = vrot.slane %v182, 2
        %v410 = vsel %vm405, %v407, %v409
        %414 = vmatprep.subr.mxu0 0.0
        %415 = vmatpush1.msra.mxu0 %v389
        %416 = vmatprep.subr.mxu0 0.0
        %417 = vmatpush1.msra.mxu0 %v390
        %418 = vmatprep.subr.mxu0 0.0
        %419 = vmatpush1.msra.mxu0 %v391
        %420 = vmatprep.subr.mxu0 0.0
        %421 = vmatpush1.msra.mxu0 %v392
        %422 = vmatprep.subr.mxu0 0.0
        %423 = vmatpush1.msra.mxu0 %v393
        %424 = vmatprep.subr.mxu0 0.0
        %425 = vmatpush1.msra.mxu0 %v394
        %426 = vmatprep.subr.mxu0 0.0
        %427 = vmatpush1.msra.mxu0 %v395
        %428 = vmatprep.subr.mxu0 0.0
        %429 = vmatpush1.msra.mxu0 %v396
        %430 = vmatprep.subr.mxu0 0.0
        %431 = vmatpush1.msra.mxu0 %v397
        %432 = vmatprep.subr.mxu0 0.0
        %433 = vmatpush1.msra.mxu0 %v398
        %434 = vmatprep.subr.mxu0 0.0
        %435 = vmatpush1.msra.mxu0 %v399
        %436 = vmatprep.subr.mxu0 0.0
        %437 = vmatpush1.msra.mxu0 %v400
        %438 = vmatprep.subr.mxu0 0.0
        %439 = vmatpush1.msra.mxu0 %v401
        %440 = vmatprep.subr.mxu0 0.0
        %441 = vmatpush1.msra.mxu0 %v402
        %442 = vmatprep.subr.mxu0 0.0
        %443 = vmatpush1.msra.mxu0 %v403
        %444 = vmatprep.subr.mxu0 0.0
        %445 = vmatpush1.msra.mxu0 %v404
        %446 = vmatprep.subr.mxu0 0.0
        %447 = vmatpush1.msra.mxu0 0.0
        %448 = vmatprep.subr.mxu0 0.0
        %449 = vmatpush1.msra.mxu0 0.0
        %450 = vmatprep.subr.mxu0 0.0
        %451 = vmatpush1.msra.mxu0 0.0
        %452 = vmatprep.subr.mxu0 0.0
        %453 = vmatpush1.msra.mxu0 0.0
        %454 = vmatprep.subr.mxu0 0.0
        %455 = vmatpush1.msra.mxu0 0.0
        %456 = vmatprep.subr.mxu0 0.0
        %457 = vmatpush1.msra.mxu0 0.0
        %458 = vmatprep.subr.mxu0 0.0
        %459 = vmatpush1.msra.mxu0 0.0
        %460 = vmatprep.subr.mxu0 0.0
        %461 = vmatpush1.msra.mxu0 0.0
        %462 = vmatprep.subr.mxu0 0.0
        %463 = vmatpush1.msra.mxu0 0.0
        %464 = vmatprep.subr.mxu0 0.0
        %465 = vmatpush1.msra.mxu0 0.0
        %466 = vmatprep.subr.mxu0 0.0
        %467 = vmatpush1.msra.mxu0 0.0
        %468 = vmatprep.subr.mxu0 0.0
        %469 = vmatpush1.msra.mxu0 0.0
        %470 = vmatprep.subr.mxu0 0.0
        %471 = vmatpush1.msra.mxu0 0.0
        %472 = vmatprep.subr.mxu0 0.0
        %473 = vmatpush1.msra.mxu0 0.0
        %474 = vmatprep.subr.mxu0 0.0
        %475 = vmatpush1.msra.mxu0 0.0
        %476 = vmatprep.subr.mxu0 0.0
        %477 = vmatpush1.msra.mxu0 0.0
        %478 = vmatprep.mubr.f32.mxu0 0.0
        %479 = vmatmul.mubr.f32.gmra.mrb[0].mxu0 %v408
        %v480 = vpop.f32.mrb[0].mxu0
        %v481 = vadd.f32 0.0, %v480
        %v482 = vpop.f32.mrb[0].mxu0
        %483 = vmatprep.mubr.f32.mxu0 0.0
        %484 = vmatmul.mubr.f32.gmra.mrb[0].mxu0 %v410
        %v485 = vpop.f32.mrb[0].mxu0
        %v486 = vadd.f32 0.0, %v485
        %v487 = vpop.f32.mrb[0].mxu0
        %488 = vmatprep.mubr.f32.mxu0 0.0
        %489 = vmatmul.mubr.f32.gmra.mrb[0].mxu0 %v409
        %v490 = vpop.f32.mrb[0].mxu0
        %v491 = vadd.f32 0.0, %v490
        %v492 = vpop.f32.mrb[0].mxu0
        %493 = vdwg.mxu0
        %v494 = vadd.f32 %v375, %v481
        %v495 = vadd.f32 %v380, %v486
        %v496 = vadd.f32 %v385, %v491
        %s497 = sadd.s32 %s173, 1
        %s498 = smul.u32 %s497, 24
        %s499 = scalar_lea.vmem %s165, %s498
        %v500 = vld [vmem:[%s499] sm:$0xff]
        %v501 = vld [vmem:[%s499 + $0x8] sm:$0xff]
        %v502 = vld [vmem:[%s499 + $0x10] sm:$0x3f]
        %s503 = scalar_lea.vmem %s1, 384
        %v504 = vld [vmem:[%s503] sm:$0xff]
        %v505 = vld [vmem:[%s503 + $0x8] sm:$0xff]
        %v506 = vld [vmem:[%s503 + $0x10] sm:$0xff]
        %v507 = vld [vmem:[%s503 + $0x18] sm:$0xff]
        %v508 = vld [vmem:[%s503 + $0x20] sm:$0xff]
        %v509 = vld [vmem:[%s503 + $0x28] sm:$0xff]
        %v510 = vld [vmem:[%s503 + $0x30] sm:$0xff]
        %v511 = vld [vmem:[%s503 + $0x38] sm:$0xff]
        %v512 = vld [vmem:[%s503 + $0x40] sm:$0xff]
        %v513 = vld [vmem:[%s503 + $0x48] sm:$0xff]
        %v514 = vld [vmem:[%s503 + $0x50] sm:$0xff]
        %v515 = vld [vmem:[%s503 + $0x58] sm:$0xff]
        %v516 = vld [vmem:[%s503 + $0x60] sm:$0xff]
        %v517 = vld [vmem:[%s503 + $0x68] sm:$0xff]
        %v518 = vld [vmem:[%s503 + $0x70] sm:$0xff]
        %v519 = vld [vmem:[%s503 + $0x78] sm:$0xff]
        %520 = vmatprep.subr.mxu0 0.0
        %521 = vmatpush1.msra.mxu0 %v504
        %522 = vmatprep.subr.mxu0 0.0
        %523 = vmatpush1.msra.mxu0 %v505
        %524 = vmatprep.subr.mxu0 0.0
        %525 = vmatpush1.msra.mxu0 %v506
        %526 = vmatprep.subr.mxu0 0.0
        %527 = vmatpush1.msra.mxu0 %v507
        %528 = vmatprep.subr.mxu0 0.0
        %529 = vmatpush1.msra.mxu0 %v508
        %530 = vmatprep.subr.mxu0 0.0
        %531 = vmatpush1.msra.mxu0 %v509
        %532 = vmatprep.subr.mxu0 0.0
        %533 = vmatpush1.msra.mxu0 %v510
        %534 = vmatprep.subr.mxu0 0.0
        %535 = vmatpush1.msra.mxu0 %v511
        %536 = vmatprep.subr.mxu0 0.0
        %537 = vmatpush1.msra.mxu0 %v512
        %538 = vmatprep.subr.mxu0 0.0
        %539 = vmatpush1.msra.mxu0 %v513
        %540 = vmatprep.subr.mxu0 0.0
        %541 = vmatpush1.msra.mxu0 %v514
        %542 = vmatprep.subr.mxu0 0.0
        %543 = vmatpush1.msra.mxu0 %v515
        %544 = vmatprep.subr.mxu0 0.0
        %545 = vmatpush1.msra.mxu0 %v516
        %546 = vmatprep.subr.mxu0 0.0
        %547 = vmatpush1.msra.mxu0 %v517
        %548 = vmatprep.subr.mxu0 0.0
        %549 = vmatpush1.msra.mxu0 %v518
        %550 = vmatprep.subr.mxu0 0.0
        %551 = vmatpush1.msra.mxu0 %v519
        %552 = vmatprep.subr.mxu0 0.0
        %553 = vmatpush1.msra.mxu0 0.0
        %554 = vmatprep.subr.mxu0 0.0
        %555 = vmatpush1.msra.mxu0 0.0
        %556 = vmatprep.subr.mxu0 0.0
        %557 = vmatpush1.msra.mxu0 0.0
        %558 = vmatprep.subr.mxu0 0.0
        %559 = vmatpush1.msra.mxu0 0.0
        %560 = vmatprep.subr.mxu0 0.0
        %561 = vmatpush1.msra.mxu0 0.0
        %562 = vmatprep.subr.mxu0 0.0
        %563 = vmatpush1.msra.mxu0 0.0
        %564 = vmatprep.subr.mxu0 0.0
        %565 = vmatpush1.msra.mxu0 0.0
        %566 = vmatprep.subr.mxu0 0.0
        %567 = vmatpush1.msra.mxu0 0.0
        %568 = vmatprep.subr.mxu0 0.0
        %569 = vmatpush1.msra.mxu0 0.0
        %570 = vmatprep.subr.mxu0 0.0
        %571 = vmatpush1.msra.mxu0 0.0
        %572 = vmatprep.subr.mxu0 0.0
        %573 = vmatpush1.msra.mxu0 0.0
        %574 = vmatprep.subr.mxu0 0.0
        %575 = vmatpush1.msra.mxu0 0.0
        %576 = vmatprep.subr.mxu0 0.0
        %577 = vmatpush1.msra.mxu0 0.0
        %578 = vmatprep.subr.mxu0 0.0
        %579 = vmatpush1.msra.mxu0 0.0
        %580 = vmatprep.subr.mxu0 0.0
        %581 = vmatpush1.msra.mxu0 0.0
        %582 = vmatprep.subr.mxu0 0.0
        %583 = vmatpush1.msra.mxu0 0.0
        %584 = vmatprep.mubr.f32.mxu0 0.0
        %585 = vmatmul.mubr.f32.gmra.mrb[0].mxu0 %v500
        %v586 = vpop.f32.mrb[0].mxu0
        %v587 = vadd.f32 0.0, %v586
        %v588 = vpop.f32.mrb[0].mxu0
        %589 = vmatprep.mubr.f32.mxu0 0.0
        %590 = vmatmul.mubr.f32.gmra.mrb[0].mxu0 %v501
        %v591 = vpop.f32.mrb[0].mxu0
        %v592 = vadd.f32 0.0, %v591
        %v593 = vpop.f32.mrb[0].mxu0
        %594 = vmatprep.mubr.f32.mxu0 0.0
        %595 = vmatmul.mubr.f32.gmra.mrb[0].mxu0 %v502
        %v596 = vpop.f32.mrb[0].mxu0
        %v597 = vadd.f32 0.0, %v596
        %v598 = vpop.f32.mrb[0].mxu0
        %599 = vdwg.mxu0
        %v600 = vadd.f32 %v494, %v587
        %v601 = vadd.f32 %v495, %v592
        %v602 = vadd.f32 %v496, %v597
        %s603 = scalar_lea.vmem %s1, 512
        %v604 = vld [vmem:[%s603] sm:$0xff]
        %v605 = vld [vmem:[%s603 + $0x8] sm:$0xff]
        %v606 = vld [vmem:[%s603 + $0x10] sm:$0xff]
        %v607 = vld [vmem:[%s603 + $0x18] sm:$0xff]
        %v608 = vld [vmem:[%s603 + $0x20] sm:$0xff]
        %v609 = vld [vmem:[%s603 + $0x28] sm:$0xff]
        %v610 = vld [vmem:[%s603 + $0x30] sm:$0xff]
        %v611 = vld [vmem:[%s603 + $0x38] sm:$0xff]
        %v612 = vld [vmem:[%s603 + $0x40] sm:$0xff]
        %v613 = vld [vmem:[%s603 + $0x48] sm:$0xff]
        %v614 = vld [vmem:[%s603 + $0x50] sm:$0xff]
        %v615 = vld [vmem:[%s603 + $0x58] sm:$0xff]
        %v616 = vld [vmem:[%s603 + $0x60] sm:$0xff]
        %v617 = vld [vmem:[%s603 + $0x68] sm:$0xff]
        %v618 = vld [vmem:[%s603 + $0x70] sm:$0xff]
        %v619 = vld [vmem:[%s603 + $0x78] sm:$0xff]
        %v623 = vrot.slane %v500, 1
        %v624 = vrot.slane %v501, 1
        %v625 = vsel %vm219, %v623, %v624
        %v626 = vrot.slane %v502, 1
        %v627 = vsel %vm219, %v624, %v626
        %631 = vmatprep.subr.mxu0 0.0
        %632 = vmatpush1.msra.mxu0 %v604
        %633 = vmatprep.subr.mxu0 0.0
        %634 = vmatpush1.msra.mxu0 %v605
        %635 = vmatprep.subr.mxu0 0.0
        %636 = vmatpush1.msra.mxu0 %v606
        %637 = vmatprep.subr.mxu0 0.0
        %638 = vmatpush1.msra.mxu0 %v607
        %639 = vmatprep.subr.mxu0 0.0
        %640 = vmatpush1.msra.mxu0 %v608
        %641 = vmatprep.subr.mxu0 0.0
        %642 = vmatpush1.msra.mxu0 %v609
        %643 = vmatprep.subr.mxu0 0.0
        %644 = vmatpush1.msra.mxu0 %v610
        %645 = vmatprep.subr.mxu0 0.0
        %646 = vmatpush1.msra.mxu0 %v611
        %647 = vmatprep.subr.mxu0 0.0
        %648 = vmatpush1.msra.mxu0 %v612
        %649 = vmatprep.subr.mxu0 0.0
        %650 = vmatpush1.msra.mxu0 %v613
        %651 = vmatprep.subr.mxu0 0.0
        %652 = vmatpush1.msra.mxu0 %v614
        %653 = vmatprep.subr.mxu0 0.0
        %654 = vmatpush1.msra.mxu0 %v615
        %655 = vmatprep.subr.mxu0 0.0
        %656 = vmatpush1.msra.mxu0 %v616
        %657 = vmatprep.subr.mxu0 0.0
        %658 = vmatpush1.msra.mxu0 %v617
        %659 = vmatprep.subr.mxu0 0.0
        %660 = vmatpush1.msra.mxu0 %v618
        %661 = vmatprep.subr.mxu0 0.0
        %662 = vmatpush1.msra.mxu0 %v619
        %663 = vmatprep.subr.mxu0 0.0
        %664 = vmatpush1.msra.mxu0 0.0
        %665 = vmatprep.subr.mxu0 0.0
        %666 = vmatpush1.msra.mxu0 0.0
        %667 = vmatprep.subr.mxu0 0.0
        %668 = vmatpush1.msra.mxu0 0.0
        %669 = vmatprep.subr.mxu0 0.0
        %670 = vmatpush1.msra.mxu0 0.0
        %671 = vmatprep.subr.mxu0 0.0
        %672 = vmatpush1.msra.mxu0 0.0
        %673 = vmatprep.subr.mxu0 0.0
        %674 = vmatpush1.msra.mxu0 0.0
        %675 = vmatprep.subr.mxu0 0.0
        %676 = vmatpush1.msra.mxu0 0.0
        %677 = vmatprep.subr.mxu0 0.0
        %678 = vmatpush1.msra.mxu0 0.0
        %679 = vmatprep.subr.mxu0 0.0
        %680 = vmatpush1.msra.mxu0 0.0
        %681 = vmatprep.subr.mxu0 0.0
        %682 = vmatpush1.msra.mxu0 0.0
        %683 = vmatprep.subr.mxu0 0.0
        %684 = vmatpush1.msra.mxu0 0.0
        %685 = vmatprep.subr.mxu0 0.0
        %686 = vmatpush1.msra.mxu0 0.0
        %687 = vmatprep.subr.mxu0 0.0
        %688 = vmatpush1.msra.mxu0 0.0
        %689 = vmatprep.subr.mxu0 0.0
        %690 = vmatpush1.msra.mxu0 0.0
        %691 = vmatprep.subr.mxu0 0.0
        %692 = vmatpush1.msra.mxu0 0.0
        %693 = vmatprep.subr.mxu0 0.0
        %694 = vmatpush1.msra.mxu0 0.0
        %695 = vmatprep.mubr.f32.mxu0 0.0
        %696 = vmatmul.mubr.f32.gmra.mrb[0].mxu0 %v625
        %v697 = vpop.f32.mrb[0].mxu0
        %v698 = vadd.f32 0.0, %v697
        %v699 = vpop.f32.mrb[0].mxu0
        %700 = vmatprep.mubr.f32.mxu0 0.0
        %701 = vmatmul.mubr.f32.gmra.mrb[0].mxu0 %v627
        %v702 = vpop.f32.mrb[0].mxu0
        %v703 = vadd.f32 0.0, %v702
        %v704 = vpop.f32.mrb[0].mxu0
        %705 = vmatprep.mubr.f32.mxu0 0.0
        %706 = vmatmul.mubr.f32.gmra.mrb[0].mxu0 %v626
        %v707 = vpop.f32.mrb[0].mxu0
        %v708 = vadd.f32 0.0, %v707
        %v709 = vpop.f32.mrb[0].mxu0
        %710 = vdwg.mxu0
        %v711 = vadd.f32 %v600, %v698
        %v712 = vadd.f32 %v601, %v703
        %v713 = vadd.f32 %v602, %v708
        %s714 = scalar_lea.vmem %s1, 640
        %v715 = vld [vmem:[%s714] sm:$0xff]
        %v716 = vld [vmem:[%s714 + $0x8] sm:$0xff]
        %v717 = vld [vmem:[%s714 + $0x10] sm:$0xff]
        %v718 = vld [vmem:[%s714 + $0x18] sm:$0xff]
        %v719 = vld [vmem:[%s714 + $0x20] sm:$0xff]
        %v720 = vld [vmem:[%s714 + $0x28] sm:$0xff]
        %v721 = vld [vmem:[%s714 + $0x30] sm:$0xff]
        %v722 = vld [vmem:[%s714 + $0x38] sm:$0xff]
        %v723 = vld [vmem:[%s714 + $0x40] sm:$0xff]
        %v724 = vld [vmem:[%s714 + $0x48] sm:$0xff]
        %v725 = vld [vmem:[%s714 + $0x50] sm:$0xff]
        %v726 = vld [vmem:[%s714 + $0x58] sm:$0xff]
        %v727 = vld [vmem:[%s714 + $0x60] sm:$0xff]
        %v728 = vld [vmem:[%s714 + $0x68] sm:$0xff]
        %v729 = vld [vmem:[%s714 + $0x70] sm:$0xff]
        %v730 = vld [vmem:[%s714 + $0x78] sm:$0xff]
        %v731 = vrot.slane %v500, 2
        %v732 = vrot.slane %v501, 2
        %v733 = vsel %vm405, %v731, %v732
        %v734 = vrot.slane %v502, 2
        %v735 = vsel %vm405, %v732, %v734
        %739 = vmatprep.subr.mxu0 0.0
        %740 = vmatpush1.msra.mxu0 %v715
        %741 = vmatprep.subr.mxu0 0.0
        %742 = vmatpush1.msra.mxu0 %v716
        %743 = vmatprep.subr.mxu0 0.0
        %744 = vmatpush1.msra.mxu0 %v717
        %745 = vmatprep.subr.mxu0 0.0
        %746 = vmatpush1.msra.mxu0 %v718
        %747 = vmatprep.subr.mxu0 0.0
        %748 = vmatpush1.msra.mxu0 %v719
        %749 = vmatprep.subr.mxu0 0.0
        %750 = vmatpush1.msra.mxu0 %v720
        %751 = vmatprep.subr.mxu0 0.0
        %752 = vmatpush1.msra.mxu0 %v721
        %753 = vmatprep.subr.mxu0 0.0
        %754 = vmatpush1.msra.mxu0 %v722
        %755 = vmatprep.subr.mxu0 0.0
        %756 = vmatpush1.msra.mxu0 %v723
        %757 = vmatprep.subr.mxu0 0.0
        %758 = vmatpush1.msra.mxu0 %v724
        %759 = vmatprep.subr.mxu0 0.0
        %760 = vmatpush1.msra.mxu0 %v725
        %761 = vmatprep.subr.mxu0 0.0
        %762 = vmatpush1.msra.mxu0 %v726
        %763 = vmatprep.subr.mxu0 0.0
        %764 = vmatpush1.msra.mxu0 %v727
        %765 = vmatprep.subr.mxu0 0.0
        %766 = vmatpush1.msra.mxu0 %v728
        %767 = vmatprep.subr.mxu0 0.0
        %768 = vmatpush1.msra.mxu0 %v729
        %769 = vmatprep.subr.mxu0 0.0
        %770 = vmatpush1.msra.mxu0 %v730
        %771 = vmatprep.subr.mxu0 0.0
        %772 = vmatpush1.msra.mxu0 0.0
        %773 = vmatprep.subr.mxu0 0.0
        %774 = vmatpush1.msra.mxu0 0.0
        %775 = vmatprep.subr.mxu0 0.0
        %776 = vmatpush1.msra.mxu0 0.0
        %777 = vmatprep.subr.mxu0 0.0
        %778 = vmatpush1.msra.mxu0 0.0
        %779 = vmatprep.subr.mxu0 0.0
        %780 = vmatpush1.msra.mxu0 0.0
        %781 = vmatprep.subr.mxu0 0.0
        %782 = vmatpush1.msra.mxu0 0.0
        %783 = vmatprep.subr.mxu0 0.0
        %784 = vmatpush1.msra.mxu0 0.0
        %785 = vmatprep.subr.mxu0 0.0
        %786 = vmatpush1.msra.mxu0 0.0
        %787 = vmatprep.subr.mxu0 0.0
        %788 = vmatpush1.msra.mxu0 0.0
        %789 = vmatprep.subr.mxu0 0.0
        %790 = vmatpush1.msra.mxu0 0.0
        %791 = vmatprep.subr.mxu0 0.0
        %792 = vmatpush1.msra.mxu0 0.0
        %793 = vmatprep.subr.mxu0 0.0
        %794 = vmatpush1.msra.mxu0 0.0
        %795 = vmatprep.subr.mxu0 0.0
        %796 = vmatpush1.msra.mxu0 0.0
        %797 = vmatprep.subr.mxu0 0.0
        %798 = vmatpush1.msra.mxu0 0.0
        %799 = vmatprep.subr.mxu0 0.0
        %800 = vmatpush1.msra.mxu0 0.0
        %801 = vmatprep.subr.mxu0 0.0
        %802 = vmatpush1.msra.mxu0 0.0
        %803 = vmatprep.mubr.f32.mxu0 0.0
        %804 = vmatmul.mubr.f32.gmra.mrb[0].mxu0 %v733
        %v805 = vpop.f32.mrb[0].mxu0
        %v806 = vadd.f32 0.0, %v805
        %v807 = vpop.f32.mrb[0].mxu0
        %808 = vmatprep.mubr.f32.mxu0 0.0
        %809 = vmatmul.mubr.f32.gmra.mrb[0].mxu0 %v735
        %v810 = vpop.f32.mrb[0].mxu0
        %v811 = vadd.f32 0.0, %v810
        %v812 = vpop.f32.mrb[0].mxu0
        %813 = vmatprep.mubr.f32.mxu0 0.0
        %814 = vmatmul.mubr.f32.gmra.mrb[0].mxu0 %v734
        %v815 = vpop.f32.mrb[0].mxu0
        %v816 = vadd.f32 0.0, %v815
        %v817 = vpop.f32.mrb[0].mxu0
        %818 = vdwg.mxu0
        %v819 = vadd.f32 %v711, %v806
        %v820 = vadd.f32 %v712, %v811
        %v821 = vadd.f32 %v713, %v816
        %s822 = sadd.s32 %s173, 2
        %s823 = smul.u32 %s822, 24
        %s824 = scalar_lea.vmem %s165, %s823
        %v825 = vld [vmem:[%s824] sm:$0xff]
        %v826 = vld [vmem:[%s824 + $0x8] sm:$0xff]
        %v827 = vld [vmem:[%s824 + $0x10] sm:$0x3f]
        %s828 = scalar_lea.vmem %s1, 768
        %v829 = vld [vmem:[%s828] sm:$0xff]
        %v830 = vld [vmem:[%s828 + $0x8] sm:$0xff]
        %v831 = vld [vmem:[%s828 + $0x10] sm:$0xff]
        %v832 = vld [vmem:[%s828 + $0x18] sm:$0xff]
        %v833 = vld [vmem:[%s828 + $0x20] sm:$0xff]
        %v834 = vld [vmem:[%s828 + $0x28] sm:$0xff]
        %v835 = vld [vmem:[%s828 + $0x30] sm:$0xff]
        %v836 = vld [vmem:[%s828 + $0x38] sm:$0xff]
        %v837 = vld [vmem:[%s828 + $0x40] sm:$0xff]
        %v838 = vld [vmem:[%s828 + $0x48] sm:$0xff]
        %v839 = vld [vmem:[%s828 + $0x50] sm:$0xff]
        %v840 = vld [vmem:[%s828 + $0x58] sm:$0xff]
        %v841 = vld [vmem:[%s828 + $0x60] sm:$0xff]
        %v842 = vld [vmem:[%s828 + $0x68] sm:$0xff]
        %v843 = vld [vmem:[%s828 + $0x70] sm:$0xff]
        %v844 = vld [vmem:[%s828 + $0x78] sm:$0xff]
        %845 = vmatprep.subr.mxu0 0.0
        %846 = vmatpush1.msra.mxu0 %v829
        %847 = vmatprep.subr.mxu0 0.0
        %848 = vmatpush1.msra.mxu0 %v830
        %849 = vmatprep.subr.mxu0 0.0
        %850 = vmatpush1.msra.mxu0 %v831
        %851 = vmatprep.subr.mxu0 0.0
        %852 = vmatpush1.msra.mxu0 %v832
        %853 = vmatprep.subr.mxu0 0.0
        %854 = vmatpush1.msra.mxu0 %v833
        %855 = vmatprep.subr.mxu0 0.0
        %856 = vmatpush1.msra.mxu0 %v834
        %857 = vmatprep.subr.mxu0 0.0
        %858 = vmatpush1.msra.mxu0 %v835
        %859 = vmatprep.subr.mxu0 0.0
        %860 = vmatpush1.msra.mxu0 %v836
        %861 = vmatprep.subr.mxu0 0.0
        %862 = vmatpush1.msra.mxu0 %v837
        %863 = vmatprep.subr.mxu0 0.0
        %864 = vmatpush1.msra.mxu0 %v838
        %865 = vmatprep.subr.mxu0 0.0
        %866 = vmatpush1.msra.mxu0 %v839
        %867 = vmatprep.subr.mxu0 0.0
        %868 = vmatpush1.msra.mxu0 %v840
        %869 = vmatprep.subr.mxu0 0.0
        %870 = vmatpush1.msra.mxu0 %v841
        %871 = vmatprep.subr.mxu0 0.0
        %872 = vmatpush1.msra.mxu0 %v842
        %873 = vmatprep.subr.mxu0 0.0
        %874 = vmatpush1.msra.mxu0 %v843
        %875 = vmatprep.subr.mxu0 0.0
        %876 = vmatpush1.msra.mxu0 %v844
        %877 = vmatprep.subr.mxu0 0.0
        %878 = vmatpush1.msra.mxu0 0.0
        %879 = vmatprep.subr.mxu0 0.0
        %880 = vmatpush1.msra.mxu0 0.0
        %881 = vmatprep.subr.mxu0 0.0
        %882 = vmatpush1.msra.mxu0 0.0
        %883 = vmatprep.subr.mxu0 0.0
        %884 = vmatpush1.msra.mxu0 0.0
        %885 = vmatprep.subr.mxu0 0.0
        %886 = vmatpush1.msra.mxu0 0.0
        %887 = vmatprep.subr.mxu0 0.0
        %888 = vmatpush1.msra.mxu0 0.0
        %889 = vmatprep.subr.mxu0 0.0
        %890 = vmatpush1.msra.mxu0 0.0
        %891 = vmatprep.subr.mxu0 0.0
        %892 = vmatpush1.msra.mxu0 0.0
        %893 = vmatprep.subr.mxu0 0.0
        %894 = vmatpush1.msra.mxu0 0.0
        %895 = vmatprep.subr.mxu0 0.0
        %896 = vmatpush1.msra.mxu0 0.0
        %897 = vmatprep.subr.mxu0 0.0
        %898 = vmatpush1.msra.mxu0 0.0
        %899 = vmatprep.subr.mxu0 0.0
        %900 = vmatpush1.msra.mxu0 0.0
        %901 = vmatprep.subr.mxu0 0.0
        %902 = vmatpush1.msra.mxu0 0.0
        %903 = vmatprep.subr.mxu0 0.0
        %904 = vmatpush1.msra.mxu0 0.0
        %905 = vmatprep.subr.mxu0 0.0
        %906 = vmatpush1.msra.mxu0 0.0
        %907 = vmatprep.subr.mxu0 0.0
        %908 = vmatpush1.msra.mxu0 0.0
        %909 = vmatprep.mubr.f32.mxu0 0.0
        %910 = vmatmul.mubr.f32.gmra.mrb[0].mxu0 %v825
        %v911 = vpop.f32.mrb[0].mxu0
        %v912 = vadd.f32 0.0, %v911
        %v913 = vpop.f32.mrb[0].mxu0
        %914 = vmatprep.mubr.f32.mxu0 0.0
        %915 = vmatmul.mubr.f32.gmra.mrb[0].mxu0 %v826
        %v916 = vpop.f32.mrb[0].mxu0
        %v917 = vadd.f32 0.0, %v916
        %v918 = vpop.f32.mrb[0].mxu0
        %919 = vmatprep.mubr.f32.mxu0 0.0
        %920 = vmatmul.mubr.f32.gmra.mrb[0].mxu0 %v827
        %v921 = vpop.f32.mrb[0].mxu0
        %v922 = vadd.f32 0.0, %v921
        %v923 = vpop.f32.mrb[0].mxu0
        %924 = vdwg.mxu0
        %v925 = vadd.f32 %v819, %v912
        %v926 = vadd.f32 %v820, %v917
        %v927 = vadd.f32 %v821, %v922
        %s928 = scalar_lea.vmem %s1, 896
        %v929 = vld [vmem:[%s928] sm:$0xff]
        %v930 = vld [vmem:[%s928 + $0x8] sm:$0xff]
        %v931 = vld [vmem:[%s928 + $0x10] sm:$0xff]
        %v932 = vld [vmem:[%s928 + $0x18] sm:$0xff]
        %v933 = vld [vmem:[%s928 + $0x20] sm:$0xff]
        %v934 = vld [vmem:[%s928 + $0x28] sm:$0xff]
        %v935 = vld [vmem:[%s928 + $0x30] sm:$0xff]
        %v936 = vld [vmem:[%s928 + $0x38] sm:$0xff]
        %v937 = vld [vmem:[%s928 + $0x40] sm:$0xff]
        %v938 = vld [vmem:[%s928 + $0x48] sm:$0xff]
        %v939 = vld [vmem:[%s928 + $0x50] sm:$0xff]
        %v940 = vld [vmem:[%s928 + $0x58] sm:$0xff]
        %v941 = vld [vmem:[%s928 + $0x60] sm:$0xff]
        %v942 = vld [vmem:[%s928 + $0x68] sm:$0xff]
        %v943 = vld [vmem:[%s928 + $0x70] sm:$0xff]
        %v944 = vld [vmem:[%s928 + $0x78] sm:$0xff]
        %v948 = vrot.slane %v825, 1
        %v949 = vrot.slane %v826, 1
        %v950 = vsel %vm219, %v948, %v949
        %v951 = vrot.slane %v827, 1
        %v952 = vsel %vm219, %v949, %v951
        %956 = vmatprep.subr.mxu0 0.0
        %957 = vmatpush1.msra.mxu0 %v929
        %958 = vmatprep.subr.mxu0 0.0
        %959 = vmatpush1.msra.mxu0 %v930
        %960 = vmatprep.subr.mxu0 0.0
        %961 = vmatpush1.msra.mxu0 %v931
        %962 = vmatprep.subr.mxu0 0.0
        %963 = vmatpush1.msra.mxu0 %v932
        %964 = vmatprep.subr.mxu0 0.0
        %965 = vmatpush1.msra.mxu0 %v933
        %966 = vmatprep.subr.mxu0 0.0
        %967 = vmatpush1.msra.mxu0 %v934
        %968 = vmatprep.subr.mxu0 0.0
        %969 = vmatpush1.msra.mxu0 %v935
        %970 = vmatprep.subr.mxu0 0.0
        %971 = vmatpush1.msra.mxu0 %v936
        %972 = vmatprep.subr.mxu0 0.0
        %973 = vmatpush1.msra.mxu0 %v937
        %974 = vmatprep.subr.mxu0 0.0
        %975 = vmatpush1.msra.mxu0 %v938
        %976 = vmatprep.subr.mxu0 0.0
        %977 = vmatpush1.msra.mxu0 %v939
        %978 = vmatprep.subr.mxu0 0.0
        %979 = vmatpush1.msra.mxu0 %v940
        %980 = vmatprep.subr.mxu0 0.0
        %981 = vmatpush1.msra.mxu0 %v941
        %982 = vmatprep.subr.mxu0 0.0
        %983 = vmatpush1.msra.mxu0 %v942
        %984 = vmatprep.subr.mxu0 0.0
        %985 = vmatpush1.msra.mxu0 %v943
        %986 = vmatprep.subr.mxu0 0.0
        %987 = vmatpush1.msra.mxu0 %v944
        %988 = vmatprep.subr.mxu0 0.0
        %989 = vmatpush1.msra.mxu0 0.0
        %990 = vmatprep.subr.mxu0 0.0
        %991 = vmatpush1.msra.mxu0 0.0
        %992 = vmatprep.subr.mxu0 0.0
        %993 = vmatpush1.msra.mxu0 0.0
        %994 = vmatprep.subr.mxu0 0.0
        %995 = vmatpush1.msra.mxu0 0.0
        %996 = vmatprep.subr.mxu0 0.0
        %997 = vmatpush1.msra.mxu0 0.0
        %998 = vmatprep.subr.mxu0 0.0
        %999 = vmatpush1.msra.mxu0 0.0
        %1000 = vmatprep.subr.mxu0 0.0
        %1001 = vmatpush1.msra.mxu0 0.0
        %1002 = vmatprep.subr.mxu0 0.0
        %1003 = vmatpush1.msra.mxu0 0.0
        %1004 = vmatprep.subr.mxu0 0.0
        %1005 = vmatpush1.msra.mxu0 0.0
        %1006 = vmatprep.subr.mxu0 0.0
        %1007 = vmatpush1.msra.mxu0 0.0
        %1008 = vmatprep.subr.mxu0 0.0
        %1009 = vmatpush1.msra.mxu0 0.0
        %1010 = vmatprep.subr.mxu0 0.0
        %1011 = vmatpush1.msra.mxu0 0.0
        %1012 = vmatprep.subr.mxu0 0.0
        %1013 = vmatpush1.msra.mxu0 0.0
        %1014 = vmatprep.subr.mxu0 0.0
        %1015 = vmatpush1.msra.mxu0 0.0
        %1016 = vmatprep.subr.mxu0 0.0
        %1017 = vmatpush1.msra.mxu0 0.0
        %1018 = vmatprep.subr.mxu0 0.0
        %1019 = vmatpush1.msra.mxu0 0.0
        %1020 = vmatprep.mubr.f32.mxu0 0.0
        %1021 = vmatmul.mubr.f32.gmra.mrb[0].mxu0 %v950
        %v1022 = vpop.f32.mrb[0].mxu0
        %v1023 = vadd.f32 0.0, %v1022
        %v1024 = vpop.f32.mrb[0].mxu0
        %1025 = vmatprep.mubr.f32.mxu0 0.0
        %1026 = vmatmul.mubr.f32.gmra.mrb[0].mxu0 %v952
        %v1027 = vpop.f32.mrb[0].mxu0
        %v1028 = vadd.f32 0.0, %v1027
        %v1029 = vpop.f32.mrb[0].mxu0
        %1030 = vmatprep.mubr.f32.mxu0 0.0
        %1031 = vmatmul.mubr.f32.gmra.mrb[0].mxu0 %v951
        %v1032 = vpop.f32.mrb[0].mxu0
        %v1033 = vadd.f32 0.0, %v1032
        %v1034 = vpop.f32.mrb[0].mxu0
        %1035 = vdwg.mxu0
        %v1036 = vadd.f32 %v925, %v1023
        %v1037 = vadd.f32 %v926, %v1028
        %v1038 = vadd.f32 %v927, %v1033
        %s1039 = scalar_lea.vmem %s1, 1024
        %v1040 = vld [vmem:[%s1039] sm:$0xff]
        %v1041 = vld [vmem:[%s1039 + $0x8] sm:$0xff]
        %v1042 = vld [vmem:[%s1039 + $0x10] sm:$0xff]
        %v1043 = vld [vmem:[%s1039 + $0x18] sm:$0xff]
        %v1044 = vld [vmem:[%s1039 + $0x20] sm:$0xff]
        %v1045 = vld [vmem:[%s1039 + $0x28] sm:$0xff]
        %v1046 = vld [vmem:[%s1039 + $0x30] sm:$0xff]
        %v1047 = vld [vmem:[%s1039 + $0x38] sm:$0xff]
        %v1048 = vld [vmem:[%s1039 + $0x40] sm:$0xff]
        %v1049 = vld [vmem:[%s1039 + $0x48] sm:$0xff]
        %v1050 = vld [vmem:[%s1039 + $0x50] sm:$0xff]
        %v1051 = vld [vmem:[%s1039 + $0x58] sm:$0xff]
        %v1052 = vld [vmem:[%s1039 + $0x60] sm:$0xff]
        %v1053 = vld [vmem:[%s1039 + $0x68] sm:$0xff]
        %v1054 = vld [vmem:[%s1039 + $0x70] sm:$0xff]
        %v1055 = vld [vmem:[%s1039 + $0x78] sm:$0xff]
        %v1056 = vrot.slane %v825, 2
        %v1057 = vrot.slane %v826, 2
        %v1058 = vsel %vm405, %v1056, %v1057
        %v1059 = vrot.slane %v827, 2
        %v1060 = vsel %vm405, %v1057, %v1059
        %1064 = vmatprep.subr.mxu0 0.0
        %1065 = vmatpush1.msra.mxu0 %v1040
        %1066 = vmatprep.subr.mxu0 0.0
        %1067 = vmatpush1.msra.mxu0 %v1041
        %1068 = vmatprep.subr.mxu0 0.0
        %1069 = vmatpush1.msra.mxu0 %v1042
        %1070 = vmatprep.subr.mxu0 0.0
        %1071 = vmatpush1.msra.mxu0 %v1043
        %1072 = vmatprep.subr.mxu0 0.0
        %1073 = vmatpush1.msra.mxu0 %v1044
        %1074 = vmatprep.subr.mxu0 0.0
        %1075 = vmatpush1.msra.mxu0 %v1045
        %1076 = vmatprep.subr.mxu0 0.0
        %1077 = vmatpush1.msra.mxu0 %v1046
        %1078 = vmatprep.subr.mxu0 0.0
        %1079 = vmatpush1.msra.mxu0 %v1047
        %1080 = vmatprep.subr.mxu0 0.0
        %1081 = vmatpush1.msra.mxu0 %v1048
        %1082 = vmatprep.subr.mxu0 0.0
        %1083 = vmatpush1.msra.mxu0 %v1049
        %1084 = vmatprep.subr.mxu0 0.0
        %1085 = vmatpush1.msra.mxu0 %v1050
        %1086 = vmatprep.subr.mxu0 0.0
        %1087 = vmatpush1.msra.mxu0 %v1051
        %1088 = vmatprep.subr.mxu0 0.0
        %1089 = vmatpush1.msra.mxu0 %v1052
        %1090 = vmatprep.subr.mxu0 0.0
        %1091 = vmatpush1.msra.mxu0 %v1053
        %1092 = vmatprep.subr.mxu0 0.0
        %1093 = vmatpush1.msra.mxu0 %v1054
        %1094 = vmatprep.subr.mxu0 0.0
        %1095 = vmatpush1.msra.mxu0 %v1055
        %1096 = vmatprep.subr.mxu0 0.0
        %1097 = vmatpush1.msra.mxu0 0.0
        %1098 = vmatprep.subr.mxu0 0.0
        %1099 = vmatpush1.msra.mxu0 0.0
        %1100 = vmatprep.subr.mxu0 0.0
        %1101 = vmatpush1.msra.mxu0 0.0
        %1102 = vmatprep.subr.mxu0 0.0
        %1103 = vmatpush1.msra.mxu0 0.0
        %1104 = vmatprep.subr.mxu0 0.0
        %1105 = vmatpush1.msra.mxu0 0.0
        %1106 = vmatprep.subr.mxu0 0.0
        %1107 = vmatpush1.msra.mxu0 0.0
        %1108 = vmatprep.subr.mxu0 0.0
        %1109 = vmatpush1.msra.mxu0 0.0
        %1110 = vmatprep.subr.mxu0 0.0
        %1111 = vmatpush1.msra.mxu0 0.0
        %1112 = vmatprep.subr.mxu0 0.0
        %1113 = vmatpush1.msra.mxu0 0.0
        %1114 = vmatprep.subr.mxu0 0.0
        %1115 = vmatpush1.msra.mxu0 0.0
        %1116 = vmatprep.subr.mxu0 0.0
        %1117 = vmatpush1.msra.mxu0 0.0
        %1118 = vmatprep.subr.mxu0 0.0
        %1119 = vmatpush1.msra.mxu0 0.0
        %1120 = vmatprep.subr.mxu0 0.0
        %1121 = vmatpush1.msra.mxu0 0.0
        %1122 = vmatprep.subr.mxu0 0.0
        %1123 = vmatpush1.msra.mxu0 0.0
        %1124 = vmatprep.subr.mxu0 0.0
        %1125 = vmatpush1.msra.mxu0 0.0
        %1126 = vmatprep.subr.mxu0 0.0
        %1127 = vmatpush1.msra.mxu0 0.0
        %1128 = vmatprep.mubr.f32.mxu0 0.0
        %1129 = vmatmul.mubr.f32.gmra.mrb[0].mxu0 %v1058
        %v1130 = vpop.f32.mrb[0].mxu0
        %v1131 = vadd.f32 0.0, %v1130
        %v1132 = vpop.f32.mrb[0].mxu0
        %1133 = vmatprep.mubr.f32.mxu0 0.0
        %1134 = vmatmul.mubr.f32.gmra.mrb[0].mxu0 %v1060
        %v1135 = vpop.f32.mrb[0].mxu0
        %v1136 = vadd.f32 0.0, %v1135
        %v1137 = vpop.f32.mrb[0].mxu0
        %1138 = vmatprep.mubr.f32.mxu0 0.0
        %1139 = vmatmul.mubr.f32.gmra.mrb[0].mxu0 %v1059
        %v1140 = vpop.f32.mrb[0].mxu0
        %v1141 = vadd.f32 0.0, %v1140
        %v1142 = vpop.f32.mrb[0].mxu0
        %1143 = vdwg.mxu0
        %v1144 = vadd.f32 %v1036, %v1131
        %v1145 = vadd.f32 %v1037, %v1136
        %v1146 = vadd.f32 %v1038, %v1141
        %v1148 = vlaneseq
        %v1149 = vshrl.u32 %v1148, 7
        %v1150 = vsub.s32 0, %v1149
        %v1151 = vrot.slane %v171, %v1150
        %v1153 = vadd.f32 %v1144, %v1151
        %v1154 = vadd.f32 %v1145, %v1151
        %v1155 = vadd.f32 %v1146, %v1151
        %s1156 = scalar_lea.vmem [#allocation2], %s178
        %1157 = vst [vmem:[%s1156] sm:$0xff] %v1153
        %1158 = vst [vmem:[%s1156 + $0x8] sm:$0xff] %v1154
        %1159 = vst [vmem:[%s1156 + $0x10] sm:$0xf] %v1155
      $region37: #{ae_decoder_forward.7} parent=31 // loop_footer
        %s177 = sadd.s32 1, %s173
      $region38: #{ae_decoder_forward.7} parent=31 // loop_footer_branch
        %172 = sbr.rel target = $region34
      $region39: #{ae_decoder_forward.7} parent=31 // loop_exit
        _
      %v1160 = vld [vmem:[#allocation2] sm:$0xff]
      %v1161 = vld [vmem:[#allocation2 + $0x8] sm:$0xff]
      %v1162 = vld [vmem:[#allocation2 + $0x10] sm:$0xf]
      %v1163 = vld [vmem:[#allocation2 + $0x18] sm:$0xff]
      %v1164 = vld [vmem:[#allocation2 + $0x20] sm:$0xff]
      %v1165 = vld [vmem:[#allocation2 + $0x28] sm:$0xf]
      %v1166 = vld [vmem:[#allocation2 + $0x30] sm:$0xff]
      %v1167 = vld [vmem:[#allocation2 + $0x38] sm:$0xff]
      %v1168 = vld [vmem:[#allocation2 + $0x40] sm:$0xf]
      %v1169 = vld [vmem:[#allocation2 + $0x48] sm:$0xff]
      %v1170 = vld [vmem:[#allocation2 + $0x50] sm:$0xff]
      %v1171 = vld [vmem:[#allocation2 + $0x58] sm:$0xf]
      %v1172 = vld [vmem:[#allocation2 + $0x60] sm:$0xff]
      %v1173 = vld [vmem:[#allocation2 + $0x68] sm:$0xff]
      %v1174 = vld [vmem:[#allocation2 + $0x70] sm:$0xf]
      %v1175 = vld [vmem:[#allocation2 + $0x78] sm:$0xff]
      %v1176 = vld [vmem:[#allocation2 + $0x80] sm:$0xff]
      %v1177 = vld [vmem:[#allocation2 + $0x88] sm:$0xf]
      %v1178 = vld [vmem:[#allocation2 + $0x90] sm:$0xff]
      %v1179 = vld [vmem:[#allocation2 + $0x98] sm:$0xff]
      %v1180 = vld [vmem:[#allocation2 + $0xa0] sm:$0xf]
      %v1181 = vld [vmem:[#allocation2 + $0xa8] sm:$0xff]
      %v1182 = vld [vmem:[#allocation2 + $0xb0] sm:$0xff]
      %v1183 = vld [vmem:[#allocation2 + $0xb8] sm:$0xf]
      %v1184 = vld [vmem:[#allocation2 + $0xc0] sm:$0xff]
      %v1185 = vld [vmem:[#allocation2 + $0xc8] sm:$0xff]
      %v1186 = vld [vmem:[#allocation2 + $0xd0] sm:$0xf]
      %v1187 = vld [vmem:[#allocation2 + $0xd8] sm:$0xff]
      %v1188 = vld [vmem:[#allocation2 + $0xe0] sm:$0xff]
      %v1189 = vld [vmem:[#allocation2 + $0xe8] sm:$0xf]
      %v1190 = vadd.f32 %v1160, %v1161
      %vm1191 = vcmask 1043456
      %v1192 = vsel %vm1191, %v1162, 0.0
      %v1193 = vadd.f32 %v1190, %v1192
      %v1194 = vrot.slane %v1193, 4
      %v1195 = vadd.f32 %v1193, %v1194
      %v1196 = vrot.slane %v1195, 2
      %v1197 = vadd.f32 %v1195, %v1196
      %v1198 = vrot.slane %v1197, 1
      %v1199 = vadd.f32 %v1197, %v1198
      %v1200 = vadd.f32 %v1163, %v1164
      %v1201 = vsel %vm1191, %v1165, 0.0
      %v1202 = vadd.f32 %v1200, %v1201
      %v1203 = vrot.slane %v1202, 4
      %v1204 = vadd.f32 %v1202, %v1203
      %v1205 = vrot.slane %v1204, 2
      %v1206 = vadd.f32 %v1204, %v1205
      %v1207 = vrot.slane %v1206, 1
      %v1208 = vadd.f32 %v1206, %v1207
      %v1209 = vadd.f32 %v1166, %v1167
      %v1210 = vsel %vm1191, %v1168, 0.0
      %v1211 = vadd.f32 %v1209, %v1210
      %v1212 = vrot.slane %v1211, 4
      %v1213 = vadd.f32 %v1211, %v1212
      %v1214 = vrot.slane %v1213, 2
      %v1215 = vadd.f32 %v1213, %v1214
      %v1216 = vrot.slane %v1215, 1
      %v1217 = vadd.f32 %v1215, %v1216
      %v1218 = vadd.f32 %v1169, %v1170
      %v1219 = vsel %vm1191, %v1171, 0.0
      %v1220 = vadd.f32 %v1218, %v1219
      %v1221 = vrot.slane %v1220, 4
      %v1222 = vadd.f32 %v1220, %v1221
      %v1223 = vrot.slane %v1222, 2
      %v1224 = vadd.f32 %v1222, %v1223
      %v1225 = vrot.slane %v1224, 1
      %v1226 = vadd.f32 %v1224, %v1225
      %v1227 = vadd.f32 %v1172, %v1173
      %v1228 = vsel %vm1191, %v1174, 0.0
      %v1229 = vadd.f32 %v1227, %v1228
      %v1230 = vrot.slane %v1229, 4
      %v1231 = vadd.f32 %v1229, %v1230
      %v1232 = vrot.slane %v1231, 2
      %v1233 = vadd.f32 %v1231, %v1232
      %v1234 = vrot.slane %v1233, 1
      %v1235 = vadd.f32 %v1233, %v1234
      %v1236 = vadd.f32 %v1175, %v1176
      %v1237 = vsel %vm1191, %v1177, 0.0
      %v1238 = vadd.f32 %v1236, %v1237
      %v1239 = vrot.slane %v1238, 4
      %v1240 = vadd.f32 %v1238, %v1239
      %v1241 = vrot.slane %v1240, 2
      %v1242 = vadd.f32 %v1240, %v1241
      %v1243 = vrot.slane %v1242, 1
      %v1244 = vadd.f32 %v1242, %v1243
      %v1245 = vadd.f32 %v1178, %v1179
      %v1246 = vsel %vm1191, %v1180, 0.0
      %v1247 = vadd.f32 %v1245, %v1246
      %v1248 = vrot.slane %v1247, 4
      %v1249 = vadd.f32 %v1247, %v1248
      %v1250 = vrot.slane %v1249, 2
      %v1251 = vadd.f32 %v1249, %v1250
      %v1252 = vrot.slane %v1251, 1
      %v1253 = vadd.f32 %v1251, %v1252
      %v1254 = vadd.f32 %v1181, %v1182
      %v1255 = vsel %vm1191, %v1183, 0.0
      %v1256 = vadd.f32 %v1254, %v1255
      %v1257 = vrot.slane %v1256, 4
      %v1258 = vadd.f32 %v1256, %v1257
      %v1259 = vrot.slane %v1258, 2
      %v1260 = vadd.f32 %v1258, %v1259
      %v1261 = vrot.slane %v1260, 1
      %v1262 = vadd.f32 %v1260, %v1261
      %v1263 = vadd.f32 %v1184, %v1185
      %v1264 = vsel %vm1191, %v1186, 0.0
      %v1265 = vadd.f32 %v1263, %v1264
      %v1266 = vrot.slane %v1265, 4
      %v1267 = vadd.f32 %v1265, %v1266
      %v1268 = vrot.slane %v1267, 2
      %v1269 = vadd.f32 %v1267, %v1268
      %v1270 = vrot.slane %v1269, 1
      %v1271 = vadd.f32 %v1269, %v1270
      %v1272 = vadd.f32 %v1187, %v1188
      %v1273 = vsel %vm1191, %v1189, 0.0
      %v1274 = vadd.f32 %v1272, %v1273
      %v1275 = vrot.slane %v1274, 4
      %v1276 = vadd.f32 %v1274, %v1275
      %v1277 = vrot.slane %v1276, 2
      %v1278 = vadd.f32 %v1276, %v1277
      %v1279 = vrot.slane %v1278, 1
      %v1280 = vadd.f32 %v1278, %v1279
      %v1281 = vadd.f32 %v1199, %v1208
      %v1282 = vadd.f32 %v1281, %v1217
      %v1283 = vadd.f32 %v1282, %v1226
      %v1284 = vadd.f32 %v1283, %v1235
      %v1285 = vadd.f32 %v1284, %v1244
      %v1286 = vadd.f32 %v1285, %v1253
      %v1287 = vadd.f32 %v1286, %v1262
      %v1288 = vadd.f32 %v1287, %v1271
      %v1289 = vadd.f32 %v1288, %v1280
      %v1290 = vmul.f32 %v1160, %v1160
      %v1291 = vmul.f32 %v1161, %v1161
      %v1292 = vmul.f32 %v1162, %v1162
      %v1293 = vmul.f32 %v1163, %v1163
      %v1294 = vmul.f32 %v1164, %v1164
      %v1295 = vmul.f32 %v1165, %v1165
      %v1296 = vmul.f32 %v1166, %v1166
      %v1297 = vmul.f32 %v1167, %v1167
      %v1298 = vmul.f32 %v1168, %v1168
      %v1299 = vmul.f32 %v1169, %v1169
      %v1300 = vmul.f32 %v1170, %v1170
      %v1301 = vmul.f32 %v1171, %v1171
      %v1302 = vmul.f32 %v1172, %v1172
      %v1303 = vmul.f32 %v1173, %v1173
      %v1304 = vmul.f32 %v1174, %v1174
      %v1305 = vmul.f32 %v1175, %v1175
      %v1306 = vmul.f32 %v1176, %v1176
      %v1307 = vmul.f32 %v1177, %v1177
      %v1308 = vmul.f32 %v1178, %v1178
      %v1309 = vmul.f32 %v1179, %v1179
      %v1310 = vmul.f32 %v1180, %v1180
      %v1311 = vmul.f32 %v1181, %v1181
      %v1312 = vmul.f32 %v1182, %v1182
      %v1313 = vmul.f32 %v1183, %v1183
      %v1314 = vmul.f32 %v1184, %v1184
      %v1315 = vmul.f32 %v1185, %v1185
      %v1316 = vmul.f32 %v1186, %v1186
      %v1317 = vmul.f32 %v1187, %v1187
      %v1318 = vmul.f32 %v1188, %v1188
      %v1319 = vmul.f32 %v1189, %v1189
      %v1320 = vadd.f32 %v1290, %v1291
      %v1321 = vsel %vm1191, %v1292, 0.0
      %v1322 = vadd.f32 %v1320, %v1321
      %v1323 = vrot.slane %v1322, 4
      %v1324 = vadd.f32 %v1322, %v1323
      %v1325 = vrot.slane %v1324, 2
      %v1326 = vadd.f32 %v1324, %v1325
      %v1327 = vrot.slane %v1326, 1
      %v1328 = vadd.f32 %v1326, %v1327
      %v1329 = vadd.f32 %v1293, %v1294
      %v1330 = vsel %vm1191, %v1295, 0.0
      %v1331 = vadd.f32 %v1329, %v1330
      %v1332 = vrot.slane %v1331, 4
      %v1333 = vadd.f32 %v1331, %v1332
      %v1334 = vrot.slane %v1333, 2
      %v1335 = vadd.f32 %v1333, %v1334
      %v1336 = vrot.slane %v1335, 1
      %v1337 = vadd.f32 %v1335, %v1336
      %v1338 = vadd.f32 %v1296, %v1297
      %v1339 = vsel %vm1191, %v1298, 0.0
      %v1340 = vadd.f32 %v1338, %v1339
      %v1341 = vrot.slane %v1340, 4
      %v1342 = vadd.f32 %v1340, %v1341
      %v1343 = vrot.slane %v1342, 2
      %v1344 = vadd.f32 %v1342, %v1343
      %v1345 = vrot.slane %v1344, 1
      %v1346 = vadd.f32 %v1344, %v1345
      %v1347 = vadd.f32 %v1299, %v1300
      %v1348 = vsel %vm1191, %v1301, 0.0
      %v1349 = vadd.f32 %v1347, %v1348
      %v1350 = vrot.slane %v1349, 4
      %v1351 = vadd.f32 %v1349, %v1350
      %v1352 = vrot.slane %v1351, 2
      %v1353 = vadd.f32 %v1351, %v1352
      %v1354 = vrot.slane %v1353, 1
      %v1355 = vadd.f32 %v1353, %v1354
      %v1356 = vadd.f32 %v1302, %v1303
      %v1357 = vsel %vm1191, %v1304, 0.0
      %v1358 = vadd.f32 %v1356, %v1357
      %v1359 = vrot.slane %v1358, 4
      %v1360 = vadd.f32 %v1358, %v1359
      %v1361 = vrot.slane %v1360, 2
      %v1362 = vadd.f32 %v1360, %v1361
      %v1363 = vrot.slane %v1362, 1
      %v1364 = vadd.f32 %v1362, %v1363
      %v1365 = vadd.f32 %v1305, %v1306
      %v1366 = vsel %vm1191, %v1307, 0.0
      %v1367 = vadd.f32 %v1365, %v1366
      %v1368 = vrot.slane %v1367, 4
      %v1369 = vadd.f32 %v1367, %v1368
      %v1370 = vrot.slane %v1369, 2
      %v1371 = vadd.f32 %v1369, %v1370
      %v1372 = vrot.slane %v1371, 1
      %v1373 = vadd.f32 %v1371, %v1372
      %v1374 = vadd.f32 %v1308, %v1309
      %v1375 = vsel %vm1191, %v1310, 0.0
      %v1376 = vadd.f32 %v1374, %v1375
      %v1377 = vrot.slane %v1376, 4
      %v1378 = vadd.f32 %v1376, %v1377
      %v1379 = vrot.slane %v1378, 2
      %v1380 = vadd.f32 %v1378, %v1379
      %v1381 = vrot.slane %v1380, 1
      %v1382 = vadd.f32 %v1380, %v1381
      %v1383 = vadd.f32 %v1311, %v1312
      %v1384 = vsel %vm1191, %v1313, 0.0
      %v1385 = vadd.f32 %v1383, %v1384
      %v1386 = vrot.slane %v1385, 4
      %v1387 = vadd.f32 %v1385, %v1386
      %v1388 = vrot.slane %v1387, 2
      %v1389 = vadd.f32 %v1387, %v1388
      %v1390 = vrot.slane %v1389, 1
      %v1391 = vadd.f32 %v1389, %v1390
      %v1392 = vadd.f32 %v1314, %v1315
      %v1393 = vsel %vm1191, %v1316, 0.0
      %v1394 = vadd.f32 %v1392, %v1393
      %v1395 = vrot.slane %v1394, 4
      %v1396 = vadd.f32 %v1394, %v1395
      %v1397 = vrot.slane %v1396, 2
      %v1398 = vadd.f32 %v1396, %v1397
      %v1399 = vrot.slane %v1398, 1
      %v1400 = vadd.f32 %v1398, %v1399
      %v1401 = vadd.f32 %v1317, %v1318
      %v1402 = vsel %vm1191, %v1319, 0.0
      %v1403 = vadd.f32 %v1401, %v1402
      %v1404 = vrot.slane %v1403, 4
      %v1405 = vadd.f32 %v1403, %v1404
      %v1406 = vrot.slane %v1405, 2
      %v1407 = vadd.f32 %v1405, %v1406
      %v1408 = vrot.slane %v1407, 1
      %v1409 = vadd.f32 %v1407, %v1408
      %v1410 = vadd.f32 %v1328, %v1337
      %v1411 = vadd.f32 %v1410, %v1346
      %v1412 = vadd.f32 %v1411, %v1355
      %v1413 = vadd.f32 %v1412, %v1364
      %v1414 = vadd.f32 %v1413, %v1373
      %v1415 = vadd.f32 %v1414, %v1382
      %v1416 = vadd.f32 %v1415, %v1391
      %v1417 = vadd.f32 %v1416, %v1400
      %v1418 = vadd.f32 %v1417, %v1409
      %v1419 = vrcp.pop 200.0
      %v1420 = vmul.f32 %v1289, %v1419
      %v1421 = vmul.f32 %v1418, %v1419
      %v1422 = vmul.f32 %v1420, %v1420
      %v1423 = vsub.f32 %v1421, %v1422
      %v1424 = vadd.f32 %v1423, 1e-05
      %v1425 = vrsqrt.pop %v1424
      %v1426 = vsub.f32 %v1160, %v1420
      %v1427 = vsub.f32 %v1161, %v1420
      %v1428 = vsub.f32 %v1162, %v1420
      %v1429 = vsub.f32 %v1163, %v1420
      %v1430 = vsub.f32 %v1164, %v1420
      %v1431 = vsub.f32 %v1165, %v1420
      %v1432 = vsub.f32 %v1166, %v1420
      %v1433 = vsub.f32 %v1167, %v1420
      %v1434 = vsub.f32 %v1168, %v1420
      %v1435 = vsub.f32 %v1169, %v1420
      %v1436 = vsub.f32 %v1170, %v1420
      %v1437 = vsub.f32 %v1171, %v1420
      %v1438 = vsub.f32 %v1172, %v1420
      %v1439 = vsub.f32 %v1173, %v1420
      %v1440 = vsub.f32 %v1174, %v1420
      %v1441 = vsub.f32 %v1175, %v1420
      %v1442 = vsub.f32 %v1176, %v1420
      %v1443 = vsub.f32 %v1177, %v1420
      %v1444 = vsub.f32 %v1178, %v1420
      %v1445 = vsub.f32 %v1179, %v1420
      %v1446 = vsub.f32 %v1180, %v1420
      %v1447 = vsub.f32 %v1181, %v1420
      %v1448 = vsub.f32 %v1182, %v1420
      %v1449 = vsub.f32 %v1183, %v1420
      %v1450 = vsub.f32 %v1184, %v1420
      %v1451 = vsub.f32 %v1185, %v1420
      %v1452 = vsub.f32 %v1186, %v1420
      %v1453 = vsub.f32 %v1187, %v1420
      %v1454 = vsub.f32 %v1188, %v1420
      %v1455 = vsub.f32 %v1189, %v1420
      %v1456 = vmul.f32 %v1426, %v1425
      %v1457 = vmul.f32 %v1427, %v1425
      %v1458 = vmul.f32 %v1428, %v1425
      %v1459 = vmul.f32 %v1429, %v1425
      %v1460 = vmul.f32 %v1430, %v1425
      %v1461 = vmul.f32 %v1431, %v1425
      %v1462 = vmul.f32 %v1432, %v1425
      %v1463 = vmul.f32 %v1433, %v1425
      %v1464 = vmul.f32 %v1434, %v1425
      %v1465 = vmul.f32 %v1435, %v1425
      %v1466 = vmul.f32 %v1436, %v1425
      %v1467 = vmul.f32 %v1437, %v1425
      %v1468 = vmul.f32 %v1438, %v1425
      %v1469 = vmul.f32 %v1439, %v1425
      %v1470 = vmul.f32 %v1440, %v1425
      %v1471 = vmul.f32 %v1441, %v1425
      %v1472 = vmul.f32 %v1442, %v1425
      %v1473 = vmul.f32 %v1443, %v1425
      %v1474 = vmul.f32 %v1444, %v1425
      %v1475 = vmul.f32 %v1445, %v1425
      %v1476 = vmul.f32 %v1446, %v1425
      %v1477 = vmul.f32 %v1447, %v1425
      %v1478 = vmul.f32 %v1448, %v1425
      %v1479 = vmul.f32 %v1449, %v1425
      %v1480 = vmul.f32 %v1450, %v1425
      %v1481 = vmul.f32 %v1451, %v1425
      %v1482 = vmul.f32 %v1452, %v1425
      %v1483 = vmul.f32 %v1453, %v1425
      %v1484 = vmul.f32 %v1454, %v1425
      %v1485 = vmul.f32 %v1455, %v1425
      %v1486 = vmax.f32 %v1456, 0.0
      %v1487 = vmax.f32 %v1457, 0.0
      %v1488 = vmax.f32 %v1458, 0.0
      %v1489 = vmax.f32 %v1459, 0.0
      %v1490 = vmax.f32 %v1460, 0.0
      %v1491 = vmax.f32 %v1461, 0.0
      %v1492 = vmax.f32 %v1462, 0.0
      %v1493 = vmax.f32 %v1463, 0.0
      %v1494 = vmax.f32 %v1464, 0.0
      %v1495 = vmax.f32 %v1465, 0.0
      %v1496 = vmax.f32 %v1466, 0.0
      %v1497 = vmax.f32 %v1467, 0.0
      %v1498 = vmax.f32 %v1468, 0.0
      %v1499 = vmax.f32 %v1469, 0.0
      %v1500 = vmax.f32 %v1470, 0.0
      %v1501 = vmax.f32 %v1471, 0.0
      %v1502 = vmax.f32 %v1472, 0.0
      %v1503 = vmax.f32 %v1473, 0.0
      %v1504 = vmax.f32 %v1474, 0.0
      %v1505 = vmax.f32 %v1475, 0.0
      %v1506 = vmax.f32 %v1476, 0.0
      %v1507 = vmax.f32 %v1477, 0.0
      %v1508 = vmax.f32 %v1478, 0.0
      %v1509 = vmax.f32 %v1479, 0.0
      %v1510 = vmax.f32 %v1480, 0.0
      %v1511 = vmax.f32 %v1481, 0.0
      %v1512 = vmax.f32 %v1482, 0.0
      %v1513 = vmax.f32 %v1483, 0.0
      %v1514 = vmax.f32 %v1484, 0.0
      %v1515 = vmax.f32 %v1485, 0.0
      %1516 = vst [vmem:[%s170] sm:$0xff] %v1486
      %1517 = vst [vmem:[%s170 + $0x8] sm:$0xff] %v1487
      %1518 = vst [vmem:[%s170 + $0x10] sm:$0xf] %v1488
      %1519 = vst [vmem:[%s170 + $0x18] sm:$0xff] %v1489
      %1520 = vst [vmem:[%s170 + $0x20] sm:$0xff] %v1490
      %1521 = vst [vmem:[%s170 + $0x28] sm:$0xf] %v1491
      %1522 = vst [vmem:[%s170 + $0x30] sm:$0xff] %v1492
      %1523 = vst [vmem:[%s170 + $0x38] sm:$0xff] %v1493
      %1524 = vst [vmem:[%s170 + $0x40] sm:$0xf] %v1494
      %1525 = vst [vmem:[%s170 + $0x48] sm:$0xff] %v1495
      %1526 = vst [vmem:[%s170 + $0x50] sm:$0xff] %v1496
      %1527 = vst [vmem:[%s170 + $0x58] sm:$0xf] %v1497
      %1528 = vst [vmem:[%s170 + $0x60] sm:$0xff] %v1498
      %1529 = vst [vmem:[%s170 + $0x68] sm:$0xff] %v1499
      %1530 = vst [vmem:[%s170 + $0x70] sm:$0xf] %v1500
      %1531 = vst [vmem:[%s170 + $0x78] sm:$0xff] %v1501
      %1532 = vst [vmem:[%s170 + $0x80] sm:$0xff] %v1502
      %1533 = vst [vmem:[%s170 + $0x88] sm:$0xf] %v1503
      %1534 = vst [vmem:[%s170 + $0x90] sm:$0xff] %v1504
      %1535 = vst [vmem:[%s170 + $0x98] sm:$0xff] %v1505
      %1536 = vst [vmem:[%s170 + $0xa0] sm:$0xf] %v1506
      %1537 = vst [vmem:[%s170 + $0xa8] sm:$0xff] %v1507
      %1538 = vst [vmem:[%s170 + $0xb0] sm:$0xff] %v1508
      %1539 = vst [vmem:[%s170 + $0xb8] sm:$0xf] %v1509
      %1540 = vst [vmem:[%s170 + $0xc0] sm:$0xff] %v1510
      %1541 = vst [vmem:[%s170 + $0xc8] sm:$0xff] %v1511
      %1542 = vst [vmem:[%s170 + $0xd0] sm:$0xf] %v1512
      %1543 = vst [vmem:[%s170 + $0xd8] sm:$0xff] %v1513
      %1544 = vst [vmem:[%s170 + $0xe0] sm:$0xff] %v1514
      %1545 = vst [vmem:[%s170 + $0xe8] sm:$0xf] %v1515
      %p1546 = scmp.lt.s32.totalorder %s14, 1
      %s1547 = scalar_select %p1546, %s14, 1
      %s1548 = smul.addr %s1547, 30
      %s1549 = smul.addr %s1548, 8
      %s1550 = scalar_lea.vmem %s3, %s1549
      // Predicated region
      $region40: #{ae_decoder_forward.7} parent=31 // pred_check
        %p1551 = pneg %p100
      $region41: #{ae_decoder_forward.7} parent=31 // pred_check_branch
        %1553 = sbr.rel (%p1551) target = $region43
      $region42: #{ae_decoder_forward.7} parent=31 // pred_region
        _
      $region43: #{ae_decoder_forward.7} parent=31 // pred_fallthru
        _
    $region32: #{ae_decoder_forward.7} parent=5 // pred_fallthru
      _
    %p1554 = scmp.le.s32.totalorder 2, %s9
    // Predicated region
    $region44: #{ae_decoder_forward.7} parent=5 // pred_check
      %p1555 = pneg %p1554
    $region45: #{ae_decoder_forward.7} parent=5 // pred_check_branch
      %1557 = sbr.rel (%p1555) target = $region47
    $region46: #{ae_decoder_forward.7} parent=5 // pred_region
      %s1558 = ssub.s32 %s9, 2
      // Predicated region
      $region48: #{ae_decoder_forward.7} parent=46 // pred_check
        %p1559 = pneg %p106
      $region49: #{ae_decoder_forward.7} parent=46 // pred_check_branch
        %1561 = sbr.rel (%p1559) target = $region51
      $region50: #{ae_decoder_forward.7} parent=46 // pred_region
        %p1562 = scmp.lt.s32.totalorder %s15, 1
        %s1563 = scalar_select %p1562, %s15, 1
        %s1564 = smul.addr %s1563, 30
        %s1565 = smul.addr %s1564, 8
        %s1566 = scalar_lea.vmem %s3, %s1565
      $region51: #{ae_decoder_forward.7} parent=46 // pred_fallthru
        _
    $region47: #{ae_decoder_forward.7} parent=5 // pred_fallthru
      _
  $region6: #{ae_decoder_forward.7} parent=0 // loop_footer
    %s13 = sadd.s32 1, %s9
  $region7: #{ae_decoder_forward.7} parent=0 // loop_footer_branch
    %8 = sbr.rel target = $region3
  $region8: #{ae_decoder_forward.7} parent=0 // loop_exit
    _

// kernel: ae_decoder_forward.8
$region0: #{ae_decoder_forward.8}
  #allocation0 [shape = 'u32[]', space=smem, size = 0x4, offset = 0x4, fixed_abs, tag = 'smem constant byte address 0x4 - core index']
  #allocation1 [shape = 'u32[144,128]{1,0:T(1,128)}', space=vmem, size = 0x12000, scoped, tag = 'internal scratch']
  #allocation2 [shape = 'f32[22,40,128]{2,1,0:T(8,128)}', space=vmem, size = 0x6e000, scoped, tag = 'scratch operand']
  %s0 = inlined_call_operand.vmem [shape: f32[2,24,42,128], index: 0, kind: input, shape index: {}]
  %s1 = inlined_call_operand.vmem [shape: f32[9,128,128], index: 1, kind: input, shape index: {}]
  %s2 = inlined_call_operand.vmem [shape: f32[1,128], index: 2, kind: input, shape index: {}]
  %s3 = inlined_call_operand.vmem [shape: f32[2,22,40,128], index: 3, kind: output, shape index: {}]
  %s4 = sld [smem:[#allocation0]]
  $region52: #{ae_decoder_forward.8} parent=0
    _
  %s6 = ssub.s32 1, %s4
  %s7 = scalar_select 0, %s6, %s4
  loop: start=0, step=1, limit=4
  $region2: #{ae_decoder_forward.8} parent=0 // loop_pre_header
    _
  $region3: #{ae_decoder_forward.8} parent=0 // loop_header
    %s9 = sphi 0, %s13
    %p10 = scmp.ge.s32.totalorder %s9, 4
    %s19 = sphi 0, %s21
    %s22 = sphi 0, %s19
    %s23 = sphi 0, %s22
    %s39 = sphi 0, %s23
    %s43 = sphi 0, %s43
    %s45 = sphi 0, %s43
    %s46 = sphi 0, %s45
    %s60 = sphi 0, %s46
    %s64 = sphi 0, %s64
    %s66 = sphi 0, %s64
    %s67 = sphi 0, %s66
    %s81 = sphi 0, %s67
    %s87 = sphi 0, %s89
    %s90 = sphi 0, %s87
    %s91 = sphi 0, %s90
    %s107 = sphi 0, %s91
  $region4: #{ae_decoder_forward.8} parent=0 // loop_header_branch
    %12 = sbr.rel (%p10) target = $region8
  $region5: #{ae_decoder_forward.8} parent=0 // loop_body
    %s14 = ssub.s32 %s9, 1
    %s15 = ssub.s32 %s9, 2
    %s16 = sadd.s32 %s9, 1
    %s17 = ssub.s32 %s9, %s16
    %p18 = scmp.eq.s32.totalorder %s17, 0
    %s20 = sadd.s32 %s19, 1
    %s21 = scalar_select %p18, %s19, %s20
    %p24 = pneg %p18
    %p25 = scmp.eq.s32.totalorder %s9, 1
    %p26 = por %p24, %p25
    %p27 = scmp.ne.s32.totalorder %s19, %s22
    %p28 = scmp.eq.s32.totalorder %s9, 0
    %p29 = por %p27, %p28
    %p30 = scmp.ne.s32.totalorder %s19, %s22
    %p31 = scmp.eq.s32.totalorder %s14, 1
    %p32 = por %p30, %p31
    %p33 = scmp.ne.s32.totalorder %s22, %s23
    %p34 = scmp.eq.s32.totalorder %s14, 0
    %p35 = por %p33, %p34
    %p36 = scmp.ne.s32.totalorder %s22, %s23
    %p37 = scmp.eq.s32.totalorder %s15, 1
    %p38 = por %p36, %p37
    %p40 = scmp.ne.s32.totalorder %s23, %s39
    %p41 = scmp.eq.s32.totalorder %s15, 0
    %p42 = por %p40, %p41
    %s44 = sadd.s32 %s43, 1
    %p47 = scmp.eq.s32.totalorder %s9, 1
    %p48 = scmp.ne.s32.totalorder %s43, %s45
    %p49 = scmp.eq.s32.totalorder %s9, 0
    %p50 = por %p48, %p49
    %p51 = scmp.ne.s32.totalorder %s43, %s45
    %p52 = scmp.eq.s32.totalorder %s14, 1
    %p53 = por %p51, %p52
    %p54 = scmp.ne.s32.totalorder %s45, %s46
    %p55 = scmp.eq.s32.totalorder %s14, 0
    %p56 = por %p54, %p55
    %p57 = scmp.ne.s32.totalorder %s45, %s46
    %p58 = scmp.eq.s32.totalorder %s15, 1
    %p59 = por %p57, %p58
    %p61 = scmp.ne.s32.totalorder %s46, %s60
    %p62 = scmp.eq.s32.totalorder %s15, 0
    %p63 = por %p61, %p62
    %s65 = sadd.s32 %s64, 1
    %p68 = scmp.eq.s32.totalorder %s9, 1
    %p69 = scmp.ne.s32.totalorder %s64, %s66
    %p70 = scmp.eq.s32.totalorder %s9, 0
    %p71 = por %p69, %p70
    %p72 = scmp.ne.s32.totalorder %s64, %s66
    %p73 = scmp.eq.s32.totalorder %s14, 1
    %p74 = por %p72, %p73
    %p75 = scmp.ne.s32.totalorder %s66, %s67
    %p76 = scmp.eq.s32.totalorder %s14, 0
    %p77 = por %p75, %p76
    %p78 = scmp.ne.s32.totalorder %s66, %s67
    %p79 = scmp.eq.s32.totalorder %s15, 1
    %p80 = por %p78, %p79
    %p82 = scmp.ne.s32.totalorder %s67, %s81
    %p83 = scmp.eq.s32.totalorder %s15, 0
    %p84 = por %p82, %p83
    %s85 = ssub.s32 %s9, %s16
    %p86 = scmp.eq.s32.totalorder %s85, 0
    %s88 = sadd.s32 %s87, 1
    %s89 = scalar_select %p86, %s87, %s88
    %p92 = pneg %p86
    %p93 = scmp.eq.s32.totalorder %s9, 1
    %p94 = por %p92, %p93
    %p95 = scmp.ne.s32.totalorder %s87, %s90
    %p96 = scmp.eq.s32.totalorder %s9, 0
    %p97 = por %p95, %p96
    %p98 = scmp.ne.s32.totalorder %s87, %s90
    %p99 = scmp.eq.s32.totalorder %s14, 1
    %p100 = por %p98, %p99
    %p101 = scmp.ne.s32.totalorder %s90, %s91
    %p102 = scmp.eq.s32.totalorder %s14, 0
    %p103 = por %p101, %p102
    %p104 = scmp.ne.s32.totalorder %s90, %s91
    %p105 = scmp.eq.s32.totalorder %s15, 1
    %p106 = por %p104, %p105
    %p108 = scmp.ne.s32.totalorder %s91, %s107
    %p109 = scmp.eq.s32.totalorder %s15, 0
    %p110 = por %p108, %p109
    %p111 = scmp.le.s32.totalorder 1, %s9
    %p112 = scmp.lt.s32.totalorder %s9, 3
    %p113 = pnand %p111, %p112
    %p114 = pneg %p113
    // Predicated region
    $region9: #{ae_decoder_forward.8} parent=5 // pred_check
      _
    $region10: #{ae_decoder_forward.8} parent=5 // pred_check_branch
      %116 = sbr.rel (%p113) target = $region12
    $region11: #{ae_decoder_forward.8} parent=5 // pred_region
      %s117 = ssub.s32 %s9, 1
      // Predicated region
      $region13: #{ae_decoder_forward.8} parent=11 // pred_check
        %p118 = pneg %p56
      $region14: #{ae_decoder_forward.8} parent=11 // pred_check_branch
        %120 = sbr.rel (%p118) target = $region16
      $region15: #{ae_decoder_forward.8} parent=11 // pred_region
        _
      $region16: #{ae_decoder_forward.8} parent=11 // pred_fallthru
        _
      // Predicated region
      $region17: #{ae_decoder_forward.8} parent=11 // pred_check
        %p121 = pneg %p77
      $region18: #{ae_decoder_forward.8} parent=11 // pred_check_branch
        %123 = sbr.rel (%p121) target = $region20
      $region19: #{ae_decoder_forward.8} parent=11 // pred_region
        _
      $region20: #{ae_decoder_forward.8} parent=11 // pred_fallthru
        _
    $region12: #{ae_decoder_forward.8} parent=5 // pred_fallthru
      _
    %p124 = scmp.lt.s32.totalorder %s9, 2
    // Predicated region
    $region21: #{ae_decoder_forward.8} parent=5 // pred_check
      %p125 = pneg %p124
    $region22: #{ae_decoder_forward.8} parent=5 // pred_check_branch
      %127 = sbr.rel (%p125) target = $region24
    $region23: #{ae_decoder_forward.8} parent=5 // pred_region
      // Predicated region
      $region25: #{ae_decoder_forward.8} parent=23 // pred_check
        %p128 = pneg %p29
      $region26: #{ae_decoder_forward.8} parent=23 // pred_check_branch
        %130 = sbr.rel (%p128) target = $region28
      $region27: #{ae_decoder_forward.8} parent=23 // pred_region
        %p131 = scmp.lt.s32.totalorder %s9, 1
        %s132 = scalar_select %p131, %s9, 1
        %s133 = smul.addr %s132, 144
        %s134 = smul.addr %s133, 8
        %s135 = scalar_lea.vmem %s0, %s134
      $region28: #{ae_decoder_forward.8} parent=23 // pred_fallthru
        _
    $region24: #{ae_decoder_forward.8} parent=5 // pred_fallthru
      _
    %p136 = scmp.le.s32.totalorder 1, %s9
    %p137 = scmp.lt.s32.totalorder %s9, 3
    %p138 = pnand %p136, %p137
    %p139 = pneg %p138
    // Predicated region
    $region29: #{ae_decoder_forward.8} parent=5 // pred_check
      _
    $region30: #{ae_decoder_forward.8} parent=5 // pred_check_branch
      %141 = sbr.rel (%p138) target = $region32
    $region31: #{ae_decoder_forward.8} parent=5 // pred_region
      %s142 = ssub.s32 %s9, 1
      %p143 = scmp.lt.s32.totalorder %s14, 1
      %s144 = scalar_select %p143, %s14, 1
      %s145 = smul.addr %s144, 144
      %s146 = smul.addr %s145, 8
      %s147 = scalar_lea.vmem %s0, %s146
      %p148 = pneg %p35
      %p149 = pneg %p32
      %p150 = pneg %p56
      %p151 = pneg %p53
      %p152 = pneg %p77
      %p153 = pneg %p74
      %p154 = pneg %p103
      %p155 = pneg %p100
      %p156 = scmp.lt.s32.totalorder %s14, 1
      %s157 = scalar_select %p156, %s14, 1
      %s158 = smul.addr %s157, 110
      %s159 = smul.addr %s158, 8
      %s160 = scalar_lea.vmem %s3, %s159
      %p161 = scmp.lt.s32.totalorder %s14, 1
      %s162 = scalar_select %p161, %s14, 1
      %s163 = smul.addr %s162, 144
      %s164 = smul.addr %s163, 8
      %s165 = scalar_lea.vmem %s0, %s164
      %p166 = scmp.lt.s32.totalorder %s14, 1
      %s167 = scalar_select %p166, %s14, 1
      %s168 = smul.addr %s167, 110
      %s169 = smul.addr %s168, 8
      %s170 = scalar_lea.vmem %s3, %s169
      %v171 = vld [vmem:[%s2] sm:$0x1]
      loop: start=0, step=1, limit=22
      $region33: #{ae_decoder_forward.8} parent=31 // loop_pre_header
        _
      $region34: #{ae_decoder_forward.8} parent=31 // loop_header
        %s173 = sphi 0, %s177
        %p174 = scmp.ge.s32.totalorder %s173, 22
      $region35: #{ae_decoder_forward.8} parent=31 // loop_header_branch
        %176 = sbr.rel (%p174) target = $region39
      $region36: #{ae_decoder_forward.8} parent=31 // loop_body
        %s178 = smul.u32 %s173, 48
        %s179 = scalar_lea.vmem %s165, %s178
        %v180 = vld [vmem:[%s179] sm:$0xff]
        %v181 = vld [vmem:[%s179 + $0x8] sm:$0xff]
        %v182 = vld [vmem:[%s179 + $0x10] sm:$0xff]
        %v183 = vld [vmem:[%s179 + $0x18] sm:$0xff]
        %v184 = vld [vmem:[%s179 + $0x20] sm:$0xff]
        %v185 = vld [vmem:[%s179 + $0x28] sm:$0x3]
        %v186 = vld [vmem:[%s1] sm:$0xff]
        %v187 = vld [vmem:[%s1 + $0x8] sm:$0xff]
        %v188 = vld [vmem:[%s1 + $0x10] sm:$0xff]
        %v189 = vld [vmem:[%s1 + $0x18] sm:$0xff]
        %v190 = vld [vmem:[%s1 + $0x20] sm:$0xff]
        %v191 = vld [vmem:[%s1 + $0x28] sm:$0xff]
        %v192 = vld [vmem:[%s1 + $0x30] sm:$0xff]
        %v193 = vld [vmem:[%s1 + $0x38] sm:$0xff]
        %v194 = vld [vmem:[%s1 + $0x40] sm:$0xff]
        %v195 = vld [vmem:[%s1 + $0x48] sm:$0xff]
        %v196 = vld [vmem:[%s1 + $0x50] sm:$0xff]
        %v197 = vld [vmem:[%s1 + $0x58] sm:$0xff]
        %v198 = vld [vmem:[%s1 + $0x60] sm:$0xff]
        %v199 = vld [vmem:[%s1 + $0x68] sm:$0xff]
        %v200 = vld [vmem:[%s1 + $0x70] sm:$0xff]
        %v201 = vld [vmem:[%s1 + $0x78] sm:$0xff]
        %s202 = scalar_lea.vmem %s1, 128
        %v203 = vld [vmem:[%s202] sm:$0xff]
        %v204 = vld [vmem:[%s202 + $0x8] sm:$0xff]
        %v205 = vld [vmem:[%s202 + $0x10] sm:$0xff]
        %v206 = vld [vmem:[%s202 + $0x18] sm:$0xff]
        %v207 = vld [vmem:[%s202 + $0x20] sm:$0xff]
        %v208 = vld [vmem:[%s202 + $0x28] sm:$0xff]
        %v209 = vld [vmem:[%s202 + $0x30] sm:$0xff]
        %v210 = vld [vmem:[%s202 + $0x38] sm:$0xff]
        %v211 = vld [vmem:[%s202 + $0x40] sm:$0xff]
        %v212 = vld [vmem:[%s202 + $0x48] sm:$0xff]
        %v213 = vld [vmem:[%s202 + $0x50] sm:$0xff]
        %v214 = vld [vmem:[%s202 + $0x58] sm:$0xff]
        %v215 = vld [vmem:[%s202 + $0x60] sm:$0xff]
        %v216 = vld [vmem:[%s202 + $0x68] sm:$0xff]
        %v217 = vld [vmem:[%s202 + $0x70] sm:$0xff]
        %v218 = vld [vmem:[%s202 + $0x78] sm:$0xff]
        %vm225 = vcmask 1046528
        %v226 = vrot.slane %v180, 1
        %v227 = vrot.slane %v181, 1
        %v228 = vsel %vm225, %v226, %v227
        %v229 = vrot.slane %v182, 1
        %v230 = vsel %vm225, %v227, %v229
        %v231 = vrot.slane %v183, 1
        %v232 = vsel %vm225, %v229, %v231
        %v233 = vrot.slane %v184, 1
        %v234 = vsel %vm225, %v231, %v233
        %v235 = vrot.slane %v185, 1
        %v236 = vsel %vm225, %v233, %v235
        %242 = vmatprep.subr.mxu0 0.0
        %243 = vmatpush1.msra.mxu0 %v203
        %244 = vmatprep.subr.mxu0 0.0
        %245 = vmatpush1.msra.mxu0 %v204
        %246 = vmatprep.subr.mxu0 0.0
        %247 = vmatpush1.msra.mxu0 %v205
        %248 = vmatprep.subr.mxu0 0.0
        %249 = vmatpush1.msra.mxu0 %v206
        %250 = vmatprep.subr.mxu0 0.0
        %251 = vmatpush1.msra.mxu0 %v207
        %252 = vmatprep.subr.mxu0 0.0
        %253 = vmatpush1.msra.mxu0 %v208
        %254 = vmatprep.subr.mxu0 0.0
        %255 = vmatpush1.msra.mxu0 %v209
        %256 = vmatprep.subr.mxu0 0.0
        %257 = vmatpush1.msra.mxu0 %v210
        %258 = vmatprep.subr.mxu0 0.0
        %259 = vmatpush1.msra.mxu0 %v211
        %260 = vmatprep.subr.mxu0 0.0
        %261 = vmatpush1.msra.mxu0 %v212
        %262 = vmatprep.subr.mxu0 0.0
        %263 = vmatpush1.msra.mxu0 %v213
        %264 = vmatprep.subr.mxu0 0.0
        %265 = vmatpush1.msra.mxu0 %v214
        %266 = vmatprep.subr.mxu0 0.0
        %267 = vmatpush1.msra.mxu0 %v215
        %268 = vmatprep.subr.mxu0 0.0
        %269 = vmatpush1.msra.mxu0 %v216
        %270 = vmatprep.subr.mxu0 0.0
        %271 = vmatpush1.msra.mxu0 %v217
        %272 = vmatprep.subr.mxu0 0.0
        %273 = vmatpush1.msra.mxu0 %v218
        %274 = vmatprep.subr.mxu0 0.0
        %275 = vmatpush1.msra.mxu0 0.0
        %276 = vmatprep.subr.mxu0 0.0
        %277 = vmatpush1.msra.mxu0 0.0
        %278 = vmatprep.subr.mxu0 0.0
        %279 = vmatpush1.msra.mxu0 0.0
        %280 = vmatprep.subr.mxu0 0.0
        %281 = vmatpush1.msra.mxu0 0.0
        %282 = vmatprep.subr.mxu0 0.0
        %283 = vmatpush1.msra.mxu0 0.0
        %284 = vmatprep.subr.mxu0 0.0
        %285 = vmatpush1.msra.mxu0 0.0
        %286 = vmatprep.subr.mxu0 0.0
        %287 = vmatpush1.msra.mxu0 0.0
        %288 = vmatprep.subr.mxu0 0.0
        %289 = vmatpush1.msra.mxu0 0.0
        %290 = vmatprep.subr.mxu0 0.0
        %291 = vmatpush1.msra.mxu0 0.0
        %292 = vmatprep.subr.mxu0 0.0
        %293 = vmatpush1.msra.mxu0 0.0
        %294 = vmatprep.subr.mxu0 0.0
        %295 = vmatpush1.msra.mxu0 0.0
        %296 = vmatprep.subr.mxu0 0.0
        %297 = vmatpush1.msra.mxu0 0.0
        %298 = vmatprep.subr.mxu0 0.0
        %299 = vmatpush1.msra.mxu0 0.0
        %300 = vmatprep.subr.mxu0 0.0
        %301 = vmatpush1.msra.mxu0 0.0
        %302 = vmatprep.subr.mxu0 0.0
        %303 = vmatpush1.msra.mxu0 0.0
        %304 = vmatprep.subr.mxu0 0.0
        %305 = vmatpush1.msra.mxu0 0.0
        %306 = vmatprep.mubr.f32.mxu0 0.0
        %307 = vmatmul.mubr.f32.gmra.mrb[0].mxu0 %v228
        %v308 = vpop.f32.mrb[0].mxu0
        %v309 = vadd.f32 0.0, %v308
        %v310 = vpop.f32.mrb[0].mxu0
        %311 = vmatprep.mubr.f32.mxu0 0.0
        %312 = vmatmul.mubr.f32.gmra.mrb[0].mxu0 %v230
        %v313 = vpop.f32.mrb[0].mxu0
        %v314 = vadd.f32 0.0, %v313
        %v315 = vpop.f32.mrb[0].mxu0
        %316 = vmatprep.mubr.f32.mxu0 0.0
        %317 = vmatmul.mubr.f32.gmra.mrb[0].mxu0 %v232
        %v318 = vpop.f32.mrb[0].mxu0
        %v319 = vadd.f32 0.0, %v318
        %v320 = vpop.f32.mrb[0].mxu0
        %321 = vmatprep.mubr.f32.mxu0 0.0
        %322 = vmatmul.mubr.f32.gmra.mrb[0].mxu0 %v234
        %v323 = vpop.f32.mrb[0].mxu0
        %v324 = vadd.f32 0.0, %v323
        %v325 = vpop.f32.mrb[0].mxu0
        %326 = vmatprep.mubr.f32.mxu0 0.0
        %327 = vmatmul.mubr.f32.gmra.mrb[0].mxu0 %v236
        %v328 = vpop.f32.mrb[0].mxu0
        %v329 = vadd.f32 0.0, %v328
        %v330 = vpop.f32.mrb[0].mxu0
        %331 = vdwg.mxu0
        %332 = vmatprep.subr.mxu0 0.0
        %333 = vmatpush1.msra.mxu0 %v186
        %334 = vmatprep.subr.mxu0 0.0
        %335 = vmatpush1.msra.mxu0 %v187
        %336 = vmatprep.subr.mxu0 0.0
        %337 = vmatpush1.msra.mxu0 %v188
        %338 = vmatprep.subr.mxu0 0.0
        %339 = vmatpush1.msra.mxu0 %v189
        %340 = vmatprep.subr.mxu0 0.0
        %341 = vmatpush1.msra.mxu0 %v190
        %342 = vmatprep.subr.mxu0 0.0
        %343 = vmatpush1.msra.mxu0 %v191
        %344 = vmatprep.subr.mxu0 0.0
        %345 = vmatpush1.msra.mxu0 %v192
        %346 = vmatprep.subr.mxu0 0.0
        %347 = vmatpush1.msra.mxu0 %v193
        %348 = vmatprep.subr.mxu0 0.0
        %349 = vmatpush1.msra.mxu0 %v194
        %350 = vmatprep.subr.mxu0 0.0
        %351 = vmatpush1.msra.mxu0 %v195
        %352 = vmatprep.subr.mxu0 0.0
        %353 = vmatpush1.msra.mxu0 %v196
        %354 = vmatprep.subr.mxu0 0.0
        %355 = vmatpush1.msra.mxu0 %v197
        %356 = vmatprep.subr.mxu0 0.0
        %357 = vmatpush1.msra.mxu0 %v198
        %358 = vmatprep.subr.mxu0 0.0
        %359 = vmatpush1.msra.mxu0 %v199
        %360 = vmatprep.subr.mxu0 0.0
        %361 = vmatpush1.msra.mxu0 %v200
        %362 = vmatprep.subr.mxu0 0.0
        %363 = vmatpush1.msra.mxu0 %v201
        %364 = vmatprep.subr.mxu0 0.0
        %365 = vmatpush1.msra.mxu0 0.0
        %366 = vmatprep.subr.mxu0 0.0
        %367 = vmatpush1.msra.mxu0 0.0
        %368 = vmatprep.subr.mxu0 0.0
        %369 = vmatpush1.msra.mxu0 0.0
        %370 = vmatprep.subr.mxu0 0.0
        %371 = vmatpush1.msra.mxu0 0.0
        %372 = vmatprep.subr.mxu0 0.0
        %373 = vmatpush1.msra.mxu0 0.0
        %374 = vmatprep.subr.mxu0 0.0
        %375 = vmatpush1.msra.mxu0 0.0
        %376 = vmatprep.subr.mxu0 0.0
        %377 = vmatpush1.msra.mxu0 0.0
        %378 = vmatprep.subr.mxu0 0.0
        %379 = vmatpush1.msra.mxu0 0.0
        %380 = vmatprep.subr.mxu0 0.0
        %381 = vmatpush1.msra.mxu0 0.0
        %382 = vmatprep.subr.mxu0 0.0
        %383 = vmatpush1.msra.mxu0 0.0
        %384 = vmatprep.subr.mxu0 0.0
        %385 = vmatpush1.msra.mxu0 0.0
        %386 = vmatprep.subr.mxu0 0.0
        %387 = vmatpush1.msra.mxu0 0.0
        %388 = vmatprep.subr.mxu0 0.0
        %389 = vmatpush1.msra.mxu0 0.0
        %390 = vmatprep.subr.mxu0 0.0
        %391 = vmatpush1.msra.mxu0 0.0
        %392 = vmatprep.subr.mxu0 0.0
        %393 = vmatpush1.msra.mxu0 0.0
        %394 = vmatprep.subr.mxu0 0.0
        %395 = vmatpush1.msra.mxu0 0.0
        %396 = vmatprep.mubr.f32.mxu0 0.0
        %397 = vmatmul.mubr.f32.gmra.mrb[0].mxu0 %v180
        %v398 = vpop.f32.mrb[0].mxu0
        %v399 = vadd.f32 %v309, %v398
        %v400 = vpop.f32.mrb[0].mxu0
        %401 = vmatprep.mubr.f32.mxu0 0.0
        %402 = vmatmul.mubr.f32.gmra.mrb[0].mxu0 %v181
        %v403 = vpop.f32.mrb[0].mxu0
        %v404 = vadd.f32 %v314, %v403
        %v405 = vpop.f32.mrb[0].mxu0
        %406 = vmatprep.mubr.f32.mxu0 0.0
        %407 = vmatmul.mubr.f32.gmra.mrb[0].mxu0 %v182
        %v408 = vpop.f32.mrb[0].mxu0
        %v409 = vadd.f32 %v319, %v408
        %v410 = vpop.f32.mrb[0].mxu0
        %411 = vmatprep.mubr.f32.mxu0 0.0
        %412 = vmatmul.mubr.f32.gmra.mrb[0].mxu0 %v183
        %v413 = vpop.f32.mrb[0].mxu0
        %v414 = vadd.f32 %v324, %v413
        %v415 = vpop.f32.mrb[0].mxu0
        %416 = vmatprep.mubr.f32.mxu0 0.0
        %417 = vmatmul.mubr.f32.gmra.mrb[0].mxu0 %v184
        %v418 = vpop.f32.mrb[0].mxu0
        %v419 = vadd.f32 %v329, %v418
        %v420 = vpop.f32.mrb[0].mxu0
        %421 = vdwg.mxu0
        %s422 = scalar_lea.vmem %s1, 256
        %v423 = vld [vmem:[%s422] sm:$0xff]
        %v424 = vld [vmem:[%s422 + $0x8] sm:$0xff]
        %v425 = vld [vmem:[%s422 + $0x10] sm:$0xff]
        %v426 = vld [vmem:[%s422 + $0x18] sm:$0xff]
        %v427 = vld [vmem:[%s422 + $0x20] sm:$0xff]
        %v428 = vld [vmem:[%s422 + $0x28] sm:$0xff]
        %v429 = vld [vmem:[%s422 + $0x30] sm:$0xff]
        %v430 = vld [vmem:[%s422 + $0x38] sm:$0xff]
        %v431 = vld [vmem:[%s422 + $0x40] sm:$0xff]
        %v432 = vld [vmem:[%s422 + $0x48] sm:$0xff]
        %v433 = vld [vmem:[%s422 + $0x50] sm:$0xff]
        %v434 = vld [vmem:[%s422 + $0x58] sm:$0xff]
        %v435 = vld [vmem:[%s422 + $0x60] sm:$0xff]
        %v436 = vld [vmem:[%s422 + $0x68] sm:$0xff]
        %v437 = vld [vmem:[%s422 + $0x70] sm:$0xff]
        %v438 = vld [vmem:[%s422 + $0x78] sm:$0xff]
        %vm439 = vcmask 1045504
        %v440 = vrot.slane %v180, 2
        %v441 = vrot.slane %v181, 2
        %v442 = vsel %vm439, %v440, %v441
        %v443 = vrot.slane %v182, 2
        %v444 = vsel %vm439, %v441, %v443
        %v445 = vrot.slane %v183, 2
        %v446 = vsel %vm439, %v443, %v445
        %v447 = vrot.slane %v184, 2
        %v448 = vsel %vm439, %v445, %v447
        %v449 = vrot.slane %v185, 2
        %v450 = vsel %vm439, %v447, %v449
        %456 = vmatprep.subr.mxu0 0.0
        %457 = vmatpush1.msra.mxu0 %v423
        %458 = vmatprep.subr.mxu0 0.0
        %459 = vmatpush1.msra.mxu0 %v424
        %460 = vmatprep.subr.mxu0 0.0
        %461 = vmatpush1.msra.mxu0 %v425
        %462 = vmatprep.subr.mxu0 0.0
        %463 = vmatpush1.msra.mxu0 %v426
        %464 = vmatprep.subr.mxu0 0.0
        %465 = vmatpush1.msra.mxu0 %v427
        %466 = vmatprep.subr.mxu0 0.0
        %467 = vmatpush1.msra.mxu0 %v428
        %468 = vmatprep.subr.mxu0 0.0
        %469 = vmatpush1.msra.mxu0 %v429
        %470 = vmatprep.subr.mxu0 0.0
        %471 = vmatpush1.msra.mxu0 %v430
        %472 = vmatprep.subr.mxu0 0.0
        %473 = vmatpush1.msra.mxu0 %v431
        %474 = vmatprep.subr.mxu0 0.0
        %475 = vmatpush1.msra.mxu0 %v432
        %476 = vmatprep.subr.mxu0 0.0
        %477 = vmatpush1.msra.mxu0 %v433
        %478 = vmatprep.subr.mxu0 0.0
        %479 = vmatpush1.msra.mxu0 %v434
        %480 = vmatprep.subr.mxu0 0.0
        %481 = vmatpush1.msra.mxu0 %v435
        %482 = vmatprep.subr.mxu0 0.0
        %483 = vmatpush1.msra.mxu0 %v436
        %484 = vmatprep.subr.mxu0 0.0
        %485 = vmatpush1.msra.mxu0 %v437
        %486 = vmatprep.subr.mxu0 0.0
        %487 = vmatpush1.msra.mxu0 %v438
        %488 = vmatprep.subr.mxu0 0.0
        %489 = vmatpush1.msra.mxu0 0.0
        %490 = vmatprep.subr.mxu0 0.0
        %491 = vmatpush1.msra.mxu0 0.0
        %492 = vmatprep.subr.mxu0 0.0
        %493 = vmatpush1.msra.mxu0 0.0
        %494 = vmatprep.subr.mxu0 0.0
        %495 = vmatpush1.msra.mxu0 0.0
        %496 = vmatprep.subr.mxu0 0.0
        %497 = vmatpush1.msra.mxu0 0.0
        %498 = vmatprep.subr.mxu0 0.0
        %499 = vmatpush1.msra.mxu0 0.0
        %500 = vmatprep.subr.mxu0 0.0
        %501 = vmatpush1.msra.mxu0 0.0
        %502 = vmatprep.subr.mxu0 0.0
        %503 = vmatpush1.msra.mxu0 0.0
        %504 = vmatprep.subr.mxu0 0.0
        %505 = vmatpush1.msra.mxu0 0.0
        %506 = vmatprep.subr.mxu0 0.0
        %507 = vmatpush1.msra.mxu0 0.0
        %508 = vmatprep.subr.mxu0 0.0
        %509 = vmatpush1.msra.mxu0 0.0
        %510 = vmatprep.subr.mxu0 0.0
        %511 = vmatpush1.msra.mxu0 0.0
        %512 = vmatprep.subr.mxu0 0.0
        %513 = vmatpush1.msra.mxu0 0.0
        %514 = vmatprep.subr.mxu0 0.0
        %515 = vmatpush1.msra.mxu0 0.0
        %516 = vmatprep.subr.mxu0 0.0
        %517 = vmatpush1.msra.mxu0 0.0
        %518 = vmatprep.subr.mxu0 0.0
        %519 = vmatpush1.msra.mxu0 0.0
        %520 = vmatprep.mubr.f32.mxu0 0.0
        %521 = vmatmul.mubr.f32.gmra.mrb[0].mxu0 %v442
        %v522 = vpop.f32.mrb[0].mxu0
        %v523 = vadd.f32 0.0, %v522
        %v524 = vpop.f32.mrb[0].mxu0
        %525 = vmatprep.mubr.f32.mxu0 0.0
        %526 = vmatmul.mubr.f32.gmra.mrb[0].mxu0 %v444
        %v527 = vpop.f32.mrb[0].mxu0
        %v528 = vadd.f32 0.0, %v527
        %v529 = vpop.f32.mrb[0].mxu0
        %530 = vmatprep.mubr.f32.mxu0 0.0
        %531 = vmatmul.mubr.f32.gmra.mrb[0].mxu0 %v446
        %v532 = vpop.f32.mrb[0].mxu0
        %v533 = vadd.f32 0.0, %v532
        %v534 = vpop.f32.mrb[0].mxu0
        %535 = vmatprep.mubr.f32.mxu0 0.0
        %536 = vmatmul.mubr.f32.gmra.mrb[0].mxu0 %v448
        %v537 = vpop.f32.mrb[0].mxu0
        %v538 = vadd.f32 0.0, %v537
        %v539 = vpop.f32.mrb[0].mxu0
        %540 = vmatprep.mubr.f32.mxu0 0.0
        %541 = vmatmul.mubr.f32.gmra.mrb[0].mxu0 %v450
        %v542 = vpop.f32.mrb[0].mxu0
        %v543 = vadd.f32 0.0, %v542
        %v544 = vpop.f32.mrb[0].mxu0
        %545 = vdwg.mxu0
        %v546 = vadd.f32 %v399, %v523
        %v547 = vadd.f32 %v404, %v528
        %v548 = vadd.f32 %v409, %v533
        %v549 = vadd.f32 %v414, %v538
        %v550 = vadd.f32 %v419, %v543
        %s551 = sadd.s32 %s173, 1
        %s552 = smul.u32 %s551, 48
        %s553 = scalar_lea.vmem %s165, %s552
        %v554 = vld [vmem:[%s553] sm:$0xff]
        %v555 = vld [vmem:[%s553 + $0x8] sm:$0xff]
        %v556 = vld [vmem:[%s553 + $0x10] sm:$0xff]
        %v557 = vld [vmem:[%s553 + $0x18] sm:$0xff]
        %v558 = vld [vmem:[%s553 + $0x20] sm:$0xff]
        %v559 = vld [vmem:[%s553 + $0x28] sm:$0x3]
        %s560 = scalar_lea.vmem %s1, 384
        %v561 = vld [vmem:[%s560] sm:$0xff]
        %v562 = vld [vmem:[%s560 + $0x8] sm:$0xff]
        %v563 = vld [vmem:[%s560 + $0x10] sm:$0xff]
        %v564 = vld [vmem:[%s560 + $0x18] sm:$0xff]
        %v565 = vld [vmem:[%s560 + $0x20] sm:$0xff]
        %v566 = vld [vmem:[%s560 + $0x28] sm:$0xff]
        %v567 = vld [vmem:[%s560 + $0x30] sm:$0xff]
        %v568 = vld [vmem:[%s560 + $0x38] sm:$0xff]
        %v569 = vld [vmem:[%s560 + $0x40] sm:$0xff]
        %v570 = vld [vmem:[%s560 + $0x48] sm:$0xff]
        %v571 = vld [vmem:[%s560 + $0x50] sm:$0xff]
        %v572 = vld [vmem:[%s560 + $0x58] sm:$0xff]
        %v573 = vld [vmem:[%s560 + $0x60] sm:$0xff]
        %v574 = vld [vmem:[%s560 + $0x68] sm:$0xff]
        %v575 = vld [vmem:[%s560 + $0x70] sm:$0xff]
        %v576 = vld [vmem:[%s560 + $0x78] sm:$0xff]
        %577 = vmatprep.subr.mxu0 0.0
        %578 = vmatpush1.msra.mxu0 %v561
        %579 = vmatprep.subr.mxu0 0.0
        %580 = vmatpush1.msra.mxu0 %v562
        %581 = vmatprep.subr.mxu0 0.0
        %582 = vmatpush1.msra.mxu0 %v563
        %583 = vmatprep.subr.mxu0 0.0
        %584 = vmatpush1.msra.mxu0 %v564
        %585 = vmatprep.subr.mxu0 0.0
        %586 = vmatpush1.msra.mxu0 %v565
        %587 = vmatprep.subr.mxu0 0.0
        %588 = vmatpush1.msra.mxu0 %v566
        %589 = vmatprep.subr.mxu0 0.0
        %590 = vmatpush1.msra.mxu0 %v567
        %591 = vmatprep.subr.mxu0 0.0
        %592 = vmatpush1.msra.mxu0 %v568
        %593 = vmatprep.subr.mxu0 0.0
        %594 = vmatpush1.msra.mxu0 %v569
        %595 = vmatprep.subr.mxu0 0.0
        %596 = vmatpush1.msra.mxu0 %v570
        %597 = vmatprep.subr.mxu0 0.0
        %598 = vmatpush1.msra.mxu0 %v571
        %599 = vmatprep.subr.mxu0 0.0
        %600 = vmatpush1.msra.mxu0 %v572
        %601 = vmatprep.subr.mxu0 0.0
        %602 = vmatpush1.msra.mxu0 %v573
        %603 = vmatprep.subr.mxu0 0.0
        %604 = vmatpush1.msra.mxu0 %v574
        %605 = vmatprep.subr.mxu0 0.0
        %606 = vmatpush1.msra.mxu0 %v575
        %607 = vmatprep.subr.mxu0 0.0
        %608 = vmatpush1.msra.mxu0 %v576
        %609 = vmatprep.subr.mxu0 0.0
        %610 = vmatpush1.msra.mxu0 0.0
        %611 = vmatprep.subr.mxu0 0.0
        %612 = vmatpush1.msra.mxu0 0.0
        %613 = vmatprep.subr.mxu0 0.0
        %614 = vmatpush1.msra.mxu0 0.0
        %615 = vmatprep.subr.mxu0 0.0
        %616 = vmatpush1.msra.mxu0 0.0
        %617 = vmatprep.subr.mxu0 0.0
        %618 = vmatpush1.msra.mxu0 0.0
        %619 = vmatprep.subr.mxu0 0.0
        %620 = vmatpush1.msra.mxu0 0.0
        %621 = vmatprep.subr.mxu0 0.0
        %622 = vmatpush1.msra.mxu0 0.0
        %623 = vmatprep.subr.mxu0 0.0
        %624 = vmatpush1.msra.mxu0 0.0
        %625 = vmatprep.subr.mxu0 0.0
        %626 = vmatpush1.msra.mxu0 0.0
        %627 = vmatprep.subr.mxu0 0.0
        %628 = vmatpush1.msra.mxu0 0.0
        %629 = vmatprep.subr.mxu0 0.0
        %630 = vmatpush1.msra.mxu0 0.0
        %631 = vmatprep.subr.mxu0 0.0
        %632 = vmatpush1.msra.mxu0 0.0
        %633 = vmatprep.subr.mxu0 0.0
        %634 = vmatpush1.msra.mxu0 0.0
        %635 = vmatprep.subr.mxu0 0.0
        %636 = vmatpush1.msra.mxu0 0.0
        %637 = vmatprep.subr.mxu0 0.0
        %638 = vmatpush1.msra.mxu0 0.0
        %639 = vmatprep.subr.mxu0 0.0
        %640 = vmatpush1.msra.mxu0 0.0
        %641 = vmatprep.mubr.f32.mxu0 0.0
        %642 = vmatmul.mubr.f32.gmra.mrb[0].mxu0 %v554
        %v643 = vpop.f32.mrb[0].mxu0
        %v644 = vadd.f32 0.0, %v643
        %v645 = vpop.f32.mrb[0].mxu0
        %646 = vmatprep.mubr.f32.mxu0 0.0
        %647 = vmatmul.mubr.f32.gmra.mrb[0].mxu0 %v555
        %v648 = vpop.f32.mrb[0].mxu0
        %v649 = vadd.f32 0.0, %v648
        %v650 = vpop.f32.mrb[0].mxu0
        %651 = vmatprep.mubr.f32.mxu0 0.0
        %652 = vmatmul.mubr.f32.gmra.mrb[0].mxu0 %v556
        %v653 = vpop.f32.mrb[0].mxu0
        %v654 = vadd.f32 0.0, %v653
        %v655 = vpop.f32.mrb[0].mxu0
        %656 = vmatprep.mubr.f32.mxu0 0.0
        %657 = vmatmul.mubr.f32.gmra.mrb[0].mxu0 %v557
        %v658 = vpop.f32.mrb[0].mxu0
        %v659 = vadd.f32 0.0, %v658
        %v660 = vpop.f32.mrb[0].mxu0
        %661 = vmatprep.mubr.f32.mxu0 0.0
        %662 = vmatmul.mubr.f32.gmra.mrb[0].mxu0 %v558
        %v663 = vpop.f32.mrb[0].mxu0
        %v664 = vadd.f32 0.0, %v663
        %v665 = vpop.f32.mrb[0].mxu0
        %666 = vdwg.mxu0
        %v667 = vadd.f32 %v546, %v644
        %v668 = vadd.f32 %v547, %v649
        %v669 = vadd.f32 %v548, %v654
        %v670 = vadd.f32 %v549, %v659
        %v671 = vadd.f32 %v550, %v664
        %s672 = scalar_lea.vmem %s1, 512
        %v673 = vld [vmem:[%s672] sm:$0xff]
        %v674 = vld [vmem:[%s672 + $0x8] sm:$0xff]
        %v675 = vld [vmem:[%s672 + $0x10] sm:$0xff]
        %v676 = vld [vmem:[%s672 + $0x18] sm:$0xff]
        %v677 = vld [vmem:[%s672 + $0x20] sm:$0xff]
        %v678 = vld [vmem:[%s672 + $0x28] sm:$0xff]
        %v679 = vld [vmem:[%s672 + $0x30] sm:$0xff]
        %v680 = vld [vmem:[%s672 + $0x38] sm:$0xff]
        %v681 = vld [vmem:[%s672 + $0x40] sm:$0xff]
        %v682 = vld [vmem:[%s672 + $0x48] sm:$0xff]
        %v683 = vld [vmem:[%s672 + $0x50] sm:$0xff]
        %v684 = vld [vmem:[%s672 + $0x58] sm:$0xff]
        %v685 = vld [vmem:[%s672 + $0x60] sm:$0xff]
        %v686 = vld [vmem:[%s672 + $0x68] sm:$0xff]
        %v687 = vld [vmem:[%s672 + $0x70] sm:$0xff]
        %v688 = vld [vmem:[%s672 + $0x78] sm:$0xff]
        %v695 = vrot.slane %v554, 1
        %v696 = vrot.slane %v555, 1
        %v697 = vsel %vm225, %v695, %v696
        %v698 = vrot.slane %v556, 1
        %v699 = vsel %vm225, %v696, %v698
        %v700 = vrot.slane %v557, 1
        %v701 = vsel %vm225, %v698, %v700
        %v702 = vrot.slane %v558, 1
        %v703 = vsel %vm225, %v700, %v702
        %v704 = vrot.slane %v559, 1
        %v705 = vsel %vm225, %v702, %v704
        %711 = vmatprep.subr.mxu0 0.0
        %712 = vmatpush1.msra.mxu0 %v673
        %713 = vmatprep.subr.mxu0 0.0
        %714 = vmatpush1.msra.mxu0 %v674
        %715 = vmatprep.subr.mxu0 0.0
        %716 = vmatpush1.msra.mxu0 %v675
        %717 = vmatprep.subr.mxu0 0.0
        %718 = vmatpush1.msra.mxu0 %v676
        %719 = vmatprep.subr.mxu0 0.0
        %720 = vmatpush1.msra.mxu0 %v677
        %721 = vmatprep.subr.mxu0 0.0
        %722 = vmatpush1.msra.mxu0 %v678
        %723 = vmatprep.subr.mxu0 0.0
        %724 = vmatpush1.msra.mxu0 %v679
        %725 = vmatprep.subr.mxu0 0.0
        %726 = vmatpush1.msra.mxu0 %v680
        %727 = vmatprep.subr.mxu0 0.0
        %728 = vmatpush1.msra.mxu0 %v681
        %729 = vmatprep.subr.mxu0 0.0
        %730 = vmatpush1.msra.mxu0 %v682
        %731 = vmatprep.subr.mxu0 0.0
        %732 = vmatpush1.msra.mxu0 %v683
        %733 = vmatprep.subr.mxu0 0.0
        %734 = vmatpush1.msra.mxu0 %v684
        %735 = vmatprep.subr.mxu0 0.0
        %736 = vmatpush1.msra.mxu0 %v685
        %737 = vmatprep.subr.mxu0 0.0
        %738 = vmatpush1.msra.mxu0 %v686
        %739 = vmatprep.subr.mxu0 0.0
        %740 = vmatpush1.msra.mxu0 %v687
        %741 = vmatprep.subr.mxu0 0.0
        %742 = vmatpush1.msra.mxu0 %v688
        %743 = vmatprep.subr.mxu0 0.0
        %744 = vmatpush1.msra.mxu0 0.0
        %745 = vmatprep.subr.mxu0 0.0
        %746 = vmatpush1.msra.mxu0 0.0
        %747 = vmatprep.subr.mxu0 0.0
        %748 = vmatpush1.msra.mxu0 0.0
        %749 = vmatprep.subr.mxu0 0.0
        %750 = vmatpush1.msra.mxu0 0.0
        %751 = vmatprep.subr.mxu0 0.0
        %752 = vmatpush1.msra.mxu0 0.0
        %753 = vmatprep.subr.mxu0 0.0
        %754 = vmatpush1.msra.mxu0 0.0
        %755 = vmatprep.subr.mxu0 0.0
        %756 = vmatpush1.msra.mxu0 0.0
        %757 = vmatprep.subr.mxu0 0.0
        %758 = vmatpush1.msra.mxu0 0.0
        %759 = vmatprep.subr.mxu0 0.0
        %760 = vmatpush1.msra.mxu0 0.0
        %761 = vmatprep.subr.mxu0 0.0
        %762 = vmatpush1.msra.mxu0 0.0
        %763 = vmatprep.subr.mxu0 0.0
        %764 = vmatpush1.msra.mxu0 0.0
        %765 = vmatprep.subr.mxu0 0.0
        %766 = vmatpush1.msra.mxu0 0.0
        %767 = vmatprep.subr.mxu0 0.0
        %768 = vmatpush1.msra.mxu0 0.0
        %769 = vmatprep.subr.mxu0 0.0
        %770 = vmatpush1.msra.mxu0 0.0
        %771 = vmatprep.subr.mxu0 0.0
        %772 = vmatpush1.msra.mxu0 0.0
        %773 = vmatprep.subr.mxu0 0.0
        %774 = vmatpush1.msra.mxu0 0.0
        %775 = vmatprep.mubr.f32.mxu0 0.0
        %776 = vmatmul.mubr.f32.gmra.mrb[0].mxu0 %v697
        %v777 = vpop.f32.mrb[0].mxu0
        %v778 = vadd.f32 0.0, %v777
        %v779 = vpop.f32.mrb[0].mxu0
        %780 = vmatprep.mubr.f32.mxu0 0.0
        %781 = vmatmul.mubr.f32.gmra.mrb[0].mxu0 %v699
        %v782 = vpop.f32.mrb[0].mxu0
        %v783 = vadd.f32 0.0, %v782
        %v784 = vpop.f32.mrb[0].mxu0
        %785 = vmatprep.mubr.f32.mxu0 0.0
        %786 = vmatmul.mubr.f32.gmra.mrb[0].mxu0 %v701
        %v787 = vpop.f32.mrb[0].mxu0
        %v788 = vadd.f32 0.0, %v787
        %v789 = vpop.f32.mrb[0].mxu0
        %790 = vmatprep.mubr.f32.mxu0 0.0
        %791 = vmatmul.mubr.f32.gmra.mrb[0].mxu0 %v703
        %v792 = vpop.f32.mrb[0].mxu0
        %v793 = vadd.f32 0.0, %v792
        %v794 = vpop.f32.mrb[0].mxu0
        %795 = vmatprep.mubr.f32.mxu0 0.0
        %796 = vmatmul.mubr.f32.gmra.mrb[0].mxu0 %v705
        %v797 = vpop.f32.mrb[0].mxu0
        %v798 = vadd.f32 0.0, %v797
        %v799 = vpop.f32.mrb[0].mxu0
        %800 = vdwg.mxu0
        %v801 = vadd.f32 %v667, %v778
        %v802 = vadd.f32 %v668, %v783
        %v803 = vadd.f32 %v669, %v788
        %v804 = vadd.f32 %v670, %v793
        %v805 = vadd.f32 %v671, %v798
        %s806 = scalar_lea.vmem %s1, 640
        %v807 = vld [vmem:[%s806] sm:$0xff]
        %v808 = vld [vmem:[%s806 + $0x8] sm:$0xff]
        %v809 = vld [vmem:[%s806 + $0x10] sm:$0xff]
        %v810 = vld [vmem:[%s806 + $0x18] sm:$0xff]
        %v811 = vld [vmem:[%s806 + $0x20] sm:$0xff]
        %v812 = vld [vmem:[%s806 + $0x28] sm:$0xff]
        %v813 = vld [vmem:[%s806 + $0x30] sm:$0xff]
        %v814 = vld [vmem:[%s806 + $0x38] sm:$0xff]
        %v815 = vld [vmem:[%s806 + $0x40] sm:$0xff]
        %v816 = vld [vmem:[%s806 + $0x48] sm:$0xff]
        %v817 = vld [vmem:[%s806 + $0x50] sm:$0xff]
        %v818 = vld [vmem:[%s806 + $0x58] sm:$0xff]
        %v819 = vld [vmem:[%s806 + $0x60] sm:$0xff]
        %v820 = vld [vmem:[%s806 + $0x68] sm:$0xff]
        %v821 = vld [vmem:[%s806 + $0x70] sm:$0xff]
        %v822 = vld [vmem:[%s806 + $0x78] sm:$0xff]
        %v823 = vrot.slane %v554, 2
        %v824 = vrot.slane %v555, 2
        %v825 = vsel %vm439, %v823, %v824
        %v826 = vrot.slane %v556, 2
        %v827 = vsel %vm439, %v824, %v826
        %v828 = vrot.slane %v557, 2
        %v829 = vsel %vm439, %v826, %v828
        %v830 = vrot.slane %v558, 2
        %v831 = vsel %vm439, %v828, %v830
        %v832 = vrot.slane %v559, 2
        %v833 = vsel %vm439, %v830, %v832
        %839 = vmatprep.subr.mxu0 0.0
        %840 = vmatpush1.msra.mxu0 %v807
        %841 = vmatprep.subr.mxu0 0.0
        %842 = vmatpush1.msra.mxu0 %v808
        %843 = vmatprep.subr.mxu0 0.0
        %844 = vmatpush1.msra.mxu0 %v809
        %845 = vmatprep.subr.mxu0 0.0
        %846 = vmatpush1.msra.mxu0 %v810
        %847 = vmatprep.subr.mxu0 0.0
        %848 = vmatpush1.msra.mxu0 %v811
        %849 = vmatprep.subr.mxu0 0.0
        %850 = vmatpush1.msra.mxu0 %v812
        %851 = vmatprep.subr.mxu0 0.0
        %852 = vmatpush1.msra.mxu0 %v813
        %853 = vmatprep.subr.mxu0 0.0
        %854 = vmatpush1.msra.mxu0 %v814
        %855 = vmatprep.subr.mxu0 0.0
        %856 = vmatpush1.msra.mxu0 %v815
        %857 = vmatprep.subr.mxu0 0.0
        %858 = vmatpush1.msra.mxu0 %v816
        %859 = vmatprep.subr.mxu0 0.0
        %860 = vmatpush1.msra.mxu0 %v817
        %861 = vmatprep.subr.mxu0 0.0
        %862 = vmatpush1.msra.mxu0 %v818
        %863 = vmatprep.subr.mxu0 0.0
        %864 = vmatpush1.msra.mxu0 %v819
        %865 = vmatprep.subr.mxu0 0.0
        %866 = vmatpush1.msra.mxu0 %v820
        %867 = vmatprep.subr.mxu0 0.0
        %868 = vmatpush1.msra.mxu0 %v821
        %869 = vmatprep.subr.mxu0 0.0
        %870 = vmatpush1.msra.mxu0 %v822
        %871 = vmatprep.subr.mxu0 0.0
        %872 = vmatpush1.msra.mxu0 0.0
        %873 = vmatprep.subr.mxu0 0.0
        %874 = vmatpush1.msra.mxu0 0.0
        %875 = vmatprep.subr.mxu0 0.0
        %876 = vmatpush1.msra.mxu0 0.0
        %877 = vmatprep.subr.mxu0 0.0
        %878 = vmatpush1.msra.mxu0 0.0
        %879 = vmatprep.subr.mxu0 0.0
        %880 = vmatpush1.msra.mxu0 0.0
        %881 = vmatprep.subr.mxu0 0.0
        %882 = vmatpush1.msra.mxu0 0.0
        %883 = vmatprep.subr.mxu0 0.0
        %884 = vmatpush1.msra.mxu0 0.0
        %885 = vmatprep.subr.mxu0 0.0
        %886 = vmatpush1.msra.mxu0 0.0
        %887 = vmatprep.subr.mxu0 0.0
        %888 = vmatpush1.msra.mxu0 0.0
        %889 = vmatprep.subr.mxu0 0.0
        %890 = vmatpush1.msra.mxu0 0.0
        %891 = vmatprep.subr.mxu0 0.0
        %892 = vmatpush1.msra.mxu0 0.0
        %893 = vmatprep.subr.mxu0 0.0
        %894 = vmatpush1.msra.mxu0 0.0
        %895 = vmatprep.subr.mxu0 0.0
        %896 = vmatpush1.msra.mxu0 0.0
        %897 = vmatprep.subr.mxu0 0.0
        %898 = vmatpush1.msra.mxu0 0.0
        %899 = vmatprep.subr.mxu0 0.0
        %900 = vmatpush1.msra.mxu0 0.0
        %901 = vmatprep.subr.mxu0 0.0
        %902 = vmatpush1.msra.mxu0 0.0
        %903 = vmatprep.mubr.f32.mxu0 0.0
        %904 = vmatmul.mubr.f32.gmra.mrb[0].mxu0 %v825
        %v905 = vpop.f32.mrb[0].mxu0
        %v906 = vadd.f32 0.0, %v905
        %v907 = vpop.f32.mrb[0].mxu0
        %908 = vmatprep.mubr.f32.mxu0 0.0
        %909 = vmatmul.mubr.f32.gmra.mrb[0].mxu0 %v827
        %v910 = vpop.f32.mrb[0].mxu0
        %v911 = vadd.f32 0.0, %v910
        %v912 = vpop.f32.mrb[0].mxu0
        %913 = vmatprep.mubr.f32.mxu0 0.0
        %914 = vmatmul.mubr.f32.gmra.mrb[0].mxu0 %v829
        %v915 = vpop.f32.mrb[0].mxu0
        %v916 = vadd.f32 0.0, %v915
        %v917 = vpop.f32.mrb[0].mxu0
        %918 = vmatprep.mubr.f32.mxu0 0.0
        %919 = vmatmul.mubr.f32.gmra.mrb[0].mxu0 %v831
        %v920 = vpop.f32.mrb[0].mxu0
        %v921 = vadd.f32 0.0, %v920
        %v922 = vpop.f32.mrb[0].mxu0
        %923 = vmatprep.mubr.f32.mxu0 0.0
        %924 = vmatmul.mubr.f32.gmra.mrb[0].mxu0 %v833
        %v925 = vpop.f32.mrb[0].mxu0
        %v926 = vadd.f32 0.0, %v925
        %v927 = vpop.f32.mrb[0].mxu0
        %928 = vdwg.mxu0
        %v929 = vadd.f32 %v801, %v906
        %v930 = vadd.f32 %v802, %v911
        %v931 = vadd.f32 %v803, %v916
        %v932 = vadd.f32 %v804, %v921
        %v933 = vadd.f32 %v805, %v926
        %s934 = sadd.s32 %s173, 2
        %s935 = smul.u32 %s934, 48
        %s936 = scalar_lea.vmem %s165, %s935
        %v937 = vld [vmem:[%s936] sm:$0xff]
        %v938 = vld [vmem:[%s936 + $0x8] sm:$0xff]
        %v939 = vld [vmem:[%s936 + $0x10] sm:$0xff]
        %v940 = vld [vmem:[%s936 + $0x18] sm:$0xff]
        %v941 = vld [vmem:[%s936 + $0x20] sm:$0xff]
        %v942 = vld [vmem:[%s936 + $0x28] sm:$0x3]
        %s943 = scalar_lea.vmem %s1, 768
        %v944 = vld [vmem:[%s943] sm:$0xff]
        %v945 = vld [vmem:[%s943 + $0x8] sm:$0xff]
        %v946 = vld [vmem:[%s943 + $0x10] sm:$0xff]
        %v947 = vld [vmem:[%s943 + $0x18] sm:$0xff]
        %v948 = vld [vmem:[%s943 + $0x20] sm:$0xff]
        %v949 = vld [vmem:[%s943 + $0x28] sm:$0xff]
        %v950 = vld [vmem:[%s943 + $0x30] sm:$0xff]
        %v951 = vld [vmem:[%s943 + $0x38] sm:$0xff]
        %v952 = vld [vmem:[%s943 + $0x40] sm:$0xff]
        %v953 = vld [vmem:[%s943 + $0x48] sm:$0xff]
        %v954 = vld [vmem:[%s943 + $0x50] sm:$0xff]
        %v955 = vld [vmem:[%s943 + $0x58] sm:$0xff]
        %v956 = vld [vmem:[%s943 + $0x60] sm:$0xff]
        %v957 = vld [vmem:[%s943 + $0x68] sm:$0xff]
        %v958 = vld [vmem:[%s943 + $0x70] sm:$0xff]
        %v959 = vld [vmem:[%s943 + $0x78] sm:$0xff]
        %960 = vmatprep.subr.mxu0 0.0
        %961 = vmatpush1.msra.mxu0 %v944
        %962 = vmatprep.subr.mxu0 0.0
        %963 = vmatpush1.msra.mxu0 %v945
        %964 = vmatprep.subr.mxu0 0.0
        %965 = vmatpush1.msra.mxu0 %v946
        %966 = vmatprep.subr.mxu0 0.0
        %967 = vmatpush1.msra.mxu0 %v947
        %968 = vmatprep.subr.mxu0 0.0
        %969 = vmatpush1.msra.mxu0 %v948
        %970 = vmatprep.subr.mxu0 0.0
        %971 = vmatpush1.msra.mxu0 %v949
        %972 = vmatprep.subr.mxu0 0.0
        %973 = vmatpush1.msra.mxu0 %v950
        %974 = vmatprep.subr.mxu0 0.0
        %975 = vmatpush1.msra.mxu0 %v951
        %976 = vmatprep.subr.mxu0 0.0
        %977 = vmatpush1.msra.mxu0 %v952
        %978 = vmatprep.subr.mxu0 0.0
        %979 = vmatpush1.msra.mxu0 %v953
        %980 = vmatprep.subr.mxu0 0.0
        %981 = vmatpush1.msra.mxu0 %v954
        %982 = vmatprep.subr.mxu0 0.0
        %983 = vmatpush1.msra.mxu0 %v955
        %984 = vmatprep.subr.mxu0 0.0
        %985 = vmatpush1.msra.mxu0 %v956
        %986 = vmatprep.subr.mxu0 0.0
        %987 = vmatpush1.msra.mxu0 %v957
        %988 = vmatprep.subr.mxu0 0.0
        %989 = vmatpush1.msra.mxu0 %v958
        %990 = vmatprep.subr.mxu0 0.0
        %991 = vmatpush1.msra.mxu0 %v959
        %992 = vmatprep.subr.mxu0 0.0
        %993 = vmatpush1.msra.mxu0 0.0
        %994 = vmatprep.subr.mxu0 0.0
        %995 = vmatpush1.msra.mxu0 0.0
        %996 = vmatprep.subr.mxu0 0.0
        %997 = vmatpush1.msra.mxu0 0.0
        %998 = vmatprep.subr.mxu0 0.0
        %999 = vmatpush1.msra.mxu0 0.0
        %1000 = vmatprep.subr.mxu0 0.0
        %1001 = vmatpush1.msra.mxu0 0.0
        %1002 = vmatprep.subr.mxu0 0.0
        %1003 = vmatpush1.msra.mxu0 0.0
        %1004 = vmatprep.subr.mxu0 0.0
        %1005 = vmatpush1.msra.mxu0 0.0
        %1006 = vmatprep.subr.mxu0 0.0
        %1007 = vmatpush1.msra.mxu0 0.0
        %1008 = vmatprep.subr.mxu0 0.0
        %1009 = vmatpush1.msra.mxu0 0.0
        %1010 = vmatprep.subr.mxu0 0.0
        %1011 = vmatpush1.msra.mxu0 0.0
        %1012 = vmatprep.subr.mxu0 0.0
        %1013 = vmatpush1.msra.mxu0 0.0
        %1014 = vmatprep.subr.mxu0 0.0
        %1015 = vmatpush1.msra.mxu0 0.0
        %1016 = vmatprep.subr.mxu0 0.0
        %1017 = vmatpush1.msra.mxu0 0.0
        %1018 = vmatprep.subr.mxu0 0.0
        %1019 = vmatpush1.msra.mxu0 0.0
        %1020 = vmatprep.subr.mxu0 0.0
        %1021 = vmatpush1.msra.mxu0 0.0
        %1022 = vmatprep.subr.mxu0 0.0
        %1023 = vmatpush1.msra.mxu0 0.0
        %1024 = vmatprep.mubr.f32.mxu0 0.0
        %1025 = vmatmul.mubr.f32.gmra.mrb[0].mxu0 %v937
        %v1026 = vpop.f32.mrb[0].mxu0
        %v1027 = vadd.f32 0.0, %v1026
        %v1028 = vpop.f32.mrb[0].mxu0
        %1029 = vmatprep.mubr.f32.mxu0 0.0
        %1030 = vmatmul.mubr.f32.gmra.mrb[0].mxu0 %v938
        %v1031 = vpop.f32.mrb[0].mxu0
        %v1032 = vadd.f32 0.0, %v1031
        %v1033 = vpop.f32.mrb[0].mxu0
        %1034 = vmatprep.mubr.f32.mxu0 0.0
        %1035 = vmatmul.mubr.f32.gmra.mrb[0].mxu0 %v939
        %v1036 = vpop.f32.mrb[0].mxu0
        %v1037 = vadd.f32 0.0, %v1036
        %v1038 = vpop.f32.mrb[0].mxu0
        %1039 = vmatprep.mubr.f32.mxu0 0.0
        %1040 = vmatmul.mubr.f32.gmra.mrb[0].mxu0 %v940
        %v1041 = vpop.f32.mrb[0].mxu0
        %v1042 = vadd.f32 0.0, %v1041
        %v1043 = vpop.f32.mrb[0].mxu0
        %1044 = vmatprep.mubr.f32.mxu0 0.0
        %1045 = vmatmul.mubr.f32.gmra.mrb[0].mxu0 %v941
        %v1046 = vpop.f32.mrb[0].mxu0
        %v1047 = vadd.f32 0.0, %v1046
        %v1048 = vpop.f32.mrb[0].mxu0
        %1049 = vdwg.mxu0
        %v1050 = vadd.f32 %v929, %v1027
        %v1051 = vadd.f32 %v930, %v1032
        %v1052 = vadd.f32 %v931, %v1037
        %v1053 = vadd.f32 %v932, %v1042
        %v1054 = vadd.f32 %v933, %v1047
        %s1055 = scalar_lea.vmem %s1, 896
        %v1056 = vld [vmem:[%s1055] sm:$0xff]
        %v1057 = vld [vmem:[%s1055 + $0x8] sm:$0xff]
        %v1058 = vld [vmem:[%s1055 + $0x10] sm:$0xff]
        %v1059 = vld [vmem:[%s1055 + $0x18] sm:$0xff]
        %v1060 = vld [vmem:[%s1055 + $0x20] sm:$0xff]
        %v1061 = vld [vmem:[%s1055 + $0x28] sm:$0xff]
        %v1062 = vld [vmem:[%s1055 + $0x30] sm:$0xff]
        %v1063 = vld [vmem:[%s1055 + $0x38] sm:$0xff]
        %v1064 = vld [vmem:[%s1055 + $0x40] sm:$0xff]
        %v1065 = vld [vmem:[%s1055 + $0x48] sm:$0xff]
        %v1066 = vld [vmem:[%s1055 + $0x50] sm:$0xff]
        %v1067 = vld [vmem:[%s1055 + $0x58] sm:$0xff]
        %v1068 = vld [vmem:[%s1055 + $0x60] sm:$0xff]
        %v1069 = vld [vmem:[%s1055 + $0x68] sm:$0xff]
        %v1070 = vld [vmem:[%s1055 + $0x70] sm:$0xff]
        %v1071 = vld [vmem:[%s1055 + $0x78] sm:$0xff]
        %v1078 = vrot.slane %v937, 1
        %v1079 = vrot.slane %v938, 1
        %v1080 = vsel %vm225, %v1078, %v1079
        %v1081 = vrot.slane %v939, 1
        %v1082 = vsel %vm225, %v1079, %v1081
        %v1083 = vrot.slane %v940, 1
        %v1084 = vsel %vm225, %v1081, %v1083
        %v1085 = vrot.slane %v941, 1
        %v1086 = vsel %vm225, %v1083, %v1085
        %v1087 = vrot.slane %v942, 1
        %v1088 = vsel %vm225, %v1085, %v1087
        %1094 = vmatprep.subr.mxu0 0.0
        %1095 = vmatpush1.msra.mxu0 %v1056
        %1096 = vmatprep.subr.mxu0 0.0
        %1097 = vmatpush1.msra.mxu0 %v1057
        %1098 = vmatprep.subr.mxu0 0.0
        %1099 = vmatpush1.msra.mxu0 %v1058
        %1100 = vmatprep.subr.mxu0 0.0
        %1101 = vmatpush1.msra.mxu0 %v1059
        %1102 = vmatprep.subr.mxu0 0.0
        %1103 = vmatpush1.msra.mxu0 %v1060
        %1104 = vmatprep.subr.mxu0 0.0
        %1105 = vmatpush1.msra.mxu0 %v1061
        %1106 = vmatprep.subr.mxu0 0.0
        %1107 = vmatpush1.msra.mxu0 %v1062
        %1108 = vmatprep.subr.mxu0 0.0
        %1109 = vmatpush1.msra.mxu0 %v1063
        %1110 = vmatprep.subr.mxu0 0.0
        %1111 = vmatpush1.msra.mxu0 %v1064
        %1112 = vmatprep.subr.mxu0 0.0
        %1113 = vmatpush1.msra.mxu0 %v1065
        %1114 = vmatprep.subr.mxu0 0.0
        %1115 = vmatpush1.msra.mxu0 %v1066
        %1116 = vmatprep.subr.mxu0 0.0
        %1117 = vmatpush1.msra.mxu0 %v1067
        %1118 = vmatprep.subr.mxu0 0.0
        %1119 = vmatpush1.msra.mxu0 %v1068
        %1120 = vmatprep.subr.mxu0 0.0
        %1121 = vmatpush1.msra.mxu0 %v1069
        %1122 = vmatprep.subr.mxu0 0.0
        %1123 = vmatpush1.msra.mxu0 %v1070
        %1124 = vmatprep.subr.mxu0 0.0
        %1125 = vmatpush1.msra.mxu0 %v1071
        %1126 = vmatprep.subr.mxu0 0.0
        %1127 = vmatpush1.msra.mxu0 0.0
        %1128 = vmatprep.subr.mxu0 0.0
        %1129 = vmatpush1.msra.mxu0 0.0
        %1130 = vmatprep.subr.mxu0 0.0
        %1131 = vmatpush1.msra.mxu0 0.0
        %1132 = vmatprep.subr.mxu0 0.0
        %1133 = vmatpush1.msra.mxu0 0.0
        %1134 = vmatprep.subr.mxu0 0.0
        %1135 = vmatpush1.msra.mxu0 0.0
        %1136 = vmatprep.subr.mxu0 0.0
        %1137 = vmatpush1.msra.mxu0 0.0
        %1138 = vmatprep.subr.mxu0 0.0
        %1139 = vmatpush1.msra.mxu0 0.0
        %1140 = vmatprep.subr.mxu0 0.0
        %1141 = vmatpush1.msra.mxu0 0.0
        %1142 = vmatprep.subr.mxu0 0.0
        %1143 = vmatpush1.msra.mxu0 0.0
        %1144 = vmatprep.subr.mxu0 0.0
        %1145 = vmatpush1.msra.mxu0 0.0
        %1146 = vmatprep.subr.mxu0 0.0
        %1147 = vmatpush1.msra.mxu0 0.0
        %1148 = vmatprep.subr.mxu0 0.0
        %1149 = vmatpush1.msra.mxu0 0.0
        %1150 = vmatprep.subr.mxu0 0.0
        %1151 = vmatpush1.msra.mxu0 0.0
        %1152 = vmatprep.subr.mxu0 0.0
        %1153 = vmatpush1.msra.mxu0 0.0
        %1154 = vmatprep.subr.mxu0 0.0
        %1155 = vmatpush1.msra.mxu0 0.0
        %1156 = vmatprep.subr.mxu0 0.0
        %1157 = vmatpush1.msra.mxu0 0.0
        %1158 = vmatprep.mubr.f32.mxu0 0.0
        %1159 = vmatmul.mubr.f32.gmra.mrb[0].mxu0 %v1080
        %v1160 = vpop.f32.mrb[0].mxu0
        %v1161 = vadd.f32 0.0, %v1160
        %v1162 = vpop.f32.mrb[0].mxu0
        %1163 = vmatprep.mubr.f32.mxu0 0.0
        %1164 = vmatmul.mubr.f32.gmra.mrb[0].mxu0 %v1082
        %v1165 = vpop.f32.mrb[0].mxu0
        %v1166 = vadd.f32 0.0, %v1165
        %v1167 = vpop.f32.mrb[0].mxu0
        %1168 = vmatprep.mubr.f32.mxu0 0.0
        %1169 = vmatmul.mubr.f32.gmra.mrb[0].mxu0 %v1084
        %v1170 = vpop.f32.mrb[0].mxu0
        %v1171 = vadd.f32 0.0, %v1170
        %v1172 = vpop.f32.mrb[0].mxu0
        %1173 = vmatprep.mubr.f32.mxu0 0.0
        %1174 = vmatmul.mubr.f32.gmra.mrb[0].mxu0 %v1086
        %v1175 = vpop.f32.mrb[0].mxu0
        %v1176 = vadd.f32 0.0, %v1175
        %v1177 = vpop.f32.mrb[0].mxu0
        %1178 = vmatprep.mubr.f32.mxu0 0.0
        %1179 = vmatmul.mubr.f32.gmra.mrb[0].mxu0 %v1088
        %v1180 = vpop.f32.mrb[0].mxu0
        %v1181 = vadd.f32 0.0, %v1180
        %v1182 = vpop.f32.mrb[0].mxu0
        %1183 = vdwg.mxu0
        %v1184 = vadd.f32 %v1050, %v1161
        %v1185 = vadd.f32 %v1051, %v1166
        %v1186 = vadd.f32 %v1052, %v1171
        %v1187 = vadd.f32 %v1053, %v1176
        %v1188 = vadd.f32 %v1054, %v1181
        %s1189 = scalar_lea.vmem %s1, 1024
        %v1190 = vld [vmem:[%s1189] sm:$0xff]
        %v1191 = vld [vmem:[%s1189 + $0x8] sm:$0xff]
        %v1192 = vld [vmem:[%s1189 + $0x10] sm:$0xff]
        %v1193 = vld [vmem:[%s1189 + $0x18] sm:$0xff]
        %v1194 = vld [vmem:[%s1189 + $0x20] sm:$0xff]
        %v1195 = vld [vmem:[%s1189 + $0x28] sm:$0xff]
        %v1196 = vld [vmem:[%s1189 + $0x30] sm:$0xff]
        %v1197 = vld [vmem:[%s1189 + $0x38] sm:$0xff]
        %v1198 = vld [vmem:[%s1189 + $0x40] sm:$0xff]
        %v1199 = vld [vmem:[%s1189 + $0x48] sm:$0xff]
        %v1200 = vld [vmem:[%s1189 + $0x50] sm:$0xff]
        %v1201 = vld [vmem:[%s1189 + $0x58] sm:$0xff]
        %v1202 = vld [vmem:[%s1189 + $0x60] sm:$0xff]
        %v1203 = vld [vmem:[%s1189 + $0x68] sm:$0xff]
        %v1204 = vld [vmem:[%s1189 + $0x70] sm:$0xff]
        %v1205 = vld [vmem:[%s1189 + $0x78] sm:$0xff]
        %v1206 = vrot.slane %v937, 2
        %v1207 = vrot.slane %v938, 2
        %v1208 = vsel %vm439, %v1206, %v1207
        %v1209 = vrot.slane %v939, 2
        %v1210 = vsel %vm439, %v1207, %v1209
        %v1211 = vrot.slane %v940, 2
        %v1212 = vsel %vm439, %v1209, %v1211
        %v1213 = vrot.slane %v941, 2
        %v1214 = vsel %vm439, %v1211, %v1213
        %v1215 = vrot.slane %v942, 2
        %v1216 = vsel %vm439, %v1213, %v1215
        %1222 = vmatprep.subr.mxu0 0.0
        %1223 = vmatpush1.msra.mxu0 %v1190
        %1224 = vmatprep.subr.mxu0 0.0
        %1225 = vmatpush1.msra.mxu0 %v1191
        %1226 = vmatprep.subr.mxu0 0.0
        %1227 = vmatpush1.msra.mxu0 %v1192
        %1228 = vmatprep.subr.mxu0 0.0
        %1229 = vmatpush1.msra.mxu0 %v1193
        %1230 = vmatprep.subr.mxu0 0.0
        %1231 = vmatpush1.msra.mxu0 %v1194
        %1232 = vmatprep.subr.mxu0 0.0
        %1233 = vmatpush1.msra.mxu0 %v1195
        %1234 = vmatprep.subr.mxu0 0.0
        %1235 = vmatpush1.msra.mxu0 %v1196
        %1236 = vmatprep.subr.mxu0 0.0
        %1237 = vmatpush1.msra.mxu0 %v1197
        %1238 = vmatprep.subr.mxu0 0.0
        %1239 = vmatpush1.msra.mxu0 %v1198
        %1240 = vmatprep.subr.mxu0 0.0
        %1241 = vmatpush1.msra.mxu0 %v1199
        %1242 = vmatprep.subr.mxu0 0.0
        %1243 = vmatpush1.msra.mxu0 %v1200
        %1244 = vmatprep.subr.mxu0 0.0
        %1245 = vmatpush1.msra.mxu0 %v1201
        %1246 = vmatprep.subr.mxu0 0.0
        %1247 = vmatpush1.msra.mxu0 %v1202
        %1248 = vmatprep.subr.mxu0 0.0
        %1249 = vmatpush1.msra.mxu0 %v1203
        %1250 = vmatprep.subr.mxu0 0.0
        %1251 = vmatpush1.msra.mxu0 %v1204
        %1252 = vmatprep.subr.mxu0 0.0
        %1253 = vmatpush1.msra.mxu0 %v1205
        %1254 = vmatprep.subr.mxu0 0.0
        %1255 = vmatpush1.msra.mxu0 0.0
        %1256 = vmatprep.subr.mxu0 0.0
        %1257 = vmatpush1.msra.mxu0 0.0
        %1258 = vmatprep.subr.mxu0 0.0
        %1259 = vmatpush1.msra.mxu0 0.0
        %1260 = vmatprep.subr.mxu0 0.0
        %1261 = vmatpush1.msra.mxu0 0.0
        %1262 = vmatprep.subr.mxu0 0.0
        %1263 = vmatpush1.msra.mxu0 0.0
        %1264 = vmatprep.subr.mxu0 0.0
        %1265 = vmatpush1.msra.mxu0 0.0
        %1266 = vmatprep.subr.mxu0 0.0
        %1267 = vmatpush1.msra.mxu0 0.0
        %1268 = vmatprep.subr.mxu0 0.0
        %1269 = vmatpush1.msra.mxu0 0.0
        %1270 = vmatprep.subr.mxu0 0.0
        %1271 = vmatpush1.msra.mxu0 0.0
        %1272 = vmatprep.subr.mxu0 0.0
        %1273 = vmatpush1.msra.mxu0 0.0
        %1274 = vmatprep.subr.mxu0 0.0
        %1275 = vmatpush1.msra.mxu0 0.0
        %1276 = vmatprep.subr.mxu0 0.0
        %1277 = vmatpush1.msra.mxu0 0.0
        %1278 = vmatprep.subr.mxu0 0.0
        %1279 = vmatpush1.msra.mxu0 0.0
        %1280 = vmatprep.subr.mxu0 0.0
        %1281 = vmatpush1.msra.mxu0 0.0
        %1282 = vmatprep.subr.mxu0 0.0
        %1283 = vmatpush1.msra.mxu0 0.0
        %1284 = vmatprep.subr.mxu0 0.0
        %1285 = vmatpush1.msra.mxu0 0.0
        %1286 = vmatprep.mubr.f32.mxu0 0.0
        %1287 = vmatmul.mubr.f32.gmra.mrb[0].mxu0 %v1208
        %v1288 = vpop.f32.mrb[0].mxu0
        %v1289 = vadd.f32 0.0, %v1288
        %v1290 = vpop.f32.mrb[0].mxu0
        %1291 = vmatprep.mubr.f32.mxu0 0.0
        %1292 = vmatmul.mubr.f32.gmra.mrb[0].mxu0 %v1210
        %v1293 = vpop.f32.mrb[0].mxu0
        %v1294 = vadd.f32 0.0, %v1293
        %v1295 = vpop.f32.mrb[0].mxu0
        %1296 = vmatprep.mubr.f32.mxu0 0.0
        %1297 = vmatmul.mubr.f32.gmra.mrb[0].mxu0 %v1212
        %v1298 = vpop.f32.mrb[0].mxu0
        %v1299 = vadd.f32 0.0, %v1298
        %v1300 = vpop.f32.mrb[0].mxu0
        %1301 = vmatprep.mubr.f32.mxu0 0.0
        %1302 = vmatmul.mubr.f32.gmra.mrb[0].mxu0 %v1214
        %v1303 = vpop.f32.mrb[0].mxu0
        %v1304 = vadd.f32 0.0, %v1303
        %v1305 = vpop.f32.mrb[0].mxu0
        %1306 = vmatprep.mubr.f32.mxu0 0.0
        %1307 = vmatmul.mubr.f32.gmra.mrb[0].mxu0 %v1216
        %v1308 = vpop.f32.mrb[0].mxu0
        %v1309 = vadd.f32 0.0, %v1308
        %v1310 = vpop.f32.mrb[0].mxu0
        %1311 = vdwg.mxu0
        %v1312 = vadd.f32 %v1184, %v1289
        %v1313 = vadd.f32 %v1185, %v1294
        %v1314 = vadd.f32 %v1186, %v1299
        %v1315 = vadd.f32 %v1187, %v1304
        %v1316 = vadd.f32 %v1188, %v1309
        %v1318 = vlaneseq
        %v1319 = vshrl.u32 %v1318, 7
        %v1320 = vsub.s32 0, %v1319
        %v1321 = vrot.slane %v171, %v1320
        %v1323 = vadd.f32 %v1312, %v1321
        %v1324 = vadd.f32 %v1313, %v1321
        %v1325 = vadd.f32 %v1314, %v1321
        %v1326 = vadd.f32 %v1315, %v1321
        %v1327 = vadd.f32 %v1316, %v1321
        %s1328 = smul.u32 %s173, 40
        %s1329 = scalar_lea.vmem [#allocation2], %s1328
        %1330 = vst [vmem:[%s1329] sm:$0xff] %v1323
        %1331 = vst [vmem:[%s1329 + $0x8] sm:$0xff] %v1324
        %1332 = vst [vmem:[%s1329 + $0x10] sm:$0xff] %v1325
        %1333 = vst [vmem:[%s1329 + $0x18] sm:$0xff] %v1326
        %1334 = vst [vmem:[%s1329 + $0x20] sm:$0xff] %v1327
      $region37: #{ae_decoder_forward.8} parent=31 // loop_footer
        %s177 = sadd.s32 1, %s173
      $region38: #{ae_decoder_forward.8} parent=31 // loop_footer_branch
        %172 = sbr.rel target = $region34
      $region39: #{ae_decoder_forward.8} parent=31 // loop_exit
        _
      %v1335 = vld [vmem:[#allocation2] sm:$0xff]
      %v1336 = vld [vmem:[#allocation2 + $0x8] sm:$0xff]
      %v1337 = vld [vmem:[#allocation2 + $0x10] sm:$0xff]
      %v1338 = vld [vmem:[#allocation2 + $0x18] sm:$0xff]
      %v1339 = vld [vmem:[#allocation2 + $0x20] sm:$0xff]
      %v1340 = vld [vmem:[#allocation2 + $0x28] sm:$0xff]
      %v1341 = vld [vmem:[#allocation2 + $0x30] sm:$0xff]
      %v1342 = vld [vmem:[#allocation2 + $0x38] sm:$0xff]
      %v1343 = vld [vmem:[#allocation2 + $0x40] sm:$0xff]
      %v1344 = vld [vmem:[#allocation2 + $0x48] sm:$0xff]
      %v1345 = vld [vmem:[#allocation2 + $0x50] sm:$0xff]
      %v1346 = vld [vmem:[#allocation2 + $0x58] sm:$0xff]
      %v1347 = vld [vmem:[#allocation2 + $0x60] sm:$0xff]
      %v1348 = vld [vmem:[#allocation2 + $0x68] sm:$0xff]
      %v1349 = vld [vmem:[#allocation2 + $0x70] sm:$0xff]
      %v1350 = vld [vmem:[#allocation2 + $0x78] sm:$0xff]
      %v1351 = vld [vmem:[#allocation2 + $0x80] sm:$0xff]
      %v1352 = vld [vmem:[#allocation2 + $0x88] sm:$0xff]
      %v1353 = vld [vmem:[#allocation2 + $0x90] sm:$0xff]
      %v1354 = vld [vmem:[#allocation2 + $0x98] sm:$0xff]
      %v1355 = vld [vmem:[#allocation2 + $0xa0] sm:$0xff]
      %v1356 = vld [vmem:[#allocation2 + $0xa8] sm:$0xff]
      %v1357 = vld [vmem:[#allocation2 + $0xb0] sm:$0xff]
      %v1358 = vld [vmem:[#allocation2 + $0xb8] sm:$0xff]
      %v1359 = vld [vmem:[#allocation2 + $0xc0] sm:$0xff]
      %v1360 = vld [vmem:[#allocation2 + $0xc8] sm:$0xff]
      %v1361 = vld [vmem:[#allocation2 + $0xd0] sm:$0xff]
      %v1362 = vld [vmem:[#allocation2 + $0xd8] sm:$0xff]
      %v1363 = vld [vmem:[#allocation2 + $0xe0] sm:$0xff]
      %v1364 = vld [vmem:[#allocation2 + $0xe8] sm:$0xff]
      %v1365 = vld [vmem:[#allocation2 + $0xf0] sm:$0xff]
      %v1366 = vld [vmem:[#allocation2 + $0xf8] sm:$0xff]
      %v1367 = vld [vmem:[#allocation2 + $0x100] sm:$0xff]
      %v1368 = vld [vmem:[#allocation2 + $0x108] sm:$0xff]
      %v1369 = vld [vmem:[#allocation2 + $0x110] sm:$0xff]
      %v1370 = vld [vmem:[#allocation2 + $0x118] sm:$0xff]
      %v1371 = vld [vmem:[#allocation2 + $0x120] sm:$0xff]
      %v1372 = vld [vmem:[#allocation2 + $0x128] sm:$0xff]
      %v1373 = vld [vmem:[#allocation2 + $0x130] sm:$0xff]
      %v1374 = vld [vmem:[#allocation2 + $0x138] sm:$0xff]
      %v1375 = vld [vmem:[#allocation2 + $0x140] sm:$0xff]
      %v1376 = vld [vmem:[#allocation2 + $0x148] sm:$0xff]
      %v1377 = vld [vmem:[#allocation2 + $0x150] sm:$0xff]
      %v1378 = vld [vmem:[#allocation2 + $0x158] sm:$0xff]
      %v1379 = vld [vmem:[#allocation2 + $0x160] sm:$0xff]
      %v1380 = vld [vmem:[#allocation2 + $0x168] sm:$0xff]
      %v1381 = vld [vmem:[#allocation2 + $0x170] sm:$0xff]
      %v1382 = vld [vmem:[#allocation2 + $0x178] sm:$0xff]
      %v1383 = vld [vmem:[#allocation2 + $0x180] sm:$0xff]
      %v1384 = vld [vmem:[#allocation2 + $0x188] sm:$0xff]
      %v1385 = vld [vmem:[#allocation2 + $0x190] sm:$0xff]
      %v1386 = vld [vmem:[#allocation2 + $0x198] sm:$0xff]
      %v1387 = vld [vmem:[#allocation2 + $0x1a0] sm:$0xff]
      %v1388 = vld [vmem:[#allocation2 + $0x1a8] sm:$0xff]
      %v1389 = vld [vmem:[#allocation2 + $0x1b0] sm:$0xff]
      %v1390 = vld [vmem:[#allocation2 + $0x1b8] sm:$0xff]
      %v1391 = vld [vmem:[#allocation2 + $0x1c0] sm:$0xff]
      %v1392 = vld [vmem:[#allocation2 + $0x1c8] sm:$0xff]
      %v1393 = vld [vmem:[#allocation2 + $0x1d0] sm:$0xff]
      %v1394 = vld [vmem:[#allocation2 + $0x1d8] sm:$0xff]
      %v1395 = vld [vmem:[#allocation2 + $0x1e0] sm:$0xff]
      %v1396 = vld [vmem:[#allocation2 + $0x1e8] sm:$0xff]
      %v1397 = vld [vmem:[#allocation2 + $0x1f0] sm:$0xff]
      %v1398 = vld [vmem:[#allocation2 + $0x1f8] sm:$0xff]
      %v1399 = vld [vmem:[#allocation2 + $0x200] sm:$0xff]
      %v1400 = vld [vmem:[#allocation2 + $0x208] sm:$0xff]
      %v1401 = vld [vmem:[#allocation2 + $0x210] sm:$0xff]
      %v1402 = vld [vmem:[#allocation2 + $0x218] sm:$0xff]
      %v1403 = vld [vmem:[#allocation2 + $0x220] sm:$0xff]
      %v1404 = vld [vmem:[#allocation2 + $0x228] sm:$0xff]
      %v1405 = vld [vmem:[#allocation2 + $0x230] sm:$0xff]
      %v1406 = vld [vmem:[#allocation2 + $0x238] sm:$0xff]
      %v1407 = vld [vmem:[#allocation2 + $0x240] sm:$0xff]
      %v1408 = vld [vmem:[#allocation2 + $0x248] sm:$0xff]
      %v1409 = vld [vmem:[#allocation2 + $0x250] sm:$0xff]
      %v1410 = vld [vmem:[#allocation2 + $0x258] sm:$0xff]
      %v1411 = vld [vmem:[#allocation2 + $0x260] sm:$0xff]
      %v1412 = vld [vmem:[#allocation2 + $0x268] sm:$0xff]
      %v1413 = vld [vmem:[#allocation2 + $0x270] sm:$0xff]
      %v1414 = vld [vmem:[#allocation2 + $0x278] sm:$0xff]
      %v1415 = vld [vmem:[#allocation2 + $0x280] sm:$0xff]
      %v1416 = vld [vmem:[#allocation2 + $0x288] sm:$0xff]
      %v1417 = vld [vmem:[#allocation2 + $0x290] sm:$0xff]
      %v1418 = vld [vmem:[#allocation2 + $0x298] sm:$0xff]
      %v1419 = vld [vmem:[#allocation2 + $0x2a0] sm:$0xff]
      %v1420 = vld [vmem:[#allocation2 + $0x2a8] sm:$0xff]
      %v1421 = vld [vmem:[#allocation2 + $0x2b0] sm:$0xff]
      %v1422 = vld [vmem:[#allocation2 + $0x2b8] sm:$0xff]
      %v1423 = vld [vmem:[#allocation2 + $0x2c0] sm:$0xff]
      %v1424 = vld [vmem:[#allocation2 + $0x2c8] sm:$0xff]
      %v1425 = vld [vmem:[#allocation2 + $0x2d0] sm:$0xff]
      %v1426 = vld [vmem:[#allocation2 + $0x2d8] sm:$0xff]
      %v1427 = vld [vmem:[#allocation2 + $0x2e0] sm:$0xff]
      %v1428 = vld [vmem:[#allocation2 + $0x2e8] sm:$0xff]
      %v1429 = vld [vmem:[#allocation2 + $0x2f0] sm:$0xff]
      %v1430 = vld [vmem:[#allocation2 + $0x2f8] sm:$0xff]
      %v1431 = vld [vmem:[#allocation2 + $0x300] sm:$0xff]
      %v1432 = vld [vmem:[#allocation2 + $0x308] sm:$0xff]
      %v1433 = vld [vmem:[#allocation2 + $0x310] sm:$0xff]
      %v1434 = vld [vmem:[#allocation2 + $0x318] sm:$0xff]
      %v1435 = vld [vmem:[#allocation2 + $0x320] sm:$0xff]
      %v1436 = vld [vmem:[#allocation2 + $0x328] sm:$0xff]
      %v1437 = vld [vmem:[#allocation2 + $0x330] sm:$0xff]
      %v1438 = vld [vmem:[#allocation2 + $0x338] sm:$0xff]
      %v1439 = vld [vmem:[#allocation2 + $0x340] sm:$0xff]
      %v1440 = vld [vmem:[#allocation2 + $0x348] sm:$0xff]
      %v1441 = vld [vmem:[#allocation2 + $0x350] sm:$0xff]
      %v1442 = vld [vmem:[#allocation2 + $0x358] sm:$0xff]
      %v1443 = vld [vmem:[#allocation2 + $0x360] sm:$0xff]
      %v1444 = vld [vmem:[#allocation2 + $0x368] sm:$0xff]
      %v1445 = vadd.f32 %v1335, %v1336
      %v1446 = vadd.f32 %v1445, %v1337
      %v1447 = vadd.f32 %v1446, %v1338
      %v1448 = vadd.f32 %v1447, %v1339
      %v1449 = vrot.slane %v1448, 4
      %v1450 = vadd.f32 %v1448, %v1449
      %v1451 = vrot.slane %v1450, 2
      %v1452 = vadd.f32 %v1450, %v1451
      %v1453 = vrot.slane %v1452, 1
      %v1454 = vadd.f32 %v1452, %v1453
      %v1455 = vadd.f32 %v1340, %v1341
      %v1456 = vadd.f32 %v1455, %v1342
      %v1457 = vadd.f32 %v1456, %v1343
      %v1458 = vadd.f32 %v1457, %v1344
      %v1459 = vrot.slane %v1458, 4
      %v1460 = vadd.f32 %v1458, %v1459
      %v1461 = vrot.slane %v1460, 2
      %v1462 = vadd.f32 %v1460, %v1461
      %v1463 = vrot.slane %v1462, 1
      %v1464 = vadd.f32 %v1462, %v1463
      %v1465 = vadd.f32 %v1345, %v1346
      %v1466 = vadd.f32 %v1465, %v1347
      %v1467 = vadd.f32 %v1466, %v1348
      %v1468 = vadd.f32 %v1467, %v1349
      %v1469 = vrot.slane %v1468, 4
      %v1470 = vadd.f32 %v1468, %v1469
      %v1471 = vrot.slane %v1470, 2
      %v1472 = vadd.f32 %v1470, %v1471
      %v1473 = vrot.slane %v1472, 1
      %v1474 = vadd.f32 %v1472, %v1473
      %v1475 = vadd.f32 %v1350, %v1351
      %v1476 = vadd.f32 %v1475, %v1352
      %v1477 = vadd.f32 %v1476, %v1353
      %v1478 = vadd.f32 %v1477, %v1354
      %v1479 = vrot.slane %v1478, 4
      %v1480 = vadd.f32 %v1478, %v1479
      %v1481 = vrot.slane %v1480, 2
      %v1482 = vadd.f32 %v1480, %v1481
      %v1483 = vrot.slane %v1482, 1
      %v1484 = vadd.f32 %v1482, %v1483
      %v1485 = vadd.f32 %v1355, %v1356
      %v1486 = vadd.f32 %v1485, %v1357
      %v1487 = vadd.f32 %v1486, %v1358
      %v1488 = vadd.f32 %v1487, %v1359
      %v1489 = vrot.slane %v1488, 4
      %v1490 = vadd.f32 %v1488, %v1489
      %v1491 = vrot.slane %v1490, 2
      %v1492 = vadd.f32 %v1490, %v1491
      %v1493 = vrot.slane %v1492, 1
      %v1494 = vadd.f32 %v1492, %v1493
      %v1495 = vadd.f32 %v1360, %v1361
      %v1496 = vadd.f32 %v1495, %v1362
      %v1497 = vadd.f32 %v1496, %v1363
      %v1498 = vadd.f32 %v1497, %v1364
      %v1499 = vrot.slane %v1498, 4
      %v1500 = vadd.f32 %v1498, %v1499
      %v1501 = vrot.slane %v1500, 2
      %v1502 = vadd.f32 %v1500, %v1501
      %v1503 = vrot.slane %v1502, 1
      %v1504 = vadd.f32 %v1502, %v1503
      %v1505 = vadd.f32 %v1365, %v1366
      %v1506 = vadd.f32 %v1505, %v1367
      %v1507 = vadd.f32 %v1506, %v1368
      %v1508 = vadd.f32 %v1507, %v1369
      %v1509 = vrot.slane %v1508, 4
      %v1510 = vadd.f32 %v1508, %v1509
      %v1511 = vrot.slane %v1510, 2
      %v1512 = vadd.f32 %v1510, %v1511
      %v1513 = vrot.slane %v1512, 1
      %v1514 = vadd.f32 %v1512, %v1513
      %v1515 = vadd.f32 %v1370, %v1371
      %v1516 = vadd.f32 %v1515, %v1372
      %v1517 = vadd.f32 %v1516, %v1373
      %v1518 = vadd.f32 %v1517, %v1374
      %v1519 = vrot.slane %v1518, 4
      %v1520 = vadd.f32 %v1518, %v1519
      %v1521 = vrot.slane %v1520, 2
      %v1522 = vadd.f32 %v1520, %v1521
      %v1523 = vrot.slane %v1522, 1
      %v1524 = vadd.f32 %v1522, %v1523
      %v1525 = vadd.f32 %v1375, %v1376
      %v1526 = vadd.f32 %v1525, %v1377
      %v1527 = vadd.f32 %v1526, %v1378
      %v1528 = vadd.f32 %v1527, %v1379
      %v1529 = vrot.slane %v1528, 4
      %v1530 = vadd.f32 %v1528, %v1529
      %v1531 = vrot.slane %v1530, 2
      %v1532 = vadd.f32 %v1530, %v1531
      %v1533 = vrot.slane %v1532, 1
      %v1534 = vadd.f32 %v1532, %v1533
      %v1535 = vadd.f32 %v1380, %v1381
      %v1536 = vadd.f32 %v1535, %v1382
      %v1537 = vadd.f32 %v1536, %v1383
      %v1538 = vadd.f32 %v1537, %v1384
      %v1539 = vrot.slane %v1538, 4
      %v1540 = vadd.f32 %v1538, %v1539
      %v1541 = vrot.slane %v1540, 2
      %v1542 = vadd.f32 %v1540, %v1541
      %v1543 = vrot.slane %v1542, 1
      %v1544 = vadd.f32 %v1542, %v1543
      %v1545 = vadd.f32 %v1385, %v1386
      %v1546 = vadd.f32 %v1545, %v1387
      %v1547 = vadd.f32 %v1546, %v1388
      %v1548 = vadd.f32 %v1547, %v1389
      %v1549 = vrot.slane %v1548, 4
      %v1550 = vadd.f32 %v1548, %v1549
      %v1551 = vrot.slane %v1550, 2
      %v1552 = vadd.f32 %v1550, %v1551
      %v1553 = vrot.slane %v1552, 1
      %v1554 = vadd.f32 %v1552, %v1553
      %v1555 = vadd.f32 %v1390, %v1391
      %v1556 = vadd.f32 %v1555, %v1392
      %v1557 = vadd.f32 %v1556, %v1393
      %v1558 = vadd.f32 %v1557, %v1394
      %v1559 = vrot.slane %v1558, 4
      %v1560 = vadd.f32 %v1558, %v1559
      %v1561 = vrot.slane %v1560, 2
      %v1562 = vadd.f32 %v1560, %v1561
      %v1563 = vrot.slane %v1562, 1
      %v1564 = vadd.f32 %v1562, %v1563
      %v1565 = vadd.f32 %v1395, %v1396
      %v1566 = vadd.f32 %v1565, %v1397
      %v1567 = vadd.f32 %v1566, %v1398
      %v1568 = vadd.f32 %v1567, %v1399
      %v1569 = vrot.slane %v1568, 4
      %v1570 = vadd.f32 %v1568, %v1569
      %v1571 = vrot.slane %v1570, 2
      %v1572 = vadd.f32 %v1570, %v1571
      %v1573 = vrot.slane %v1572, 1
      %v1574 = vadd.f32 %v1572, %v1573
      %v1575 = vadd.f32 %v1400, %v1401
      %v1576 = vadd.f32 %v1575, %v1402
      %v1577 = vadd.f32 %v1576, %v1403
      %v1578 = vadd.f32 %v1577, %v1404
      %v1579 = vrot.slane %v1578, 4
      %v1580 = vadd.f32 %v1578, %v1579
      %v1581 = vrot.slane %v1580, 2
      %v1582 = vadd.f32 %v1580, %v1581
      %v1583 = vrot.slane %v1582, 1
      %v1584 = vadd.f32 %v1582, %v1583
      %v1585 = vadd.f32 %v1405, %v1406
      %v1586 = vadd.f32 %v1585, %v1407
      %v1587 = vadd.f32 %v1586, %v1408
      %v1588 = vadd.f32 %v1587, %v1409
      %v1589 = vrot.slane %v1588, 4
      %v1590 = vadd.f32 %v1588, %v1589
      %v1591 = vrot.slane %v1590, 2
      %v1592 = vadd.f32 %v1590, %v1591
      %v1593 = vrot.slane %v1592, 1
      %v1594 = vadd.f32 %v1592, %v1593
      %v1595 = vadd.f32 %v1410, %v1411
      %v1596 = vadd.f32 %v1595, %v1412
      %v1597 = vadd.f32 %v1596, %v1413
      %v1598 = vadd.f32 %v1597, %v1414
      %v1599 = vrot.slane %v1598, 4
      %v1600 = vadd.f32 %v1598, %v1599
      %v1601 = vrot.slane %v1600, 2
      %v1602 = vadd.f32 %v1600, %v1601
      %v1603 = vrot.slane %v1602, 1
      %v1604 = vadd.f32 %v1602, %v1603
      %v1605 = vadd.f32 %v1415, %v1416
      %v1606 = vadd.f32 %v1605, %v1417
      %v1607 = vadd.f32 %v1606, %v1418
      %v1608 = vadd.f32 %v1607, %v1419
      %v1609 = vrot.slane %v1608, 4
      %v1610 = vadd.f32 %v1608, %v1609
      %v1611 = vrot.slane %v1610, 2
      %v1612 = vadd.f32 %v1610, %v1611
      %v1613 = vrot.slane %v1612, 1
      %v1614 = vadd.f32 %v1612, %v1613
      %v1615 = vadd.f32 %v1420, %v1421
      %v1616 = vadd.f32 %v1615, %v1422
      %v1617 = vadd.f32 %v1616, %v1423
      %v1618 = vadd.f32 %v1617, %v1424
      %v1619 = vrot.slane %v1618, 4
      %v1620 = vadd.f32 %v1618, %v1619
      %v1621 = vrot.slane %v1620, 2
      %v1622 = vadd.f32 %v1620, %v1621
      %v1623 = vrot.slane %v1622, 1
      %v1624 = vadd.f32 %v1622, %v1623
      %v1625 = vadd.f32 %v1425, %v1426
      %v1626 = vadd.f32 %v1625, %v1427
      %v1627 = vadd.f32 %v1626, %v1428
      %v1628 = vadd.f32 %v1627, %v1429
      %v1629 = vrot.slane %v1628, 4
      %v1630 = vadd.f32 %v1628, %v1629
      %v1631 = vrot.slane %v1630, 2
      %v1632 = vadd.f32 %v1630, %v1631
      %v1633 = vrot.slane %v1632, 1
      %v1634 = vadd.f32 %v1632, %v1633
      %v1635 = vadd.f32 %v1430, %v1431
      %v1636 = vadd.f32 %v1635, %v1432
      %v1637 = vadd.f32 %v1636, %v1433
      %v1638 = vadd.f32 %v1637, %v1434
      %v1639 = vrot.slane %v1638, 4
      %v1640 = vadd.f32 %v1638, %v1639
      %v1641 = vrot.slane %v1640, 2
      %v1642 = vadd.f32 %v1640, %v1641
      %v1643 = vrot.slane %v1642, 1
      %v1644 = vadd.f32 %v1642, %v1643
      %v1645 = vadd.f32 %v1435, %v1436
      %v1646 = vadd.f32 %v1645, %v1437
      %v1647 = vadd.f32 %v1646, %v1438
      %v1648 = vadd.f32 %v1647, %v1439
      %v1649 = vrot.slane %v1648, 4
      %v1650 = vadd.f32 %v1648, %v1649
      %v1651 = vrot.slane %v1650, 2
      %v1652 = vadd.f32 %v1650, %v1651
      %v1653 = vrot.slane %v1652, 1
      %v1654 = vadd.f32 %v1652, %v1653
      %v1655 = vadd.f32 %v1440, %v1441
      %v1656 = vadd.f32 %v1655, %v1442
      %v1657 = vadd.f32 %v1656, %v1443
      %v1658 = vadd.f32 %v1657, %v1444
      %v1659 = vrot.slane %v1658, 4
      %v1660 = vadd.f32 %v1658, %v1659
      %v1661 = vrot.slane %v1660, 2
      %v1662 = vadd.f32 %v1660, %v1661
      %v1663 = vrot.slane %v1662, 1
      %v1664 = vadd.f32 %v1662, %v1663
      %v1665 = vadd.f32 %v1454, %v1464
      %v1666 = vadd.f32 %v1665, %v1474
      %v1667 = vadd.f32 %v1666, %v1484
      %v1668 = vadd.f32 %v1667, %v1494
      %v1669 = vadd.f32 %v1668, %v1504
      %v1670 = vadd.f32 %v1669, %v1514
      %v1671 = vadd.f32 %v1670, %v1524
      %v1672 = vadd.f32 %v1671, %v1534
      %v1673 = vadd.f32 %v1672, %v1544
      %v1674 = vadd.f32 %v1673, %v1554
      %v1675 = vadd.f32 %v1674, %v1564
      %v1676 = vadd.f32 %v1675, %v1574
      %v1677 = vadd.f32 %v1676, %v1584
      %v1678 = vadd.f32 %v1677, %v1594
      %v1679 = vadd.f32 %v1678, %v1604
      %v1680 = vadd.f32 %v1679, %v1614
      %v1681 = vadd.f32 %v1680, %v1624
      %v1682 = vadd.f32 %v1681, %v1634
      %v1683 = vadd.f32 %v1682, %v1644
      %v1684 = vadd.f32 %v1683, %v1654
      %v1685 = vadd.f32 %v1684, %v1664
      %v1686 = vmul.f32 %v1335, %v1335
      %v1687 = vmul.f32 %v1336, %v1336
      %v1688 = vmul.f32 %v1337, %v1337
      %v1689 = vmul.f32 %v1338, %v1338
      %v1690 = vmul.f32 %v1339, %v1339
      %v1691 = vmul.f32 %v1340, %v1340
      %v1692 = vmul.f32 %v1341, %v1341
      %v1693 = vmul.f32 %v1342, %v1342
      %v1694 = vmul.f32 %v1343, %v1343
      %v1695 = vmul.f32 %v1344, %v1344
      %v1696 = vmul.f32 %v1345, %v1345
      %v1697 = vmul.f32 %v1346, %v1346
      %v1698 = vmul.f32 %v1347, %v1347
      %v1699 = vmul.f32 %v1348, %v1348
      %v1700 = vmul.f32 %v1349, %v1349
      %v1701 = vmul.f32 %v1350, %v1350
      %v1702 = vmul.f32 %v1351, %v1351
      %v1703 = vmul.f32 %v1352, %v1352
      %v1704 = vmul.f32 %v1353, %v1353
      %v1705 = vmul.f32 %v1354, %v1354
      %v1706 = vmul.f32 %v1355, %v1355
      %v1707 = vmul.f32 %v1356, %v1356
      %v1708 = vmul.f32 %v1357, %v1357
      %v1709 = vmul.f32 %v1358, %v1358
      %v1710 = vmul.f32 %v1359, %v1359
      %v1711 = vmul.f32 %v1360, %v1360
      %v1712 = vmul.f32 %v1361, %v1361
      %v1713 = vmul.f32 %v1362, %v1362
      %v1714 = vmul.f32 %v1363, %v1363
      %v1715 = vmul.f32 %v1364, %v1364
      %v1716 = vmul.f32 %v1365, %v1365
      %v1717 = vmul.f32 %v1366, %v1366
      %v1718 = vmul.f32 %v1367, %v1367
      %v1719 = vmul.f32 %v1368, %v1368
      %v1720 = vmul.f32 %v1369, %v1369
      %v1721 = vmul.f32 %v1370, %v1370
      %v1722 = vmul.f32 %v1371, %v1371
      %v1723 = vmul.f32 %v1372, %v1372
      %v1724 = vmul.f32 %v1373, %v1373
      %v1725 = vmul.f32 %v1374, %v1374
      %v1726 = vmul.f32 %v1375, %v1375
      %v1727 = vmul.f32 %v1376, %v1376
      %v1728 = vmul.f32 %v1377, %v1377
      %v1729 = vmul.f32 %v1378, %v1378
      %v1730 = vmul.f32 %v1379, %v1379
      %v1731 = vmul.f32 %v1380, %v1380
      %v1732 = vmul.f32 %v1381, %v1381
      %v1733 = vmul.f32 %v1382, %v1382
      %v1734 = vmul.f32 %v1383, %v1383
      %v1735 = vmul.f32 %v1384, %v1384
      %v1736 = vmul.f32 %v1385, %v1385
      %v1737 = vmul.f32 %v1386, %v1386
      %v1738 = vmul.f32 %v1387, %v1387
      %v1739 = vmul.f32 %v1388, %v1388
      %v1740 = vmul.f32 %v1389, %v1389
      %v1741 = vmul.f32 %v1390, %v1390
      %v1742 = vmul.f32 %v1391, %v1391
      %v1743 = vmul.f32 %v1392, %v1392
      %v1744 = vmul.f32 %v1393, %v1393
      %v1745 = vmul.f32 %v1394, %v1394
      %v1746 = vmul.f32 %v1395, %v1395
      %v1747 = vmul.f32 %v1396, %v1396
      %v1748 = vmul.f32 %v1397, %v1397
      %v1749 = vmul.f32 %v1398, %v1398
      %v1750 = vmul.f32 %v1399, %v1399
      %v1751 = vmul.f32 %v1400, %v1400
      %v1752 = vmul.f32 %v1401, %v1401
      %v1753 = vmul.f32 %v1402, %v1402
      %v1754 = vmul.f32 %v1403, %v1403
      %v1755 = vmul.f32 %v1404, %v1404
      %v1756 = vmul.f32 %v1405, %v1405
      %v1757 = vmul.f32 %v1406, %v1406
      %v1758 = vmul.f32 %v1407, %v1407
      %v1759 = vmul.f32 %v1408, %v1408
      %v1760 = vmul.f32 %v1409, %v1409
      %v1761 = vmul.f32 %v1410, %v1410
      %v1762 = vmul.f32 %v1411, %v1411
      %v1763 = vmul.f32 %v1412, %v1412
      %v1764 = vmul.f32 %v1413, %v1413
      %v1765 = vmul.f32 %v1414, %v1414
      %v1766 = vmul.f32 %v1415, %v1415
      %v1767 = vmul.f32 %v1416, %v1416
      %v1768 = vmul.f32 %v1417, %v1417
      %v1769 = vmul.f32 %v1418, %v1418
      %v1770 = vmul.f32 %v1419, %v1419
      %v1771 = vmul.f32 %v1420, %v1420
      %v1772 = vmul.f32 %v1421, %v1421
      %v1773 = vmul.f32 %v1422, %v1422
      %v1774 = vmul.f32 %v1423, %v1423
      %v1775 = vmul.f32 %v1424, %v1424
      %v1776 = vmul.f32 %v1425, %v1425
      %v1777 = vmul.f32 %v1426, %v1426
      %v1778 = vmul.f32 %v1427, %v1427
      %v1779 = vmul.f32 %v1428, %v1428
      %v1780 = vmul.f32 %v1429, %v1429
      %v1781 = vmul.f32 %v1430, %v1430
      %v1782 = vmul.f32 %v1431, %v1431
      %v1783 = vmul.f32 %v1432, %v1432
      %v1784 = vmul.f32 %v1433, %v1433
      %v1785 = vmul.f32 %v1434, %v1434
      %v1786 = vmul.f32 %v1435, %v1435
      %v1787 = vmul.f32 %v1436, %v1436
      %v1788 = vmul.f32 %v1437, %v1437
      %v1789 = vmul.f32 %v1438, %v1438
      %v1790 = vmul.f32 %v1439, %v1439
      %v1791 = vmul.f32 %v1440, %v1440
      %v1792 = vmul.f32 %v1441, %v1441
      %v1793 = vmul.f32 %v1442, %v1442
      %v1794 = vmul.f32 %v1443, %v1443
      %v1795 = vmul.f32 %v1444, %v1444
      %v1796 = vadd.f32 %v1686, %v1687
      %v1797 = vadd.f32 %v1796, %v1688
      %v1798 = vadd.f32 %v1797, %v1689
      %v1799 = vadd.f32 %v1798, %v1690
      %v1800 = vrot.slane %v1799, 4
      %v1801 = vadd.f32 %v1799, %v1800
      %v1802 = vrot.slane %v1801, 2
      %v1803 = vadd.f32 %v1801, %v1802
      %v1804 = vrot.slane %v1803, 1
      %v1805 = vadd.f32 %v1803, %v1804
      %v1806 = vadd.f32 %v1691, %v1692
      %v1807 = vadd.f32 %v1806, %v1693
      %v1808 = vadd.f32 %v1807, %v1694
      %v1809 = vadd.f32 %v1808, %v1695
      %v1810 = vrot.slane %v1809, 4
      %v1811 = vadd.f32 %v1809, %v1810
      %v1812 = vrot.slane %v1811, 2
      %v1813 = vadd.f32 %v1811, %v1812
      %v1814 = vrot.slane %v1813, 1
      %v1815 = vadd.f32 %v1813, %v1814
      %v1816 = vadd.f32 %v1696, %v1697
      %v1817 = vadd.f32 %v1816, %v1698
      %v1818 = vadd.f32 %v1817, %v1699
      %v1819 = vadd.f32 %v1818, %v1700
      %v1820 = vrot.slane %v1819, 4
      %v1821 = vadd.f32 %v1819, %v1820
      %v1822 = vrot.slane %v1821, 2
      %v1823 = vadd.f32 %v1821, %v1822
      %v1824 = vrot.slane %v1823, 1
      %v1825 = vadd.f32 %v1823, %v1824
      %v1826 = vadd.f32 %v1701, %v1702
      %v1827 = vadd.f32 %v1826, %v1703
      %v1828 = vadd.f32 %v1827, %v1704
      %v1829 = vadd.f32 %v1828, %v1705
      %v1830 = vrot.slane %v1829, 4
      %v1831 = vadd.f32 %v1829, %v1830
      %v1832 = vrot.slane %v1831, 2
      %v1833 = vadd.f32 %v1831, %v1832
      %v1834 = vrot.slane %v1833, 1
      %v1835 = vadd.f32 %v1833, %v1834
      %v1836 = vadd.f32 %v1706, %v1707
      %v1837 = vadd.f32 %v1836, %v1708
      %v1838 = vadd.f32 %v1837, %v1709
      %v1839 = vadd.f32 %v1838, %v1710
      %v1840 = vrot.slane %v1839, 4
      %v1841 = vadd.f32 %v1839, %v1840
      %v1842 = vrot.slane %v1841, 2
      %v1843 = vadd.f32 %v1841, %v1842
      %v1844 = vrot.slane %v1843, 1
      %v1845 = vadd.f32 %v1843, %v1844
      %v1846 = vadd.f32 %v1711, %v1712
      %v1847 = vadd.f32 %v1846, %v1713
      %v1848 = vadd.f32 %v1847, %v1714
      %v1849 = vadd.f32 %v1848, %v1715
      %v1850 = vrot.slane %v1849, 4
      %v1851 = vadd.f32 %v1849, %v1850
      %v1852 = vrot.slane %v1851, 2
      %v1853 = vadd.f32 %v1851, %v1852
      %v1854 = vrot.slane %v1853, 1
      %v1855 = vadd.f32 %v1853, %v1854
      %v1856 = vadd.f32 %v1716, %v1717
      %v1857 = vadd.f32 %v1856, %v1718
      %v1858 = vadd.f32 %v1857, %v1719
      %v1859 = vadd.f32 %v1858, %v1720
      %v1860 = vrot.slane %v1859, 4
      %v1861 = vadd.f32 %v1859, %v1860
      %v1862 = vrot.slane %v1861, 2
      %v1863 = vadd.f32 %v1861, %v1862
      %v1864 = vrot.slane %v1863, 1
      %v1865 = vadd.f32 %v1863, %v1864
      %v1866 = vadd.f32 %v1721, %v1722
      %v1867 = vadd.f32 %v1866, %v1723
      %v1868 = vadd.f32 %v1867, %v1724
      %v1869 = vadd.f32 %v1868, %v1725
      %v1870 = vrot.slane %v1869, 4
      %v1871 = vadd.f32 %v1869, %v1870
      %v1872 = vrot.slane %v1871, 2
      %v1873 = vadd.f32 %v1871, %v1872
      %v1874 = vrot.slane %v1873, 1
      %v1875 = vadd.f32 %v1873, %v1874
      %v1876 = vadd.f32 %v1726, %v1727
      %v1877 = vadd.f32 %v1876, %v1728
      %v1878 = vadd.f32 %v1877, %v1729
      %v1879 = vadd.f32 %v1878, %v1730
      %v1880 = vrot.slane %v1879, 4
      %v1881 = vadd.f32 %v1879, %v1880
      %v1882 = vrot.slane %v1881, 2
      %v1883 = vadd.f32 %v1881, %v1882
      %v1884 = vrot.slane %v1883, 1
      %v1885 = vadd.f32 %v1883, %v1884
      %v1886 = vadd.f32 %v1731, %v1732
      %v1887 = vadd.f32 %v1886, %v1733
      %v1888 = vadd.f32 %v1887, %v1734
      %v1889 = vadd.f32 %v1888, %v1735
      %v1890 = vrot.slane %v1889, 4
      %v1891 = vadd.f32 %v1889, %v1890
      %v1892 = vrot.slane %v1891, 2
      %v1893 = vadd.f32 %v1891, %v1892
      %v1894 = vrot.slane %v1893, 1
      %v1895 = vadd.f32 %v1893, %v1894
      %v1896 = vadd.f32 %v1736, %v1737
      %v1897 = vadd.f32 %v1896, %v1738
      %v1898 = vadd.f32 %v1897, %v1739
      %v1899 = vadd.f32 %v1898, %v1740
      %v1900 = vrot.slane %v1899, 4
      %v1901 = vadd.f32 %v1899, %v1900
      %v1902 = vrot.slane %v1901, 2
      %v1903 = vadd.f32 %v1901, %v1902
      %v1904 = vrot.slane %v1903, 1
      %v1905 = vadd.f32 %v1903, %v1904
      %v1906 = vadd.f32 %v1741, %v1742
      %v1907 = vadd.f32 %v1906, %v1743
      %v1908 = vadd.f32 %v1907, %v1744
      %v1909 = vadd.f32 %v1908, %v1745
      %v1910 = vrot.slane %v1909, 4
      %v1911 = vadd.f32 %v1909, %v1910
      %v1912 = vrot.slane %v1911, 2
      %v1913 = vadd.f32 %v1911, %v1912
      %v1914 = vrot.slane %v1913, 1
      %v1915 = vadd.f32 %v1913, %v1914
      %v1916 = vadd.f32 %v1746, %v1747
      %v1917 = vadd.f32 %v1916, %v1748
      %v1918 = vadd.f32 %v1917, %v1749
      %v1919 = vadd.f32 %v1918, %v1750
      %v1920 = vrot.slane %v1919, 4
      %v1921 = vadd.f32 %v1919, %v1920
      %v1922 = vrot.slane %v1921, 2
      %v1923 = vadd.f32 %v1921, %v1922
      %v1924 = vrot.slane %v1923, 1
      %v1925 = vadd.f32 %v1923, %v1924
      %v1926 = vadd.f32 %v1751, %v1752
      %v1927 = vadd.f32 %v1926, %v1753
      %v1928 = vadd.f32 %v1927, %v1754
      %v1929 = vadd.f32 %v1928, %v1755
      %v1930 = vrot.slane %v1929, 4
      %v1931 = vadd.f32 %v1929, %v1930
      %v1932 = vrot.slane %v1931, 2
      %v1933 = vadd.f32 %v1931, %v1932
      %v1934 = vrot.slane %v1933, 1
      %v1935 = vadd.f32 %v1933, %v1934
      %v1936 = vadd.f32 %v1756, %v1757
      %v1937 = vadd.f32 %v1936, %v1758
      %v1938 = vadd.f32 %v1937, %v1759
      %v1939 = vadd.f32 %v1938, %v1760
      %v1940 = vrot.slane %v1939, 4
      %v1941 = vadd.f32 %v1939, %v1940
      %v1942 = vrot.slane %v1941, 2
      %v1943 = vadd.f32 %v1941, %v1942
      %v1944 = vrot.slane %v1943, 1
      %v1945 = vadd.f32 %v1943, %v1944
      %v1946 = vadd.f32 %v1761, %v1762
      %v1947 = vadd.f32 %v1946, %v1763
      %v1948 = vadd.f32 %v1947, %v1764
      %v1949 = vadd.f32 %v1948, %v1765
      %v1950 = vrot.slane %v1949, 4
      %v1951 = vadd.f32 %v1949, %v1950
      %v1952 = vrot.slane %v1951, 2
      %v1953 = vadd.f32 %v1951, %v1952
      %v1954 = vrot.slane %v1953, 1
      %v1955 = vadd.f32 %v1953, %v1954
      %v1956 = vadd.f32 %v1766, %v1767
      %v1957 = vadd.f32 %v1956, %v1768
      %v1958 = vadd.f32 %v1957, %v1769
      %v1959 = vadd.f32 %v1958, %v1770
      %v1960 = vrot.slane %v1959, 4
      %v1961 = vadd.f32 %v1959, %v1960
      %v1962 = vrot.slane %v1961, 2
      %v1963 = vadd.f32 %v1961, %v1962
      %v1964 = vrot.slane %v1963, 1
      %v1965 = vadd.f32 %v1963, %v1964
      %v1966 = vadd.f32 %v1771, %v1772
      %v1967 = vadd.f32 %v1966, %v1773
      %v1968 = vadd.f32 %v1967, %v1774
      %v1969 = vadd.f32 %v1968, %v1775
      %v1970 = vrot.slane %v1969, 4
      %v1971 = vadd.f32 %v1969, %v1970
      %v1972 = vrot.slane %v1971, 2
      %v1973 = vadd.f32 %v1971, %v1972
      %v1974 = vrot.slane %v1973, 1
      %v1975 = vadd.f32 %v1973, %v1974
      %v1976 = vadd.f32 %v1776, %v1777
      %v1977 = vadd.f32 %v1976, %v1778
      %v1978 = vadd.f32 %v1977, %v1779
      %v1979 = vadd.f32 %v1978, %v1780
      %v1980 = vrot.slane %v1979, 4
      %v1981 = vadd.f32 %v1979, %v1980
      %v1982 = vrot.slane %v1981, 2
      %v1983 = vadd.f32 %v1981, %v1982
      %v1984 = vrot.slane %v1983, 1
      %v1985 = vadd.f32 %v1983, %v1984
      %v1986 = vadd.f32 %v1781, %v1782
      %v1987 = vadd.f32 %v1986, %v1783
      %v1988 = vadd.f32 %v1987, %v1784
      %v1989 = vadd.f32 %v1988, %v1785
      %v1990 = vrot.slane %v1989, 4
      %v1991 = vadd.f32 %v1989, %v1990
      %v1992 = vrot.slane %v1991, 2
      %v1993 = vadd.f32 %v1991, %v1992
      %v1994 = vrot.slane %v1993, 1
      %v1995 = vadd.f32 %v1993, %v1994
      %v1996 = vadd.f32 %v1786, %v1787
      %v1997 = vadd.f32 %v1996, %v1788
      %v1998 = vadd.f32 %v1997, %v1789
      %v1999 = vadd.f32 %v1998, %v1790
      %v2000 = vrot.slane %v1999, 4
      %v2001 = vadd.f32 %v1999, %v2000
      %v2002 = vrot.slane %v2001, 2
      %v2003 = vadd.f32 %v2001, %v2002
      %v2004 = vrot.slane %v2003, 1
      %v2005 = vadd.f32 %v2003, %v2004
      %v2006 = vadd.f32 %v1791, %v1792
      %v2007 = vadd.f32 %v2006, %v1793
      %v2008 = vadd.f32 %v2007, %v1794
      %v2009 = vadd.f32 %v2008, %v1795
      %v2010 = vrot.slane %v2009, 4
      %v2011 = vadd.f32 %v2009, %v2010
      %v2012 = vrot.slane %v2011, 2
      %v2013 = vadd.f32 %v2011, %v2012
      %v2014 = vrot.slane %v2013, 1
      %v2015 = vadd.f32 %v2013, %v2014
      %v2016 = vadd.f32 %v1805, %v1815
      %v2017 = vadd.f32 %v2016, %v1825
      %v2018 = vadd.f32 %v2017, %v1835
      %v2019 = vadd.f32 %v2018, %v1845
      %v2020 = vadd.f32 %v2019, %v1855
      %v2021 = vadd.f32 %v2020, %v1865
      %v2022 = vadd.f32 %v2021, %v1875
      %v2023 = vadd.f32 %v2022, %v1885
      %v2024 = vadd.f32 %v2023, %v1895
      %v2025 = vadd.f32 %v2024, %v1905
      %v2026 = vadd.f32 %v2025, %v1915
      %v2027 = vadd.f32 %v2026, %v1925
      %v2028 = vadd.f32 %v2027, %v1935
      %v2029 = vadd.f32 %v2028, %v1945
      %v2030 = vadd.f32 %v2029, %v1955
      %v2031 = vadd.f32 %v2030, %v1965
      %v2032 = vadd.f32 %v2031, %v1975
      %v2033 = vadd.f32 %v2032, %v1985
      %v2034 = vadd.f32 %v2033, %v1995
      %v2035 = vadd.f32 %v2034, %v2005
      %v2036 = vadd.f32 %v2035, %v2015
      %v2037 = vrcp.pop 880.0
      %v2038 = vmul.f32 %v1685, %v2037
      %v2039 = vmul.f32 %v2036, %v2037
      %v2040 = vmul.f32 %v2038, %v2038
      %v2041 = vsub.f32 %v2039, %v2040
      %v2042 = vadd.f32 %v2041, 1e-05
      %v2043 = vrsqrt.pop %v2042
      %v2044 = vsub.f32 %v1335, %v2038
      %v2045 = vsub.f32 %v1336, %v2038
      %v2046 = vsub.f32 %v1337, %v2038
      %v2047 = vsub.f32 %v1338, %v2038
      %v2048 = vsub.f32 %v1339, %v2038
      %v2049 = vsub.f32 %v1340, %v2038
      %v2050 = vsub.f32 %v1341, %v2038
      %v2051 = vsub.f32 %v1342, %v2038
      %v2052 = vsub.f32 %v1343, %v2038
      %v2053 = vsub.f32 %v1344, %v2038
      %v2054 = vsub.f32 %v1345, %v2038
      %v2055 = vsub.f32 %v1346, %v2038
      %v2056 = vsub.f32 %v1347, %v2038
      %v2057 = vsub.f32 %v1348, %v2038
      %v2058 = vsub.f32 %v1349, %v2038
      %v2059 = vsub.f32 %v1350, %v2038
      %v2060 = vsub.f32 %v1351, %v2038
      %v2061 = vsub.f32 %v1352, %v2038
      %v2062 = vsub.f32 %v1353, %v2038
      %v2063 = vsub.f32 %v1354, %v2038
      %v2064 = vsub.f32 %v1355, %v2038
      %v2065 = vsub.f32 %v1356, %v2038
      %v2066 = vsub.f32 %v1357, %v2038
      %v2067 = vsub.f32 %v1358, %v2038
      %v2068 = vsub.f32 %v1359, %v2038
      %v2069 = vsub.f32 %v1360, %v2038
      %v2070 = vsub.f32 %v1361, %v2038
      %v2071 = vsub.f32 %v1362, %v2038
      %v2072 = vsub.f32 %v1363, %v2038
      %v2073 = vsub.f32 %v1364, %v2038
      %v2074 = vsub.f32 %v1365, %v2038
      %v2075 = vsub.f32 %v1366, %v2038
      %v2076 = vsub.f32 %v1367, %v2038
      %v2077 = vsub.f32 %v1368, %v2038
      %v2078 = vsub.f32 %v1369, %v2038
      %v2079 = vsub.f32 %v1370, %v2038
      %v2080 = vsub.f32 %v1371, %v2038
      %v2081 = vsub.f32 %v1372, %v2038
      %v2082 = vsub.f32 %v1373, %v2038
      %v2083 = vsub.f32 %v1374, %v2038
      %v2084 = vsub.f32 %v1375, %v2038
      %v2085 = vsub.f32 %v1376, %v2038
      %v2086 = vsub.f32 %v1377, %v2038
      %v2087 = vsub.f32 %v1378, %v2038
      %v2088 = vsub.f32 %v1379, %v2038
      %v2089 = vsub.f32 %v1380, %v2038
      %v2090 = vsub.f32 %v1381, %v2038
      %v2091 = vsub.f32 %v1382, %v2038
      %v2092 = vsub.f32 %v1383, %v2038
      %v2093 = vsub.f32 %v1384, %v2038
      %v2094 = vsub.f32 %v1385, %v2038
      %v2095 = vsub.f32 %v1386, %v2038
      %v2096 = vsub.f32 %v1387, %v2038
      %v2097 = vsub.f32 %v1388, %v2038
      %v2098 = vsub.f32 %v1389, %v2038
      %v2099 = vsub.f32 %v1390, %v2038
      %v2100 = vsub.f32 %v1391, %v2038
      %v2101 = vsub.f32 %v1392, %v2038
      %v2102 = vsub.f32 %v1393, %v2038
      %v2103 = vsub.f32 %v1394, %v2038
      %v2104 = vsub.f32 %v1395, %v2038
      %v2105 = vsub.f32 %v1396, %v2038
      %v2106 = vsub.f32 %v1397, %v2038
      %v2107 = vsub.f32 %v1398, %v2038
      %v2108 = vsub.f32 %v1399, %v2038
      %v2109 = vsub.f32 %v1400, %v2038
      %v2110 = vsub.f32 %v1401, %v2038
      %v2111 = vsub.f32 %v1402, %v2038
      %v2112 = vsub.f32 %v1403, %v2038
      %v2113 = vsub.f32 %v1404, %v2038
      %v2114 = vsub.f32 %v1405, %v2038
      %v2115 = vsub.f32 %v1406, %v2038
      %v2116 = vsub.f32 %v1407, %v2038
      %v2117 = vsub.f32 %v1408, %v2038
      %v2118 = vsub.f32 %v1409, %v2038
      %v2119 = vsub.f32 %v1410, %v2038
      %v2120 = vsub.f32 %v1411, %v2038
      %v2121 = vsub.f32 %v1412, %v2038
      %v2122 = vsub.f32 %v1413, %v2038
      %v2123 = vsub.f32 %v1414, %v2038
      %v2124 = vsub.f32 %v1415, %v2038
      %v2125 = vsub.f32 %v1416, %v2038
      %v2126 = vsub.f32 %v1417, %v2038
      %v2127 = vsub.f32 %v1418, %v2038
      %v2128 = vsub.f32 %v1419, %v2038
      %v2129 = vsub.f32 %v1420, %v2038
      %v2130 = vsub.f32 %v1421, %v2038
      %v2131 = vsub.f32 %v1422, %v2038
      %v2132 = vsub.f32 %v1423, %v2038
      %v2133 = vsub.f32 %v1424, %v2038
      %v2134 = vsub.f32 %v1425, %v2038
      %v2135 = vsub.f32 %v1426, %v2038
      %v2136 = vsub.f32 %v1427, %v2038
      %v2137 = vsub.f32 %v1428, %v2038
      %v2138 = vsub.f32 %v1429, %v2038
      %v2139 = vsub.f32 %v1430, %v2038
      %v2140 = vsub.f32 %v1431, %v2038
      %v2141 = vsub.f32 %v1432, %v2038
      %v2142 = vsub.f32 %v1433, %v2038
      %v2143 = vsub.f32 %v1434, %v2038
      %v2144 = vsub.f32 %v1435, %v2038
      %v2145 = vsub.f32 %v1436, %v2038
      %v2146 = vsub.f32 %v1437, %v2038
      %v2147 = vsub.f32 %v1438, %v2038
      %v2148 = vsub.f32 %v1439, %v2038
      %v2149 = vsub.f32 %v1440, %v2038
      %v2150 = vsub.f32 %v1441, %v2038
      %v2151 = vsub.f32 %v1442, %v2038
      %v2152 = vsub.f32 %v1443, %v2038
      %v2153 = vsub.f32 %v1444, %v2038
      %v2154 = vmul.f32 %v2044, %v2043
      %v2155 = vmul.f32 %v2045, %v2043
      %v2156 = vmul.f32 %v2046, %v2043
      %v2157 = vmul.f32 %v2047, %v2043
      %v2158 = vmul.f32 %v2048, %v2043
      %v2159 = vmul.f32 %v2049, %v2043
      %v2160 = vmul.f32 %v2050, %v2043
      %v2161 = vmul.f32 %v2051, %v2043
      %v2162 = vmul.f32 %v2052, %v2043
      %v2163 = vmul.f32 %v2053, %v2043
      %v2164 = vmul.f32 %v2054, %v2043
      %v2165 = vmul.f32 %v2055, %v2043
      %v2166 = vmul.f32 %v2056, %v2043
      %v2167 = vmul.f32 %v2057, %v2043
      %v2168 = vmul.f32 %v2058, %v2043
      %v2169 = vmul.f32 %v2059, %v2043
      %v2170 = vmul.f32 %v2060, %v2043
      %v2171 = vmul.f32 %v2061, %v2043
      %v2172 = vmul.f32 %v2062, %v2043
      %v2173 = vmul.f32 %v2063, %v2043
      %v2174 = vmul.f32 %v2064, %v2043
      %v2175 = vmul.f32 %v2065, %v2043
      %v2176 = vmul.f32 %v2066, %v2043
      %v2177 = vmul.f32 %v2067, %v2043
      %v2178 = vmul.f32 %v2068, %v2043
      %v2179 = vmul.f32 %v2069, %v2043
      %v2180 = vmul.f32 %v2070, %v2043
      %v2181 = vmul.f32 %v2071, %v2043
      %v2182 = vmul.f32 %v2072, %v2043
      %v2183 = vmul.f32 %v2073, %v2043
      %v2184 = vmul.f32 %v2074, %v2043
      %v2185 = vmul.f32 %v2075, %v2043
      %v2186 = vmul.f32 %v2076, %v2043
      %v2187 = vmul.f32 %v2077, %v2043
      %v2188 = vmul.f32 %v2078, %v2043
      %v2189 = vmul.f32 %v2079, %v2043
      %v2190 = vmul.f32 %v2080, %v2043
      %v2191 = vmul.f32 %v2081, %v2043
      %v2192 = vmul.f32 %v2082, %v2043
      %v2193 = vmul.f32 %v2083, %v2043
      %v2194 = vmul.f32 %v2084, %v2043
      %v2195 = vmul.f32 %v2085, %v2043
      %v2196 = vmul.f32 %v2086, %v2043
      %v2197 = vmul.f32 %v2087, %v2043
      %v2198 = vmul.f32 %v2088, %v2043
      %v2199 = vmul.f32 %v2089, %v2043
      %v2200 = vmul.f32 %v2090, %v2043
      %v2201 = vmul.f32 %v2091, %v2043
      %v2202 = vmul.f32 %v2092, %v2043
      %v2203 = vmul.f32 %v2093, %v2043
      %v2204 = vmul.f32 %v2094, %v2043
      %v2205 = vmul.f32 %v2095, %v2043
      %v2206 = vmul.f32 %v2096, %v2043
      %v2207 = vmul.f32 %v2097, %v2043
      %v2208 = vmul.f32 %v2098, %v2043
      %v2209 = vmul.f32 %v2099, %v2043
      %v2210 = vmul.f32 %v2100, %v2043
      %v2211 = vmul.f32 %v2101, %v2043
      %v2212 = vmul.f32 %v2102, %v2043
      %v2213 = vmul.f32 %v2103, %v2043
      %v2214 = vmul.f32 %v2104, %v2043
      %v2215 = vmul.f32 %v2105, %v2043
      %v2216 = vmul.f32 %v2106, %v2043
      %v2217 = vmul.f32 %v2107, %v2043
      %v2218 = vmul.f32 %v2108, %v2043
      %v2219 = vmul.f32 %v2109, %v2043
      %v2220 = vmul.f32 %v2110, %v2043
      %v2221 = vmul.f32 %v2111, %v2043
      %v2222 = vmul.f32 %v2112, %v2043
      %v2223 = vmul.f32 %v2113, %v2043
      %v2224 = vmul.f32 %v2114, %v2043
      %v2225 = vmul.f32 %v2115, %v2043
      %v2226 = vmul.f32 %v2116, %v2043
      %v2227 = vmul.f32 %v2117, %v2043
      %v2228 = vmul.f32 %v2118, %v2043
      %v2229 = vmul.f32 %v2119, %v2043
      %v2230 = vmul.f32 %v2120, %v2043
      %v2231 = vmul.f32 %v2121, %v2043
      %v2232 = vmul.f32 %v2122, %v2043
      %v2233 = vmul.f32 %v2123, %v2043
      %v2234 = vmul.f32 %v2124, %v2043
      %v2235 = vmul.f32 %v2125, %v2043
      %v2236 = vmul.f32 %v2126, %v2043
      %v2237 = vmul.f32 %v2127, %v2043
      %v2238 = vmul.f32 %v2128, %v2043
      %v2239 = vmul.f32 %v2129, %v2043
      %v2240 = vmul.f32 %v2130, %v2043
      %v2241 = vmul.f32 %v2131, %v2043
      %v2242 = vmul.f32 %v2132, %v2043
      %v2243 = vmul.f32 %v2133, %v2043
      %v2244 = vmul.f32 %v2134, %v2043
      %v2245 = vmul.f32 %v2135, %v2043
      %v2246 = vmul.f32 %v2136, %v2043
      %v2247 = vmul.f32 %v2137, %v2043
      %v2248 = vmul.f32 %v2138, %v2043
      %v2249 = vmul.f32 %v2139, %v2043
      %v2250 = vmul.f32 %v2140, %v2043
      %v2251 = vmul.f32 %v2141, %v2043
      %v2252 = vmul.f32 %v2142, %v2043
      %v2253 = vmul.f32 %v2143, %v2043
      %v2254 = vmul.f32 %v2144, %v2043
      %v2255 = vmul.f32 %v2145, %v2043
      %v2256 = vmul.f32 %v2146, %v2043
      %v2257 = vmul.f32 %v2147, %v2043
      %v2258 = vmul.f32 %v2148, %v2043
      %v2259 = vmul.f32 %v2149, %v2043
      %v2260 = vmul.f32 %v2150, %v2043
      %v2261 = vmul.f32 %v2151, %v2043
      %v2262 = vmul.f32 %v2152, %v2043
      %v2263 = vmul.f32 %v2153, %v2043
      %v2264 = vmax.f32 %v2154, 0.0
      %v2265 = vmax.f32 %v2155, 0.0
      %v2266 = vmax.f32 %v2156, 0.0
      %v2267 = vmax.f32 %v2157, 0.0
      %v2268 = vmax.f32 %v2158, 0.0
      %v2269 = vmax.f32 %v2159, 0.0
      %v2270 = vmax.f32 %v2160, 0.0
      %v2271 = vmax.f32 %v2161, 0.0
      %v2272 = vmax.f32 %v2162, 0.0
      %v2273 = vmax.f32 %v2163, 0.0
      %v2274 = vmax.f32 %v2164, 0.0
      %v2275 = vmax.f32 %v2165, 0.0
      %v2276 = vmax.f32 %v2166, 0.0
      %v2277 = vmax.f32 %v2167, 0.0
      %v2278 = vmax.f32 %v2168, 0.0
      %v2279 = vmax.f32 %v2169, 0.0
      %v2280 = vmax.f32 %v2170, 0.0
      %v2281 = vmax.f32 %v2171, 0.0
      %v2282 = vmax.f32 %v2172, 0.0
      %v2283 = vmax.f32 %v2173, 0.0
      %v2284 = vmax.f32 %v2174, 0.0
      %v2285 = vmax.f32 %v2175, 0.0
      %v2286 = vmax.f32 %v2176, 0.0
      %v2287 = vmax.f32 %v2177, 0.0
      %v2288 = vmax.f32 %v2178, 0.0
      %v2289 = vmax.f32 %v2179, 0.0
      %v2290 = vmax.f32 %v2180, 0.0
      %v2291 = vmax.f32 %v2181, 0.0
      %v2292 = vmax.f32 %v2182, 0.0
      %v2293 = vmax.f32 %v2183, 0.0
      %v2294 = vmax.f32 %v2184, 0.0
      %v2295 = vmax.f32 %v2185, 0.0
      %v2296 = vmax.f32 %v2186, 0.0
      %v2297 = vmax.f32 %v2187, 0.0
      %v2298 = vmax.f32 %v2188, 0.0
      %v2299 = vmax.f32 %v2189, 0.0
      %v2300 = vmax.f32 %v2190, 0.0
      %v2301 = vmax.f32 %v2191, 0.0
      %v2302 = vmax.f32 %v2192, 0.0
      %v2303 = vmax.f32 %v2193, 0.0
      %v2304 = vmax.f32 %v2194, 0.0
      %v2305 = vmax.f32 %v2195, 0.0
      %v2306 = vmax.f32 %v2196, 0.0
      %v2307 = vmax.f32 %v2197, 0.0
      %v2308 = vmax.f32 %v2198, 0.0
      %v2309 = vmax.f32 %v2199, 0.0
      %v2310 = vmax.f32 %v2200, 0.0
      %v2311 = vmax.f32 %v2201, 0.0
      %v2312 = vmax.f32 %v2202, 0.0
      %v2313 = vmax.f32 %v2203, 0.0
      %v2314 = vmax.f32 %v2204, 0.0
      %v2315 = vmax.f32 %v2205, 0.0
      %v2316 = vmax.f32 %v2206, 0.0
      %v2317 = vmax.f32 %v2207, 0.0
      %v2318 = vmax.f32 %v2208, 0.0
      %v2319 = vmax.f32 %v2209, 0.0
      %v2320 = vmax.f32 %v2210, 0.0
      %v2321 = vmax.f32 %v2211, 0.0
      %v2322 = vmax.f32 %v2212, 0.0
      %v2323 = vmax.f32 %v2213, 0.0
      %v2324 = vmax.f32 %v2214, 0.0
      %v2325 = vmax.f32 %v2215, 0.0
      %v2326 = vmax.f32 %v2216, 0.0
      %v2327 = vmax.f32 %v2217, 0.0
      %v2328 = vmax.f32 %v2218, 0.0
      %v2329 = vmax.f32 %v2219, 0.0
      %v2330 = vmax.f32 %v2220, 0.0
      %v2331 = vmax.f32 %v2221, 0.0
      %v2332 = vmax.f32 %v2222, 0.0
      %v2333 = vmax.f32 %v2223, 0.0
      %v2334 = vmax.f32 %v2224, 0.0
      %v2335 = vmax.f32 %v2225, 0.0
      %v2336 = vmax.f32 %v2226, 0.0
      %v2337 = vmax.f32 %v2227, 0.0
      %v2338 = vmax.f32 %v2228, 0.0
      %v2339 = vmax.f32 %v2229, 0.0
      %v2340 = vmax.f32 %v2230, 0.0
      %v2341 = vmax.f32 %v2231, 0.0
      %v2342 = vmax.f32 %v2232, 0.0
      %v2343 = vmax.f32 %v2233, 0.0
      %v2344 = vmax.f32 %v2234, 0.0
      %v2345 = vmax.f32 %v2235, 0.0
      %v2346 = vmax.f32 %v2236, 0.0
      %v2347 = vmax.f32 %v2237, 0.0
      %v2348 = vmax.f32 %v2238, 0.0
      %v2349 = vmax.f32 %v2239, 0.0
      %v2350 = vmax.f32 %v2240, 0.0
      %v2351 = vmax.f32 %v2241, 0.0
      %v2352 = vmax.f32 %v2242, 0.0
      %v2353 = vmax.f32 %v2243, 0.0
      %v2354 = vmax.f32 %v2244, 0.0
      %v2355 = vmax.f32 %v2245, 0.0
      %v2356 = vmax.f32 %v2246, 0.0
      %v2357 = vmax.f32 %v2247, 0.0
      %v2358 = vmax.f32 %v2248, 0.0
      %v2359 = vmax.f32 %v2249, 0.0
      %v2360 = vmax.f32 %v2250, 0.0
      %v2361 = vmax.f32 %v2251, 0.0
      %v2362 = vmax.f32 %v2252, 0.0
      %v2363 = vmax.f32 %v2253, 0.0
      %v2364 = vmax.f32 %v2254, 0.0
      %v2365 = vmax.f32 %v2255, 0.0
      %v2366 = vmax.f32 %v2256, 0.0
      %v2367 = vmax.f32 %v2257, 0.0
      %v2368 = vmax.f32 %v2258, 0.0
      %v2369 = vmax.f32 %v2259, 0.0
      %v2370 = vmax.f32 %v2260, 0.0
      %v2371 = vmax.f32 %v2261, 0.0
      %v2372 = vmax.f32 %v2262, 0.0
      %v2373 = vmax.f32 %v2263, 0.0
      %2374 = vst [vmem:[%s170] sm:$0xff] %v2264
      %2375 = vst [vmem:[%s170 + $0x8] sm:$0xff] %v2265
      %2376 = vst [vmem:[%s170 + $0x10] sm:$0xff] %v2266
      %2377 = vst [vmem:[%s170 + $0x18] sm:$0xff] %v2267
      %2378 = vst [vmem:[%s170 + $0x20] sm:$0xff] %v2268
      %2379 = vst [vmem:[%s170 + $0x28] sm:$0xff] %v2269
      %2380 = vst [vmem:[%s170 + $0x30] sm:$0xff] %v2270
      %2381 = vst [vmem:[%s170 + $0x38] sm:$0xff] %v2271
      %2382 = vst [vmem:[%s170 + $0x40] sm:$0xff] %v2272
      %2383 = vst [vmem:[%s170 + $0x48] sm:$0xff] %v2273
      %2384 = vst [vmem:[%s170 + $0x50] sm:$0xff] %v2274
      %2385 = vst [vmem:[%s170 + $0x58] sm:$0xff] %v2275
      %2386 = vst [vmem:[%s170 + $0x60] sm:$0xff] %v2276
      %2387 = vst [vmem:[%s170 + $0x68] sm:$0xff] %v2277
      %2388 = vst [vmem:[%s170 + $0x70] sm:$0xff] %v2278
      %2389 = vst [vmem:[%s170 + $0x78] sm:$0xff] %v2279
      %2390 = vst [vmem:[%s170 + $0x80] sm:$0xff] %v2280
      %2391 = vst [vmem:[%s170 + $0x88] sm:$0xff] %v2281
      %2392 = vst [vmem:[%s170 + $0x90] sm:$0xff] %v2282
      %2393 = vst [vmem:[%s170 + $0x98] sm:$0xff] %v2283
      %2394 = vst [vmem:[%s170 + $0xa0] sm:$0xff] %v2284
      %2395 = vst [vmem:[%s170 + $0xa8] sm:$0xff] %v2285
      %2396 = vst [vmem:[%s170 + $0xb0] sm:$0xff] %v2286
      %2397 = vst [vmem:[%s170 + $0xb8] sm:$0xff] %v2287
      %2398 = vst [vmem:[%s170 + $0xc0] sm:$0xff] %v2288
      %2399 = vst [vmem:[%s170 + $0xc8] sm:$0xff] %v2289
      %2400 = vst [vmem:[%s170 + $0xd0] sm:$0xff] %v2290
      %2401 = vst [vmem:[%s170 + $0xd8] sm:$0xff] %v2291
      %2402 = vst [vmem:[%s170 + $0xe0] sm:$0xff] %v2292
      %2403 = vst [vmem:[%s170 + $0xe8] sm:$0xff] %v2293
      %2404 = vst [vmem:[%s170 + $0xf0] sm:$0xff] %v2294
      %2405 = vst [vmem:[%s170 + $0xf8] sm:$0xff] %v2295
      %2406 = vst [vmem:[%s170 + $0x100] sm:$0xff] %v2296
      %2407 = vst [vmem:[%s170 + $0x108] sm:$0xff] %v2297
      %2408 = vst [vmem:[%s170 + $0x110] sm:$0xff] %v2298
      %2409 = vst [vmem:[%s170 + $0x118] sm:$0xff] %v2299
      %2410 = vst [vmem:[%s170 + $0x120] sm:$0xff] %v2300
      %2411 = vst [vmem:[%s170 + $0x128] sm:$0xff] %v2301
      %2412 = vst [vmem:[%s170 + $0x130] sm:$0xff] %v2302
      %2413 = vst [vmem:[%s170 + $0x138] sm:$0xff] %v2303
      %2414 = vst [vmem:[%s170 + $0x140] sm:$0xff] %v2304
      %2415 = vst [vmem:[%s170 + $0x148] sm:$0xff] %v2305
      %2416 = vst [vmem:[%s170 + $0x150] sm:$0xff] %v2306
      %2417 = vst [vmem:[%s170 + $0x158] sm:$0xff] %v2307
      %2418 = vst [vmem:[%s170 + $0x160] sm:$0xff] %v2308
      %2419 = vst [vmem:[%s170 + $0x168] sm:$0xff] %v2309
      %2420 = vst [vmem:[%s170 + $0x170] sm:$0xff] %v2310
      %2421 = vst [vmem:[%s170 + $0x178] sm:$0xff] %v2311
      %2422 = vst [vmem:[%s170 + $0x180] sm:$0xff] %v2312
      %2423 = vst [vmem:[%s170 + $0x188] sm:$0xff] %v2313
      %2424 = vst [vmem:[%s170 + $0x190] sm:$0xff] %v2314
      %2425 = vst [vmem:[%s170 + $0x198] sm:$0xff] %v2315
      %2426 = vst [vmem:[%s170 + $0x1a0] sm:$0xff] %v2316
      %2427 = vst [vmem:[%s170 + $0x1a8] sm:$0xff] %v2317
      %2428 = vst [vmem:[%s170 + $0x1b0] sm:$0xff] %v2318
      %2429 = vst [vmem:[%s170 + $0x1b8] sm:$0xff] %v2319
      %2430 = vst [vmem:[%s170 + $0x1c0] sm:$0xff] %v2320
      %2431 = vst [vmem:[%s170 + $0x1c8] sm:$0xff] %v2321
      %2432 = vst [vmem:[%s170 + $0x1d0] sm:$0xff] %v2322
      %2433 = vst [vmem:[%s170 + $0x1d8] sm:$0xff] %v2323
      %2434 = vst [vmem:[%s170 + $0x1e0] sm:$0xff] %v2324
      %2435 = vst [vmem:[%s170 + $0x1e8] sm:$0xff] %v2325
      %2436 = vst [vmem:[%s170 + $0x1f0] sm:$0xff] %v2326
      %2437 = vst [vmem:[%s170 + $0x1f8] sm:$0xff] %v2327
      %2438 = vst [vmem:[%s170 + $0x200] sm:$0xff] %v2328
      %2439 = vst [vmem:[%s170 + $0x208] sm:$0xff] %v2329
      %2440 = vst [vmem:[%s170 + $0x210] sm:$0xff] %v2330
      %2441 = vst [vmem:[%s170 + $0x218] sm:$0xff] %v2331
      %2442 = vst [vmem:[%s170 + $0x220] sm:$0xff] %v2332
      %2443 = vst [vmem:[%s170 + $0x228] sm:$0xff] %v2333
      %2444 = vst [vmem:[%s170 + $0x230] sm:$0xff] %v2334
      %2445 = vst [vmem:[%s170 + $0x238] sm:$0xff] %v2335
      %2446 = vst [vmem:[%s170 + $0x240] sm:$0xff] %v2336
      %2447 = vst [vmem:[%s170 + $0x248] sm:$0xff] %v2337
      %2448 = vst [vmem:[%s170 + $0x250] sm:$0xff] %v2338
      %2449 = vst [vmem:[%s170 + $0x258] sm:$0xff] %v2339
      %2450 = vst [vmem:[%s170 + $0x260] sm:$0xff] %v2340
      %2451 = vst [vmem:[%s170 + $0x268] sm:$0xff] %v2341
      %2452 = vst [vmem:[%s170 + $0x270] sm:$0xff] %v2342
      %2453 = vst [vmem:[%s170 + $0x278] sm:$0xff] %v2343
      %2454 = vst [vmem:[%s170 + $0x280] sm:$0xff] %v2344
      %2455 = vst [vmem:[%s170 + $0x288] sm:$0xff] %v2345
      %2456 = vst [vmem:[%s170 + $0x290] sm:$0xff] %v2346
      %2457 = vst [vmem:[%s170 + $0x298] sm:$0xff] %v2347
      %2458 = vst [vmem:[%s170 + $0x2a0] sm:$0xff] %v2348
      %2459 = vst [vmem:[%s170 + $0x2a8] sm:$0xff] %v2349
      %2460 = vst [vmem:[%s170 + $0x2b0] sm:$0xff] %v2350
      %2461 = vst [vmem:[%s170 + $0x2b8] sm:$0xff] %v2351
      %2462 = vst [vmem:[%s170 + $0x2c0] sm:$0xff] %v2352
      %2463 = vst [vmem:[%s170 + $0x2c8] sm:$0xff] %v2353
      %2464 = vst [vmem:[%s170 + $0x2d0] sm:$0xff] %v2354
      %2465 = vst [vmem:[%s170 + $0x2d8] sm:$0xff] %v2355
      %2466 = vst [vmem:[%s170 + $0x2e0] sm:$0xff] %v2356
      %2467 = vst [vmem:[%s170 + $0x2e8] sm:$0xff] %v2357
      %2468 = vst [vmem:[%s170 + $0x2f0] sm:$0xff] %v2358
      %2469 = vst [vmem:[%s170 + $0x2f8] sm:$0xff] %v2359
      %2470 = vst [vmem:[%s170 + $0x300] sm:$0xff] %v2360
      %2471 = vst [vmem:[%s170 + $0x308] sm:$0xff] %v2361
      %2472 = vst [vmem:[%s170 + $0x310] sm:$0xff] %v2362
      %2473 = vst [vmem:[%s170 + $0x318] sm:$0xff] %v2363
      %2474 = vst [vmem:[%s170 + $0x320] sm:$0xff] %v2364
      %2475 = vst [vmem:[%s170 + $0x328] sm:$0xff] %v2365
      %2476 = vst [vmem:[%s170 + $0x330] sm:$0xff] %v2366
      %2477 = vst [vmem:[%s170 + $0x338] sm:$0xff] %v2367
      %2478 = vst [vmem:[%s170 + $0x340] sm:$0xff] %v2368
      %2479 = vst [vmem:[%s170 + $0x348] sm:$0xff] %v2369
      %2480 = vst [vmem:[%s170 + $0x350] sm:$0xff] %v2370
      %2481 = vst [vmem:[%s170 + $0x358] sm:$0xff] %v2371
      %2482 = vst [vmem:[%s170 + $0x360] sm:$0xff] %v2372
      %2483 = vst [vmem:[%s170 + $0x368] sm:$0xff] %v2373
      %p2484 = scmp.lt.s32.totalorder %s14, 1
      %s2485 = scalar_select %p2484, %s14, 1
      %s2486 = smul.addr %s2485, 110
      %s2487 = smul.addr %s2486, 8
      %s2488 = scalar_lea.vmem %s3, %s2487
      // Predicated region
      $region40: #{ae_decoder_forward.8} parent=31 // pred_check
        %p2489 = pneg %p100
      $region41: #{ae_decoder_forward.8} parent=31 // pred_check_branch
        %2491 = sbr.rel (%p2489) target = $region43
      $region42: #{ae_decoder_forward.8} parent=31 // pred_region
        _
      $region43: #{ae_decoder_forward.8} parent=31 // pred_fallthru
        _
    $region32: #{ae_decoder_forward.8} parent=5 // pred_fallthru
      _
    %p2492 = scmp.le.s32.totalorder 2, %s9
    // Predicated region
    $region44: #{ae_decoder_forward.8} parent=5 // pred_check
      %p2493 = pneg %p2492
    $region45: #{ae_decoder_forward.8} parent=5 // pred_check_branch
      %2495 = sbr.rel (%p2493) target = $region47
    $region46: #{ae_decoder_forward.8} parent=5 // pred_region
      %s2496 = ssub.s32 %s9, 2
      // Predicated region
      $region48: #{ae_decoder_forward.8} parent=46 // pred_check
        %p2497 = pneg %p106
      $region49: #{ae_decoder_forward.8} parent=46 // pred_check_branch
        %2499 = sbr.rel (%p2497) target = $region51
      $region50: #{ae_decoder_forward.8} parent=46 // pred_region
        %p2500 = scmp.lt.s32.totalorder %s15, 1
        %s2501 = scalar_select %p2500, %s15, 1
        %s2502 = smul.addr %s2501, 110
        %s2503 = smul.addr %s2502, 8
        %s2504 = scalar_lea.vmem %s3, %s2503
      $region51: #{ae_decoder_forward.8} parent=46 // pred_fallthru
        _
    $region47: #{ae_decoder_forward.8} parent=5 // pred_fallthru
      _
  $region6: #{ae_decoder_forward.8} parent=0 // loop_footer
    %s13 = sadd.s32 1, %s9
  $region7: #{ae_decoder_forward.8} parent=0 // loop_footer_branch
    %8 = sbr.rel target = $region3
  $region8: #{ae_decoder_forward.8} parent=0 // loop_exit
    _

// kernel: ae_decoder_forward.9
$region0: #{ae_decoder_forward.9}
  #allocation0 [shape = 'u32[]', space=smem, size = 0x4, offset = 0x4, fixed_abs, tag = 'smem constant byte address 0x4 - core index']
  #allocation1 [shape = 'u32[144,128]{1,0:T(1,128)}', space=vmem, size = 0x12000, scoped, tag = 'internal scratch']
  %s0 = inlined_call_operand.vmem [shape: f32[2,47,82,128], index: 0, kind: input, shape index: {}]
  %s1 = inlined_call_operand.vmem [shape: f32[9,128,3], index: 1, kind: input, shape index: {}]
  %s2 = inlined_call_operand.vmem [shape: f32[1,3], index: 2, kind: input, shape index: {}]
  %s3 = inlined_call_operand.vmem [shape: f32[2,45,80,3], index: 3, kind: output, shape index: {}]
  %s4 = sld [smem:[#allocation0]]
  $region52: #{ae_decoder_forward.9} parent=0
    _
  %s6 = ssub.s32 1, %s4
  %s7 = scalar_select 0, %s6, %s4
  loop: start=0, step=1, limit=4
  $region2: #{ae_decoder_forward.9} parent=0 // loop_pre_header
    _
  $region3: #{ae_decoder_forward.9} parent=0 // loop_header
    %s9 = sphi 0, %s13
    %p10 = scmp.ge.s32.totalorder %s9, 4
    %s19 = sphi 0, %s21
    %s22 = sphi 0, %s19
    %s23 = sphi 0, %s22
    %s39 = sphi 0, %s23
    %s43 = sphi 0, %s43
    %s45 = sphi 0, %s43
    %s46 = sphi 0, %s45
    %s60 = sphi 0, %s46
    %s64 = sphi 0, %s64
    %s66 = sphi 0, %s64
    %s67 = sphi 0, %s66
    %s81 = sphi 0, %s67
    %s87 = sphi 0, %s89
    %s90 = sphi 0, %s87
    %s91 = sphi 0, %s90
    %s107 = sphi 0, %s91
  $region4: #{ae_decoder_forward.9} parent=0 // loop_header_branch
    %12 = sbr.rel (%p10) target = $region8
  $region5: #{ae_decoder_forward.9} parent=0 // loop_body
    %s14 = ssub.s32 %s9, 1
    %s15 = ssub.s32 %s9, 2
    %s16 = sadd.s32 %s9, 1
    %s17 = ssub.s32 %s9, %s16
    %p18 = scmp.eq.s32.totalorder %s17, 0
    %s20 = sadd.s32 %s19, 1
    %s21 = scalar_select %p18, %s19, %s20
    %p24 = pneg %p18
    %p25 = scmp.eq.s32.totalorder %s9, 1
    %p26 = por %p24, %p25
    %p27 = scmp.ne.s32.totalorder %s19, %s22
    %p28 = scmp.eq.s32.totalorder %s9, 0
    %p29 = por %p27, %p28
    %p30 = scmp.ne.s32.totalorder %s19, %s22
    %p31 = scmp.eq.s32.totalorder %s14, 1
    %p32 = por %p30, %p31
    %p33 = scmp.ne.s32.totalorder %s22, %s23
    %p34 = scmp.eq.s32.totalorder %s14, 0
    %p35 = por %p33, %p34
    %p36 = scmp.ne.s32.totalorder %s22, %s23
    %p37 = scmp.eq.s32.totalorder %s15, 1
    %p38 = por %p36, %p37
    %p40 = scmp.ne.s32.totalorder %s23, %s39
    %p41 = scmp.eq.s32.totalorder %s15, 0
    %p42 = por %p40, %p41
    %s44 = sadd.s32 %s43, 1
    %p47 = scmp.eq.s32.totalorder %s9, 1
    %p48 = scmp.ne.s32.totalorder %s43, %s45
    %p49 = scmp.eq.s32.totalorder %s9, 0
    %p50 = por %p48, %p49
    %p51 = scmp.ne.s32.totalorder %s43, %s45
    %p52 = scmp.eq.s32.totalorder %s14, 1
    %p53 = por %p51, %p52
    %p54 = scmp.ne.s32.totalorder %s45, %s46
    %p55 = scmp.eq.s32.totalorder %s14, 0
    %p56 = por %p54, %p55
    %p57 = scmp.ne.s32.totalorder %s45, %s46
    %p58 = scmp.eq.s32.totalorder %s15, 1
    %p59 = por %p57, %p58
    %p61 = scmp.ne.s32.totalorder %s46, %s60
    %p62 = scmp.eq.s32.totalorder %s15, 0
    %p63 = por %p61, %p62
    %s65 = sadd.s32 %s64, 1
    %p68 = scmp.eq.s32.totalorder %s9, 1
    %p69 = scmp.ne.s32.totalorder %s64, %s66
    %p70 = scmp.eq.s32.totalorder %s9, 0
    %p71 = por %p69, %p70
    %p72 = scmp.ne.s32.totalorder %s64, %s66
    %p73 = scmp.eq.s32.totalorder %s14, 1
    %p74 = por %p72, %p73
    %p75 = scmp.ne.s32.totalorder %s66, %s67
    %p76 = scmp.eq.s32.totalorder %s14, 0
    %p77 = por %p75, %p76
    %p78 = scmp.ne.s32.totalorder %s66, %s67
    %p79 = scmp.eq.s32.totalorder %s15, 1
    %p80 = por %p78, %p79
    %p82 = scmp.ne.s32.totalorder %s67, %s81
    %p83 = scmp.eq.s32.totalorder %s15, 0
    %p84 = por %p82, %p83
    %s85 = ssub.s32 %s9, %s16
    %p86 = scmp.eq.s32.totalorder %s85, 0
    %s88 = sadd.s32 %s87, 1
    %s89 = scalar_select %p86, %s87, %s88
    %p92 = pneg %p86
    %p93 = scmp.eq.s32.totalorder %s9, 1
    %p94 = por %p92, %p93
    %p95 = scmp.ne.s32.totalorder %s87, %s90
    %p96 = scmp.eq.s32.totalorder %s9, 0
    %p97 = por %p95, %p96
    %p98 = scmp.ne.s32.totalorder %s87, %s90
    %p99 = scmp.eq.s32.totalorder %s14, 1
    %p100 = por %p98, %p99
    %p101 = scmp.ne.s32.totalorder %s90, %s91
    %p102 = scmp.eq.s32.totalorder %s14, 0
    %p103 = por %p101, %p102
    %p104 = scmp.ne.s32.totalorder %s90, %s91
    %p105 = scmp.eq.s32.totalorder %s15, 1
    %p106 = por %p104, %p105
    %p108 = scmp.ne.s32.totalorder %s91, %s107
    %p109 = scmp.eq.s32.totalorder %s15, 0
    %p110 = por %p108, %p109
    %p111 = scmp.le.s32.totalorder 1, %s9
    %p112 = scmp.lt.s32.totalorder %s9, 3
    %p113 = pnand %p111, %p112
    %p114 = pneg %p113
    // Predicated region
    $region9: #{ae_decoder_forward.9} parent=5 // pred_check
      _
    $region10: #{ae_decoder_forward.9} parent=5 // pred_check_branch
      %116 = sbr.rel (%p113) target = $region12
    $region11: #{ae_decoder_forward.9} parent=5 // pred_region
      %s117 = ssub.s32 %s9, 1
      // Predicated region
      $region13: #{ae_decoder_forward.9} parent=11 // pred_check
        %p118 = pneg %p56
      $region14: #{ae_decoder_forward.9} parent=11 // pred_check_branch
        %120 = sbr.rel (%p118) target = $region16
      $region15: #{ae_decoder_forward.9} parent=11 // pred_region
        _
      $region16: #{ae_decoder_forward.9} parent=11 // pred_fallthru
        _
      // Predicated region
      $region17: #{ae_decoder_forward.9} parent=11 // pred_check
        %p121 = pneg %p77
      $region18: #{ae_decoder_forward.9} parent=11 // pred_check_branch
        %123 = sbr.rel (%p121) target = $region20
      $region19: #{ae_decoder_forward.9} parent=11 // pred_region
        _
      $region20: #{ae_decoder_forward.9} parent=11 // pred_fallthru
        _
    $region12: #{ae_decoder_forward.9} parent=5 // pred_fallthru
      _
    %p124 = scmp.lt.s32.totalorder %s9, 2
    // Predicated region
    $region21: #{ae_decoder_forward.9} parent=5 // pred_check
      %p125 = pneg %p124
    $region22: #{ae_decoder_forward.9} parent=5 // pred_check_branch
      %127 = sbr.rel (%p125) target = $region24
    $region23: #{ae_decoder_forward.9} parent=5 // pred_region
      // Predicated region
      $region25: #{ae_decoder_forward.9} parent=23 // pred_check
        %p128 = pneg %p29
      $region26: #{ae_decoder_forward.9} parent=23 // pred_check_branch
        %130 = sbr.rel (%p128) target = $region28
      $region27: #{ae_decoder_forward.9} parent=23 // pred_region
        %p131 = scmp.lt.s32.totalorder %s9, 1
        %s132 = scalar_select %p131, %s9, 1
        %s133 = smul.addr %s132, 517
        %s134 = smul.addr %s133, 8
        %s135 = scalar_lea.vmem %s0, %s134
      $region28: #{ae_decoder_forward.9} parent=23 // pred_fallthru
        _
    $region24: #{ae_decoder_forward.9} parent=5 // pred_fallthru
      _
    %p136 = scmp.le.s32.totalorder 1, %s9
    %p137 = scmp.lt.s32.totalorder %s9, 3
    %p138 = pnand %p136, %p137
    %p139 = pneg %p138
    // Predicated region
    $region29: #{ae_decoder_forward.9} parent=5 // pred_check
      _
    $region30: #{ae_decoder_forward.9} parent=5 // pred_check_branch
      %141 = sbr.rel (%p138) target = $region32
    $region31: #{ae_decoder_forward.9} parent=5 // pred_region
      %s142 = ssub.s32 %s9, 1
      %p143 = scmp.lt.s32.totalorder %s14, 1
      %s144 = scalar_select %p143, %s14, 1
      %s145 = smul.addr %s144, 517
      %s146 = smul.addr %s145, 8
      %s147 = scalar_lea.vmem %s0, %s146
      %p148 = pneg %p35
      %p149 = pneg %p32
      %p150 = pneg %p56
      %p151 = pneg %p53
      %p152 = pneg %p77
      %p153 = pneg %p74
      %p154 = pneg %p103
      %p155 = pneg %p100
      %p156 = scmp.lt.s32.totalorder %s14, 1
      %s157 = scalar_select %p156, %s14, 1
      %s158 = smul.addr %s157, 450
      %s159 = smul.addr %s158, 8
      %s160 = scalar_lea.vmem %s3, %s159
      %p161 = scmp.lt.s32.totalorder %s14, 1
      %s162 = scalar_select %p161, %s14, 1
      %s163 = smul.addr %s162, 517
      %s164 = smul.addr %s163, 8
      %s165 = scalar_lea.vmem %s0, %s164
      %p166 = scmp.lt.s32.totalorder %s14, 1
      %s167 = scalar_select %p166, %s14, 1
      %s168 = smul.addr %s167, 450
      %s169 = smul.addr %s168, 8
      %s170 = scalar_lea.vmem %s3, %s169
      %v171 = vld [vmem:[%s2] sm:$0x1]
      loop: start=0, step=1, limit=45
      $region33: #{ae_decoder_forward.9} parent=31 // loop_pre_header
        _
      $region34: #{ae_decoder_forward.9} parent=31 // loop_header
        %s173 = sphi 0, %s177
        %p174 = scmp.ge.s32.totalorder %s173, 45
      $region35: #{ae_decoder_forward.9} parent=31 // loop_header_branch
        %176 = sbr.rel (%p174) target = $region39
      $region36: #{ae_decoder_forward.9} parent=31 // loop_body
        %s178 = smul.u32 %s173, 88
        %s179 = scalar_lea.vmem %s165, %s178
        %v180 = vld [vmem:[%s179] sm:$0xff]
        %v181 = vld [vmem:[%s179 + $0x8] sm:$0xff]
        %v182 = vld [vmem:[%s179 + $0x10] sm:$0xff]
        %v183 = vld [vmem:[%s179 + $0x18] sm:$0xff]
        %v184 = vld [vmem:[%s179 + $0x20] sm:$0xff]
        %v185 = vld [vmem:[%s179 + $0x28] sm:$0xff]
        %v186 = vld [vmem:[%s179 + $0x30] sm:$0xff]
        %v187 = vld [vmem:[%s179 + $0x38] sm:$0xff]
        %v188 = vld [vmem:[%s179 + $0x40] sm:$0xff]
        %v189 = vld [vmem:[%s179 + $0x48] sm:$0xff]
        %v190 = vld [vmem:[%s179 + $0x50] sm:$0x3]
        %v191 = vld [vmem:[%s1] sm:$0xff]
        %v192 = vld [vmem:[%s1 + $0x8] sm:$0xff]
        %v193 = vld [vmem:[%s1 + $0x10] sm:$0xff]
        %v194 = vld [vmem:[%s1 + $0x18] sm:$0xff]
        %v195 = vld [vmem:[%s1 + $0x20] sm:$0xff]
        %v196 = vld [vmem:[%s1 + $0x28] sm:$0xff]
        %v197 = vld [vmem:[%s1 + $0x30] sm:$0xff]
        %v198 = vld [vmem:[%s1 + $0x38] sm:$0xff]
        %v199 = vld [vmem:[%s1 + $0x40] sm:$0xff]
        %v200 = vld [vmem:[%s1 + $0x48] sm:$0xff]
        %v201 = vld [vmem:[%s1 + $0x50] sm:$0xff]
        %v202 = vld [vmem:[%s1 + $0x58] sm:$0xff]
        %v203 = vld [vmem:[%s1 + $0x60] sm:$0xff]
        %v204 = vld [vmem:[%s1 + $0x68] sm:$0xff]
        %v205 = vld [vmem:[%s1 + $0x70] sm:$0xff]
        %v206 = vld [vmem:[%s1 + $0x78] sm:$0xff]
        %s207 = scalar_lea.vmem %s1, 128
        %v208 = vld [vmem:[%s207] sm:$0xff]
        %v209 = vld [vmem:[%s207 + $0x8] sm:$0xff]
        %v210 = vld [vmem:[%s207 + $0x10] sm:$0xff]
        %v211 = vld [vmem:[%s207 + $0x18] sm:$0xff]
        %v212 = vld [vmem:[%s207 + $0x20] sm:$0xff]
        %v213 = vld [vmem:[%s207 + $0x28] sm:$0xff]
        %v214 = vld [vmem:[%s207 + $0x30] sm:$0xff]
        %v215 = vld [vmem:[%s207 + $0x38] sm:$0xff]
        %v216 = vld [vmem:[%s207 + $0x40] sm:$0xff]
        %v217 = vld [vmem:[%s207 + $0x48] sm:$0xff]
        %v218 = vld [vmem:[%s207 + $0x50] sm:$0xff]
        %v219 = vld [vmem:[%s207 + $0x58] sm:$0xff]
        %v220 = vld [vmem:[%s207 + $0x60] sm:$0xff]
        %v221 = vld [vmem:[%s207 + $0x68] sm:$0xff]
        %v222 = vld [vmem:[%s207 + $0x70] sm:$0xff]
        %v223 = vld [vmem:[%s207 + $0x78] sm:$0xff]
        %vm235 = vcmask 1046528
        %v236 = vrot.slane %v180, 1
        %v237 = vrot.slane %v181, 1
        %v238 = vsel %vm235, %v236, %v237
        %v239 = vrot.slane %v182, 1
        %v240 = vsel %vm235, %v237, %v239
        %v241 = vrot.slane %v183, 1
        %v242 = vsel %vm235, %v239, %v241
        %v243 = vrot.slane %v184, 1
        %v244 = vsel %vm235, %v241, %v243
        %v245 = vrot.slane %v185, 1
        %v246 = vsel %vm235, %v243, %v245
        %v247 = vrot.slane %v186, 1
        %v248 = vsel %vm235, %v245, %v247
        %v249 = vrot.slane %v187, 1
        %v250 = vsel %vm235, %v247, %v249
        %v251 = vrot.slane %v188, 1
        %v252 = vsel %vm235, %v249, %v251
        %v253 = vrot.slane %v189, 1
        %v254 = vsel %vm235, %v251, %v253
        %v255 = vrot.slane %v190, 1
        %v256 = vsel %vm235, %v253, %v255
        %267 = vmatprep.subr.mxu0 0.0
        %268 = vmatpush1.msra.mxu0 %v208
        %269 = vmatprep.subr.mxu0 0.0
        %270 = vmatpush1.msra.mxu0 %v209
        %271 = vmatprep.subr.mxu0 0.0
        %272 = vmatpush1.msra.mxu0 %v210
        %273 = vmatprep.subr.mxu0 0.0
        %274 = vmatpush1.msra.mxu0 %v211
        %275 = vmatprep.subr.mxu0 0.0
        %276 = vmatpush1.msra.mxu0 %v212
        %277 = vmatprep.subr.mxu0 0.0
        %278 = vmatpush1.msra.mxu0 %v213
        %279 = vmatprep.subr.mxu0 0.0
        %280 = vmatpush1.msra.mxu0 %v214
        %281 = vmatprep.subr.mxu0 0.0
        %282 = vmatpush1.msra.mxu0 %v215
        %283 = vmatprep.subr.mxu0 0.0
        %284 = vmatpush1.msra.mxu0 %v216
        %285 = vmatprep.subr.mxu0 0.0
        %286 = vmatpush1.msra.mxu0 %v217
        %287 = vmatprep.subr.mxu0 0.0
        %288 = vmatpush1.msra.mxu0 %v218
        %289 = vmatprep.subr.mxu0 0.0
        %290 = vmatpush1.msra.mxu0 %v219
        %291 = vmatprep.subr.mxu0 0.0
        %292 = vmatpush1.msra.mxu0 %v220
        %293 = vmatprep.subr.mxu0 0.0
        %294 = vmatpush1.msra.mxu0 %v221
        %295 = vmatprep.subr.mxu0 0.0
        %296 = vmatpush1.msra.mxu0 %v222
        %297 = vmatprep.subr.mxu0 0.0
        %298 = vmatpush1.msra.mxu0 %v223
        %299 = vmatprep.subr.mxu0 0.0
        %300 = vmatpush1.msra.mxu0 0.0
        %301 = vmatprep.subr.mxu0 0.0
        %302 = vmatpush1.msra.mxu0 0.0
        %303 = vmatprep.subr.mxu0 0.0
        %304 = vmatpush1.msra.mxu0 0.0
        %305 = vmatprep.subr.mxu0 0.0
        %306 = vmatpush1.msra.mxu0 0.0
        %307 = vmatprep.subr.mxu0 0.0
        %308 = vmatpush1.msra.mxu0 0.0
        %309 = vmatprep.subr.mxu0 0.0
        %310 = vmatpush1.msra.mxu0 0.0
        %311 = vmatprep.subr.mxu0 0.0
        %312 = vmatpush1.msra.mxu0 0.0
        %313 = vmatprep.subr.mxu0 0.0
        %314 = vmatpush1.msra.mxu0 0.0
        %315 = vmatprep.subr.mxu0 0.0
        %316 = vmatpush1.msra.mxu0 0.0
        %317 = vmatprep.subr.mxu0 0.0
        %318 = vmatpush1.msra.mxu0 0.0
        %319 = vmatprep.subr.mxu0 0.0
        %320 = vmatpush1.msra.mxu0 0.0
        %321 = vmatprep.subr.mxu0 0.0
        %322 = vmatpush1.msra.mxu0 0.0
        %323 = vmatprep.subr.mxu0 0.0
        %324 = vmatpush1.msra.mxu0 0.0
        %325 = vmatprep.subr.mxu0 0.0
        %326 = vmatpush1.msra.mxu0 0.0
        %327 = vmatprep.subr.mxu0 0.0
        %328 = vmatpush1.msra.mxu0 0.0
        %329 = vmatprep.subr.mxu0 0.0
        %330 = vmatpush1.msra.mxu0 0.0
        %331 = vmatprep.mubr.f32.mxu0 0.0
        %332 = vmatmul.mubr.f32.gmra.mrb[0].mxu0 %v238
        %v333 = vpop.f32.mrb[0].mxu0
        %v334 = vadd.f32 0.0, %v333
        %v335 = vpop.f32.mrb[0].mxu0
        %336 = vmatprep.mubr.f32.mxu0 0.0
        %337 = vmatmul.mubr.f32.gmra.mrb[0].mxu0 %v240
        %v338 = vpop.f32.mrb[0].mxu0
        %v339 = vadd.f32 0.0, %v338
        %v340 = vpop.f32.mrb[0].mxu0
        %341 = vmatprep.mubr.f32.mxu0 0.0
        %342 = vmatmul.mubr.f32.gmra.mrb[0].mxu0 %v242
        %v343 = vpop.f32.mrb[0].mxu0
        %v344 = vadd.f32 0.0, %v343
        %v345 = vpop.f32.mrb[0].mxu0
        %346 = vmatprep.mubr.f32.mxu0 0.0
        %347 = vmatmul.mubr.f32.gmra.mrb[0].mxu0 %v244
        %v348 = vpop.f32.mrb[0].mxu0
        %v349 = vadd.f32 0.0, %v348
        %v350 = vpop.f32.mrb[0].mxu0
        %351 = vmatprep.mubr.f32.mxu0 0.0
        %352 = vmatmul.mubr.f32.gmra.mrb[0].mxu0 %v246
        %v353 = vpop.f32.mrb[0].mxu0
        %v354 = vadd.f32 0.0, %v353
        %v355 = vpop.f32.mrb[0].mxu0
        %356 = vmatprep.mubr.f32.mxu0 0.0
        %357 = vmatmul.mubr.f32.gmra.mrb[0].mxu0 %v248
        %v358 = vpop.f32.mrb[0].mxu0
        %v359 = vadd.f32 0.0, %v358
        %v360 = vpop.f32.mrb[0].mxu0
        %361 = vmatprep.mubr.f32.mxu0 0.0
        %362 = vmatmul.mubr.f32.gmra.mrb[0].mxu0 %v250
        %v363 = vpop.f32.mrb[0].mxu0
        %v364 = vadd.f32 0.0, %v363
        %v365 = vpop.f32.mrb[0].mxu0
        %366 = vmatprep.mubr.f32.mxu0 0.0
        %367 = vmatmul.mubr.f32.gmra.mrb[0].mxu0 %v252
        %v368 = vpop.f32.mrb[0].mxu0
        %v369 = vadd.f32 0.0, %v368
        %v370 = vpop.f32.mrb[0].mxu0
        %371 = vmatprep.mubr.f32.mxu0 0.0
        %372 = vmatmul.mubr.f32.gmra.mrb[0].mxu0 %v254
        %v373 = vpop.f32.mrb[0].mxu0
        %v374 = vadd.f32 0.0, %v373
        %v375 = vpop.f32.mrb[0].mxu0
        %376 = vmatprep.mubr.f32.mxu0 0.0
        %377 = vmatmul.mubr.f32.gmra.mrb[0].mxu0 %v256
        %v378 = vpop.f32.mrb[0].mxu0
        %v379 = vadd.f32 0.0, %v378
        %v380 = vpop.f32.mrb[0].mxu0
        %381 = vdwg.mxu0
        %382 = vmatprep.subr.mxu0 0.0
        %383 = vmatpush1.msra.mxu0 %v191
        %384 = vmatprep.subr.mxu0 0.0
        %385 = vmatpush1.msra.mxu0 %v192
        %386 = vmatprep.subr.mxu0 0.0
        %387 = vmatpush1.msra.mxu0 %v193
        %388 = vmatprep.subr.mxu0 0.0
        %389 = vmatpush1.msra.mxu0 %v194
        %390 = vmatprep.subr.mxu0 0.0
        %391 = vmatpush1.msra.mxu0 %v195
        %392 = vmatprep.subr.mxu0 0.0
        %393 = vmatpush1.msra.mxu0 %v196
        %394 = vmatprep.subr.mxu0 0.0
        %395 = vmatpush1.msra.mxu0 %v197
        %396 = vmatprep.subr.mxu0 0.0
        %397 = vmatpush1.msra.mxu0 %v198
        %398 = vmatprep.subr.mxu0 0.0
        %399 = vmatpush1.msra.mxu0 %v199
        %400 = vmatprep.subr.mxu0 0.0
        %401 = vmatpush1.msra.mxu0 %v200
        %402 = vmatprep.subr.mxu0 0.0
        %403 = vmatpush1.msra.mxu0 %v201
        %404 = vmatprep.subr.mxu0 0.0
        %405 = vmatpush1.msra.mxu0 %v202
        %406 = vmatprep.subr.mxu0 0.0
        %407 = vmatpush1.msra.mxu0 %v203
        %408 = vmatprep.subr.mxu0 0.0
        %409 = vmatpush1.msra.mxu0 %v204
        %410 = vmatprep.subr.mxu0 0.0
        %411 = vmatpush1.msra.mxu0 %v205
        %412 = vmatprep.subr.mxu0 0.0
        %413 = vmatpush1.msra.mxu0 %v206
        %414 = vmatprep.subr.mxu0 0.0
        %415 = vmatpush1.msra.mxu0 0.0
        %416 = vmatprep.subr.mxu0 0.0
        %417 = vmatpush1.msra.mxu0 0.0
        %418 = vmatprep.subr.mxu0 0.0
        %419 = vmatpush1.msra.mxu0 0.0
        %420 = vmatprep.subr.mxu0 0.0
        %421 = vmatpush1.msra.mxu0 0.0
        %422 = vmatprep.subr.mxu0 0.0
        %423 = vmatpush1.msra.mxu0 0.0
        %424 = vmatprep.subr.mxu0 0.0
        %425 = vmatpush1.msra.mxu0 0.0
        %426 = vmatprep.subr.mxu0 0.0
        %427 = vmatpush1.msra.mxu0 0.0
        %428 = vmatprep.subr.mxu0 0.0
        %429 = vmatpush1.msra.mxu0 0.0
        %430 = vmatprep.subr.mxu0 0.0
        %431 = vmatpush1.msra.mxu0 0.0
        %432 = vmatprep.subr.mxu0 0.0
        %433 = vmatpush1.msra.mxu0 0.0
        %434 = vmatprep.subr.mxu0 0.0
        %435 = vmatpush1.msra.mxu0 0.0
        %436 = vmatprep.subr.mxu0 0.0
        %437 = vmatpush1.msra.mxu0 0.0
        %438 = vmatprep.subr.mxu0 0.0
        %439 = vmatpush1.msra.mxu0 0.0
        %440 = vmatprep.subr.mxu0 0.0
        %441 = vmatpush1.msra.mxu0 0.0
        %442 = vmatprep.subr.mxu0 0.0
        %443 = vmatpush1.msra.mxu0 0.0
        %444 = vmatprep.subr.mxu0 0.0
        %445 = vmatpush1.msra.mxu0 0.0
        %446 = vmatprep.mubr.f32.mxu0 0.0
        %447 = vmatmul.mubr.f32.gmra.mrb[0].mxu0 %v180
        %v448 = vpop.f32.mrb[0].mxu0
        %v449 = vadd.f32 %v334, %v448
        %v450 = vpop.f32.mrb[0].mxu0
        %451 = vmatprep.mubr.f32.mxu0 0.0
        %452 = vmatmul.mubr.f32.gmra.mrb[0].mxu0 %v181
        %v453 = vpop.f32.mrb[0].mxu0
        %v454 = vadd.f32 %v339, %v453
        %v455 = vpop.f32.mrb[0].mxu0
        %456 = vmatprep.mubr.f32.mxu0 0.0
        %457 = vmatmul.mubr.f32.gmra.mrb[0].mxu0 %v182
        %v458 = vpop.f32.mrb[0].mxu0
        %v459 = vadd.f32 %v344, %v458
        %v460 = vpop.f32.mrb[0].mxu0
        %461 = vmatprep.mubr.f32.mxu0 0.0
        %462 = vmatmul.mubr.f32.gmra.mrb[0].mxu0 %v183
        %v463 = vpop.f32.mrb[0].mxu0
        %v464 = vadd.f32 %v349, %v463
        %v465 = vpop.f32.mrb[0].mxu0
        %466 = vmatprep.mubr.f32.mxu0 0.0
        %467 = vmatmul.mubr.f32.gmra.mrb[0].mxu0 %v184
        %v468 = vpop.f32.mrb[0].mxu0
        %v469 = vadd.f32 %v354, %v468
        %v470 = vpop.f32.mrb[0].mxu0
        %471 = vmatprep.mubr.f32.mxu0 0.0
        %472 = vmatmul.mubr.f32.gmra.mrb[0].mxu0 %v185
        %v473 = vpop.f32.mrb[0].mxu0
        %v474 = vadd.f32 %v359, %v473
        %v475 = vpop.f32.mrb[0].mxu0
        %476 = vmatprep.mubr.f32.mxu0 0.0
        %477 = vmatmul.mubr.f32.gmra.mrb[0].mxu0 %v186
        %v478 = vpop.f32.mrb[0].mxu0
        %v479 = vadd.f32 %v364, %v478
        %v480 = vpop.f32.mrb[0].mxu0
        %481 = vmatprep.mubr.f32.mxu0 0.0
        %482 = vmatmul.mubr.f32.gmra.mrb[0].mxu0 %v187
        %v483 = vpop.f32.mrb[0].mxu0
        %v484 = vadd.f32 %v369, %v483
        %v485 = vpop.f32.mrb[0].mxu0
        %486 = vmatprep.mubr.f32.mxu0 0.0
        %487 = vmatmul.mubr.f32.gmra.mrb[0].mxu0 %v188
        %v488 = vpop.f32.mrb[0].mxu0
        %v489 = vadd.f32 %v374, %v488
        %v490 = vpop.f32.mrb[0].mxu0
        %491 = vmatprep.mubr.f32.mxu0 0.0
        %492 = vmatmul.mubr.f32.gmra.mrb[0].mxu0 %v189
        %v493 = vpop.f32.mrb[0].mxu0
        %v494 = vadd.f32 %v379, %v493
        %v495 = vpop.f32.mrb[0].mxu0
        %496 = vdwg.mxu0
        %s497 = scalar_lea.vmem %s1, 256
        %v498 = vld [vmem:[%s497] sm:$0xff]
        %v499 = vld [vmem:[%s497 + $0x8] sm:$0xff]
        %v500 = vld [vmem:[%s497 + $0x10] sm:$0xff]
        %v501 = vld [vmem:[%s497 + $0x18] sm:$0xff]
        %v502 = vld [vmem:[%s497 + $0x20] sm:$0xff]
        %v503 = vld [vmem:[%s497 + $0x28] sm:$0xff]
        %v504 = vld [vmem:[%s497 + $0x30] sm:$0xff]
        %v505 = vld [vmem:[%s497 + $0x38] sm:$0xff]
        %v506 = vld [vmem:[%s497 + $0x40] sm:$0xff]
        %v507 = vld [vmem:[%s497 + $0x48] sm:$0xff]
        %v508 = vld [vmem:[%s497 + $0x50] sm:$0xff]
        %v509 = vld [vmem:[%s497 + $0x58] sm:$0xff]
        %v510 = vld [vmem:[%s497 + $0x60] sm:$0xff]
        %v511 = vld [vmem:[%s497 + $0x68] sm:$0xff]
        %v512 = vld [vmem:[%s497 + $0x70] sm:$0xff]
        %v513 = vld [vmem:[%s497 + $0x78] sm:$0xff]
        %vm514 = vcmask 1045504
        %v515 = vrot.slane %v180, 2
        %v516 = vrot.slane %v181, 2
        %v517 = vsel %vm514, %v515, %v516
        %v518 = vrot.slane %v182, 2
        %v519 = vsel %vm514, %v516, %v518
        %v520 = vrot.slane %v183, 2
        %v521 = vsel %vm514, %v518, %v520
        %v522 = vrot.slane %v184, 2
        %v523 = vsel %vm514, %v520, %v522
        %v524 = vrot.slane %v185, 2
        %v525 = vsel %vm514, %v522, %v524
        %v526 = vrot.slane %v186, 2
        %v527 = vsel %vm514, %v524, %v526
        %v528 = vrot.slane %v187, 2
        %v529 = vsel %vm514, %v526, %v528
        %v530 = vrot.slane %v188, 2
        %v531 = vsel %vm514, %v528, %v530
        %v532 = vrot.slane %v189, 2
        %v533 = vsel %vm514, %v530, %v532
        %v534 = vrot.slane %v190, 2
        %v535 = vsel %vm514, %v532, %v534
        %546 = vmatprep.subr.mxu0 0.0
        %547 = vmatpush1.msra.mxu0 %v498
        %548 = vmatprep.subr.mxu0 0.0
        %549 = vmatpush1.msra.mxu0 %v499
        %550 = vmatprep.subr.mxu0 0.0
        %551 = vmatpush1.msra.mxu0 %v500
        %552 = vmatprep.subr.mxu0 0.0
        %553 = vmatpush1.msra.mxu0 %v501
        %554 = vmatprep.subr.mxu0 0.0
        %555 = vmatpush1.msra.mxu0 %v502
        %556 = vmatprep.subr.mxu0 0.0
        %557 = vmatpush1.msra.mxu0 %v503
        %558 = vmatprep.subr.mxu0 0.0
        %559 = vmatpush1.msra.mxu0 %v504
        %560 = vmatprep.subr.mxu0 0.0
        %561 = vmatpush1.msra.mxu0 %v505
        %562 = vmatprep.subr.mxu0 0.0
        %563 = vmatpush1.msra.mxu0 %v506
        %564 = vmatprep.subr.mxu0 0.0
        %565 = vmatpush1.msra.mxu0 %v507
        %566 = vmatprep.subr.mxu0 0.0
        %567 = vmatpush1.msra.mxu0 %v508
        %568 = vmatprep.subr.mxu0 0.0
        %569 = vmatpush1.msra.mxu0 %v509
        %570 = vmatprep.subr.mxu0 0.0
        %571 = vmatpush1.msra.mxu0 %v510
        %572 = vmatprep.subr.mxu0 0.0
        %573 = vmatpush1.msra.mxu0 %v511
        %574 = vmatprep.subr.mxu0 0.0
        %575 = vmatpush1.msra.mxu0 %v512
        %576 = vmatprep.subr.mxu0 0.0
        %577 = vmatpush1.msra.mxu0 %v513
        %578 = vmatprep.subr.mxu0 0.0
        %579 = vmatpush1.msra.mxu0 0.0
        %580 = vmatprep.subr.mxu0 0.0
        %581 = vmatpush1.msra.mxu0 0.0
        %582 = vmatprep.subr.mxu0 0.0
        %583 = vmatpush1.msra.mxu0 0.0
        %584 = vmatprep.subr.mxu0 0.0
        %585 = vmatpush1.msra.mxu0 0.0
        %586 = vmatprep.subr.mxu0 0.0
        %587 = vmatpush1.msra.mxu0 0.0
        %588 = vmatprep.subr.mxu0 0.0
        %589 = vmatpush1.msra.mxu0 0.0
        %590 = vmatprep.subr.mxu0 0.0
        %591 = vmatpush1.msra.mxu0 0.0
        %592 = vmatprep.subr.mxu0 0.0
        %593 = vmatpush1.msra.mxu0 0.0
        %594 = vmatprep.subr.mxu0 0.0
        %595 = vmatpush1.msra.mxu0 0.0
        %596 = vmatprep.subr.mxu0 0.0
        %597 = vmatpush1.msra.mxu0 0.0
        %598 = vmatprep.subr.mxu0 0.0
        %599 = vmatpush1.msra.mxu0 0.0
        %600 = vmatprep.subr.mxu0 0.0
        %601 = vmatpush1.msra.mxu0 0.0
        %602 = vmatprep.subr.mxu0 0.0
        %603 = vmatpush1.msra.mxu0 0.0
        %604 = vmatprep.subr.mxu0 0.0
        %605 = vmatpush1.msra.mxu0 0.0
        %606 = vmatprep.subr.mxu0 0.0
        %607 = vmatpush1.msra.mxu0 0.0
        %608 = vmatprep.subr.mxu0 0.0
        %609 = vmatpush1.msra.mxu0 0.0
        %610 = vmatprep.mubr.f32.mxu0 0.0
        %611 = vmatmul.mubr.f32.gmra.mrb[0].mxu0 %v517
        %v612 = vpop.f32.mrb[0].mxu0
        %v613 = vadd.f32 0.0, %v612
        %v614 = vpop.f32.mrb[0].mxu0
        %615 = vmatprep.mubr.f32.mxu0 0.0
        %616 = vmatmul.mubr.f32.gmra.mrb[0].mxu0 %v519
        %v617 = vpop.f32.mrb[0].mxu0
        %v618 = vadd.f32 0.0, %v617
        %v619 = vpop.f32.mrb[0].mxu0
        %620 = vmatprep.mubr.f32.mxu0 0.0
        %621 = vmatmul.mubr.f32.gmra.mrb[0].mxu0 %v521
        %v622 = vpop.f32.mrb[0].mxu0
        %v623 = vadd.f32 0.0, %v622
        %v624 = vpop.f32.mrb[0].mxu0
        %625 = vmatprep.mubr.f32.mxu0 0.0
        %626 = vmatmul.mubr.f32.gmra.mrb[0].mxu0 %v523
        %v627 = vpop.f32.mrb[0].mxu0
        %v628 = vadd.f32 0.0, %v627
        %v629 = vpop.f32.mrb[0].mxu0
        %630 = vmatprep.mubr.f32.mxu0 0.0
        %631 = vmatmul.mubr.f32.gmra.mrb[0].mxu0 %v525
        %v632 = vpop.f32.mrb[0].mxu0
        %v633 = vadd.f32 0.0, %v632
        %v634 = vpop.f32.mrb[0].mxu0
        %635 = vmatprep.mubr.f32.mxu0 0.0
        %636 = vmatmul.mubr.f32.gmra.mrb[0].mxu0 %v527
        %v637 = vpop.f32.mrb[0].mxu0
        %v638 = vadd.f32 0.0, %v637
        %v639 = vpop.f32.mrb[0].mxu0
        %640 = vmatprep.mubr.f32.mxu0 0.0
        %641 = vmatmul.mubr.f32.gmra.mrb[0].mxu0 %v529
        %v642 = vpop.f32.mrb[0].mxu0
        %v643 = vadd.f32 0.0, %v642
        %v644 = vpop.f32.mrb[0].mxu0
        %645 = vmatprep.mubr.f32.mxu0 0.0
        %646 = vmatmul.mubr.f32.gmra.mrb[0].mxu0 %v531
        %v647 = vpop.f32.mrb[0].mxu0
        %v648 = vadd.f32 0.0, %v647
        %v649 = vpop.f32.mrb[0].mxu0
        %650 = vmatprep.mubr.f32.mxu0 0.0
        %651 = vmatmul.mubr.f32.gmra.mrb[0].mxu0 %v533
        %v652 = vpop.f32.mrb[0].mxu0
        %v653 = vadd.f32 0.0, %v652
        %v654 = vpop.f32.mrb[0].mxu0
        %655 = vmatprep.mubr.f32.mxu0 0.0
        %656 = vmatmul.mubr.f32.gmra.mrb[0].mxu0 %v535
        %v657 = vpop.f32.mrb[0].mxu0
        %v658 = vadd.f32 0.0, %v657
        %v659 = vpop.f32.mrb[0].mxu0
        %660 = vdwg.mxu0
        %v661 = vadd.f32 %v449, %v613
        %v662 = vadd.f32 %v454, %v618
        %v663 = vadd.f32 %v459, %v623
        %v664 = vadd.f32 %v464, %v628
        %v665 = vadd.f32 %v469, %v633
        %v666 = vadd.f32 %v474, %v638
        %v667 = vadd.f32 %v479, %v643
        %v668 = vadd.f32 %v484, %v648
        %v669 = vadd.f32 %v489, %v653
        %v670 = vadd.f32 %v494, %v658
        %s671 = sadd.s32 %s173, 1
        %s672 = smul.u32 %s671, 88
        %s673 = scalar_lea.vmem %s165, %s672
        %v674 = vld [vmem:[%s673] sm:$0xff]
        %v675 = vld [vmem:[%s673 + $0x8] sm:$0xff]
        %v676 = vld [vmem:[%s673 + $0x10] sm:$0xff]
        %v677 = vld [vmem:[%s673 + $0x18] sm:$0xff]
        %v678 = vld [vmem:[%s673 + $0x20] sm:$0xff]
        %v679 = vld [vmem:[%s673 + $0x28] sm:$0xff]
        %v680 = vld [vmem:[%s673 + $0x30] sm:$0xff]
        %v681 = vld [vmem:[%s673 + $0x38] sm:$0xff]
        %v682 = vld [vmem:[%s673 + $0x40] sm:$0xff]
        %v683 = vld [vmem:[%s673 + $0x48] sm:$0xff]
        %v684 = vld [vmem:[%s673 + $0x50] sm:$0x3]
        %s685 = scalar_lea.vmem %s1, 384
        %v686 = vld [vmem:[%s685] sm:$0xff]
        %v687 = vld [vmem:[%s685 + $0x8] sm:$0xff]
        %v688 = vld [vmem:[%s685 + $0x10] sm:$0xff]
        %v689 = vld [vmem:[%s685 + $0x18] sm:$0xff]
        %v690 = vld [vmem:[%s685 + $0x20] sm:$0xff]
        %v691 = vld [vmem:[%s685 + $0x28] sm:$0xff]
        %v692 = vld [vmem:[%s685 + $0x30] sm:$0xff]
        %v693 = vld [vmem:[%s685 + $0x38] sm:$0xff]
        %v694 = vld [vmem:[%s685 + $0x40] sm:$0xff]
        %v695 = vld [vmem:[%s685 + $0x48] sm:$0xff]
        %v696 = vld [vmem:[%s685 + $0x50] sm:$0xff]
        %v697 = vld [vmem:[%s685 + $0x58] sm:$0xff]
        %v698 = vld [vmem:[%s685 + $0x60] sm:$0xff]
        %v699 = vld [vmem:[%s685 + $0x68] sm:$0xff]
        %v700 = vld [vmem:[%s685 + $0x70] sm:$0xff]
        %v701 = vld [vmem:[%s685 + $0x78] sm:$0xff]
        %702 = vmatprep.subr.mxu0 0.0
        %703 = vmatpush1.msra.mxu0 %v686
        %704 = vmatprep.subr.mxu0 0.0
        %705 = vmatpush1.msra.mxu0 %v687
        %706 = vmatprep.subr.mxu0 0.0
        %707 = vmatpush1.msra.mxu0 %v688
        %708 = vmatprep.subr.mxu0 0.0
        %709 = vmatpush1.msra.mxu0 %v689
        %710 = vmatprep.subr.mxu0 0.0
        %711 = vmatpush1.msra.mxu0 %v690
        %712 = vmatprep.subr.mxu0 0.0
        %713 = vmatpush1.msra.mxu0 %v691
        %714 = vmatprep.subr.mxu0 0.0
        %715 = vmatpush1.msra.mxu0 %v692
        %716 = vmatprep.subr.mxu0 0.0
        %717 = vmatpush1.msra.mxu0 %v693
        %718 = vmatprep.subr.mxu0 0.0
        %719 = vmatpush1.msra.mxu0 %v694
        %720 = vmatprep.subr.mxu0 0.0
        %721 = vmatpush1.msra.mxu0 %v695
        %722 = vmatprep.subr.mxu0 0.0
        %723 = vmatpush1.msra.mxu0 %v696
        %724 = vmatprep.subr.mxu0 0.0
        %725 = vmatpush1.msra.mxu0 %v697
        %726 = vmatprep.subr.mxu0 0.0
        %727 = vmatpush1.msra.mxu0 %v698
        %728 = vmatprep.subr.mxu0 0.0
        %729 = vmatpush1.msra.mxu0 %v699
        %730 = vmatprep.subr.mxu0 0.0
        %731 = vmatpush1.msra.mxu0 %v700
        %732 = vmatprep.subr.mxu0 0.0
        %733 = vmatpush1.msra.mxu0 %v701
        %734 = vmatprep.subr.mxu0 0.0
        %735 = vmatpush1.msra.mxu0 0.0
        %736 = vmatprep.subr.mxu0 0.0
        %737 = vmatpush1.msra.mxu0 0.0
        %738 = vmatprep.subr.mxu0 0.0
        %739 = vmatpush1.msra.mxu0 0.0
        %740 = vmatprep.subr.mxu0 0.0
        %741 = vmatpush1.msra.mxu0 0.0
        %742 = vmatprep.subr.mxu0 0.0
        %743 = vmatpush1.msra.mxu0 0.0
        %744 = vmatprep.subr.mxu0 0.0
        %745 = vmatpush1.msra.mxu0 0.0
        %746 = vmatprep.subr.mxu0 0.0
        %747 = vmatpush1.msra.mxu0 0.0
        %748 = vmatprep.subr.mxu0 0.0
        %749 = vmatpush1.msra.mxu0 0.0
        %750 = vmatprep.subr.mxu0 0.0
        %751 = vmatpush1.msra.mxu0 0.0
        %752 = vmatprep.subr.mxu0 0.0
        %753 = vmatpush1.msra.mxu0 0.0
        %754 = vmatprep.subr.mxu0 0.0
        %755 = vmatpush1.msra.mxu0 0.0
        %756 = vmatprep.subr.mxu0 0.0
        %757 = vmatpush1.msra.mxu0 0.0
        %758 = vmatprep.subr.mxu0 0.0
        %759 = vmatpush1.msra.mxu0 0.0
        %760 = vmatprep.subr.mxu0 0.0
        %761 = vmatpush1.msra.mxu0 0.0
        %762 = vmatprep.subr.mxu0 0.0
        %763 = vmatpush1.msra.mxu0 0.0
        %764 = vmatprep.subr.mxu0 0.0
        %765 = vmatpush1.msra.mxu0 0.0
        %766 = vmatprep.mubr.f32.mxu0 0.0
        %767 = vmatmul.mubr.f32.gmra.mrb[0].mxu0 %v674
        %v768 = vpop.f32.mrb[0].mxu0
        %v769 = vadd.f32 0.0, %v768
        %v770 = vpop.f32.mrb[0].mxu0
        %771 = vmatprep.mubr.f32.mxu0 0.0
        %772 = vmatmul.mubr.f32.gmra.mrb[0].mxu0 %v675
        %v773 = vpop.f32.mrb[0].mxu0
        %v774 = vadd.f32 0.0, %v773
        %v775 = vpop.f32.mrb[0].mxu0
        %776 = vmatprep.mubr.f32.mxu0 0.0
        %777 = vmatmul.mubr.f32.gmra.mrb[0].mxu0 %v676
        %v778 = vpop.f32.mrb[0].mxu0
        %v779 = vadd.f32 0.0, %v778
        %v780 = vpop.f32.mrb[0].mxu0
        %781 = vmatprep.mubr.f32.mxu0 0.0
        %782 = vmatmul.mubr.f32.gmra.mrb[0].mxu0 %v677
        %v783 = vpop.f32.mrb[0].mxu0
        %v784 = vadd.f32 0.0, %v783
        %v785 = vpop.f32.mrb[0].mxu0
        %786 = vmatprep.mubr.f32.mxu0 0.0
        %787 = vmatmul.mubr.f32.gmra.mrb[0].mxu0 %v678
        %v788 = vpop.f32.mrb[0].mxu0
        %v789 = vadd.f32 0.0, %v788
        %v790 = vpop.f32.mrb[0].mxu0
        %791 = vmatprep.mubr.f32.mxu0 0.0
        %792 = vmatmul.mubr.f32.gmra.mrb[0].mxu0 %v679
        %v793 = vpop.f32.mrb[0].mxu0
        %v794 = vadd.f32 0.0, %v793
        %v795 = vpop.f32.mrb[0].mxu0
        %796 = vmatprep.mubr.f32.mxu0 0.0
        %797 = vmatmul.mubr.f32.gmra.mrb[0].mxu0 %v680
        %v798 = vpop.f32.mrb[0].mxu0
        %v799 = vadd.f32 0.0, %v798
        %v800 = vpop.f32.mrb[0].mxu0
        %801 = vmatprep.mubr.f32.mxu0 0.0
        %802 = vmatmul.mubr.f32.gmra.mrb[0].mxu0 %v681
        %v803 = vpop.f32.mrb[0].mxu0
        %v804 = vadd.f32 0.0, %v803
        %v805 = vpop.f32.mrb[0].mxu0
        %806 = vmatprep.mubr.f32.mxu0 0.0
        %807 = vmatmul.mubr.f32.gmra.mrb[0].mxu0 %v682
        %v808 = vpop.f32.mrb[0].mxu0
        %v809 = vadd.f32 0.0, %v808
        %v810 = vpop.f32.mrb[0].mxu0
        %811 = vmatprep.mubr.f32.mxu0 0.0
        %812 = vmatmul.mubr.f32.gmra.mrb[0].mxu0 %v683
        %v813 = vpop.f32.mrb[0].mxu0
        %v814 = vadd.f32 0.0, %v813
        %v815 = vpop.f32.mrb[0].mxu0
        %816 = vdwg.mxu0
        %v817 = vadd.f32 %v661, %v769
        %v818 = vadd.f32 %v662, %v774
        %v819 = vadd.f32 %v663, %v779
        %v820 = vadd.f32 %v664, %v784
        %v821 = vadd.f32 %v665, %v789
        %v822 = vadd.f32 %v666, %v794
        %v823 = vadd.f32 %v667, %v799
        %v824 = vadd.f32 %v668, %v804
        %v825 = vadd.f32 %v669, %v809
        %v826 = vadd.f32 %v670, %v814
        %s827 = scalar_lea.vmem %s1, 512
        %v828 = vld [vmem:[%s827] sm:$0xff]
        %v829 = vld [vmem:[%s827 + $0x8] sm:$0xff]
        %v830 = vld [vmem:[%s827 + $0x10] sm:$0xff]
        %v831 = vld [vmem:[%s827 + $0x18] sm:$0xff]
        %v832 = vld [vmem:[%s827 + $0x20] sm:$0xff]
        %v833 = vld [vmem:[%s827 + $0x28] sm:$0xff]
        %v834 = vld [vmem:[%s827 + $0x30] sm:$0xff]
        %v835 = vld [vmem:[%s827 + $0x38] sm:$0xff]
        %v836 = vld [vmem:[%s827 + $0x40] sm:$0xff]
        %v837 = vld [vmem:[%s827 + $0x48] sm:$0xff]
        %v838 = vld [vmem:[%s827 + $0x50] sm:$0xff]
        %v839 = vld [vmem:[%s827 + $0x58] sm:$0xff]
        %v840 = vld [vmem:[%s827 + $0x60] sm:$0xff]
        %v841 = vld [vmem:[%s827 + $0x68] sm:$0xff]
        %v842 = vld [vmem:[%s827 + $0x70] sm:$0xff]
        %v843 = vld [vmem:[%s827 + $0x78] sm:$0xff]
        %v855 = vrot.slane %v674, 1
        %v856 = vrot.slane %v675, 1
        %v857 = vsel %vm235, %v855, %v856
        %v858 = vrot.slane %v676, 1
        %v859 = vsel %vm235, %v856, %v858
        %v860 = vrot.slane %v677, 1
        %v861 = vsel %vm235, %v858, %v860
        %v862 = vrot.slane %v678, 1
        %v863 = vsel %vm235, %v860, %v862
        %v864 = vrot.slane %v679, 1
        %v865 = vsel %vm235, %v862, %v864
        %v866 = vrot.slane %v680, 1
        %v867 = vsel %vm235, %v864, %v866
        %v868 = vrot.slane %v681, 1
        %v869 = vsel %vm235, %v866, %v868
        %v870 = vrot.slane %v682, 1
        %v871 = vsel %vm235, %v868, %v870
        %v872 = vrot.slane %v683, 1
        %v873 = vsel %vm235, %v870, %v872
        %v874 = vrot.slane %v684, 1
        %v875 = vsel %vm235, %v872, %v874
        %886 = vmatprep.subr.mxu0 0.0
        %887 = vmatpush1.msra.mxu0 %v828
        %888 = vmatprep.subr.mxu0 0.0
        %889 = vmatpush1.msra.mxu0 %v829
        %890 = vmatprep.subr.mxu0 0.0
        %891 = vmatpush1.msra.mxu0 %v830
        %892 = vmatprep.subr.mxu0 0.0
        %893 = vmatpush1.msra.mxu0 %v831
        %894 = vmatprep.subr.mxu0 0.0
        %895 = vmatpush1.msra.mxu0 %v832
        %896 = vmatprep.subr.mxu0 0.0
        %897 = vmatpush1.msra.mxu0 %v833
        %898 = vmatprep.subr.mxu0 0.0
        %899 = vmatpush1.msra.mxu0 %v834
        %900 = vmatprep.subr.mxu0 0.0
        %901 = vmatpush1.msra.mxu0 %v835
        %902 = vmatprep.subr.mxu0 0.0
        %903 = vmatpush1.msra.mxu0 %v836
        %904 = vmatprep.subr.mxu0 0.0
        %905 = vmatpush1.msra.mxu0 %v837
        %906 = vmatprep.subr.mxu0 0.0
        %907 = vmatpush1.msra.mxu0 %v838
        %908 = vmatprep.subr.mxu0 0.0
        %909 = vmatpush1.msra.mxu0 %v839
        %910 = vmatprep.subr.mxu0 0.0
        %911 = vmatpush1.msra.mxu0 %v840
        %912 = vmatprep.subr.mxu0 0.0
        %913 = vmatpush1.msra.mxu0 %v841
        %914 = vmatprep.subr.mxu0 0.0
        %915 = vmatpush1.msra.mxu0 %v842
        %916 = vmatprep.subr.mxu0 0.0
        %917 = vmatpush1.msra.mxu0 %v843
        %918 = vmatprep.subr.mxu0 0.0
        %919 = vmatpush1.msra.mxu0 0.0
        %920 = vmatprep.subr.mxu0 0.0
        %921 = vmatpush1.msra.mxu0 0.0
        %922 = vmatprep.subr.mxu0 0.0
        %923 = vmatpush1.msra.mxu0 0.0
        %924 = vmatprep.subr.mxu0 0.0
        %925 = vmatpush1.msra.mxu0 0.0
        %926 = vmatprep.subr.mxu0 0.0
        %927 = vmatpush1.msra.mxu0 0.0
        %928 = vmatprep.subr.mxu0 0.0
        %929 = vmatpush1.msra.mxu0 0.0
        %930 = vmatprep.subr.mxu0 0.0
        %931 = vmatpush1.msra.mxu0 0.0
        %932 = vmatprep.subr.mxu0 0.0
        %933 = vmatpush1.msra.mxu0 0.0
        %934 = vmatprep.subr.mxu0 0.0
        %935 = vmatpush1.msra.mxu0 0.0
        %936 = vmatprep.subr.mxu0 0.0
        %937 = vmatpush1.msra.mxu0 0.0
        %938 = vmatprep.subr.mxu0 0.0
        %939 = vmatpush1.msra.mxu0 0.0
        %940 = vmatprep.subr.mxu0 0.0
        %941 = vmatpush1.msra.mxu0 0.0
        %942 = vmatprep.subr.mxu0 0.0
        %943 = vmatpush1.msra.mxu0 0.0
        %944 = vmatprep.subr.mxu0 0.0
        %945 = vmatpush1.msra.mxu0 0.0
        %946 = vmatprep.subr.mxu0 0.0
        %947 = vmatpush1.msra.mxu0 0.0
        %948 = vmatprep.subr.mxu0 0.0
        %949 = vmatpush1.msra.mxu0 0.0
        %950 = vmatprep.mubr.f32.mxu0 0.0
        %951 = vmatmul.mubr.f32.gmra.mrb[0].mxu0 %v857
        %v952 = vpop.f32.mrb[0].mxu0
        %v953 = vadd.f32 0.0, %v952
        %v954 = vpop.f32.mrb[0].mxu0
        %955 = vmatprep.mubr.f32.mxu0 0.0
        %956 = vmatmul.mubr.f32.gmra.mrb[0].mxu0 %v859
        %v957 = vpop.f32.mrb[0].mxu0
        %v958 = vadd.f32 0.0, %v957
        %v959 = vpop.f32.mrb[0].mxu0
        %960 = vmatprep.mubr.f32.mxu0 0.0
        %961 = vmatmul.mubr.f32.gmra.mrb[0].mxu0 %v861
        %v962 = vpop.f32.mrb[0].mxu0
        %v963 = vadd.f32 0.0, %v962
        %v964 = vpop.f32.mrb[0].mxu0
        %965 = vmatprep.mubr.f32.mxu0 0.0
        %966 = vmatmul.mubr.f32.gmra.mrb[0].mxu0 %v863
        %v967 = vpop.f32.mrb[0].mxu0
        %v968 = vadd.f32 0.0, %v967
        %v969 = vpop.f32.mrb[0].mxu0
        %970 = vmatprep.mubr.f32.mxu0 0.0
        %971 = vmatmul.mubr.f32.gmra.mrb[0].mxu0 %v865
        %v972 = vpop.f32.mrb[0].mxu0
        %v973 = vadd.f32 0.0, %v972
        %v974 = vpop.f32.mrb[0].mxu0
        %975 = vmatprep.mubr.f32.mxu0 0.0
        %976 = vmatmul.mubr.f32.gmra.mrb[0].mxu0 %v867
        %v977 = vpop.f32.mrb[0].mxu0
        %v978 = vadd.f32 0.0, %v977
        %v979 = vpop.f32.mrb[0].mxu0
        %980 = vmatprep.mubr.f32.mxu0 0.0
        %981 = vmatmul.mubr.f32.gmra.mrb[0].mxu0 %v869
        %v982 = vpop.f32.mrb[0].mxu0
        %v983 = vadd.f32 0.0, %v982
        %v984 = vpop.f32.mrb[0].mxu0
        %985 = vmatprep.mubr.f32.mxu0 0.0
        %986 = vmatmul.mubr.f32.gmra.mrb[0].mxu0 %v871
        %v987 = vpop.f32.mrb[0].mxu0
        %v988 = vadd.f32 0.0, %v987
        %v989 = vpop.f32.mrb[0].mxu0
        %990 = vmatprep.mubr.f32.mxu0 0.0
        %991 = vmatmul.mubr.f32.gmra.mrb[0].mxu0 %v873
        %v992 = vpop.f32.mrb[0].mxu0
        %v993 = vadd.f32 0.0, %v992
        %v994 = vpop.f32.mrb[0].mxu0
        %995 = vmatprep.mubr.f32.mxu0 0.0
        %996 = vmatmul.mubr.f32.gmra.mrb[0].mxu0 %v875
        %v997 = vpop.f32.mrb[0].mxu0
        %v998 = vadd.f32 0.0, %v997
        %v999 = vpop.f32.mrb[0].mxu0
        %1000 = vdwg.mxu0
        %v1001 = vadd.f32 %v817, %v953
        %v1002 = vadd.f32 %v818, %v958
        %v1003 = vadd.f32 %v819, %v963
        %v1004 = vadd.f32 %v820, %v968
        %v1005 = vadd.f32 %v821, %v973
        %v1006 = vadd.f32 %v822, %v978
        %v1007 = vadd.f32 %v823, %v983
        %v1008 = vadd.f32 %v824, %v988
        %v1009 = vadd.f32 %v825, %v993
        %v1010 = vadd.f32 %v826, %v998
        %s1011 = scalar_lea.vmem %s1, 640
        %v1012 = vld [vmem:[%s1011] sm:$0xff]
        %v1013 = vld [vmem:[%s1011 + $0x8] sm:$0xff]
        %v1014 = vld [vmem:[%s1011 + $0x10] sm:$0xff]
        %v1015 = vld [vmem:[%s1011 + $0x18] sm:$0xff]
        %v1016 = vld [vmem:[%s1011 + $0x20] sm:$0xff]
        %v1017 = vld [vmem:[%s1011 + $0x28] sm:$0xff]
        %v1018 = vld [vmem:[%s1011 + $0x30] sm:$0xff]
        %v1019 = vld [vmem:[%s1011 + $0x38] sm:$0xff]
        %v1020 = vld [vmem:[%s1011 + $0x40] sm:$0xff]
        %v1021 = vld [vmem:[%s1011 + $0x48] sm:$0xff]
        %v1022 = vld [vmem:[%s1011 + $0x50] sm:$0xff]
        %v1023 = vld [vmem:[%s1011 + $0x58] sm:$0xff]
        %v1024 = vld [vmem:[%s1011 + $0x60] sm:$0xff]
        %v1025 = vld [vmem:[%s1011 + $0x68] sm:$0xff]
        %v1026 = vld [vmem:[%s1011 + $0x70] sm:$0xff]
        %v1027 = vld [vmem:[%s1011 + $0x78] sm:$0xff]
        %v1028 = vrot.slane %v674, 2
        %v1029 = vrot.slane %v675, 2
        %v1030 = vsel %vm514, %v1028, %v1029
        %v1031 = vrot.slane %v676, 2
        %v1032 = vsel %vm514, %v1029, %v1031
        %v1033 = vrot.slane %v677, 2
        %v1034 = vsel %vm514, %v1031, %v1033
        %v1035 = vrot.slane %v678, 2
        %v1036 = vsel %vm514, %v1033, %v1035
        %v1037 = vrot.slane %v679, 2
        %v1038 = vsel %vm514, %v1035, %v1037
        %v1039 = vrot.slane %v680, 2
        %v1040 = vsel %vm514, %v1037, %v1039
        %v1041 = vrot.slane %v681, 2
        %v1042 = vsel %vm514, %v1039, %v1041
        %v1043 = vrot.slane %v682, 2
        %v1044 = vsel %vm514, %v1041, %v1043
        %v1045 = vrot.slane %v683, 2
        %v1046 = vsel %vm514, %v1043, %v1045
        %v1047 = vrot.slane %v684, 2
        %v1048 = vsel %vm514, %v1045, %v1047
        %1059 = vmatprep.subr.mxu0 0.0
        %1060 = vmatpush1.msra.mxu0 %v1012
        %1061 = vmatprep.subr.mxu0 0.0
        %1062 = vmatpush1.msra.mxu0 %v1013
        %1063 = vmatprep.subr.mxu0 0.0
        %1064 = vmatpush1.msra.mxu0 %v1014
        %1065 = vmatprep.subr.mxu0 0.0
        %1066 = vmatpush1.msra.mxu0 %v1015
        %1067 = vmatprep.subr.mxu0 0.0
        %1068 = vmatpush1.msra.mxu0 %v1016
        %1069 = vmatprep.subr.mxu0 0.0
        %1070 = vmatpush1.msra.mxu0 %v1017
        %1071 = vmatprep.subr.mxu0 0.0
        %1072 = vmatpush1.msra.mxu0 %v1018
        %1073 = vmatprep.subr.mxu0 0.0
        %1074 = vmatpush1.msra.mxu0 %v1019
        %1075 = vmatprep.subr.mxu0 0.0
        %1076 = vmatpush1.msra.mxu0 %v1020
        %1077 = vmatprep.subr.mxu0 0.0
        %1078 = vmatpush1.msra.mxu0 %v1021
        %1079 = vmatprep.subr.mxu0 0.0
        %1080 = vmatpush1.msra.mxu0 %v1022
        %1081 = vmatprep.subr.mxu0 0.0
        %1082 = vmatpush1.msra.mxu0 %v1023
        %1083 = vmatprep.subr.mxu0 0.0
        %1084 = vmatpush1.msra.mxu0 %v1024
        %1085 = vmatprep.subr.mxu0 0.0
        %1086 = vmatpush1.msra.mxu0 %v1025
        %1087 = vmatprep.subr.mxu0 0.0
        %1088 = vmatpush1.msra.mxu0 %v1026
        %1089 = vmatprep.subr.mxu0 0.0
        %1090 = vmatpush1.msra.mxu0 %v1027
        %1091 = vmatprep.subr.mxu0 0.0
        %1092 = vmatpush1.msra.mxu0 0.0
        %1093 = vmatprep.subr.mxu0 0.0
        %1094 = vmatpush1.msra.mxu0 0.0
        %1095 = vmatprep.subr.mxu0 0.0
        %1096 = vmatpush1.msra.mxu0 0.0
        %1097 = vmatprep.subr.mxu0 0.0
        %1098 = vmatpush1.msra.mxu0 0.0
        %1099 = vmatprep.subr.mxu0 0.0
        %1100 = vmatpush1.msra.mxu0 0.0
        %1101 = vmatprep.subr.mxu0 0.0
        %1102 = vmatpush1.msra.mxu0 0.0
        %1103 = vmatprep.subr.mxu0 0.0
        %1104 = vmatpush1.msra.mxu0 0.0
        %1105 = vmatprep.subr.mxu0 0.0
        %1106 = vmatpush1.msra.mxu0 0.0
        %1107 = vmatprep.subr.mxu0 0.0
        %1108 = vmatpush1.msra.mxu0 0.0
        %1109 = vmatprep.subr.mxu0 0.0
        %1110 = vmatpush1.msra.mxu0 0.0
        %1111 = vmatprep.subr.mxu0 0.0
        %1112 = vmatpush1.msra.mxu0 0.0
        %1113 = vmatprep.subr.mxu0 0.0
        %1114 = vmatpush1.msra.mxu0 0.0
        %1115 = vmatprep.subr.mxu0 0.0
        %1116 = vmatpush1.msra.mxu0 0.0
        %1117 = vmatprep.subr.mxu0 0.0
        %1118 = vmatpush1.msra.mxu0 0.0
        %1119 = vmatprep.subr.mxu0 0.0
        %1120 = vmatpush1.msra.mxu0 0.0
        %1121 = vmatprep.subr.mxu0 0.0
        %1122 = vmatpush1.msra.mxu0 0.0
        %1123 = vmatprep.mubr.f32.mxu0 0.0
        %1124 = vmatmul.mubr.f32.gmra.mrb[0].mxu0 %v1030
        %v1125 = vpop.f32.mrb[0].mxu0
        %v1126 = vadd.f32 0.0, %v1125
        %v1127 = vpop.f32.mrb[0].mxu0
        %1128 = vmatprep.mubr.f32.mxu0 0.0
        %1129 = vmatmul.mubr.f32.gmra.mrb[0].mxu0 %v1032
        %v1130 = vpop.f32.mrb[0].mxu0
        %v1131 = vadd.f32 0.0, %v1130
        %v1132 = vpop.f32.mrb[0].mxu0
        %1133 = vmatprep.mubr.f32.mxu0 0.0
        %1134 = vmatmul.mubr.f32.gmra.mrb[0].mxu0 %v1034
        %v1135 = vpop.f32.mrb[0].mxu0
        %v1136 = vadd.f32 0.0, %v1135
        %v1137 = vpop.f32.mrb[0].mxu0
        %1138 = vmatprep.mubr.f32.mxu0 0.0
        %1139 = vmatmul.mubr.f32.gmra.mrb[0].mxu0 %v1036
        %v1140 = vpop.f32.mrb[0].mxu0
        %v1141 = vadd.f32 0.0, %v1140
        %v1142 = vpop.f32.mrb[0].mxu0
        %1143 = vmatprep.mubr.f32.mxu0 0.0
        %1144 = vmatmul.mubr.f32.gmra.mrb[0].mxu0 %v1038
        %v1145 = vpop.f32.mrb[0].mxu0
        %v1146 = vadd.f32 0.0, %v1145
        %v1147 = vpop.f32.mrb[0].mxu0
        %1148 = vmatprep.mubr.f32.mxu0 0.0
        %1149 = vmatmul.mubr.f32.gmra.mrb[0].mxu0 %v1040
        %v1150 = vpop.f32.mrb[0].mxu0
        %v1151 = vadd.f32 0.0, %v1150
        %v1152 = vpop.f32.mrb[0].mxu0
        %1153 = vmatprep.mubr.f32.mxu0 0.0
        %1154 = vmatmul.mubr.f32.gmra.mrb[0].mxu0 %v1042
        %v1155 = vpop.f32.mrb[0].mxu0
        %v1156 = vadd.f32 0.0, %v1155
        %v1157 = vpop.f32.mrb[0].mxu0
        %1158 = vmatprep.mubr.f32.mxu0 0.0
        %1159 = vmatmul.mubr.f32.gmra.mrb[0].mxu0 %v1044
        %v1160 = vpop.f32.mrb[0].mxu0
        %v1161 = vadd.f32 0.0, %v1160
        %v1162 = vpop.f32.mrb[0].mxu0
        %1163 = vmatprep.mubr.f32.mxu0 0.0
        %1164 = vmatmul.mubr.f32.gmra.mrb[0].mxu0 %v1046
        %v1165 = vpop.f32.mrb[0].mxu0
        %v1166 = vadd.f32 0.0, %v1165
        %v1167 = vpop.f32.mrb[0].mxu0
        %1168 = vmatprep.mubr.f32.mxu0 0.0
        %1169 = vmatmul.mubr.f32.gmra.mrb[0].mxu0 %v1048
        %v1170 = vpop.f32.mrb[0].mxu0
        %v1171 = vadd.f32 0.0, %v1170
        %v1172 = vpop.f32.mrb[0].mxu0
        %1173 = vdwg.mxu0
        %v1174 = vadd.f32 %v1001, %v1126
        %v1175 = vadd.f32 %v1002, %v1131
        %v1176 = vadd.f32 %v1003, %v1136
        %v1177 = vadd.f32 %v1004, %v1141
        %v1178 = vadd.f32 %v1005, %v1146
        %v1179 = vadd.f32 %v1006, %v1151
        %v1180 = vadd.f32 %v1007, %v1156
        %v1181 = vadd.f32 %v1008, %v1161
        %v1182 = vadd.f32 %v1009, %v1166
        %v1183 = vadd.f32 %v1010, %v1171
        %s1184 = sadd.s32 %s173, 2
        %s1185 = smul.u32 %s1184, 88
        %s1186 = scalar_lea.vmem %s165, %s1185
        %v1187 = vld [vmem:[%s1186] sm:$0xff]
        %v1188 = vld [vmem:[%s1186 + $0x8] sm:$0xff]
        %v1189 = vld [vmem:[%s1186 + $0x10] sm:$0xff]
        %v1190 = vld [vmem:[%s1186 + $0x18] sm:$0xff]
        %v1191 = vld [vmem:[%s1186 + $0x20] sm:$0xff]
        %v1192 = vld [vmem:[%s1186 + $0x28] sm:$0xff]
        %v1193 = vld [vmem:[%s1186 + $0x30] sm:$0xff]
        %v1194 = vld [vmem:[%s1186 + $0x38] sm:$0xff]
        %v1195 = vld [vmem:[%s1186 + $0x40] sm:$0xff]
        %v1196 = vld [vmem:[%s1186 + $0x48] sm:$0xff]
        %v1197 = vld [vmem:[%s1186 + $0x50] sm:$0x3]
        %s1198 = scalar_lea.vmem %s1, 768
        %v1199 = vld [vmem:[%s1198] sm:$0xff]
        %v1200 = vld [vmem:[%s1198 + $0x8] sm:$0xff]
        %v1201 = vld [vmem:[%s1198 + $0x10] sm:$0xff]
        %v1202 = vld [vmem:[%s1198 + $0x18] sm:$0xff]
        %v1203 = vld [vmem:[%s1198 + $0x20] sm:$0xff]
        %v1204 = vld [vmem:[%s1198 + $0x28] sm:$0xff]
        %v1205 = vld [vmem:[%s1198 + $0x30] sm:$0xff]
        %v1206 = vld [vmem:[%s1198 + $0x38] sm:$0xff]
        %v1207 = vld [vmem:[%s1198 + $0x40] sm:$0xff]
        %v1208 = vld [vmem:[%s1198 + $0x48] sm:$0xff]
        %v1209 = vld [vmem:[%s1198 + $0x50] sm:$0xff]
        %v1210 = vld [vmem:[%s1198 + $0x58] sm:$0xff]
        %v1211 = vld [vmem:[%s1198 + $0x60] sm:$0xff]
        %v1212 = vld [vmem:[%s1198 + $0x68] sm:$0xff]
        %v1213 = vld [vmem:[%s1198 + $0x70] sm:$0xff]
        %v1214 = vld [vmem:[%s1198 + $0x78] sm:$0xff]
        %1215 = vmatprep.subr.mxu0 0.0
        %1216 = vmatpush1.msra.mxu0 %v1199
        %1217 = vmatprep.subr.mxu0 0.0
        %1218 = vmatpush1.msra.mxu0 %v1200
        %1219 = vmatprep.subr.mxu0 0.0
        %1220 = vmatpush1.msra.mxu0 %v1201
        %1221 = vmatprep.subr.mxu0 0.0
        %1222 = vmatpush1.msra.mxu0 %v1202
        %1223 = vmatprep.subr.mxu0 0.0
        %1224 = vmatpush1.msra.mxu0 %v1203
        %1225 = vmatprep.subr.mxu0 0.0
        %1226 = vmatpush1.msra.mxu0 %v1204
        %1227 = vmatprep.subr.mxu0 0.0
        %1228 = vmatpush1.msra.mxu0 %v1205
        %1229 = vmatprep.subr.mxu0 0.0
        %1230 = vmatpush1.msra.mxu0 %v1206
        %1231 = vmatprep.subr.mxu0 0.0
        %1232 = vmatpush1.msra.mxu0 %v1207
        %1233 = vmatprep.subr.mxu0 0.0
        %1234 = vmatpush1.msra.mxu0 %v1208
        %1235 = vmatprep.subr.mxu0 0.0
        %1236 = vmatpush1.msra.mxu0 %v1209
        %1237 = vmatprep.subr.mxu0 0.0
        %1238 = vmatpush1.msra.mxu0 %v1210
        %1239 = vmatprep.subr.mxu0 0.0
        %1240 = vmatpush1.msra.mxu0 %v1211
        %1241 = vmatprep.subr.mxu0 0.0
        %1242 = vmatpush1.msra.mxu0 %v1212
        %1243 = vmatprep.subr.mxu0 0.0
        %1244 = vmatpush1.msra.mxu0 %v1213
        %1245 = vmatprep.subr.mxu0 0.0
        %1246 = vmatpush1.msra.mxu0 %v1214
        %1247 = vmatprep.subr.mxu0 0.0
        %1248 = vmatpush1.msra.mxu0 0.0
        %1249 = vmatprep.subr.mxu0 0.0
        %1250 = vmatpush1.msra.mxu0 0.0
        %1251 = vmatprep.subr.mxu0 0.0
        %1252 = vmatpush1.msra.mxu0 0.0
        %1253 = vmatprep.subr.mxu0 0.0
        %1254 = vmatpush1.msra.mxu0 0.0
        %1255 = vmatprep.subr.mxu0 0.0
        %1256 = vmatpush1.msra.mxu0 0.0
        %1257 = vmatprep.subr.mxu0 0.0
        %1258 = vmatpush1.msra.mxu0 0.0
        %1259 = vmatprep.subr.mxu0 0.0
        %1260 = vmatpush1.msra.mxu0 0.0
        %1261 = vmatprep.subr.mxu0 0.0
        %1262 = vmatpush1.msra.mxu0 0.0
        %1263 = vmatprep.subr.mxu0 0.0
        %1264 = vmatpush1.msra.mxu0 0.0
        %1265 = vmatprep.subr.mxu0 0.0
        %1266 = vmatpush1.msra.mxu0 0.0
        %1267 = vmatprep.subr.mxu0 0.0
        %1268 = vmatpush1.msra.mxu0 0.0
        %1269 = vmatprep.subr.mxu0 0.0
        %1270 = vmatpush1.msra.mxu0 0.0
        %1271 = vmatprep.subr.mxu0 0.0
        %1272 = vmatpush1.msra.mxu0 0.0
        %1273 = vmatprep.subr.mxu0 0.0
        %1274 = vmatpush1.msra.mxu0 0.0
        %1275 = vmatprep.subr.mxu0 0.0
        %1276 = vmatpush1.msra.mxu0 0.0
        %1277 = vmatprep.subr.mxu0 0.0
        %1278 = vmatpush1.msra.mxu0 0.0
        %1279 = vmatprep.mubr.f32.mxu0 0.0
        %1280 = vmatmul.mubr.f32.gmra.mrb[0].mxu0 %v1187
        %v1281 = vpop.f32.mrb[0].mxu0
        %v1282 = vadd.f32 0.0, %v1281
        %v1283 = vpop.f32.mrb[0].mxu0
        %1284 = vmatprep.mubr.f32.mxu0 0.0
        %1285 = vmatmul.mubr.f32.gmra.mrb[0].mxu0 %v1188
        %v1286 = vpop.f32.mrb[0].mxu0
        %v1287 = vadd.f32 0.0, %v1286
        %v1288 = vpop.f32.mrb[0].mxu0
        %1289 = vmatprep.mubr.f32.mxu0 0.0
        %1290 = vmatmul.mubr.f32.gmra.mrb[0].mxu0 %v1189
        %v1291 = vpop.f32.mrb[0].mxu0
        %v1292 = vadd.f32 0.0, %v1291
        %v1293 = vpop.f32.mrb[0].mxu0
        %1294 = vmatprep.mubr.f32.mxu0 0.0
        %1295 = vmatmul.mubr.f32.gmra.mrb[0].mxu0 %v1190
        %v1296 = vpop.f32.mrb[0].mxu0
        %v1297 = vadd.f32 0.0, %v1296
        %v1298 = vpop.f32.mrb[0].mxu0
        %1299 = vmatprep.mubr.f32.mxu0 0.0
        %1300 = vmatmul.mubr.f32.gmra.mrb[0].mxu0 %v1191
        %v1301 = vpop.f32.mrb[0].mxu0
        %v1302 = vadd.f32 0.0, %v1301
        %v1303 = vpop.f32.mrb[0].mxu0
        %1304 = vmatprep.mubr.f32.mxu0 0.0
        %1305 = vmatmul.mubr.f32.gmra.mrb[0].mxu0 %v1192
        %v1306 = vpop.f32.mrb[0].mxu0
        %v1307 = vadd.f32 0.0, %v1306
        %v1308 = vpop.f32.mrb[0].mxu0
        %1309 = vmatprep.mubr.f32.mxu0 0.0
        %1310 = vmatmul.mubr.f32.gmra.mrb[0].mxu0 %v1193
        %v1311 = vpop.f32.mrb[0].mxu0
        %v1312 = vadd.f32 0.0, %v1311
        %v1313 = vpop.f32.mrb[0].mxu0
        %1314 = vmatprep.mubr.f32.mxu0 0.0
        %1315 = vmatmul.mubr.f32.gmra.mrb[0].mxu0 %v1194
        %v1316 = vpop.f32.mrb[0].mxu0
        %v1317 = vadd.f32 0.0, %v1316
        %v1318 = vpop.f32.mrb[0].mxu0
        %1319 = vmatprep.mubr.f32.mxu0 0.0
        %1320 = vmatmul.mubr.f32.gmra.mrb[0].mxu0 %v1195
        %v1321 = vpop.f32.mrb[0].mxu0
        %v1322 = vadd.f32 0.0, %v1321
        %v1323 = vpop.f32.mrb[0].mxu0
        %1324 = vmatprep.mubr.f32.mxu0 0.0
        %1325 = vmatmul.mubr.f32.gmra.mrb[0].mxu0 %v1196
        %v1326 = vpop.f32.mrb[0].mxu0
        %v1327 = vadd.f32 0.0, %v1326
        %v1328 = vpop.f32.mrb[0].mxu0
        %1329 = vdwg.mxu0
        %v1330 = vadd.f32 %v1174, %v1282
        %v1331 = vadd.f32 %v1175, %v1287
        %v1332 = vadd.f32 %v1176, %v1292
        %v1333 = vadd.f32 %v1177, %v1297
        %v1334 = vadd.f32 %v1178, %v1302
        %v1335 = vadd.f32 %v1179, %v1307
        %v1336 = vadd.f32 %v1180, %v1312
        %v1337 = vadd.f32 %v1181, %v1317
        %v1338 = vadd.f32 %v1182, %v1322
        %v1339 = vadd.f32 %v1183, %v1327
        %s1340 = scalar_lea.vmem %s1, 896
        %v1341 = vld [vmem:[%s1340] sm:$0xff]
        %v1342 = vld [vmem:[%s1340 + $0x8] sm:$0xff]
        %v1343 = vld [vmem:[%s1340 + $0x10] sm:$0xff]
        %v1344 = vld [vmem:[%s1340 + $0x18] sm:$0xff]
        %v1345 = vld [vmem:[%s1340 + $0x20] sm:$0xff]
        %v1346 = vld [vmem:[%s1340 + $0x28] sm:$0xff]
        %v1347 = vld [vmem:[%s1340 + $0x30] sm:$0xff]
        %v1348 = vld [vmem:[%s1340 + $0x38] sm:$0xff]
        %v1349 = vld [vmem:[%s1340 + $0x40] sm:$0xff]
        %v1350 = vld [vmem:[%s1340 + $0x48] sm:$0xff]
        %v1351 = vld [vmem:[%s1340 + $0x50] sm:$0xff]
        %v1352 = vld [vmem:[%s1340 + $0x58] sm:$0xff]
        %v1353 = vld [vmem:[%s1340 + $0x60] sm:$0xff]
        %v1354 = vld [vmem:[%s1340 + $0x68] sm:$0xff]
        %v1355 = vld [vmem:[%s1340 + $0x70] sm:$0xff]
        %v1356 = vld [vmem:[%s1340 + $0x78] sm:$0xff]
        %v1368 = vrot.slane %v1187, 1
        %v1369 = vrot.slane %v1188, 1
        %v1370 = vsel %vm235, %v1368, %v1369
        %v1371 = vrot.slane %v1189, 1
        %v1372 = vsel %vm235, %v1369, %v1371
        %v1373 = vrot.slane %v1190, 1
        %v1374 = vsel %vm235, %v1371, %v1373
        %v1375 = vrot.slane %v1191, 1
        %v1376 = vsel %vm235, %v1373, %v1375
        %v1377 = vrot.slane %v1192, 1
        %v1378 = vsel %vm235, %v1375, %v1377
        %v1379 = vrot.slane %v1193, 1
        %v1380 = vsel %vm235, %v1377, %v1379
        %v1381 = vrot.slane %v1194, 1
        %v1382 = vsel %vm235, %v1379, %v1381
        %v1383 = vrot.slane %v1195, 1
        %v1384 = vsel %vm235, %v1381, %v1383
        %v1385 = vrot.slane %v1196, 1
        %v1386 = vsel %vm235, %v1383, %v1385
        %v1387 = vrot.slane %v1197, 1
        %v1388 = vsel %vm235, %v1385, %v1387
        %1399 = vmatprep.subr.mxu0 0.0
        %1400 = vmatpush1.msra.mxu0 %v1341
        %1401 = vmatprep.subr.mxu0 0.0
        %1402 = vmatpush1.msra.mxu0 %v1342
        %1403 = vmatprep.subr.mxu0 0.0
        %1404 = vmatpush1.msra.mxu0 %v1343
        %1405 = vmatprep.subr.mxu0 0.0
        %1406 = vmatpush1.msra.mxu0 %v1344
        %1407 = vmatprep.subr.mxu0 0.0
        %1408 = vmatpush1.msra.mxu0 %v1345
        %1409 = vmatprep.subr.mxu0 0.0
        %1410 = vmatpush1.msra.mxu0 %v1346
        %1411 = vmatprep.subr.mxu0 0.0
        %1412 = vmatpush1.msra.mxu0 %v1347
        %1413 = vmatprep.subr.mxu0 0.0
        %1414 = vmatpush1.msra.mxu0 %v1348
        %1415 = vmatprep.subr.mxu0 0.0
        %1416 = vmatpush1.msra.mxu0 %v1349
        %1417 = vmatprep.subr.mxu0 0.0
        %1418 = vmatpush1.msra.mxu0 %v1350
        %1419 = vmatprep.subr.mxu0 0.0
        %1420 = vmatpush1.msra.mxu0 %v1351
        %1421 = vmatprep.subr.mxu0 0.0
        %1422 = vmatpush1.msra.mxu0 %v1352
        %1423 = vmatprep.subr.mxu0 0.0
        %1424 = vmatpush1.msra.mxu0 %v1353
        %1425 = vmatprep.subr.mxu0 0.0
        %1426 = vmatpush1.msra.mxu0 %v1354
        %1427 = vmatprep.subr.mxu0 0.0
        %1428 = vmatpush1.msra.mxu0 %v1355
        %1429 = vmatprep.subr.mxu0 0.0
        %1430 = vmatpush1.msra.mxu0 %v1356
        %1431 = vmatprep.subr.mxu0 0.0
        %1432 = vmatpush1.msra.mxu0 0.0
        %1433 = vmatprep.subr.mxu0 0.0
        %1434 = vmatpush1.msra.mxu0 0.0
        %1435 = vmatprep.subr.mxu0 0.0
        %1436 = vmatpush1.msra.mxu0 0.0
        %1437 = vmatprep.subr.mxu0 0.0
        %1438 = vmatpush1.msra.mxu0 0.0
        %1439 = vmatprep.subr.mxu0 0.0
        %1440 = vmatpush1.msra.mxu0 0.0
        %1441 = vmatprep.subr.mxu0 0.0
        %1442 = vmatpush1.msra.mxu0 0.0
        %1443 = vmatprep.subr.mxu0 0.0
        %1444 = vmatpush1.msra.mxu0 0.0
        %1445 = vmatprep.subr.mxu0 0.0
        %1446 = vmatpush1.msra.mxu0 0.0
        %1447 = vmatprep.subr.mxu0 0.0
        %1448 = vmatpush1.msra.mxu0 0.0
        %1449 = vmatprep.subr.mxu0 0.0
        %1450 = vmatpush1.msra.mxu0 0.0
        %1451 = vmatprep.subr.mxu0 0.0
        %1452 = vmatpush1.msra.mxu0 0.0
        %1453 = vmatprep.subr.mxu0 0.0
        %1454 = vmatpush1.msra.mxu0 0.0
        %1455 = vmatprep.subr.mxu0 0.0
        %1456 = vmatpush1.msra.mxu0 0.0
        %1457 = vmatprep.subr.mxu0 0.0
        %1458 = vmatpush1.msra.mxu0 0.0
        %1459 = vmatprep.subr.mxu0 0.0
        %1460 = vmatpush1.msra.mxu0 0.0
        %1461 = vmatprep.subr.mxu0 0.0
        %1462 = vmatpush1.msra.mxu0 0.0
        %1463 = vmatprep.mubr.f32.mxu0 0.0
        %1464 = vmatmul.mubr.f32.gmra.mrb[0].mxu0 %v1370
        %v1465 = vpop.f32.mrb[0].mxu0
        %v1466 = vadd.f32 0.0, %v1465
        %v1467 = vpop.f32.mrb[0].mxu0
        %1468 = vmatprep.mubr.f32.mxu0 0.0
        %1469 = vmatmul.mubr.f32.gmra.mrb[0].mxu0 %v1372
        %v1470 = vpop.f32.mrb[0].mxu0
        %v1471 = vadd.f32 0.0, %v1470
        %v1472 = vpop.f32.mrb[0].mxu0
        %1473 = vmatprep.mubr.f32.mxu0 0.0
        %1474 = vmatmul.mubr.f32.gmra.mrb[0].mxu0 %v1374
        %v1475 = vpop.f32.mrb[0].mxu0
        %v1476 = vadd.f32 0.0, %v1475
        %v1477 = vpop.f32.mrb[0].mxu0
        %1478 = vmatprep.mubr.f32.mxu0 0.0
        %1479 = vmatmul.mubr.f32.gmra.mrb[0].mxu0 %v1376
        %v1480 = vpop.f32.mrb[0].mxu0
        %v1481 = vadd.f32 0.0, %v1480
        %v1482 = vpop.f32.mrb[0].mxu0
        %1483 = vmatprep.mubr.f32.mxu0 0.0
        %1484 = vmatmul.mubr.f32.gmra.mrb[0].mxu0 %v1378
        %v1485 = vpop.f32.mrb[0].mxu0
        %v1486 = vadd.f32 0.0, %v1485
        %v1487 = vpop.f32.mrb[0].mxu0
        %1488 = vmatprep.mubr.f32.mxu0 0.0
        %1489 = vmatmul.mubr.f32.gmra.mrb[0].mxu0 %v1380
        %v1490 = vpop.f32.mrb[0].mxu0
        %v1491 = vadd.f32 0.0, %v1490
        %v1492 = vpop.f32.mrb[0].mxu0
        %1493 = vmatprep.mubr.f32.mxu0 0.0
        %1494 = vmatmul.mubr.f32.gmra.mrb[0].mxu0 %v1382
        %v1495 = vpop.f32.mrb[0].mxu0
        %v1496 = vadd.f32 0.0, %v1495
        %v1497 = vpop.f32.mrb[0].mxu0
        %1498 = vmatprep.mubr.f32.mxu0 0.0
        %1499 = vmatmul.mubr.f32.gmra.mrb[0].mxu0 %v1384
        %v1500 = vpop.f32.mrb[0].mxu0
        %v1501 = vadd.f32 0.0, %v1500
        %v1502 = vpop.f32.mrb[0].mxu0
        %1503 = vmatprep.mubr.f32.mxu0 0.0
        %1504 = vmatmul.mubr.f32.gmra.mrb[0].mxu0 %v1386
        %v1505 = vpop.f32.mrb[0].mxu0
        %v1506 = vadd.f32 0.0, %v1505
        %v1507 = vpop.f32.mrb[0].mxu0
        %1508 = vmatprep.mubr.f32.mxu0 0.0
        %1509 = vmatmul.mubr.f32.gmra.mrb[0].mxu0 %v1388
        %v1510 = vpop.f32.mrb[0].mxu0
        %v1511 = vadd.f32 0.0, %v1510
        %v1512 = vpop.f32.mrb[0].mxu0
        %1513 = vdwg.mxu0
        %v1514 = vadd.f32 %v1330, %v1466
        %v1515 = vadd.f32 %v1331, %v1471
        %v1516 = vadd.f32 %v1332, %v1476
        %v1517 = vadd.f32 %v1333, %v1481
        %v1518 = vadd.f32 %v1334, %v1486
        %v1519 = vadd.f32 %v1335, %v1491
        %v1520 = vadd.f32 %v1336, %v1496
        %v1521 = vadd.f32 %v1337, %v1501
        %v1522 = vadd.f32 %v1338, %v1506
        %v1523 = vadd.f32 %v1339, %v1511
        %s1524 = scalar_lea.vmem %s1, 1024
        %v1525 = vld [vmem:[%s1524] sm:$0xff]
        %v1526 = vld [vmem:[%s1524 + $0x8] sm:$0xff]
        %v1527 = vld [vmem:[%s1524 + $0x10] sm:$0xff]
        %v1528 = vld [vmem:[%s1524 + $0x18] sm:$0xff]
        %v1529 = vld [vmem:[%s1524 + $0x20] sm:$0xff]
        %v1530 = vld [vmem:[%s1524 + $0x28] sm:$0xff]
        %v1531 = vld [vmem:[%s1524 + $0x30] sm:$0xff]
        %v1532 = vld [vmem:[%s1524 + $0x38] sm:$0xff]
        %v1533 = vld [vmem:[%s1524 + $0x40] sm:$0xff]
        %v1534 = vld [vmem:[%s1524 + $0x48] sm:$0xff]
        %v1535 = vld [vmem:[%s1524 + $0x50] sm:$0xff]
        %v1536 = vld [vmem:[%s1524 + $0x58] sm:$0xff]
        %v1537 = vld [vmem:[%s1524 + $0x60] sm:$0xff]
        %v1538 = vld [vmem:[%s1524 + $0x68] sm:$0xff]
        %v1539 = vld [vmem:[%s1524 + $0x70] sm:$0xff]
        %v1540 = vld [vmem:[%s1524 + $0x78] sm:$0xff]
        %v1541 = vrot.slane %v1187, 2
        %v1542 = vrot.slane %v1188, 2
        %v1543 = vsel %vm514, %v1541, %v1542
        %v1544 = vrot.slane %v1189, 2
        %v1545 = vsel %vm514, %v1542, %v1544
        %v1546 = vrot.slane %v1190, 2
        %v1547 = vsel %vm514, %v1544, %v1546
        %v1548 = vrot.slane %v1191, 2
        %v1549 = vsel %vm514, %v1546, %v1548
        %v1550 = vrot.slane %v1192, 2
        %v1551 = vsel %vm514, %v1548, %v1550
        %v1552 = vrot.slane %v1193, 2
        %v1553 = vsel %vm514, %v1550, %v1552
        %v1554 = vrot.slane %v1194, 2
        %v1555 = vsel %vm514, %v1552, %v1554
        %v1556 = vrot.slane %v1195, 2
        %v1557 = vsel %vm514, %v1554, %v1556
        %v1558 = vrot.slane %v1196, 2
        %v1559 = vsel %vm514, %v1556, %v1558
        %v1560 = vrot.slane %v1197, 2
        %v1561 = vsel %vm514, %v1558, %v1560
        %1572 = vmatprep.subr.mxu0 0.0
        %1573 = vmatpush1.msra.mxu0 %v1525
        %1574 = vmatprep.subr.mxu0 0.0
        %1575 = vmatpush1.msra.mxu0 %v1526
        %1576 = vmatprep.subr.mxu0 0.0
        %1577 = vmatpush1.msra.mxu0 %v1527
        %1578 = vmatprep.subr.mxu0 0.0
        %1579 = vmatpush1.msra.mxu0 %v1528
        %1580 = vmatprep.subr.mxu0 0.0
        %1581 = vmatpush1.msra.mxu0 %v1529
        %1582 = vmatprep.subr.mxu0 0.0
        %1583 = vmatpush1.msra.mxu0 %v1530
        %1584 = vmatprep.subr.mxu0 0.0
        %1585 = vmatpush1.msra.mxu0 %v1531
        %1586 = vmatprep.subr.mxu0 0.0
        %1587 = vmatpush1.msra.mxu0 %v1532
        %1588 = vmatprep.subr.mxu0 0.0
        %1589 = vmatpush1.msra.mxu0 %v1533
        %1590 = vmatprep.subr.mxu0 0.0
        %1591 = vmatpush1.msra.mxu0 %v1534
        %1592 = vmatprep.subr.mxu0 0.0
        %1593 = vmatpush1.msra.mxu0 %v1535
        %1594 = vmatprep.subr.mxu0 0.0
        %1595 = vmatpush1.msra.mxu0 %v1536
        %1596 = vmatprep.subr.mxu0 0.0
        %1597 = vmatpush1.msra.mxu0 %v1537
        %1598 = vmatprep.subr.mxu0 0.0
        %1599 = vmatpush1.msra.mxu0 %v1538
        %1600 = vmatprep.subr.mxu0 0.0
        %1601 = vmatpush1.msra.mxu0 %v1539
        %1602 = vmatprep.subr.mxu0 0.0
        %1603 = vmatpush1.msra.mxu0 %v1540
        %1604 = vmatprep.subr.mxu0 0.0
        %1605 = vmatpush1.msra.mxu0 0.0
        %1606 = vmatprep.subr.mxu0 0.0
        %1607 = vmatpush1.msra.mxu0 0.0
        %1608 = vmatprep.subr.mxu0 0.0
        %1609 = vmatpush1.msra.mxu0 0.0
        %1610 = vmatprep.subr.mxu0 0.0
        %1611 = vmatpush1.msra.mxu0 0.0
        %1612 = vmatprep.subr.mxu0 0.0
        %1613 = vmatpush1.msra.mxu0 0.0
        %1614 = vmatprep.subr.mxu0 0.0
        %1615 = vmatpush1.msra.mxu0 0.0
        %1616 = vmatprep.subr.mxu0 0.0
        %1617 = vmatpush1.msra.mxu0 0.0
        %1618 = vmatprep.subr.mxu0 0.0
        %1619 = vmatpush1.msra.mxu0 0.0
        %1620 = vmatprep.subr.mxu0 0.0
        %1621 = vmatpush1.msra.mxu0 0.0
        %1622 = vmatprep.subr.mxu0 0.0
        %1623 = vmatpush1.msra.mxu0 0.0
        %1624 = vmatprep.subr.mxu0 0.0
        %1625 = vmatpush1.msra.mxu0 0.0
        %1626 = vmatprep.subr.mxu0 0.0
        %1627 = vmatpush1.msra.mxu0 0.0
        %1628 = vmatprep.subr.mxu0 0.0
        %1629 = vmatpush1.msra.mxu0 0.0
        %1630 = vmatprep.subr.mxu0 0.0
        %1631 = vmatpush1.msra.mxu0 0.0
        %1632 = vmatprep.subr.mxu0 0.0
        %1633 = vmatpush1.msra.mxu0 0.0
        %1634 = vmatprep.subr.mxu0 0.0
        %1635 = vmatpush1.msra.mxu0 0.0
        %1636 = vmatprep.mubr.f32.mxu0 0.0
        %1637 = vmatmul.mubr.f32.gmra.mrb[0].mxu0 %v1543
        %v1638 = vpop.f32.mrb[0].mxu0
        %v1639 = vadd.f32 0.0, %v1638
        %v1640 = vpop.f32.mrb[0].mxu0
        %1641 = vmatprep.mubr.f32.mxu0 0.0
        %1642 = vmatmul.mubr.f32.gmra.mrb[0].mxu0 %v1545
        %v1643 = vpop.f32.mrb[0].mxu0
        %v1644 = vadd.f32 0.0, %v1643
        %v1645 = vpop.f32.mrb[0].mxu0
        %1646 = vmatprep.mubr.f32.mxu0 0.0
        %1647 = vmatmul.mubr.f32.gmra.mrb[0].mxu0 %v1547
        %v1648 = vpop.f32.mrb[0].mxu0
        %v1649 = vadd.f32 0.0, %v1648
        %v1650 = vpop.f32.mrb[0].mxu0
        %1651 = vmatprep.mubr.f32.mxu0 0.0
        %1652 = vmatmul.mubr.f32.gmra.mrb[0].mxu0 %v1549
        %v1653 = vpop.f32.mrb[0].mxu0
        %v1654 = vadd.f32 0.0, %v1653
        %v1655 = vpop.f32.mrb[0].mxu0
        %1656 = vmatprep.mubr.f32.mxu0 0.0
        %1657 = vmatmul.mubr.f32.gmra.mrb[0].mxu0 %v1551
        %v1658 = vpop.f32.mrb[0].mxu0
        %v1659 = vadd.f32 0.0, %v1658
        %v1660 = vpop.f32.mrb[0].mxu0
        %1661 = vmatprep.mubr.f32.mxu0 0.0
        %1662 = vmatmul.mubr.f32.gmra.mrb[0].mxu0 %v1553
        %v1663 = vpop.f32.mrb[0].mxu0
        %v1664 = vadd.f32 0.0, %v1663
        %v1665 = vpop.f32.mrb[0].mxu0
        %1666 = vmatprep.mubr.f32.mxu0 0.0
        %1667 = vmatmul.mubr.f32.gmra.mrb[0].mxu0 %v1555
        %v1668 = vpop.f32.mrb[0].mxu0
        %v1669 = vadd.f32 0.0, %v1668
        %v1670 = vpop.f32.mrb[0].mxu0
        %1671 = vmatprep.mubr.f32.mxu0 0.0
        %1672 = vmatmul.mubr.f32.gmra.mrb[0].mxu0 %v1557
        %v1673 = vpop.f32.mrb[0].mxu0
        %v1674 = vadd.f32 0.0, %v1673
        %v1675 = vpop.f32.mrb[0].mxu0
        %1676 = vmatprep.mubr.f32.mxu0 0.0
        %1677 = vmatmul.mubr.f32.gmra.mrb[0].mxu0 %v1559
        %v1678 = vpop.f32.mrb[0].mxu0
        %v1679 = vadd.f32 0.0, %v1678
        %v1680 = vpop.f32.mrb[0].mxu0
        %1681 = vmatprep.mubr.f32.mxu0 0.0
        %1682 = vmatmul.mubr.f32.gmra.mrb[0].mxu0 %v1561
        %v1683 = vpop.f32.mrb[0].mxu0
        %v1684 = vadd.f32 0.0, %v1683
        %v1685 = vpop.f32.mrb[0].mxu0
        %1686 = vdwg.mxu0
        %v1687 = vadd.f32 %v1514, %v1639
        %v1688 = vadd.f32 %v1515, %v1644
        %v1689 = vadd.f32 %v1516, %v1649
        %v1690 = vadd.f32 %v1517, %v1654
        %v1691 = vadd.f32 %v1518, %v1659
        %v1692 = vadd.f32 %v1519, %v1664
        %v1693 = vadd.f32 %v1520, %v1669
        %v1694 = vadd.f32 %v1521, %v1674
        %v1695 = vadd.f32 %v1522, %v1679
        %v1696 = vadd.f32 %v1523, %v1684
        %v1698 = vlaneseq
        %v1699 = vshrl.u32 %v1698, 7
        %v1700 = vsub.s32 0, %v1699
        %v1701 = vrot.slane %v171, %v1700
        %v1703 = vadd.f32 %v1687, %v1701
        %v1704 = vadd.f32 %v1688, %v1701
        %v1705 = vadd.f32 %v1689, %v1701
        %v1706 = vadd.f32 %v1690, %v1701
        %v1707 = vadd.f32 %v1691, %v1701
        %v1708 = vadd.f32 %v1692, %v1701
        %v1709 = vadd.f32 %v1693, %v1701
        %v1710 = vadd.f32 %v1694, %v1701
        %v1711 = vadd.f32 %v1695, %v1701
        %v1712 = vadd.f32 %v1696, %v1701
        %v1713 = vsub.f32 0.0, %v1703
        %v1714 = vsub.f32 0.0, %v1704
        %v1715 = vsub.f32 0.0, %v1705
        %v1716 = vsub.f32 0.0, %v1706
        %v1717 = vsub.f32 0.0, %v1707
        %v1718 = vsub.f32 0.0, %v1708
        %v1719 = vsub.f32 0.0, %v1709
        %v1720 = vsub.f32 0.0, %v1710
        %v1721 = vsub.f32 0.0, %v1711
        %v1722 = vsub.f32 0.0, %v1712
        %v1723 = vmul.f32 %v1713, 1.442695
        %v1724 = vpow.pop %v1723
        %v1725 = vmul.f32 %v1714, 1.442695
        %v1726 = vpow.pop %v1725
        %v1727 = vmul.f32 %v1715, 1.442695
        %v1728 = vpow.pop %v1727
        %v1729 = vmul.f32 %v1716, 1.442695
        %v1730 = vpow.pop %v1729
        %v1731 = vmul.f32 %v1717, 1.442695
        %v1732 = vpow.pop %v1731
        %v1733 = vmul.f32 %v1718, 1.442695
        %v1734 = vpow.pop %v1733
        %v1735 = vmul.f32 %v1719, 1.442695
        %v1736 = vpow.pop %v1735
        %v1737 = vmul.f32 %v1720, 1.442695
        %v1738 = vpow.pop %v1737
        %v1739 = vmul.f32 %v1721, 1.442695
        %v1740 = vpow.pop %v1739
        %v1741 = vmul.f32 %v1722, 1.442695
        %v1742 = vpow.pop %v1741
        %v1743 = vadd.f32 %v1724, 1.0
        %v1744 = vadd.f32 %v1726, 1.0
        %v1745 = vadd.f32 %v1728, 1.0
        %v1746 = vadd.f32 %v1730, 1.0
        %v1747 = vadd.f32 %v1732, 1.0
        %v1748 = vadd.f32 %v1734, 1.0
        %v1749 = vadd.f32 %v1736, 1.0
        %v1750 = vadd.f32 %v1738, 1.0
        %v1751 = vadd.f32 %v1740, 1.0
        %v1752 = vadd.f32 %v1742, 1.0
        %v1753 = vrcp.pop %v1743
        %v1754 = vmul.f32 1.0, %v1753
        %v1755 = vrcp.pop %v1744
        %v1756 = vmul.f32 1.0, %v1755
        %v1757 = vrcp.pop %v1745
        %v1758 = vmul.f32 1.0, %v1757
        %v1759 = vrcp.pop %v1746
        %v1760 = vmul.f32 1.0, %v1759
        %v1761 = vrcp.pop %v1747
        %v1762 = vmul.f32 1.0, %v1761
        %v1763 = vrcp.pop %v1748
        %v1764 = vmul.f32 1.0, %v1763
        %v1765 = vrcp.pop %v1749
        %v1766 = vmul.f32 1.0, %v1765
        %v1767 = vrcp.pop %v1750
        %v1768 = vmul.f32 1.0, %v1767
        %v1769 = vrcp.pop %v1751
        %v1770 = vmul.f32 1.0, %v1769
        %v1771 = vrcp.pop %v1752
        %v1772 = vmul.f32 1.0, %v1771
        %s1773 = smul.u32 %s173, 80
        %s1774 = scalar_lea.vmem %s170, %s1773
        %vm1775 = vcmask 23552
        %1776 = vst.msk [vmem:[%s1774] sm:$0xff] %vm1775, %v1754
        %1777 = vst.msk [vmem:[%s1774 + $0x8] sm:$0xff] %vm1775, %v1756
        %1778 = vst.msk [vmem:[%s1774 + $0x10] sm:$0xff] %vm1775, %v1758
        %1779 = vst.msk [vmem:[%s1774 + $0x18] sm:$0xff] %vm1775, %v1760
        %1780 = vst.msk [vmem:[%s1774 + $0x20] sm:$0xff] %vm1775, %v1762
        %1781 = vst.msk [vmem:[%s1774 + $0x28] sm:$0xff] %vm1775, %v1764
        %1782 = vst.msk [vmem:[%s1774 + $0x30] sm:$0xff] %vm1775, %v1766
        %1783 = vst.msk [vmem:[%s1774 + $0x38] sm:$0xff] %vm1775, %v1768
        %1784 = vst.msk [vmem:[%s1774 + $0x40] sm:$0xff] %vm1775, %v1770
        %1785 = vst.msk [vmem:[%s1774 + $0x48] sm:$0xff] %vm1775, %v1772
      $region37: #{ae_decoder_forward.9} parent=31 // loop_footer
        %s177 = sadd.s32 1, %s173
      $region38: #{ae_decoder_forward.9} parent=31 // loop_footer_branch
        %172 = sbr.rel target = $region34
      $region39: #{ae_decoder_forward.9} parent=31 // loop_exit
        _
      %p1786 = scmp.lt.s32.totalorder %s14, 1
      %s1787 = scalar_select %p1786, %s14, 1
      %s1788 = smul.addr %s1787, 450
      %s1789 = smul.addr %s1788, 8
      %s1790 = scalar_lea.vmem %s3, %s1789
      // Predicated region
      $region40: #{ae_decoder_forward.9} parent=31 // pred_check
        %p1791 = pneg %p100
      $region41: #{ae_decoder_forward.9} parent=31 // pred_check_branch
        %1793 = sbr.rel (%p1791) target = $region43
      $region42: #{ae_decoder_forward.9} parent=31 // pred_region
        _
      $region43: #{ae_decoder_forward.9} parent=31 // pred_fallthru
        _
    $region32: #{ae_decoder_forward.9} parent=5 // pred_fallthru
      _
    %p1794 = scmp.le.s32.totalorder 2, %s9
    // Predicated region
    $region44: #{ae_decoder_forward.9} parent=5 // pred_check
      %p1795 = pneg %p1794
    $region45: #{ae_decoder_forward.9} parent=5 // pred_check_branch
      %1797 = sbr.rel (%p1795) target = $region47
    $region46: #{ae_decoder_forward.9} parent=5 // pred_region
      %s1798 = ssub.s32 %s9, 2
      // Predicated region
      $region48: #{ae_decoder_forward.9} parent=46 // pred_check
        %p1799 = pneg %p106
      $region49: #{ae_decoder_forward.9} parent=46 // pred_check_branch
        %1801 = sbr.rel (%p1799) target = $region51
      $region50: #{ae_decoder_forward.9} parent=46 // pred_region
        %p1802 = scmp.lt.s32.totalorder %s15, 1
        %s1803 = scalar_select %p1802, %s15, 1
        %s1804 = smul.addr %s1803, 450
        %s1805 = smul.addr %s1804, 8
        %s1806 = scalar_lea.vmem %s3, %s1805
      $region51: #{ae_decoder_forward.9} parent=46 // pred_fallthru
        _
    $region47: #{ae_decoder_forward.9} parent=5 // pred_fallthru
      _
  $region6: #{ae_decoder_forward.9} parent=0 // loop_footer
    %s13 = sadd.s32 1, %s9
  $region7: #{ae_decoder_forward.9} parent=0 // loop_footer_branch
    %8 = sbr.rel target = $region3
  $region8: #{ae_decoder_forward.9} parent=0 // loop_exit
    _

</llo_original>
